<compile_context>
chip_gen: v6e
topology: v6e:2x2x1
jax: 0.10.0
libtpu: 0.0.40
codegen_flags: <defaults>
</compile_context>

<pallas_src>
import functools

import jax
import jax.numpy as jnp
from jax.experimental import pallas as pl
from jax.experimental.pallas import tpu as pltpu


C1P = 128      # conv1 out channels padded 96 -> 128 (lane dense)
C2 = 256       # conv2 out channels
C3 = 384       # conv3 out channels
FC1 = 1024
FC2 = 128
NOUT_PAD = 128  # fc3's 2 logits padded to one 128-lane vreg


# ----------------------------------------------------------------------------
# Fused whole-network kernel (one grid step per image)
# ----------------------------------------------------------------------------
def _siamese_fused_kernel(x1_ref, c1w_ref, c1b_ref, c2w_ref, c2b_ref,
                          c3w_ref, c3b_ref, f1w_ref, f1b_ref, f2w_ref, f2b_ref,
                          f3w_ref, f3b_ref, o_ref,
                          *, s1, p1k, p1s, c2k, p2k, p2s, c3k, c1p):
    # ---- conv1 (pre-im2col'd): one bf16 MXU matmul, f32 accum / bias / ReLU --
    h1 = jnp.dot(x1_ref[...], c1w_ref[...], preferred_element_type=jnp.float32)
    h1 = jnp.maximum(h1 + c1b_ref[...], 0.0).astype(jnp.bfloat16)   # (s1*s1, c1p)

    # ---- pool1 (p1k x p1k, stride p1s), bf16 max, entirely in vregs ----------
    # Row-plane view of conv1 output: rows1[h] = conv1(h, :, :) of shape (s1, c1p)
    rows1 = [h1[r * s1:(r + 1) * s1, :] for r in range(s1)]
    q1 = (s1 - p1k) // p1s + 1
    hmax = []
    for ph in range(q1):
        pm = rows1[ph * p1s]
        for i in range(1, p1k):
            pm = jnp.maximum(pm, rows1[ph * p1s + i])
        hmax.append(pm)                                             # (s1, c1p)
    # Lane-concat the q1 H-pooled planes so the W reduction is one pass.
    pmcat = jnp.concatenate(hmax, axis=1)                           # (s1, q1*c1p)
    dwlen = s1 - p1k + 1
    dw = pmcat[0:dwlen, :]
    for j in range(1, p1k):
        dw = jnp.maximum(dw, pmcat[j:j + dwlen, :])                 # (dwlen, q1*c1p)
    # Stride-p1s W subsample as an exact 0/1 selection matmul: keeps the row
    # regrouping on the MXU (no strided vector ops, nothing written to HBM).
    widx = jax.lax.broadcasted_iota(jnp.int32, (q1, dwlen), 0)
    ridx = jax.lax.broadcasted_iota(jnp.int32, (q1, dwlen), 1)
    sel = (ridx == p1s * widx).astype(jnp.bfloat16)
    p1 = jnp.dot(sel, dw, preferred_element_type=jnp.float32).astype(jnp.bfloat16)
    # p1[w, ph*c1p + c] == pool1 output at (h=ph, w=w, channel=c)

    # ---- conv2 (c2k x c2k, stride 1): in-kernel im2col via lane concat -------
    s2 = q1 - c2k + 1
    rows2 = []
    for h in range(s2):
        taps = [p1[dj:dj + s2, (h + di) * c1p:(h + di + 1) * c1p]
                for di in range(c2k) for dj in range(c2k)]
        xrow = jnp.concatenate(taps, axis=1)                        # (s2, c2k*c2k*c1p)
        a = jnp.dot(xrow, c2w_ref[...], preferred_element_type=jnp.float32)
        rows2.append(jnp.maximum(a + c2b_ref[...], 0.0).astype(jnp.bfloat16))

    # ---- pool2 (p2k x p2k, stride p2s) + conv3 im2col (1x1 spatial output) ---
    q2 = (s2 - p2k) // p2s + 1
    assert q2 == c3k  # conv3 consumes the full pooled grid -> 1x1 output
    pieces = []
    for ph in range(q2):
        pm = rows2[ph * p2s]
        for i in range(1, p2k):
            pm = jnp.maximum(pm, rows2[ph * p2s + i])               # (s2, C2)
        for pw in range(q2):
            v = pm[pw * p2s:pw * p2s + 1, :]
            for j in range(1, p2k):
                v = jnp.maximum(v, pm[pw * p2s + j:pw * p2s + j + 1, :])
            pieces.append(v)                                        # (1, C2)
    x3 = jnp.concatenate(pieces, axis=1)                            # (1, c3k*c3k*C2)

    # ---- conv3 (1x1 spatial) + fc1 + fc2 + fc3, all fused --------------------
    h = jnp.dot(x3, c3w_ref[...], preferred_element_type=jnp.float32)
    h = jnp.maximum(h + c3b_ref[...], 0.0).astype(jnp.bfloat16)
    h = jnp.dot(h, f1w_ref[...], preferred_element_type=jnp.float32)
    h = jnp.maximum(h + f1b_ref[...], 0.0).astype(jnp.bfloat16)
    h = jnp.dot(h, f2w_ref[...], preferred_element_type=jnp.float32)
    h = jnp.maximum(h + f2b_ref[...], 0.0).astype(jnp.bfloat16)
    h = jnp.dot(h, f3w_ref[...], preferred_element_type=jnp.float32) + f3b_ref[...]
    # Output block kept (8, 128)-aligned; row 0 holds the (padded) logits.
    o_ref[...] = jnp.broadcast_to(h, o_ref.shape).astype(o_ref.dtype)


# ----------------------------------------------------------------------------
# XLA glue: conv1 patch extraction (stride 4), K padding folded into the build.
# ----------------------------------------------------------------------------
def _conv1_im2col(x_nhwc, k, stride, taps_padded):
    """(B, H, W, C) NHWC -> ((B, OH*OW, taps_padded*C), OH, OW); K order (kh, kw, c)."""
    B, H, W, C = x_nhwc.shape
    OH = (H - k) // stride + 1
    OW = (W - k) // stride + 1
    taps = [x_nhwc[:, i:i + stride * (OH - 1) + 1:stride,
                      j:j + stride * (OW - 1) + 1:stride, :]
            for i in range(k) for j in range(k)]
    taps += [jnp.zeros_like(taps[0])] * (taps_padded - k * k)   # fold K pad in
    patches = jnp.stack(taps, axis=3)                # (B, OH, OW, taps_padded, C)
    return patches.reshape(B, OH * OW, taps_padded * C), OH, OW


# ----------------------------------------------------------------------------
# Parameters
# ----------------------------------------------------------------------------
def init_params(key):
    ks = jax.random.split(key, 6)
    s = 0.05  # deterministic synthetic init

    def n(k, shape):
        return jax.random.normal(k, shape, jnp.float32) * s

    c1 = n(ks[0], (11, 11, 3, 96))       # HWIO
    c2 = n(ks[1], (3, 3, 96, 256))
    c3 = n(ks[2], (3, 3, 256, 384))
    f1 = n(ks[3], (384, 1024))
    f2 = n(ks[4], (1024, 128))
    f3 = n(ks[5], (128, 2))

    def conv_matrix(w_hwio, k_pad, n_pad, cin_pad=None):
        kh, kw, cin, cout = w_hwio.shape
        if cin_pad is not None and cin_pad > cin:
            w_hwio = jnp.pad(w_hwio, ((0, 0), (0, 0), (0, cin_pad - cin), (0, 0)))
            cin = cin_pad
        wm = w_hwio.reshape(kh * kw * cin, cout)     # rows ordered (kh, kw, cin)
        wm = jnp.pad(wm, ((0, k_pad - wm.shape[0]), (0, n_pad - cout)))
        return wm.astype(jnp.bfloat16)

    def bias(n_pad):
        return jnp.zeros((1, n_pad), jnp.float32)

    return {
        # conv1: K = 11*11*3 = 363 -> 384 (matches the 7 zero taps in im2col), Cout 96 -> 128
        "conv1_wm": conv_matrix(c1, 384, C1P), "conv1_b": bias(C1P),
        # conv2: Cin padded 96 -> 128 (lane-dense activations); K = 9*128 = 1152
        "conv2_wm": conv_matrix(c2, 3 * 3 * C1P, C2, cin_pad=C1P), "conv2_b": bias(C2),
        # conv3: K = 9*256 = 2304, N = 384
        "conv3_wm": conv_matrix(c3, 3 * 3 * C2, C3), "conv3_b": bias(C3),
        "fc1_wm": f1.astype(jnp.bfloat16), "fc1_b": bias(FC1),
        "fc2_wm": f2.astype(jnp.bfloat16), "fc2_b": bias(FC2),
        # fc3: 2 logits padded to 128 lanes (sliced back to 2 at the end)
        "fc3_wm": jnp.pad(f3, ((0, 0), (0, NOUT_PAD - 2))).astype(jnp.bfloat16),
        "fc3_b": bias(NOUT_PAD),
    }


# ----------------------------------------------------------------------------
# Forward
# ----------------------------------------------------------------------------
def forward_batched(params, x_nchw):
    # PyTorch NCHW -> NHWC; bf16 activations throughout the trunk.
    x = jnp.transpose(x_nchw, (0, 2, 3, 1)).astype(jnp.bfloat16)
    B = x.shape[0]

    # conv1 patch extraction stays in XLA.
    # TODO(synk): in-kernel im2col for conv1 is intentionally skipped — the raw
    # image has only 3 channels, so keeping it in VMEM lane-dense is impossible
    # (3/128 lane occupancy would inflate VMEM ~40x).
    xm, OH, OW = _conv1_im2col(x, 11, 4, 128)            # (B, 289, 384) bf16
    assert OH == OW
    s1 = OH
    q1 = (s1 - 3) // 2 + 1
    s2 = q1 - 3 + 1
    q2 = (s2 - 2) // 2 + 1
    assert q2 == 3, "input spatial size must reduce to a 1x1 conv3 output (e.g. 75x75)"

    weights = (params["conv1_wm"], params["conv1_b"],
               params["conv2_wm"], params["conv2_b"],
               params["conv3_wm"], params["conv3_b"],
               params["fc1_wm"], params["fc1_b"],
               params["fc2_wm"], params["fc2_b"],
               params["fc3_wm"], params["fc3_b"])

    kern = functools.partial(_siamese_fused_kernel, s1=s1, p1k=3, p1s=2,
                             c2k=3, p2k=2, p2s=2, c3k=3, c1p=C1P)

    in_specs = [pl.BlockSpec((None, s1 * s1, xm.shape[2]), lambda i: (i, 0, 0))]
    # Weight / bias blocks: full arrays with constant index_map -> DMA'd once,
    # VMEM-resident across all grid steps.
    # TODO(synk): pl.Buffered(1) on these would drop their unused second buffer
    # (~3.5 MiB); omitted since total kernel VMEM is already only ~8 MiB.
    in_specs += [pl.BlockSpec(w.shape, lambda i: (0, 0)) for w in weights]

    flops = 2 * B * (s1 * s1 * xm.shape[2] * C1P
                     + s2 * s2 * (9 * C1P) * C2
                     + (9 * C2) * C3 + C3 * FC1 + FC1 * FC2 + FC2 * NOUT_PAD)
    bytes_accessed = (int(xm.size) * 2
                      + sum(int(w.size) * w.dtype.itemsize for w in weights)
                      + B * 8 * NOUT_PAD * 4)

    out = pl.pallas_call(
        kern,
        out_shape=jax.ShapeDtypeStruct((B, 8, NOUT_PAD), jnp.float32),
        grid=(B,),
        in_specs=in_specs,
        out_specs=pl.BlockSpec((None, 8, NOUT_PAD), lambda i: (i, 0, 0)),
        compiler_params=pltpu.CompilerParams(dimension_semantics=("parallel",)),
        cost_estimate=pl.CostEstimate(flops=flops, transcendentals=0,
                                      bytes_accessed=bytes_accessed),
    )(xm, *weights)
    return out[:, 0, :2]                                  # valid logits, (B, 2)


def siamese_forward(params, img1, img2):
    # Shared weights -> run both branches as one batched pass (half the launches).
    B = img1.shape[0]
    x = jnp.concatenate([img1, img2], axis=0)
    out = forward_batched(params, x)
    # TODO(synk): original `if out1 == out2: print(...)` is an ill-formed tensor
    # truthiness check in PyTorch (raises for >1 element); intentionally omitted.
    return out[:B], out[B:]


if __name__ == "__main__":
    key = jax.random.PRNGKey(0)
    kp, k1, k2 = jax.random.split(key, 3)
    params = init_params(kp)

    # Smallest input consistent with the module: 75x75 so the conv trunk ends at
    # (N, 384, 1, 1) and the flatten matches Linear(in_features=384).
    img1 = jax.random.normal(k1, (2, 3, 75, 75), jnp.float32)
    img2 = jax.random.normal(k2, (2, 3, 75, 75), jnp.float32)

    fwd = jax.jit(siamese_forward)
    out1, out2 = fwd(params, img1, img2)
    out1 = jax.block_until_ready(out1)
    out2 = jax.block_until_ready(out2)
    assert out1.shape == (2, 2) and out2.shape == (2, 2)
    assert bool(jnp.all(jnp.isfinite(out1))) and bool(jnp.all(jnp.isfinite(out2)))
    print("KERNEL_OK")
</pallas_src>

<mosaic_0001>
module attributes {stable_mosaic.version = 11 : i64} {
  func.func @_siamese_fused_kernel(%arg0: i32, %arg1: memref<1x289x384xbf16, #tpu.memory_space<vmem>>, %arg2: memref<384x128xbf16, #tpu.memory_space<vmem>>, %arg3: memref<1x128xf32, #tpu.memory_space<vmem>>, %arg4: memref<1152x256xbf16, #tpu.memory_space<vmem>>, %arg5: memref<1x256xf32, #tpu.memory_space<vmem>>, %arg6: memref<2304x384xbf16, #tpu.memory_space<vmem>>, %arg7: memref<1x384xf32, #tpu.memory_space<vmem>>, %arg8: memref<384x1024xbf16, #tpu.memory_space<vmem>>, %arg9: memref<1x1024xf32, #tpu.memory_space<vmem>>, %arg10: memref<1024x128xbf16, #tpu.memory_space<vmem>>, %arg11: memref<1x128xf32, #tpu.memory_space<vmem>>, %arg12: memref<128x128xbf16, #tpu.memory_space<vmem>>, %arg13: memref<1x128xf32, #tpu.memory_space<vmem>>, %arg14: memref<1x8x128xf32, #tpu.memory_space<vmem>>) attributes {dimension_semantics = [#tpu.dimension_semantics<parallel>], iteration_bounds = array<i64: 4>, scalar_prefetch = 0 : i64, scratch_operands = 0 : i64, tpu.core_type = #tpu.core_type<tc>, window_params = [{transform_indices = @transform_0, window_bounds = array<i64: 1, 289, 384>}, {pipeline_mode = #tpu.pipeline_mode<synchronous>, transform_indices = @transform_1, window_bounds = array<i64: 384, 128>}, {pipeline_mode = #tpu.pipeline_mode<synchronous>, transform_indices = @transform_2, window_bounds = array<i64: 1, 128>}, {pipeline_mode = #tpu.pipeline_mode<synchronous>, transform_indices = @transform_3, window_bounds = array<i64: 1152, 256>}, {pipeline_mode = #tpu.pipeline_mode<synchronous>, transform_indices = @transform_4, window_bounds = array<i64: 1, 256>}, {pipeline_mode = #tpu.pipeline_mode<synchronous>, transform_indices = @transform_5, window_bounds = array<i64: 2304, 384>}, {pipeline_mode = #tpu.pipeline_mode<synchronous>, transform_indices = @transform_6, window_bounds = array<i64: 1, 384>}, {pipeline_mode = #tpu.pipeline_mode<synchronous>, transform_indices = @transform_7, window_bounds = array<i64: 384, 1024>}, {pipeline_mode = #tpu.pipeline_mode<synchronous>, transform_indices = @transform_8, window_bounds = array<i64: 1, 1024>}, {pipeline_mode = #tpu.pipeline_mode<synchronous>, transform_indices = @transform_9, window_bounds = array<i64: 1024, 128>}, {pipeline_mode = #tpu.pipeline_mode<synchronous>, transform_indices = @transform_10, window_bounds = array<i64: 1, 128>}, {pipeline_mode = #tpu.pipeline_mode<synchronous>, transform_indices = @transform_11, window_bounds = array<i64: 128, 128>}, {pipeline_mode = #tpu.pipeline_mode<synchronous>, transform_indices = @transform_12, window_bounds = array<i64: 1, 128>}, {transform_indices = @transform_13, window_bounds = array<i64: 1, 8, 128>}]} {
    %c0 = arith.constant 0 : index
    %c0_0 = arith.constant 0 : index
    %c0_1 = arith.constant 0 : index
    %0 = vector.load %arg1[%c0, %c0_0, %c0_1] : memref<1x289x384xbf16, #tpu.memory_space<vmem>>, vector<1x289x384xbf16>
    %1 = vector.shape_cast %0 : vector<1x289x384xbf16> to vector<289x384xbf16>
    %c0_2 = arith.constant 0 : index
    %c0_3 = arith.constant 0 : index
    %2 = vector.load %arg2[%c0_2, %c0_3] : memref<384x128xbf16, #tpu.memory_space<vmem>>, vector<384x128xbf16>
    %cst = arith.constant dense<0.000000e+00> : vector<289x128xf32>
    %3 = tpu.matmul %1, %2, %cst {dimension_numbers = #tpu.dot_dimension_numbers<[1], [0], [0], [1], [0, 0, 1, 1], [], []>} : vector<289x384xbf16>, vector<384x128xbf16>, vector<289x128xf32> -> vector<289x128xf32>
    %c0_4 = arith.constant 0 : index
    %c0_5 = arith.constant 0 : index
    %4 = vector.load %arg3[%c0_4, %c0_5] : memref<1x128xf32, #tpu.memory_space<vmem>>, vector<1x128xf32>
    %5 = vector.broadcast %4 : vector<1x128xf32> to vector<289x128xf32>
    %6 = arith.addf %3, %5 : vector<289x128xf32>
    %cst_6 = arith.constant 0.000000e+00 : f32
    %7 = vector.broadcast %cst_6 : f32 to vector<289x128xf32>
    %8 = arith.maximumf %6, %7 : vector<289x128xf32>
    %9 = arith.truncf %8 : vector<289x128xf32> to vector<289x128xbf16>
    %10 = vector.extract_strided_slice %9 {offsets = [0, 0], sizes = [17, 128], strides = [1, 1]} : vector<289x128xbf16> to vector<17x128xbf16>
    %11 = vector.extract_strided_slice %9 {offsets = [17, 0], sizes = [17, 128], strides = [1, 1]} : vector<289x128xbf16> to vector<17x128xbf16>
    %12 = vector.extract_strided_slice %9 {offsets = [34, 0], sizes = [17, 128], strides = [1, 1]} : vector<289x128xbf16> to vector<17x128xbf16>
    %13 = vector.extract_strided_slice %9 {offsets = [51, 0], sizes = [17, 128], strides = [1, 1]} : vector<289x128xbf16> to vector<17x128xbf16>
    %14 = vector.extract_strided_slice %9 {offsets = [68, 0], sizes = [17, 128], strides = [1, 1]} : vector<289x128xbf16> to vector<17x128xbf16>
    %15 = vector.extract_strided_slice %9 {offsets = [85, 0], sizes = [17, 128], strides = [1, 1]} : vector<289x128xbf16> to vector<17x128xbf16>
    %16 = vector.extract_strided_slice %9 {offsets = [102, 0], sizes = [17, 128], strides = [1, 1]} : vector<289x128xbf16> to vector<17x128xbf16>
    %17 = vector.extract_strided_slice %9 {offsets = [119, 0], sizes = [17, 128], strides = [1, 1]} : vector<289x128xbf16> to vector<17x128xbf16>
    %18 = vector.extract_strided_slice %9 {offsets = [136, 0], sizes = [17, 128], strides = [1, 1]} : vector<289x128xbf16> to vector<17x128xbf16>
    %19 = vector.extract_strided_slice %9 {offsets = [153, 0], sizes = [17, 128], strides = [1, 1]} : vector<289x128xbf16> to vector<17x128xbf16>
    %20 = vector.extract_strided_slice %9 {offsets = [170, 0], sizes = [17, 128], strides = [1, 1]} : vector<289x128xbf16> to vector<17x128xbf16>
    %21 = vector.extract_strided_slice %9 {offsets = [187, 0], sizes = [17, 128], strides = [1, 1]} : vector<289x128xbf16> to vector<17x128xbf16>
    %22 = vector.extract_strided_slice %9 {offsets = [204, 0], sizes = [17, 128], strides = [1, 1]} : vector<289x128xbf16> to vector<17x128xbf16>
    %23 = vector.extract_strided_slice %9 {offsets = [221, 0], sizes = [17, 128], strides = [1, 1]} : vector<289x128xbf16> to vector<17x128xbf16>
    %24 = vector.extract_strided_slice %9 {offsets = [238, 0], sizes = [17, 128], strides = [1, 1]} : vector<289x128xbf16> to vector<17x128xbf16>
    %25 = vector.extract_strided_slice %9 {offsets = [255, 0], sizes = [17, 128], strides = [1, 1]} : vector<289x128xbf16> to vector<17x128xbf16>
    %26 = vector.extract_strided_slice %9 {offsets = [272, 0], sizes = [17, 128], strides = [1, 1]} : vector<289x128xbf16> to vector<17x128xbf16>
    %27 = arith.maximumf %10, %11 : vector<17x128xbf16>
    %28 = arith.maximumf %27, %12 : vector<17x128xbf16>
    %29 = arith.maximumf %12, %13 : vector<17x128xbf16>
    %30 = arith.maximumf %29, %14 : vector<17x128xbf16>
    %31 = arith.maximumf %14, %15 : vector<17x128xbf16>
    %32 = arith.maximumf %31, %16 : vector<17x128xbf16>
    %33 = arith.maximumf %16, %17 : vector<17x128xbf16>
    %34 = arith.maximumf %33, %18 : vector<17x128xbf16>
    %35 = arith.maximumf %18, %19 : vector<17x128xbf16>
    %36 = arith.maximumf %35, %20 : vector<17x128xbf16>
    %37 = arith.maximumf %20, %21 : vector<17x128xbf16>
    %38 = arith.maximumf %37, %22 : vector<17x128xbf16>
    %39 = arith.maximumf %22, %23 : vector<17x128xbf16>
    %40 = arith.maximumf %39, %24 : vector<17x128xbf16>
    %41 = arith.maximumf %24, %25 : vector<17x128xbf16>
    %42 = arith.maximumf %41, %26 : vector<17x128xbf16>
    %43 = tpu.concatenate %28, %30, %32, %34, %36, %38, %40, %42 in 1 : vector<17x128xbf16>, vector<17x128xbf16>, vector<17x128xbf16>, vector<17x128xbf16>, vector<17x128xbf16>, vector<17x128xbf16>, vector<17x128xbf16>, vector<17x128xbf16> -> vector<17x1024xbf16>
    %44 = vector.extract_strided_slice %43 {offsets = [0, 0], sizes = [15, 1024], strides = [1, 1]} : vector<17x1024xbf16> to vector<15x1024xbf16>
    %45 = vector.extract_strided_slice %43 {offsets = [1, 0], sizes = [15, 1024], strides = [1, 1]} : vector<17x1024xbf16> to vector<15x1024xbf16>
    %46 = arith.maximumf %44, %45 : vector<15x1024xbf16>
    %47 = vector.extract_strided_slice %43 {offsets = [2, 0], sizes = [15, 1024], strides = [1, 1]} : vector<17x1024xbf16> to vector<15x1024xbf16>
    %48 = arith.maximumf %46, %47 : vector<15x1024xbf16>
    %49 = tpu.iota {dimensions = array<i32: 0>} : vector<8x15xi32>
    %50 = tpu.iota {dimensions = array<i32: 1>} : vector<8x15xi32>
    %c2_i32 = arith.constant 2 : i32
    %51 = vector.broadcast %c2_i32 : i32 to vector<8x15xi32>
    %52 = arith.muli %51, %49 : vector<8x15xi32>
    %53 = arith.cmpi eq, %50, %52 : vector<8x15xi32>
    %54 = arith.extui %53 : vector<8x15xi1> to vector<8x15xi32>
    %55 = arith.sitofp %54 : vector<8x15xi32> to vector<8x15xf32>
    %56 = arith.truncf %55 : vector<8x15xf32> to vector<8x15xbf16>
    %cst_7 = arith.constant dense<0.000000e+00> : vector<8x1024xf32>
    %57 = tpu.matmul %56, %48, %cst_7 {dimension_numbers = #tpu.dot_dimension_numbers<[1], [0], [0], [1], [0, 0, 1, 1], [], []>} : vector<8x15xbf16>, vector<15x1024xbf16>, vector<8x1024xf32> -> vector<8x1024xf32>
    %58 = arith.truncf %57 : vector<8x1024xf32> to vector<8x1024xbf16>
    %59 = vector.extract_strided_slice %58 {offsets = [0, 0], sizes = [6, 128], strides = [1, 1]} : vector<8x1024xbf16> to vector<6x128xbf16>
    %60 = vector.extract_strided_slice %58 {offsets = [1, 0], sizes = [6, 128], strides = [1, 1]} : vector<8x1024xbf16> to vector<6x128xbf16>
    %61 = vector.extract_strided_slice %58 {offsets = [2, 0], sizes = [6, 128], strides = [1, 1]} : vector<8x1024xbf16> to vector<6x128xbf16>
    %62 = vector.extract_strided_slice %58 {offsets = [0, 128], sizes = [6, 128], strides = [1, 1]} : vector<8x1024xbf16> to vector<6x128xbf16>
    %63 = vector.extract_strided_slice %58 {offsets = [1, 128], sizes = [6, 128], strides = [1, 1]} : vector<8x1024xbf16> to vector<6x128xbf16>
    %64 = vector.extract_strided_slice %58 {offsets = [2, 128], sizes = [6, 128], strides = [1, 1]} : vector<8x1024xbf16> to vector<6x128xbf16>
    %65 = vector.extract_strided_slice %58 {offsets = [0, 256], sizes = [6, 128], strides = [1, 1]} : vector<8x1024xbf16> to vector<6x128xbf16>
    %66 = vector.extract_strided_slice %58 {offsets = [1, 256], sizes = [6, 128], strides = [1, 1]} : vector<8x1024xbf16> to vector<6x128xbf16>
    %67 = vector.extract_strided_slice %58 {offsets = [2, 256], sizes = [6, 128], strides = [1, 1]} : vector<8x1024xbf16> to vector<6x128xbf16>
    %68 = tpu.concatenate %59, %60, %61, %62, %63, %64, %65, %66, %67 in 1 : vector<6x128xbf16>, vector<6x128xbf16>, vector<6x128xbf16>, vector<6x128xbf16>, vector<6x128xbf16>, vector<6x128xbf16>, vector<6x128xbf16>, vector<6x128xbf16>, vector<6x128xbf16> -> vector<6x1152xbf16>
    %c0_8 = arith.constant 0 : index
    %c0_9 = arith.constant 0 : index
    %69 = vector.load %arg4[%c0_8, %c0_9] : memref<1152x256xbf16, #tpu.memory_space<vmem>>, vector<1152x256xbf16>
    %cst_10 = arith.constant dense<0.000000e+00> : vector<6x256xf32>
    %70 = tpu.matmul %68, %69, %cst_10 {dimension_numbers = #tpu.dot_dimension_numbers<[1], [0], [0], [1], [0, 0, 1, 1], [], []>} : vector<6x1152xbf16>, vector<1152x256xbf16>, vector<6x256xf32> -> vector<6x256xf32>
    %c0_11 = arith.constant 0 : index
    %c0_12 = arith.constant 0 : index
    %71 = vector.load %arg5[%c0_11, %c0_12] : memref<1x256xf32, #tpu.memory_space<vmem>>, vector<1x256xf32>
    %72 = vector.broadcast %71 : vector<1x256xf32> to vector<6x256xf32>
    %73 = arith.addf %70, %72 : vector<6x256xf32>
    %cst_13 = arith.constant 0.000000e+00 : f32
    %74 = vector.broadcast %cst_13 : f32 to vector<6x256xf32>
    %75 = arith.maximumf %73, %74 : vector<6x256xf32>
    %76 = arith.truncf %75 : vector<6x256xf32> to vector<6x256xbf16>
    %77 = vector.extract_strided_slice %58 {offsets = [0, 128], sizes = [6, 128], strides = [1, 1]} : vector<8x1024xbf16> to vector<6x128xbf16>
    %78 = vector.extract_strided_slice %58 {offsets = [1, 128], sizes = [6, 128], strides = [1, 1]} : vector<8x1024xbf16> to vector<6x128xbf16>
    %79 = vector.extract_strided_slice %58 {offsets = [2, 128], sizes = [6, 128], strides = [1, 1]} : vector<8x1024xbf16> to vector<6x128xbf16>
    %80 = vector.extract_strided_slice %58 {offsets = [0, 256], sizes = [6, 128], strides = [1, 1]} : vector<8x1024xbf16> to vector<6x128xbf16>
    %81 = vector.extract_strided_slice %58 {offsets = [1, 256], sizes = [6, 128], strides = [1, 1]} : vector<8x1024xbf16> to vector<6x128xbf16>
    %82 = vector.extract_strided_slice %58 {offsets = [2, 256], sizes = [6, 128], strides = [1, 1]} : vector<8x1024xbf16> to vector<6x128xbf16>
    %83 = vector.extract_strided_slice %58 {offsets = [0, 384], sizes = [6, 128], strides = [1, 1]} : vector<8x1024xbf16> to vector<6x128xbf16>
    %84 = vector.extract_strided_slice %58 {offsets = [1, 384], sizes = [6, 128], strides = [1, 1]} : vector<8x1024xbf16> to vector<6x128xbf16>
    %85 = vector.extract_strided_slice %58 {offsets = [2, 384], sizes = [6, 128], strides = [1, 1]} : vector<8x1024xbf16> to vector<6x128xbf16>
    %86 = tpu.concatenate %77, %78, %79, %80, %81, %82, %83, %84, %85 in 1 : vector<6x128xbf16>, vector<6x128xbf16>, vector<6x128xbf16>, vector<6x128xbf16>, vector<6x128xbf16>, vector<6x128xbf16>, vector<6x128xbf16>, vector<6x128xbf16>, vector<6x128xbf16> -> vector<6x1152xbf16>
    %c0_14 = arith.constant 0 : index
    %c0_15 = arith.constant 0 : index
    %87 = vector.load %arg4[%c0_14, %c0_15] : memref<1152x256xbf16, #tpu.memory_space<vmem>>, vector<1152x256xbf16>
    %cst_16 = arith.constant dense<0.000000e+00> : vector<6x256xf32>
    %88 = tpu.matmul %86, %87, %cst_16 {dimension_numbers = #tpu.dot_dimension_numbers<[1], [0], [0], [1], [0, 0, 1, 1], [], []>} : vector<6x1152xbf16>, vector<1152x256xbf16>, vector<6x256xf32> -> vector<6x256xf32>
    %c0_17 = arith.constant 0 : index
    %c0_18 = arith.constant 0 : index
    %89 = vector.load %arg5[%c0_17, %c0_18] : memref<1x256xf32, #tpu.memory_space<vmem>>, vector<1x256xf32>
    %90 = vector.broadcast %89 : vector<1x256xf32> to vector<6x256xf32>
    %91 = arith.addf %88, %90 : vector<6x256xf32>
    %cst_19 = arith.constant 0.000000e+00 : f32
    %92 = vector.broadcast %cst_19 : f32 to vector<6x256xf32>
    %93 = arith.maximumf %91, %92 : vector<6x256xf32>
    %94 = arith.truncf %93 : vector<6x256xf32> to vector<6x256xbf16>
    %95 = vector.extract_strided_slice %58 {offsets = [0, 256], sizes = [6, 128], strides = [1, 1]} : vector<8x1024xbf16> to vector<6x128xbf16>
    %96 = vector.extract_strided_slice %58 {offsets = [1, 256], sizes = [6, 128], strides = [1, 1]} : vector<8x1024xbf16> to vector<6x128xbf16>
    %97 = vector.extract_strided_slice %58 {offsets = [2, 256], sizes = [6, 128], strides = [1, 1]} : vector<8x1024xbf16> to vector<6x128xbf16>
    %98 = vector.extract_strided_slice %58 {offsets = [0, 384], sizes = [6, 128], strides = [1, 1]} : vector<8x1024xbf16> to vector<6x128xbf16>
    %99 = vector.extract_strided_slice %58 {offsets = [1, 384], sizes = [6, 128], strides = [1, 1]} : vector<8x1024xbf16> to vector<6x128xbf16>
    %100 = vector.extract_strided_slice %58 {offsets = [2, 384], sizes = [6, 128], strides = [1, 1]} : vector<8x1024xbf16> to vector<6x128xbf16>
    %101 = vector.extract_strided_slice %58 {offsets = [0, 512], sizes = [6, 128], strides = [1, 1]} : vector<8x1024xbf16> to vector<6x128xbf16>
    %102 = vector.extract_strided_slice %58 {offsets = [1, 512], sizes = [6, 128], strides = [1, 1]} : vector<8x1024xbf16> to vector<6x128xbf16>
    %103 = vector.extract_strided_slice %58 {offsets = [2, 512], sizes = [6, 128], strides = [1, 1]} : vector<8x1024xbf16> to vector<6x128xbf16>
    %104 = tpu.concatenate %95, %96, %97, %98, %99, %100, %101, %102, %103 in 1 : vector<6x128xbf16>, vector<6x128xbf16>, vector<6x128xbf16>, vector<6x128xbf16>, vector<6x128xbf16>, vector<6x128xbf16>, vector<6x128xbf16>, vector<6x128xbf16>, vector<6x128xbf16> -> vector<6x1152xbf16>
    %c0_20 = arith.constant 0 : index
    %c0_21 = arith.constant 0 : index
    %105 = vector.load %arg4[%c0_20, %c0_21] : memref<1152x256xbf16, #tpu.memory_space<vmem>>, vector<1152x256xbf16>
    %cst_22 = arith.constant dense<0.000000e+00> : vector<6x256xf32>
    %106 = tpu.matmul %104, %105, %cst_22 {dimension_numbers = #tpu.dot_dimension_numbers<[1], [0], [0], [1], [0, 0, 1, 1], [], []>} : vector<6x1152xbf16>, vector<1152x256xbf16>, vector<6x256xf32> -> vector<6x256xf32>
    %c0_23 = arith.constant 0 : index
    %c0_24 = arith.constant 0 : index
    %107 = vector.load %arg5[%c0_23, %c0_24] : memref<1x256xf32, #tpu.memory_space<vmem>>, vector<1x256xf32>
    %108 = vector.broadcast %107 : vector<1x256xf32> to vector<6x256xf32>
    %109 = arith.addf %106, %108 : vector<6x256xf32>
    %cst_25 = arith.constant 0.000000e+00 : f32
    %110 = vector.broadcast %cst_25 : f32 to vector<6x256xf32>
    %111 = arith.maximumf %109, %110 : vector<6x256xf32>
    %112 = arith.truncf %111 : vector<6x256xf32> to vector<6x256xbf16>
    %113 = vector.extract_strided_slice %58 {offsets = [0, 384], sizes = [6, 128], strides = [1, 1]} : vector<8x1024xbf16> to vector<6x128xbf16>
    %114 = vector.extract_strided_slice %58 {offsets = [1, 384], sizes = [6, 128], strides = [1, 1]} : vector<8x1024xbf16> to vector<6x128xbf16>
    %115 = vector.extract_strided_slice %58 {offsets = [2, 384], sizes = [6, 128], strides = [1, 1]} : vector<8x1024xbf16> to vector<6x128xbf16>
    %116 = vector.extract_strided_slice %58 {offsets = [0, 512], sizes = [6, 128], strides = [1, 1]} : vector<8x1024xbf16> to vector<6x128xbf16>
    %117 = vector.extract_strided_slice %58 {offsets = [1, 512], sizes = [6, 128], strides = [1, 1]} : vector<8x1024xbf16> to vector<6x128xbf16>
    %118 = vector.extract_strided_slice %58 {offsets = [2, 512], sizes = [6, 128], strides = [1, 1]} : vector<8x1024xbf16> to vector<6x128xbf16>
    %119 = vector.extract_strided_slice %58 {offsets = [0, 640], sizes = [6, 128], strides = [1, 1]} : vector<8x1024xbf16> to vector<6x128xbf16>
    %120 = vector.extract_strided_slice %58 {offsets = [1, 640], sizes = [6, 128], strides = [1, 1]} : vector<8x1024xbf16> to vector<6x128xbf16>
    %121 = vector.extract_strided_slice %58 {offsets = [2, 640], sizes = [6, 128], strides = [1, 1]} : vector<8x1024xbf16> to vector<6x128xbf16>
    %122 = tpu.concatenate %113, %114, %115, %116, %117, %118, %119, %120, %121 in 1 : vector<6x128xbf16>, vector<6x128xbf16>, vector<6x128xbf16>, vector<6x128xbf16>, vector<6x128xbf16>, vector<6x128xbf16>, vector<6x128xbf16>, vector<6x128xbf16>, vector<6x128xbf16> -> vector<6x1152xbf16>
    %c0_26 = arith.constant 0 : index
    %c0_27 = arith.constant 0 : index
    %123 = vector.load %arg4[%c0_26, %c0_27] : memref<1152x256xbf16, #tpu.memory_space<vmem>>, vector<1152x256xbf16>
    %cst_28 = arith.constant dense<0.000000e+00> : vector<6x256xf32>
    %124 = tpu.matmul %122, %123, %cst_28 {dimension_numbers = #tpu.dot_dimension_numbers<[1], [0], [0], [1], [0, 0, 1, 1], [], []>} : vector<6x1152xbf16>, vector<1152x256xbf16>, vector<6x256xf32> -> vector<6x256xf32>
    %c0_29 = arith.constant 0 : index
    %c0_30 = arith.constant 0 : index
    %125 = vector.load %arg5[%c0_29, %c0_30] : memref<1x256xf32, #tpu.memory_space<vmem>>, vector<1x256xf32>
    %126 = vector.broadcast %125 : vector<1x256xf32> to vector<6x256xf32>
    %127 = arith.addf %124, %126 : vector<6x256xf32>
    %cst_31 = arith.constant 0.000000e+00 : f32
    %128 = vector.broadcast %cst_31 : f32 to vector<6x256xf32>
    %129 = arith.maximumf %127, %128 : vector<6x256xf32>
    %130 = arith.truncf %129 : vector<6x256xf32> to vector<6x256xbf16>
    %131 = vector.extract_strided_slice %58 {offsets = [0, 512], sizes = [6, 128], strides = [1, 1]} : vector<8x1024xbf16> to vector<6x128xbf16>
    %132 = vector.extract_strided_slice %58 {offsets = [1, 512], sizes = [6, 128], strides = [1, 1]} : vector<8x1024xbf16> to vector<6x128xbf16>
    %133 = vector.extract_strided_slice %58 {offsets = [2, 512], sizes = [6, 128], strides = [1, 1]} : vector<8x1024xbf16> to vector<6x128xbf16>
    %134 = vector.extract_strided_slice %58 {offsets = [0, 640], sizes = [6, 128], strides = [1, 1]} : vector<8x1024xbf16> to vector<6x128xbf16>
    %135 = vector.extract_strided_slice %58 {offsets = [1, 640], sizes = [6, 128], strides = [1, 1]} : vector<8x1024xbf16> to vector<6x128xbf16>
    %136 = vector.extract_strided_slice %58 {offsets = [2, 640], sizes = [6, 128], strides = [1, 1]} : vector<8x1024xbf16> to vector<6x128xbf16>
    %137 = vector.extract_strided_slice %58 {offsets = [0, 768], sizes = [6, 128], strides = [1, 1]} : vector<8x1024xbf16> to vector<6x128xbf16>
    %138 = vector.extract_strided_slice %58 {offsets = [1, 768], sizes = [6, 128], strides = [1, 1]} : vector<8x1024xbf16> to vector<6x128xbf16>
    %139 = vector.extract_strided_slice %58 {offsets = [2, 768], sizes = [6, 128], strides = [1, 1]} : vector<8x1024xbf16> to vector<6x128xbf16>
    %140 = tpu.concatenate %131, %132, %133, %134, %135, %136, %137, %138, %139 in 1 : vector<6x128xbf16>, vector<6x128xbf16>, vector<6x128xbf16>, vector<6x128xbf16>, vector<6x128xbf16>, vector<6x128xbf16>, vector<6x128xbf16>, vector<6x128xbf16>, vector<6x128xbf16> -> vector<6x1152xbf16>
    %c0_32 = arith.constant 0 : index
    %c0_33 = arith.constant 0 : index
    %141 = vector.load %arg4[%c0_32, %c0_33] : memref<1152x256xbf16, #tpu.memory_space<vmem>>, vector<1152x256xbf16>
    %cst_34 = arith.constant dense<0.000000e+00> : vector<6x256xf32>
    %142 = tpu.matmul %140, %141, %cst_34 {dimension_numbers = #tpu.dot_dimension_numbers<[1], [0], [0], [1], [0, 0, 1, 1], [], []>} : vector<6x1152xbf16>, vector<1152x256xbf16>, vector<6x256xf32> -> vector<6x256xf32>
    %c0_35 = arith.constant 0 : index
    %c0_36 = arith.constant 0 : index
    %143 = vector.load %arg5[%c0_35, %c0_36] : memref<1x256xf32, #tpu.memory_space<vmem>>, vector<1x256xf32>
    %144 = vector.broadcast %143 : vector<1x256xf32> to vector<6x256xf32>
    %145 = arith.addf %142, %144 : vector<6x256xf32>
    %cst_37 = arith.constant 0.000000e+00 : f32
    %146 = vector.broadcast %cst_37 : f32 to vector<6x256xf32>
    %147 = arith.maximumf %145, %146 : vector<6x256xf32>
    %148 = arith.truncf %147 : vector<6x256xf32> to vector<6x256xbf16>
    %149 = vector.extract_strided_slice %58 {offsets = [0, 640], sizes = [6, 128], strides = [1, 1]} : vector<8x1024xbf16> to vector<6x128xbf16>
    %150 = vector.extract_strided_slice %58 {offsets = [1, 640], sizes = [6, 128], strides = [1, 1]} : vector<8x1024xbf16> to vector<6x128xbf16>
    %151 = vector.extract_strided_slice %58 {offsets = [2, 640], sizes = [6, 128], strides = [1, 1]} : vector<8x1024xbf16> to vector<6x128xbf16>
    %152 = vector.extract_strided_slice %58 {offsets = [0, 768], sizes = [6, 128], strides = [1, 1]} : vector<8x1024xbf16> to vector<6x128xbf16>
    %153 = vector.extract_strided_slice %58 {offsets = [1, 768], sizes = [6, 128], strides = [1, 1]} : vector<8x1024xbf16> to vector<6x128xbf16>
    %154 = vector.extract_strided_slice %58 {offsets = [2, 768], sizes = [6, 128], strides = [1, 1]} : vector<8x1024xbf16> to vector<6x128xbf16>
    %155 = vector.extract_strided_slice %58 {offsets = [0, 896], sizes = [6, 128], strides = [1, 1]} : vector<8x1024xbf16> to vector<6x128xbf16>
    %156 = vector.extract_strided_slice %58 {offsets = [1, 896], sizes = [6, 128], strides = [1, 1]} : vector<8x1024xbf16> to vector<6x128xbf16>
    %157 = vector.extract_strided_slice %58 {offsets = [2, 896], sizes = [6, 128], strides = [1, 1]} : vector<8x1024xbf16> to vector<6x128xbf16>
    %158 = tpu.concatenate %149, %150, %151, %152, %153, %154, %155, %156, %157 in 1 : vector<6x128xbf16>, vector<6x128xbf16>, vector<6x128xbf16>, vector<6x128xbf16>, vector<6x128xbf16>, vector<6x128xbf16>, vector<6x128xbf16>, vector<6x128xbf16>, vector<6x128xbf16> -> vector<6x1152xbf16>
    %c0_38 = arith.constant 0 : index
    %c0_39 = arith.constant 0 : index
    %159 = vector.load %arg4[%c0_38, %c0_39] : memref<1152x256xbf16, #tpu.memory_space<vmem>>, vector<1152x256xbf16>
    %cst_40 = arith.constant dense<0.000000e+00> : vector<6x256xf32>
    %160 = tpu.matmul %158, %159, %cst_40 {dimension_numbers = #tpu.dot_dimension_numbers<[1], [0], [0], [1], [0, 0, 1, 1], [], []>} : vector<6x1152xbf16>, vector<1152x256xbf16>, vector<6x256xf32> -> vector<6x256xf32>
    %c0_41 = arith.constant 0 : index
    %c0_42 = arith.constant 0 : index
    %161 = vector.load %arg5[%c0_41, %c0_42] : memref<1x256xf32, #tpu.memory_space<vmem>>, vector<1x256xf32>
    %162 = vector.broadcast %161 : vector<1x256xf32> to vector<6x256xf32>
    %163 = arith.addf %160, %162 : vector<6x256xf32>
    %cst_43 = arith.constant 0.000000e+00 : f32
    %164 = vector.broadcast %cst_43 : f32 to vector<6x256xf32>
    %165 = arith.maximumf %163, %164 : vector<6x256xf32>
    %166 = arith.truncf %165 : vector<6x256xf32> to vector<6x256xbf16>
    %167 = arith.maximumf %76, %94 : vector<6x256xbf16>
    %168 = vector.extract_strided_slice %167 {offsets = [0, 0], sizes = [1, 256], strides = [1, 1]} : vector<6x256xbf16> to vector<1x256xbf16>
    %169 = vector.extract_strided_slice %167 {offsets = [1, 0], sizes = [1, 256], strides = [1, 1]} : vector<6x256xbf16> to vector<1x256xbf16>
    %170 = arith.maximumf %168, %169 : vector<1x256xbf16>
    %171 = vector.extract_strided_slice %167 {offsets = [2, 0], sizes = [1, 256], strides = [1, 1]} : vector<6x256xbf16> to vector<1x256xbf16>
    %172 = vector.extract_strided_slice %167 {offsets = [3, 0], sizes = [1, 256], strides = [1, 1]} : vector<6x256xbf16> to vector<1x256xbf16>
    %173 = arith.maximumf %171, %172 : vector<1x256xbf16>
    %174 = vector.extract_strided_slice %167 {offsets = [4, 0], sizes = [1, 256], strides = [1, 1]} : vector<6x256xbf16> to vector<1x256xbf16>
    %175 = vector.extract_strided_slice %167 {offsets = [5, 0], sizes = [1, 256], strides = [1, 1]} : vector<6x256xbf16> to vector<1x256xbf16>
    %176 = arith.maximumf %174, %175 : vector<1x256xbf16>
    %177 = arith.maximumf %112, %130 : vector<6x256xbf16>
    %178 = vector.extract_strided_slice %177 {offsets = [0, 0], sizes = [1, 256], strides = [1, 1]} : vector<6x256xbf16> to vector<1x256xbf16>
    %179 = vector.extract_strided_slice %177 {offsets = [1, 0], sizes = [1, 256], strides = [1, 1]} : vector<6x256xbf16> to vector<1x256xbf16>
    %180 = arith.maximumf %178, %179 : vector<1x256xbf16>
    %181 = vector.extract_strided_slice %177 {offsets = [2, 0], sizes = [1, 256], strides = [1, 1]} : vector<6x256xbf16> to vector<1x256xbf16>
    %182 = vector.extract_strided_slice %177 {offsets = [3, 0], sizes = [1, 256], strides = [1, 1]} : vector<6x256xbf16> to vector<1x256xbf16>
    %183 = arith.maximumf %181, %182 : vector<1x256xbf16>
    %184 = vector.extract_strided_slice %177 {offsets = [4, 0], sizes = [1, 256], strides = [1, 1]} : vector<6x256xbf16> to vector<1x256xbf16>
    %185 = vector.extract_strided_slice %177 {offsets = [5, 0], sizes = [1, 256], strides = [1, 1]} : vector<6x256xbf16> to vector<1x256xbf16>
    %186 = arith.maximumf %184, %185 : vector<1x256xbf16>
    %187 = arith.maximumf %148, %166 : vector<6x256xbf16>
    %188 = vector.extract_strided_slice %187 {offsets = [0, 0], sizes = [1, 256], strides = [1, 1]} : vector<6x256xbf16> to vector<1x256xbf16>
    %189 = vector.extract_strided_slice %187 {offsets = [1, 0], sizes = [1, 256], strides = [1, 1]} : vector<6x256xbf16> to vector<1x256xbf16>
    %190 = arith.maximumf %188, %189 : vector<1x256xbf16>
    %191 = vector.extract_strided_slice %187 {offsets = [2, 0], sizes = [1, 256], strides = [1, 1]} : vector<6x256xbf16> to vector<1x256xbf16>
    %192 = vector.extract_strided_slice %187 {offsets = [3, 0], sizes = [1, 256], strides = [1, 1]} : vector<6x256xbf16> to vector<1x256xbf16>
    %193 = arith.maximumf %191, %192 : vector<1x256xbf16>
    %194 = vector.extract_strided_slice %187 {offsets = [4, 0], sizes = [1, 256], strides = [1, 1]} : vector<6x256xbf16> to vector<1x256xbf16>
    %195 = vector.extract_strided_slice %187 {offsets = [5, 0], sizes = [1, 256], strides = [1, 1]} : vector<6x256xbf16> to vector<1x256xbf16>
    %196 = arith.maximumf %194, %195 : vector<1x256xbf16>
    %197 = tpu.concatenate %170, %173, %176, %180, %183, %186, %190, %193, %196 in 1 : vector<1x256xbf16>, vector<1x256xbf16>, vector<1x256xbf16>, vector<1x256xbf16>, vector<1x256xbf16>, vector<1x256xbf16>, vector<1x256xbf16>, vector<1x256xbf16>, vector<1x256xbf16> -> vector<1x2304xbf16>
    %c0_44 = arith.constant 0 : index
    %c0_45 = arith.constant 0 : index
    %198 = vector.load %arg6[%c0_44, %c0_45] : memref<2304x384xbf16, #tpu.memory_space<vmem>>, vector<2304x384xbf16>
    %cst_46 = arith.constant dense<0.000000e+00> : vector<1x384xf32>
    %199 = tpu.matmul %197, %198, %cst_46 {dimension_numbers = #tpu.dot_dimension_numbers<[1], [0], [0], [1], [0, 0, 1, 1], [], []>} : vector<1x2304xbf16>, vector<2304x384xbf16>, vector<1x384xf32> -> vector<1x384xf32>
    %c0_47 = arith.constant 0 : index
    %c0_48 = arith.constant 0 : index
    %200 = vector.load %arg7[%c0_47, %c0_48] : memref<1x384xf32, #tpu.memory_space<vmem>>, vector<1x384xf32>
    %201 = arith.addf %199, %200 : vector<1x384xf32>
    %cst_49 = arith.constant 0.000000e+00 : f32
    %202 = vector.broadcast %cst_49 : f32 to vector<1x384xf32>
    %203 = arith.maximumf %201, %202 : vector<1x384xf32>
    %204 = arith.truncf %203 : vector<1x384xf32> to vector<1x384xbf16>
    %c0_50 = arith.constant 0 : index
    %c0_51 = arith.constant 0 : index
    %205 = vector.load %arg8[%c0_50, %c0_51] : memref<384x1024xbf16, #tpu.memory_space<vmem>>, vector<384x1024xbf16>
    %cst_52 = arith.constant dense<0.000000e+00> : vector<1x1024xf32>
    %206 = tpu.matmul %204, %205, %cst_52 {dimension_numbers = #tpu.dot_dimension_numbers<[1], [0], [0], [1], [0, 0, 1, 1], [], []>} : vector<1x384xbf16>, vector<384x1024xbf16>, vector<1x1024xf32> -> vector<1x1024xf32>
    %c0_53 = arith.constant 0 : index
    %c0_54 = arith.constant 0 : index
    %207 = vector.load %arg9[%c0_53, %c0_54] : memref<1x1024xf32, #tpu.memory_space<vmem>>, vector<1x1024xf32>
    %208 = arith.addf %206, %207 : vector<1x1024xf32>
    %cst_55 = arith.constant 0.000000e+00 : f32
    %209 = vector.broadcast %cst_55 : f32 to vector<1x1024xf32>
    %210 = arith.maximumf %208, %209 : vector<1x1024xf32>
    %211 = arith.truncf %210 : vector<1x1024xf32> to vector<1x1024xbf16>
    %c0_56 = arith.constant 0 : index
    %c0_57 = arith.constant 0 : index
    %212 = vector.load %arg10[%c0_56, %c0_57] : memref<1024x128xbf16, #tpu.memory_space<vmem>>, vector<1024x128xbf16>
    %cst_58 = arith.constant dense<0.000000e+00> : vector<1x128xf32>
    %213 = tpu.matmul %211, %212, %cst_58 {dimension_numbers = #tpu.dot_dimension_numbers<[1], [0], [0], [1], [0, 0, 1, 1], [], []>} : vector<1x1024xbf16>, vector<1024x128xbf16>, vector<1x128xf32> -> vector<1x128xf32>
    %c0_59 = arith.constant 0 : index
    %c0_60 = arith.constant 0 : index
    %214 = vector.load %arg11[%c0_59, %c0_60] : memref<1x128xf32, #tpu.memory_space<vmem>>, vector<1x128xf32>
    %215 = arith.addf %213, %214 : vector<1x128xf32>
    %cst_61 = arith.constant 0.000000e+00 : f32
    %216 = vector.broadcast %cst_61 : f32 to vector<1x128xf32>
    %217 = arith.maximumf %215, %216 : vector<1x128xf32>
    %218 = arith.truncf %217 : vector<1x128xf32> to vector<1x128xbf16>
    %c0_62 = arith.constant 0 : index
    %c0_63 = arith.constant 0 : index
    %219 = vector.load %arg12[%c0_62, %c0_63] : memref<128x128xbf16, #tpu.memory_space<vmem>>, vector<128x128xbf16>
    %cst_64 = arith.constant dense<0.000000e+00> : vector<1x128xf32>
    %220 = tpu.matmul %218, %219, %cst_64 {dimension_numbers = #tpu.dot_dimension_numbers<[1], [0], [0], [1], [0, 0, 1, 1], [], []>} : vector<1x128xbf16>, vector<128x128xbf16>, vector<1x128xf32> -> vector<1x128xf32>
    %c0_65 = arith.constant 0 : index
    %c0_66 = arith.constant 0 : index
    %221 = vector.load %arg13[%c0_65, %c0_66] : memref<1x128xf32, #tpu.memory_space<vmem>>, vector<1x128xf32>
    %222 = arith.addf %220, %221 : vector<1x128xf32>
    %223 = vector.shape_cast %222 : vector<1x128xf32> to vector<1x128xf32>
    %224 = vector.broadcast %223 : vector<1x128xf32> to vector<8x128xf32>
    %c0_67 = arith.constant 0 : index
    %c0_68 = arith.constant 0 : index
    %c0_69 = arith.constant 0 : index
    %225 = vector.load %arg14[%c0_67, %c0_68, %c0_69] : memref<1x8x128xf32, #tpu.memory_space<vmem>>, vector<1x8x128xf32>
    %226 = vector.shape_cast %225 : vector<1x8x128xf32> to vector<8x128xf32>
    %227 = vector.shape_cast %224 : vector<8x128xf32> to vector<1x8x128xf32>
    tpu.vector_store %arg14[%c0_67, %c0_68, %c0_69], %227 {strides = array<i32>} : memref<1x8x128xf32, #tpu.memory_space<vmem>>, vector<1x8x128xf32>,
    return
  }
  func.func @transform_0(%arg0: i32) -> (i32, i32, i32) {
    %c0_i32 = arith.constant 0 : i32
    %c0_i32_0 = arith.constant 0 : i32
    %c0_i32_1 = arith.constant 0 : i32
    return %arg0, %c0_i32, %c0_i32_0 : i32, i32, i32
  }
  func.func @transform_1(%arg0: i32) -> (i32, i32) {
    %c0_i32 = arith.constant 0 : i32
    %c0_i32_0 = arith.constant 0 : i32
    %c0_i32_1 = arith.constant 0 : i32
    return %c0_i32, %c0_i32_0 : i32, i32
  }
  func.func @transform_2(%arg0: i32) -> (i32, i32) {
    %c0_i32 = arith.constant 0 : i32
    %c0_i32_0 = arith.constant 0 : i32
    %c0_i32_1 = arith.constant 0 : i32
    return %c0_i32, %c0_i32_0 : i32, i32
  }
  func.func @transform_3(%arg0: i32) -> (i32, i32) {
    %c0_i32 = arith.constant 0 : i32
    %c0_i32_0 = arith.constant 0 : i32
    %c0_i32_1 = arith.constant 0 : i32
    return %c0_i32, %c0_i32_0 : i32, i32
  }
  func.func @transform_4(%arg0: i32) -> (i32, i32) {
    %c0_i32 = arith.constant 0 : i32
    %c0_i32_0 = arith.constant 0 : i32
    %c0_i32_1 = arith.constant 0 : i32
    return %c0_i32, %c0_i32_0 : i32, i32
  }
  func.func @transform_5(%arg0: i32) -> (i32, i32) {
    %c0_i32 = arith.constant 0 : i32
    %c0_i32_0 = arith.constant 0 : i32
    %c0_i32_1 = arith.constant 0 : i32
    return %c0_i32, %c0_i32_0 : i32, i32
  }
  func.func @transform_6(%arg0: i32) -> (i32, i32) {
    %c0_i32 = arith.constant 0 : i32
    %c0_i32_0 = arith.constant 0 : i32
    %c0_i32_1 = arith.constant 0 : i32
    return %c0_i32, %c0_i32_0 : i32, i32
  }
  func.func @transform_7(%arg0: i32) -> (i32, i32) {
    %c0_i32 = arith.constant 0 : i32
    %c0_i32_0 = arith.constant 0 : i32
    %c0_i32_1 = arith.constant 0 : i32
    return %c0_i32, %c0_i32_0 : i32, i32
  }
  func.func @transform_8(%arg0: i32) -> (i32, i32) {
    %c0_i32 = arith.constant 0 : i32
    %c0_i32_0 = arith.constant 0 : i32
    %c0_i32_1 = arith.constant 0 : i32
    return %c0_i32, %c0_i32_0 : i32, i32
  }
  func.func @transform_9(%arg0: i32) -> (i32, i32) {
    %c0_i32 = arith.constant 0 : i32
    %c0_i32_0 = arith.constant 0 : i32
    %c0_i32_1 = arith.constant 0 : i32
    return %c0_i32, %c0_i32_0 : i32, i32
  }
  func.func @transform_10(%arg0: i32) -> (i32, i32) {
    %c0_i32 = arith.constant 0 : i32
    %c0_i32_0 = arith.constant 0 : i32
    %c0_i32_1 = arith.constant 0 : i32
    return %c0_i32, %c0_i32_0 : i32, i32
  }
  func.func @transform_11(%arg0: i32) -> (i32, i32) {
    %c0_i32 = arith.constant 0 : i32
    %c0_i32_0 = arith.constant 0 : i32
    %c0_i32_1 = arith.constant 0 : i32
    return %c0_i32, %c0_i32_0 : i32, i32
  }
  func.func @transform_12(%arg0: i32) -> (i32, i32) {
    %c0_i32 = arith.constant 0 : i32
    %c0_i32_0 = arith.constant 0 : i32
    %c0_i32_1 = arith.constant 0 : i32
    return %c0_i32, %c0_i32_0 : i32, i32
  }
  func.func @transform_13(%arg0: i32) -> (i32, i32, i32) {
    %c0_i32 = arith.constant 0 : i32
    %c0_i32_0 = arith.constant 0 : i32
    %c0_i32_1 = arith.constant 0 : i32
    return %arg0, %c0_i32, %c0_i32_0 : i32, i32, i32
  }
}

</mosaic_0001>

<llo_original>
// kernel: siamese_forward.1
$region0: #{siamese_forward.1}
  #allocation0 [shape = 'u32[]', space=smem, size = 0x4, offset = 0x4, fixed_abs, tag = 'smem constant byte address 0x4 - core index']
  #allocation1 [shape = 'u32[144,128]{1,0:T(1,128)}', space=vmem, size = 0x12000, scoped, tag = 'internal scratch']
  %s0 = inlined_call_operand.vmem [shape: bf16[4,289,384], index: 0, kind: input, shape index: {}]
  %s1 = inlined_call_operand.vmem [shape: bf16[384,128], index: 1, kind: input, shape index: {}]
  %s2 = inlined_call_operand.vmem [shape: f32[1,128], index: 2, kind: input, shape index: {}]
  %s3 = inlined_call_operand.vmem [shape: bf16[1152,256], index: 3, kind: input, shape index: {}]
  %s4 = inlined_call_operand.vmem [shape: f32[1,256], index: 4, kind: input, shape index: {}]
  %s5 = inlined_call_operand.vmem [shape: bf16[2304,384], index: 5, kind: input, shape index: {}]
  %s6 = inlined_call_operand.vmem [shape: f32[1,384], index: 6, kind: input, shape index: {}]
  %s7 = inlined_call_operand.vmem [shape: bf16[384,1024], index: 7, kind: input, shape index: {}]
  %s8 = inlined_call_operand.vmem [shape: f32[1,1024], index: 8, kind: input, shape index: {}]
  %s9 = inlined_call_operand.vmem [shape: bf16[1024,128], index: 9, kind: input, shape index: {}]
  %s10 = inlined_call_operand.vmem [shape: f32[1,128], index: 10, kind: input, shape index: {}]
  %s11 = inlined_call_operand.vmem [shape: bf16[128,128], index: 11, kind: input, shape index: {}]
  %s12 = inlined_call_operand.vmem [shape: f32[1,128], index: 12, kind: input, shape index: {}]
  %s13 = inlined_call_operand.vmem [shape: f32[4,8,128], index: 13, kind: output, shape index: {}]
  %s14 = sld [smem:[#allocation0]]
  $region85: #{siamese_forward.1} parent=0
    _
  %s16 = ssub.s32 1, %s14
  %s17 = scalar_select 0, %s16, %s14
  loop: start=0, step=1, limit=6
  $region2: #{siamese_forward.1} parent=0 // loop_pre_header
    _
  $region3: #{siamese_forward.1} parent=0 // loop_header
    %s19 = sphi 0, %s23
    %p20 = scmp.ge.s32.totalorder %s19, 6
    %s29 = sphi 0, %s31
    %s32 = sphi 0, %s29
    %s33 = sphi 0, %s32
    %s49 = sphi 0, %s33
    %s53 = sphi 0, %s53
    %s55 = sphi 0, %s53
    %s56 = sphi 0, %s55
    %s70 = sphi 0, %s56
    %s74 = sphi 0, %s74
    %s76 = sphi 0, %s74
    %s77 = sphi 0, %s76
    %s91 = sphi 0, %s77
    %s95 = sphi 0, %s95
    %s97 = sphi 0, %s95
    %s98 = sphi 0, %s97
    %s112 = sphi 0, %s98
    %s116 = sphi 0, %s116
    %s118 = sphi 0, %s116
    %s119 = sphi 0, %s118
    %s133 = sphi 0, %s119
    %s137 = sphi 0, %s137
    %s139 = sphi 0, %s137
    %s140 = sphi 0, %s139
    %s154 = sphi 0, %s140
    %s158 = sphi 0, %s158
    %s160 = sphi 0, %s158
    %s161 = sphi 0, %s160
    %s175 = sphi 0, %s161
    %s179 = sphi 0, %s179
    %s181 = sphi 0, %s179
    %s182 = sphi 0, %s181
    %s196 = sphi 0, %s182
    %s200 = sphi 0, %s200
    %s202 = sphi 0, %s200
    %s203 = sphi 0, %s202
    %s217 = sphi 0, %s203
    %s221 = sphi 0, %s221
    %s223 = sphi 0, %s221
    %s224 = sphi 0, %s223
    %s238 = sphi 0, %s224
    %s242 = sphi 0, %s242
    %s244 = sphi 0, %s242
    %s245 = sphi 0, %s244
    %s259 = sphi 0, %s245
    %s263 = sphi 0, %s263
    %s265 = sphi 0, %s263
    %s266 = sphi 0, %s265
    %s280 = sphi 0, %s266
    %s284 = sphi 0, %s284
    %s286 = sphi 0, %s284
    %s287 = sphi 0, %s286
    %s301 = sphi 0, %s287
    %s307 = sphi 0, %s309
    %s310 = sphi 0, %s307
    %s311 = sphi 0, %s310
    %s327 = sphi 0, %s311
  $region4: #{siamese_forward.1} parent=0 // loop_header_branch
    %22 = sbr.rel (%p20) target = $region8
  $region5: #{siamese_forward.1} parent=0 // loop_body
    %s24 = ssub.s32 %s19, 1
    %s25 = ssub.s32 %s19, 2
    %s26 = sadd.s32 %s19, 1
    %s27 = ssub.s32 %s19, %s26
    %p28 = scmp.eq.s32.totalorder %s27, 0
    %s30 = sadd.s32 %s29, 1
    %s31 = scalar_select %p28, %s29, %s30
    %p34 = pneg %p28
    %p35 = scmp.eq.s32.totalorder %s19, 3
    %p36 = por %p34, %p35
    %p37 = scmp.ne.s32.totalorder %s29, %s32
    %p38 = scmp.eq.s32.totalorder %s19, 0
    %p39 = por %p37, %p38
    %p40 = scmp.ne.s32.totalorder %s29, %s32
    %p41 = scmp.eq.s32.totalorder %s24, 3
    %p42 = por %p40, %p41
    %p43 = scmp.ne.s32.totalorder %s32, %s33
    %p44 = scmp.eq.s32.totalorder %s24, 0
    %p45 = por %p43, %p44
    %p46 = scmp.ne.s32.totalorder %s32, %s33
    %p47 = scmp.eq.s32.totalorder %s25, 3
    %p48 = por %p46, %p47
    %p50 = scmp.ne.s32.totalorder %s33, %s49
    %p51 = scmp.eq.s32.totalorder %s25, 0
    %p52 = por %p50, %p51
    %s54 = sadd.s32 %s53, 1
    %p57 = scmp.eq.s32.totalorder %s19, 3
    %p58 = scmp.ne.s32.totalorder %s53, %s55
    %p59 = scmp.eq.s32.totalorder %s19, 0
    %p60 = por %p58, %p59
    %p61 = scmp.ne.s32.totalorder %s53, %s55
    %p62 = scmp.eq.s32.totalorder %s24, 3
    %p63 = por %p61, %p62
    %p64 = scmp.ne.s32.totalorder %s55, %s56
    %p65 = scmp.eq.s32.totalorder %s24, 0
    %p66 = por %p64, %p65
    %p67 = scmp.ne.s32.totalorder %s55, %s56
    %p68 = scmp.eq.s32.totalorder %s25, 3
    %p69 = por %p67, %p68
    %p71 = scmp.ne.s32.totalorder %s56, %s70
    %p72 = scmp.eq.s32.totalorder %s25, 0
    %p73 = por %p71, %p72
    %s75 = sadd.s32 %s74, 1
    %p78 = scmp.eq.s32.totalorder %s19, 3
    %p79 = scmp.ne.s32.totalorder %s74, %s76
    %p80 = scmp.eq.s32.totalorder %s19, 0
    %p81 = por %p79, %p80
    %p82 = scmp.ne.s32.totalorder %s74, %s76
    %p83 = scmp.eq.s32.totalorder %s24, 3
    %p84 = por %p82, %p83
    %p85 = scmp.ne.s32.totalorder %s76, %s77
    %p86 = scmp.eq.s32.totalorder %s24, 0
    %p87 = por %p85, %p86
    %p88 = scmp.ne.s32.totalorder %s76, %s77
    %p89 = scmp.eq.s32.totalorder %s25, 3
    %p90 = por %p88, %p89
    %p92 = scmp.ne.s32.totalorder %s77, %s91
    %p93 = scmp.eq.s32.totalorder %s25, 0
    %p94 = por %p92, %p93
    %s96 = sadd.s32 %s95, 1
    %p99 = scmp.eq.s32.totalorder %s19, 3
    %p100 = scmp.ne.s32.totalorder %s95, %s97
    %p101 = scmp.eq.s32.totalorder %s19, 0
    %p102 = por %p100, %p101
    %p103 = scmp.ne.s32.totalorder %s95, %s97
    %p104 = scmp.eq.s32.totalorder %s24, 3
    %p105 = por %p103, %p104
    %p106 = scmp.ne.s32.totalorder %s97, %s98
    %p107 = scmp.eq.s32.totalorder %s24, 0
    %p108 = por %p106, %p107
    %p109 = scmp.ne.s32.totalorder %s97, %s98
    %p110 = scmp.eq.s32.totalorder %s25, 3
    %p111 = por %p109, %p110
    %p113 = scmp.ne.s32.totalorder %s98, %s112
    %p114 = scmp.eq.s32.totalorder %s25, 0
    %p115 = por %p113, %p114
    %s117 = sadd.s32 %s116, 1
    %p120 = scmp.eq.s32.totalorder %s19, 3
    %p121 = scmp.ne.s32.totalorder %s116, %s118
    %p122 = scmp.eq.s32.totalorder %s19, 0
    %p123 = por %p121, %p122
    %p124 = scmp.ne.s32.totalorder %s116, %s118
    %p125 = scmp.eq.s32.totalorder %s24, 3
    %p126 = por %p124, %p125
    %p127 = scmp.ne.s32.totalorder %s118, %s119
    %p128 = scmp.eq.s32.totalorder %s24, 0
    %p129 = por %p127, %p128
    %p130 = scmp.ne.s32.totalorder %s118, %s119
    %p131 = scmp.eq.s32.totalorder %s25, 3
    %p132 = por %p130, %p131
    %p134 = scmp.ne.s32.totalorder %s119, %s133
    %p135 = scmp.eq.s32.totalorder %s25, 0
    %p136 = por %p134, %p135
    %s138 = sadd.s32 %s137, 1
    %p141 = scmp.eq.s32.totalorder %s19, 3
    %p142 = scmp.ne.s32.totalorder %s137, %s139
    %p143 = scmp.eq.s32.totalorder %s19, 0
    %p144 = por %p142, %p143
    %p145 = scmp.ne.s32.totalorder %s137, %s139
    %p146 = scmp.eq.s32.totalorder %s24, 3
    %p147 = por %p145, %p146
    %p148 = scmp.ne.s32.totalorder %s139, %s140
    %p149 = scmp.eq.s32.totalorder %s24, 0
    %p150 = por %p148, %p149
    %p151 = scmp.ne.s32.totalorder %s139, %s140
    %p152 = scmp.eq.s32.totalorder %s25, 3
    %p153 = por %p151, %p152
    %p155 = scmp.ne.s32.totalorder %s140, %s154
    %p156 = scmp.eq.s32.totalorder %s25, 0
    %p157 = por %p155, %p156
    %s159 = sadd.s32 %s158, 1
    %p162 = scmp.eq.s32.totalorder %s19, 3
    %p163 = scmp.ne.s32.totalorder %s158, %s160
    %p164 = scmp.eq.s32.totalorder %s19, 0
    %p165 = por %p163, %p164
    %p166 = scmp.ne.s32.totalorder %s158, %s160
    %p167 = scmp.eq.s32.totalorder %s24, 3
    %p168 = por %p166, %p167
    %p169 = scmp.ne.s32.totalorder %s160, %s161
    %p170 = scmp.eq.s32.totalorder %s24, 0
    %p171 = por %p169, %p170
    %p172 = scmp.ne.s32.totalorder %s160, %s161
    %p173 = scmp.eq.s32.totalorder %s25, 3
    %p174 = por %p172, %p173
    %p176 = scmp.ne.s32.totalorder %s161, %s175
    %p177 = scmp.eq.s32.totalorder %s25, 0
    %p178 = por %p176, %p177
    %s180 = sadd.s32 %s179, 1
    %p183 = scmp.eq.s32.totalorder %s19, 3
    %p184 = scmp.ne.s32.totalorder %s179, %s181
    %p185 = scmp.eq.s32.totalorder %s19, 0
    %p186 = por %p184, %p185
    %p187 = scmp.ne.s32.totalorder %s179, %s181
    %p188 = scmp.eq.s32.totalorder %s24, 3
    %p189 = por %p187, %p188
    %p190 = scmp.ne.s32.totalorder %s181, %s182
    %p191 = scmp.eq.s32.totalorder %s24, 0
    %p192 = por %p190, %p191
    %p193 = scmp.ne.s32.totalorder %s181, %s182
    %p194 = scmp.eq.s32.totalorder %s25, 3
    %p195 = por %p193, %p194
    %p197 = scmp.ne.s32.totalorder %s182, %s196
    %p198 = scmp.eq.s32.totalorder %s25, 0
    %p199 = por %p197, %p198
    %s201 = sadd.s32 %s200, 1
    %p204 = scmp.eq.s32.totalorder %s19, 3
    %p205 = scmp.ne.s32.totalorder %s200, %s202
    %p206 = scmp.eq.s32.totalorder %s19, 0
    %p207 = por %p205, %p206
    %p208 = scmp.ne.s32.totalorder %s200, %s202
    %p209 = scmp.eq.s32.totalorder %s24, 3
    %p210 = por %p208, %p209
    %p211 = scmp.ne.s32.totalorder %s202, %s203
    %p212 = scmp.eq.s32.totalorder %s24, 0
    %p213 = por %p211, %p212
    %p214 = scmp.ne.s32.totalorder %s202, %s203
    %p215 = scmp.eq.s32.totalorder %s25, 3
    %p216 = por %p214, %p215
    %p218 = scmp.ne.s32.totalorder %s203, %s217
    %p219 = scmp.eq.s32.totalorder %s25, 0
    %p220 = por %p218, %p219
    %s222 = sadd.s32 %s221, 1
    %p225 = scmp.eq.s32.totalorder %s19, 3
    %p226 = scmp.ne.s32.totalorder %s221, %s223
    %p227 = scmp.eq.s32.totalorder %s19, 0
    %p228 = por %p226, %p227
    %p229 = scmp.ne.s32.totalorder %s221, %s223
    %p230 = scmp.eq.s32.totalorder %s24, 3
    %p231 = por %p229, %p230
    %p232 = scmp.ne.s32.totalorder %s223, %s224
    %p233 = scmp.eq.s32.totalorder %s24, 0
    %p234 = por %p232, %p233
    %p235 = scmp.ne.s32.totalorder %s223, %s224
    %p236 = scmp.eq.s32.totalorder %s25, 3
    %p237 = por %p235, %p236
    %p239 = scmp.ne.s32.totalorder %s224, %s238
    %p240 = scmp.eq.s32.totalorder %s25, 0
    %p241 = por %p239, %p240
    %s243 = sadd.s32 %s242, 1
    %p246 = scmp.eq.s32.totalorder %s19, 3
    %p247 = scmp.ne.s32.totalorder %s242, %s244
    %p248 = scmp.eq.s32.totalorder %s19, 0
    %p249 = por %p247, %p248
    %p250 = scmp.ne.s32.totalorder %s242, %s244
    %p251 = scmp.eq.s32.totalorder %s24, 3
    %p252 = por %p250, %p251
    %p253 = scmp.ne.s32.totalorder %s244, %s245
    %p254 = scmp.eq.s32.totalorder %s24, 0
    %p255 = por %p253, %p254
    %p256 = scmp.ne.s32.totalorder %s244, %s245
    %p257 = scmp.eq.s32.totalorder %s25, 3
    %p258 = por %p256, %p257
    %p260 = scmp.ne.s32.totalorder %s245, %s259
    %p261 = scmp.eq.s32.totalorder %s25, 0
    %p262 = por %p260, %p261
    %s264 = sadd.s32 %s263, 1
    %p267 = scmp.eq.s32.totalorder %s19, 3
    %p268 = scmp.ne.s32.totalorder %s263, %s265
    %p269 = scmp.eq.s32.totalorder %s19, 0
    %p270 = por %p268, %p269
    %p271 = scmp.ne.s32.totalorder %s263, %s265
    %p272 = scmp.eq.s32.totalorder %s24, 3
    %p273 = por %p271, %p272
    %p274 = scmp.ne.s32.totalorder %s265, %s266
    %p275 = scmp.eq.s32.totalorder %s24, 0
    %p276 = por %p274, %p275
    %p277 = scmp.ne.s32.totalorder %s265, %s266
    %p278 = scmp.eq.s32.totalorder %s25, 3
    %p279 = por %p277, %p278
    %p281 = scmp.ne.s32.totalorder %s266, %s280
    %p282 = scmp.eq.s32.totalorder %s25, 0
    %p283 = por %p281, %p282
    %s285 = sadd.s32 %s284, 1
    %p288 = scmp.eq.s32.totalorder %s19, 3
    %p289 = scmp.ne.s32.totalorder %s284, %s286
    %p290 = scmp.eq.s32.totalorder %s19, 0
    %p291 = por %p289, %p290
    %p292 = scmp.ne.s32.totalorder %s284, %s286
    %p293 = scmp.eq.s32.totalorder %s24, 3
    %p294 = por %p292, %p293
    %p295 = scmp.ne.s32.totalorder %s286, %s287
    %p296 = scmp.eq.s32.totalorder %s24, 0
    %p297 = por %p295, %p296
    %p298 = scmp.ne.s32.totalorder %s286, %s287
    %p299 = scmp.eq.s32.totalorder %s25, 3
    %p300 = por %p298, %p299
    %p302 = scmp.ne.s32.totalorder %s287, %s301
    %p303 = scmp.eq.s32.totalorder %s25, 0
    %p304 = por %p302, %p303
    %s305 = ssub.s32 %s19, %s26
    %p306 = scmp.eq.s32.totalorder %s305, 0
    %s308 = sadd.s32 %s307, 1
    %s309 = scalar_select %p306, %s307, %s308
    %p312 = pneg %p306
    %p313 = scmp.eq.s32.totalorder %s19, 3
    %p314 = por %p312, %p313
    %p315 = scmp.ne.s32.totalorder %s307, %s310
    %p316 = scmp.eq.s32.totalorder %s19, 0
    %p317 = por %p315, %p316
    %p318 = scmp.ne.s32.totalorder %s307, %s310
    %p319 = scmp.eq.s32.totalorder %s24, 3
    %p320 = por %p318, %p319
    %p321 = scmp.ne.s32.totalorder %s310, %s311
    %p322 = scmp.eq.s32.totalorder %s24, 0
    %p323 = por %p321, %p322
    %p324 = scmp.ne.s32.totalorder %s310, %s311
    %p325 = scmp.eq.s32.totalorder %s25, 3
    %p326 = por %p324, %p325
    %p328 = scmp.ne.s32.totalorder %s311, %s327
    %p329 = scmp.eq.s32.totalorder %s25, 0
    %p330 = por %p328, %p329
    %p331 = scmp.le.s32.totalorder 1, %s19
    %p332 = scmp.lt.s32.totalorder %s19, 5
    %p333 = pnand %p331, %p332
    %p334 = pneg %p333
    // Predicated region
    $region9: #{siamese_forward.1} parent=5 // pred_check
      _
    $region10: #{siamese_forward.1} parent=5 // pred_check_branch
      %336 = sbr.rel (%p333) target = $region12
    $region11: #{siamese_forward.1} parent=5 // pred_region
      %s337 = ssub.s32 %s19, 1
      // Predicated region
      $region13: #{siamese_forward.1} parent=11 // pred_check
        %p338 = pneg %p66
      $region14: #{siamese_forward.1} parent=11 // pred_check_branch
        %340 = sbr.rel (%p338) target = $region16
      $region15: #{siamese_forward.1} parent=11 // pred_region
        _
      $region16: #{siamese_forward.1} parent=11 // pred_fallthru
        _
      // Predicated region
      $region17: #{siamese_forward.1} parent=11 // pred_check
        %p341 = pneg %p87
      $region18: #{siamese_forward.1} parent=11 // pred_check_branch
        %343 = sbr.rel (%p341) target = $region20
      $region19: #{siamese_forward.1} parent=11 // pred_region
        _
      $region20: #{siamese_forward.1} parent=11 // pred_fallthru
        _
      // Predicated region
      $region21: #{siamese_forward.1} parent=11 // pred_check
        %p344 = pneg %p108
      $region22: #{siamese_forward.1} parent=11 // pred_check_branch
        %346 = sbr.rel (%p344) target = $region24
      $region23: #{siamese_forward.1} parent=11 // pred_region
        _
      $region24: #{siamese_forward.1} parent=11 // pred_fallthru
        _
      // Predicated region
      $region25: #{siamese_forward.1} parent=11 // pred_check
        %p347 = pneg %p129
      $region26: #{siamese_forward.1} parent=11 // pred_check_branch
        %349 = sbr.rel (%p347) target = $region28
      $region27: #{siamese_forward.1} parent=11 // pred_region
        _
      $region28: #{siamese_forward.1} parent=11 // pred_fallthru
        _
      // Predicated region
      $region29: #{siamese_forward.1} parent=11 // pred_check
        %p350 = pneg %p150
      $region30: #{siamese_forward.1} parent=11 // pred_check_branch
        %352 = sbr.rel (%p350) target = $region32
      $region31: #{siamese_forward.1} parent=11 // pred_region
        _
      $region32: #{siamese_forward.1} parent=11 // pred_fallthru
        _
      // Predicated region
      $region33: #{siamese_forward.1} parent=11 // pred_check
        %p353 = pneg %p171
      $region34: #{siamese_forward.1} parent=11 // pred_check_branch
        %355 = sbr.rel (%p353) target = $region36
      $region35: #{siamese_forward.1} parent=11 // pred_region
        _
      $region36: #{siamese_forward.1} parent=11 // pred_fallthru
        _
      // Predicated region
      $region37: #{siamese_forward.1} parent=11 // pred_check
        %p356 = pneg %p192
      $region38: #{siamese_forward.1} parent=11 // pred_check_branch
        %358 = sbr.rel (%p356) target = $region40
      $region39: #{siamese_forward.1} parent=11 // pred_region
        _
      $region40: #{siamese_forward.1} parent=11 // pred_fallthru
        _
      // Predicated region
      $region41: #{siamese_forward.1} parent=11 // pred_check
        %p359 = pneg %p213
      $region42: #{siamese_forward.1} parent=11 // pred_check_branch
        %361 = sbr.rel (%p359) target = $region44
      $region43: #{siamese_forward.1} parent=11 // pred_region
        _
      $region44: #{siamese_forward.1} parent=11 // pred_fallthru
        _
      // Predicated region
      $region45: #{siamese_forward.1} parent=11 // pred_check
        %p362 = pneg %p234
      $region46: #{siamese_forward.1} parent=11 // pred_check_branch
        %364 = sbr.rel (%p362) target = $region48
      $region47: #{siamese_forward.1} parent=11 // pred_region
        _
      $region48: #{siamese_forward.1} parent=11 // pred_fallthru
        _
      // Predicated region
      $region49: #{siamese_forward.1} parent=11 // pred_check
        %p365 = pneg %p255
      $region50: #{siamese_forward.1} parent=11 // pred_check_branch
        %367 = sbr.rel (%p365) target = $region52
      $region51: #{siamese_forward.1} parent=11 // pred_region
        _
      $region52: #{siamese_forward.1} parent=11 // pred_fallthru
        _
      // Predicated region
      $region53: #{siamese_forward.1} parent=11 // pred_check
        %p368 = pneg %p276
      $region54: #{siamese_forward.1} parent=11 // pred_check_branch
        %370 = sbr.rel (%p368) target = $region56
      $region55: #{siamese_forward.1} parent=11 // pred_region
        _
      $region56: #{siamese_forward.1} parent=11 // pred_fallthru
        _
      // Predicated region
      $region57: #{siamese_forward.1} parent=11 // pred_check
        %p371 = pneg %p297
      $region58: #{siamese_forward.1} parent=11 // pred_check_branch
        %373 = sbr.rel (%p371) target = $region60
      $region59: #{siamese_forward.1} parent=11 // pred_region
        _
      $region60: #{siamese_forward.1} parent=11 // pred_fallthru
        _
    $region12: #{siamese_forward.1} parent=5 // pred_fallthru
      _
    %p374 = scmp.lt.s32.totalorder %s19, 4
    // Predicated region
    $region61: #{siamese_forward.1} parent=5 // pred_check
      %p375 = pneg %p374
    $region62: #{siamese_forward.1} parent=5 // pred_check_branch
      %377 = sbr.rel (%p375) target = $region64
    $region63: #{siamese_forward.1} parent=5 // pred_region
      // Predicated region
      $region65: #{siamese_forward.1} parent=63 // pred_check
        %p378 = pneg %p39
      $region66: #{siamese_forward.1} parent=63 // pred_check_branch
        %380 = sbr.rel (%p378) target = $region68
      $region67: #{siamese_forward.1} parent=63 // pred_region
        %p381 = scmp.lt.s32.totalorder %s19, 3
        %s382 = scalar_select %p381, %s19, 3
        %s383 = smul.addr %s382, 111
        %s384 = smul.addr %s383, 4
        %s385 = scalar_lea.vmem %s0, %s384
      $region68: #{siamese_forward.1} parent=63 // pred_fallthru
        _
    $region64: #{siamese_forward.1} parent=5 // pred_fallthru
      _
    %p386 = scmp.le.s32.totalorder 1, %s19
    %p387 = scmp.lt.s32.totalorder %s19, 5
    %p388 = pnand %p386, %p387
    %p389 = pneg %p388
    // Predicated region
    $region69: #{siamese_forward.1} parent=5 // pred_check
      _
    $region70: #{siamese_forward.1} parent=5 // pred_check_branch
      %391 = sbr.rel (%p388) target = $region72
    $region71: #{siamese_forward.1} parent=5 // pred_region
      %s392 = ssub.s32 %s19, 1
      %p393 = scmp.lt.s32.totalorder %s24, 3
      %s394 = scalar_select %p393, %s24, 3
      %s395 = smul.addr %s394, 111
      %s396 = smul.addr %s395, 4
      %s397 = scalar_lea.vmem %s0, %s396
      %p398 = pneg %p45
      %p399 = pneg %p42
      %p400 = pneg %p66
      %p401 = pneg %p63
      %p402 = pneg %p87
      %p403 = pneg %p84
      %p404 = pneg %p108
      %p405 = pneg %p105
      %p406 = pneg %p129
      %p407 = pneg %p126
      %p408 = pneg %p150
      %p409 = pneg %p147
      %p410 = pneg %p171
      %p411 = pneg %p168
      %p412 = pneg %p192
      %p413 = pneg %p189
      %p414 = pneg %p213
      %p415 = pneg %p210
      %p416 = pneg %p234
      %p417 = pneg %p231
      %p418 = pneg %p255
      %p419 = pneg %p252
      %p420 = pneg %p276
      %p421 = pneg %p273
      %p422 = pneg %p297
      %p423 = pneg %p294
      %p424 = pneg %p323
      %p425 = pneg %p320
      %p426 = scmp.lt.s32.totalorder %s24, 3
      %s427 = scalar_select %p426, %s24, 3
      %s428 = smul.addr %s427, 8
      %s429 = scalar_lea.vmem %s13, %s428
      %p430 = scmp.lt.s32.totalorder %s24, 3
      %s431 = scalar_select %p430, %s24, 3
      %s432 = smul.addr %s431, 111
      %s433 = smul.addr %s432, 4
      %s434 = scalar_lea.vmem %s0, %s433
      %p435 = scmp.lt.s32.totalorder %s24, 3
      %s436 = scalar_select %p435, %s24, 3
      %s437 = smul.addr %s436, 8
      %s438 = scalar_lea.vmem %s13, %s437
      %v440 = vld [vmem:[%s434] sm:$0xff]
      %v441 = vld [vmem:[%s434 + $0x8] sm:$0xf]
      %v442 = vld [vmem:[%s434 + $0xc] sm:$0xff]
      %v443 = vld [vmem:[%s434 + $0x14] sm:$0xf]
      %v444 = vld [vmem:[%s434 + $0x18] sm:$0xff]
      %v445 = vld [vmem:[%s434 + $0x20] sm:$0xf]
      %v446 = vld [vmem:[%s434 + $0x24] sm:$0xff]
      %v447 = vld [vmem:[%s434 + $0x2c] sm:$0xf]
      %v448 = vld [vmem:[%s434 + $0x30] sm:$0xff]
      %v449 = vld [vmem:[%s434 + $0x38] sm:$0xf]
      %v450 = vld [vmem:[%s434 + $0x3c] sm:$0xff]
      %v451 = vld [vmem:[%s434 + $0x44] sm:$0xf]
      %v452 = vld [vmem:[%s434 + $0x48] sm:$0xff]
      %v453 = vld [vmem:[%s434 + $0x50] sm:$0xf]
      %v454 = vld [vmem:[%s434 + $0x54] sm:$0xff]
      %v455 = vld [vmem:[%s434 + $0x5c] sm:$0xf]
      %v456 = vld [vmem:[%s434 + $0x60] sm:$0xff]
      %v457 = vld [vmem:[%s434 + $0x68] sm:$0xf]
      %v458 = vld [vmem:[%s434 + $0x6c] sm:$0xff]
      %v459 = vld [vmem:[%s434 + $0x74] sm:$0xf]
      %v460 = vld [vmem:[%s434 + $0x78] sm:$0xff]
      %v461 = vld [vmem:[%s434 + $0x80] sm:$0xf]
      %v462 = vld [vmem:[%s434 + $0x84] sm:$0xff]
      %v463 = vld [vmem:[%s434 + $0x8c] sm:$0xf]
      %v464 = vld [vmem:[%s434 + $0x90] sm:$0xff]
      %v465 = vld [vmem:[%s434 + $0x98] sm:$0xf]
      %v466 = vld [vmem:[%s434 + $0x9c] sm:$0xff]
      %v467 = vld [vmem:[%s434 + $0xa4] sm:$0xf]
      %v468 = vld [vmem:[%s434 + $0xa8] sm:$0xff]
      %v469 = vld [vmem:[%s434 + $0xb0] sm:$0xf]
      %v470 = vld [vmem:[%s434 + $0xb4] sm:$0xff]
      %v471 = vld [vmem:[%s434 + $0xbc] sm:$0xf]
      %v472 = vld [vmem:[%s434 + $0xc0] sm:$0xff]
      %v473 = vld [vmem:[%s434 + $0xc8] sm:$0xf]
      %v474 = vld [vmem:[%s434 + $0xcc] sm:$0xff]
      %v475 = vld [vmem:[%s434 + $0xd4] sm:$0xf]
      %v476 = vld [vmem:[%s434 + $0xd8] sm:$0xff]
      %v477 = vld [vmem:[%s434 + $0xe0] sm:$0xf]
      %v478 = vld [vmem:[%s434 + $0xe4] sm:$0xff]
      %v479 = vld [vmem:[%s434 + $0xec] sm:$0xf]
      %v480 = vld [vmem:[%s434 + $0xf0] sm:$0xff]
      %v481 = vld [vmem:[%s434 + $0xf8] sm:$0xf]
      %v482 = vld [vmem:[%s434 + $0xfc] sm:$0xff]
      %v483 = vld [vmem:[%s434 + $0x104] sm:$0xf]
      %v484 = vld [vmem:[%s434 + $0x108] sm:$0xff]
      %v485 = vld [vmem:[%s434 + $0x110] sm:$0xf]
      %v486 = vld [vmem:[%s434 + $0x114] sm:$0xff]
      %v487 = vld [vmem:[%s434 + $0x11c] sm:$0xf]
      %v488 = vld [vmem:[%s434 + $0x120] sm:$0xff]
      %v489 = vld [vmem:[%s434 + $0x128] sm:$0xf]
      %v490 = vld [vmem:[%s434 + $0x12c] sm:$0xff]
      %v491 = vld [vmem:[%s434 + $0x134] sm:$0xf]
      %v492 = vld [vmem:[%s434 + $0x138] sm:$0xff]
      %v493 = vld [vmem:[%s434 + $0x140] sm:$0xf]
      %v494 = vld [vmem:[%s434 + $0x144] sm:$0xff]
      %v495 = vld [vmem:[%s434 + $0x14c] sm:$0xf]
      %v496 = vld [vmem:[%s434 + $0x150] sm:$0xff]
      %v497 = vld [vmem:[%s434 + $0x158] sm:$0xf]
      %v498 = vld [vmem:[%s434 + $0x15c] sm:$0xff]
      %v499 = vld [vmem:[%s434 + $0x164] sm:$0xf]
      %v500 = vld [vmem:[%s434 + $0x168] sm:$0xff]
      %v501 = vld [vmem:[%s434 + $0x170] sm:$0xf]
      %v502 = vld [vmem:[%s434 + $0x174] sm:$0xff]
      %v503 = vld [vmem:[%s434 + $0x17c] sm:$0xf]
      %v504 = vld [vmem:[%s434 + $0x180] sm:$0xff]
      %v505 = vld [vmem:[%s434 + $0x188] sm:$0xf]
      %v506 = vld [vmem:[%s434 + $0x18c] sm:$0xff]
      %v507 = vld [vmem:[%s434 + $0x194] sm:$0xf]
      %v508 = vld [vmem:[%s434 + $0x198] sm:$0xff]
      %v509 = vld [vmem:[%s434 + $0x1a0] sm:$0xf]
      %v510 = vld [vmem:[%s434 + $0x1a4] sm:$0xff]
      %v511 = vld [vmem:[%s434 + $0x1ac] sm:$0xf]
      %v512 = vld [vmem:[%s434 + $0x1b0] sm:$0x11]
      %v513 = vld [vmem:[%s434 + $0x1b8] sm:$0x1]
      %v514 = vld [vmem:[%s1] sm:$0xf]
      %v515 = vld [vmem:[%s1 + $0x4] sm:$0xf]
      %v516 = vld [vmem:[%s1 + $0x8] sm:$0xf]
      %v517 = vld [vmem:[%s1 + $0xc] sm:$0xf]
      %v518 = vld [vmem:[%s1 + $0x10] sm:$0xf]
      %v519 = vld [vmem:[%s1 + $0x14] sm:$0xf]
      %v520 = vld [vmem:[%s1 + $0x18] sm:$0xf]
      %v521 = vld [vmem:[%s1 + $0x1c] sm:$0xf]
      %v522 = vld [vmem:[%s1 + $0x20] sm:$0xf]
      %v523 = vld [vmem:[%s1 + $0x24] sm:$0xf]
      %v524 = vld [vmem:[%s1 + $0x28] sm:$0xf]
      %v525 = vld [vmem:[%s1 + $0x2c] sm:$0xf]
      %v526 = vld [vmem:[%s1 + $0x30] sm:$0xf]
      %v527 = vld [vmem:[%s1 + $0x34] sm:$0xf]
      %v528 = vld [vmem:[%s1 + $0x38] sm:$0xf]
      %v529 = vld [vmem:[%s1 + $0x3c] sm:$0xf]
      %v530 = vld [vmem:[%s1 + $0x40] sm:$0xf]
      %v531 = vld [vmem:[%s1 + $0x44] sm:$0xf]
      %v532 = vld [vmem:[%s1 + $0x48] sm:$0xf]
      %v533 = vld [vmem:[%s1 + $0x4c] sm:$0xf]
      %v534 = vld [vmem:[%s1 + $0x50] sm:$0xf]
      %v535 = vld [vmem:[%s1 + $0x54] sm:$0xf]
      %v536 = vld [vmem:[%s1 + $0x58] sm:$0xf]
      %v537 = vld [vmem:[%s1 + $0x5c] sm:$0xf]
      %v538 = vld [vmem:[%s1 + $0x60] sm:$0xf]
      %v539 = vld [vmem:[%s1 + $0x64] sm:$0xf]
      %v540 = vld [vmem:[%s1 + $0x68] sm:$0xf]
      %v541 = vld [vmem:[%s1 + $0x6c] sm:$0xf]
      %v542 = vld [vmem:[%s1 + $0x70] sm:$0xf]
      %v543 = vld [vmem:[%s1 + $0x74] sm:$0xf]
      %v544 = vld [vmem:[%s1 + $0x78] sm:$0xf]
      %v545 = vld [vmem:[%s1 + $0x7c] sm:$0xf]
      %v546 = vld [vmem:[%s1 + $0x80] sm:$0xf]
      %v547 = vld [vmem:[%s1 + $0x84] sm:$0xf]
      %v548 = vld [vmem:[%s1 + $0x88] sm:$0xf]
      %v549 = vld [vmem:[%s1 + $0x8c] sm:$0xf]
      %v550 = vld [vmem:[%s1 + $0x90] sm:$0xf]
      %v551 = vld [vmem:[%s1 + $0x94] sm:$0xf]
      %v552 = vld [vmem:[%s1 + $0x98] sm:$0xf]
      %v553 = vld [vmem:[%s1 + $0x9c] sm:$0xf]
      %v554 = vld [vmem:[%s1 + $0xa0] sm:$0xf]
      %v555 = vld [vmem:[%s1 + $0xa4] sm:$0xf]
      %v556 = vld [vmem:[%s1 + $0xa8] sm:$0xf]
      %v557 = vld [vmem:[%s1 + $0xac] sm:$0xf]
      %v558 = vld [vmem:[%s1 + $0xb0] sm:$0xf]
      %v559 = vld [vmem:[%s1 + $0xb4] sm:$0xf]
      %v560 = vld [vmem:[%s1 + $0xb8] sm:$0xf]
      %v561 = vld [vmem:[%s1 + $0xbc] sm:$0xf]
      %v562 = vld [vmem:[%s2] sm:$0x1]
      %v564 = vlaneseq
      %v565 = vshrl.u32 %v564, 7
      %v566 = vsub.s32 0, %v565
      %v567 = vrot.slane %v562, %v566
      %v643 = vunpack.c.l.b16 %v440
      %v644 = vunpack.c.h.b16 %v440
      %v645 = vunpack.c.l.b16 %v441
      %v646 = vunpack.c.l.b16 %v442
      %v647 = vunpack.c.h.b16 %v442
      %v648 = vunpack.c.l.b16 %v443
      %v649 = vunpack.c.l.b16 %v444
      %v650 = vunpack.c.h.b16 %v444
      %v651 = vunpack.c.l.b16 %v445
      %v652 = vunpack.c.l.b16 %v446
      %v653 = vunpack.c.h.b16 %v446
      %v654 = vunpack.c.l.b16 %v447
      %v655 = vunpack.c.l.b16 %v448
      %v656 = vunpack.c.h.b16 %v448
      %v657 = vunpack.c.l.b16 %v449
      %v658 = vunpack.c.l.b16 %v450
      %v659 = vunpack.c.h.b16 %v450
      %v660 = vunpack.c.l.b16 %v451
      %v661 = vunpack.c.l.b16 %v452
      %v662 = vunpack.c.h.b16 %v452
      %v663 = vunpack.c.l.b16 %v453
      %v664 = vunpack.c.l.b16 %v454
      %v665 = vunpack.c.h.b16 %v454
      %v666 = vunpack.c.l.b16 %v455
      %v667 = vunpack.c.l.b16 %v456
      %v668 = vunpack.c.h.b16 %v456
      %v669 = vunpack.c.l.b16 %v457
      %v670 = vunpack.c.l.b16 %v458
      %v671 = vunpack.c.h.b16 %v458
      %v672 = vunpack.c.l.b16 %v459
      %v673 = vunpack.c.l.b16 %v460
      %v674 = vunpack.c.h.b16 %v460
      %v675 = vunpack.c.l.b16 %v461
      %v676 = vunpack.c.l.b16 %v462
      %v677 = vunpack.c.h.b16 %v462
      %v678 = vunpack.c.l.b16 %v463
      %v679 = vunpack.c.l.b16 %v464
      %v680 = vunpack.c.h.b16 %v464
      %v681 = vunpack.c.l.b16 %v465
      %v682 = vunpack.c.l.b16 %v466
      %v683 = vunpack.c.h.b16 %v466
      %v684 = vunpack.c.l.b16 %v467
      %v685 = vunpack.c.l.b16 %v468
      %v686 = vunpack.c.h.b16 %v468
      %v687 = vunpack.c.l.b16 %v469
      %v688 = vunpack.c.l.b16 %v470
      %v689 = vunpack.c.h.b16 %v470
      %v690 = vunpack.c.l.b16 %v471
      %v691 = vunpack.c.l.b16 %v472
      %v692 = vunpack.c.h.b16 %v472
      %v693 = vunpack.c.l.b16 %v473
      %v694 = vunpack.c.l.b16 %v474
      %v695 = vunpack.c.h.b16 %v474
      %v696 = vunpack.c.l.b16 %v475
      %v697 = vunpack.c.l.b16 %v476
      %v698 = vunpack.c.h.b16 %v476
      %v699 = vunpack.c.l.b16 %v477
      %v700 = vunpack.c.l.b16 %v478
      %v701 = vunpack.c.h.b16 %v478
      %v702 = vunpack.c.l.b16 %v479
      %v703 = vunpack.c.l.b16 %v480
      %v704 = vunpack.c.h.b16 %v480
      %v705 = vunpack.c.l.b16 %v481
      %v706 = vunpack.c.l.b16 %v482
      %v707 = vunpack.c.h.b16 %v482
      %v708 = vunpack.c.l.b16 %v483
      %v709 = vunpack.c.l.b16 %v484
      %v710 = vunpack.c.h.b16 %v484
      %v711 = vunpack.c.l.b16 %v485
      %v712 = vunpack.c.l.b16 %v486
      %v713 = vunpack.c.h.b16 %v486
      %v714 = vunpack.c.l.b16 %v487
      %v715 = vunpack.c.l.b16 %v488
      %v716 = vunpack.c.h.b16 %v488
      %v717 = vunpack.c.l.b16 %v489
      %v718 = vunpack.c.l.b16 %v490
      %v719 = vunpack.c.h.b16 %v490
      %v720 = vunpack.c.l.b16 %v491
      %v721 = vunpack.c.l.b16 %v492
      %v722 = vunpack.c.h.b16 %v492
      %v723 = vunpack.c.l.b16 %v493
      %v724 = vunpack.c.l.b16 %v494
      %v725 = vunpack.c.h.b16 %v494
      %v726 = vunpack.c.l.b16 %v495
      %v727 = vunpack.c.l.b16 %v496
      %v728 = vunpack.c.h.b16 %v496
      %v729 = vunpack.c.l.b16 %v497
      %v730 = vunpack.c.l.b16 %v498
      %v731 = vunpack.c.h.b16 %v498
      %v732 = vunpack.c.l.b16 %v499
      %v733 = vunpack.c.l.b16 %v500
      %v734 = vunpack.c.h.b16 %v500
      %v735 = vunpack.c.l.b16 %v501
      %v736 = vunpack.c.l.b16 %v502
      %v737 = vunpack.c.h.b16 %v502
      %v738 = vunpack.c.l.b16 %v503
      %v739 = vunpack.c.l.b16 %v504
      %v740 = vunpack.c.h.b16 %v504
      %v741 = vunpack.c.l.b16 %v505
      %v742 = vunpack.c.l.b16 %v506
      %v743 = vunpack.c.h.b16 %v506
      %v744 = vunpack.c.l.b16 %v507
      %v745 = vunpack.c.l.b16 %v508
      %v746 = vunpack.c.h.b16 %v508
      %v747 = vunpack.c.l.b16 %v509
      %v748 = vunpack.c.l.b16 %v510
      %v749 = vunpack.c.h.b16 %v510
      %v750 = vunpack.c.l.b16 %v511
      %v751 = vunpack.c.l.b16 %v512
      %v752 = vunpack.c.h.b16 %v512
      %v753 = vunpack.c.l.b16 %v513
      %v754 = vpack.c.b16 %v646, %v643
      %v755 = vpack.c.b16 %v647, %v644
      %v756 = vpack.c.b16 %v648, %v645
      %v757 = vpack.c.b16 %v652, %v649
      %v758 = vpack.c.b16 %v653, %v650
      %v759 = vpack.c.b16 %v654, %v651
      %v760 = vpack.c.b16 %v658, %v655
      %v761 = vpack.c.b16 %v659, %v656
      %v762 = vpack.c.b16 %v660, %v657
      %v763 = vpack.c.b16 %v664, %v661
      %v764 = vpack.c.b16 %v665, %v662
      %v765 = vpack.c.b16 %v666, %v663
      %v766 = vpack.c.b16 %v670, %v667
      %v767 = vpack.c.b16 %v671, %v668
      %v768 = vpack.c.b16 %v672, %v669
      %v769 = vpack.c.b16 %v676, %v673
      %v770 = vpack.c.b16 %v677, %v674
      %v771 = vpack.c.b16 %v678, %v675
      %v772 = vpack.c.b16 %v682, %v679
      %v773 = vpack.c.b16 %v683, %v680
      %v774 = vpack.c.b16 %v684, %v681
      %v775 = vpack.c.b16 %v688, %v685
      %v776 = vpack.c.b16 %v689, %v686
      %v777 = vpack.c.b16 %v690, %v687
      %v778 = vpack.c.b16 %v694, %v691
      %v779 = vpack.c.b16 %v695, %v692
      %v780 = vpack.c.b16 %v696, %v693
      %v781 = vpack.c.b16 %v700, %v697
      %v782 = vpack.c.b16 %v701, %v698
      %v783 = vpack.c.b16 %v702, %v699
      %v784 = vpack.c.b16 %v706, %v703
      %v785 = vpack.c.b16 %v707, %v704
      %v786 = vpack.c.b16 %v708, %v705
      %v787 = vpack.c.b16 %v712, %v709
      %v788 = vpack.c.b16 %v713, %v710
      %v789 = vpack.c.b16 %v714, %v711
      %v790 = vpack.c.b16 %v718, %v715
      %v791 = vpack.c.b16 %v719, %v716
      %v792 = vpack.c.b16 %v720, %v717
      %v793 = vpack.c.b16 %v724, %v721
      %v794 = vpack.c.b16 %v725, %v722
      %v795 = vpack.c.b16 %v726, %v723
      %v796 = vpack.c.b16 %v730, %v727
      %v797 = vpack.c.b16 %v731, %v728
      %v798 = vpack.c.b16 %v732, %v729
      %v799 = vpack.c.b16 %v736, %v733
      %v800 = vpack.c.b16 %v737, %v734
      %v801 = vpack.c.b16 %v738, %v735
      %v802 = vpack.c.b16 %v742, %v739
      %v803 = vpack.c.b16 %v743, %v740
      %v804 = vpack.c.b16 %v744, %v741
      %v805 = vpack.c.b16 %v748, %v745
      %v806 = vpack.c.b16 %v749, %v746
      %v807 = vpack.c.b16 %v750, %v747
      %v808 = vpack.c.b16 %v751, %v751
      %v809 = vpack.c.b16 %v752, %v752
      %v810 = vpack.c.b16 %v753, %v753
      %v916 = vunpack.c.l.b16 %v514
      %v917 = vunpack.c.l.b16 %v515
      %v918 = vunpack.c.l.b16 %v516
      %v919 = vunpack.c.l.b16 %v517
      %v920 = vunpack.c.l.b16 %v518
      %v921 = vunpack.c.l.b16 %v519
      %v922 = vunpack.c.l.b16 %v520
      %v923 = vunpack.c.l.b16 %v521
      %v924 = vunpack.c.l.b16 %v522
      %v925 = vunpack.c.l.b16 %v523
      %v926 = vunpack.c.l.b16 %v524
      %v927 = vunpack.c.l.b16 %v525
      %v928 = vunpack.c.l.b16 %v526
      %v929 = vunpack.c.l.b16 %v527
      %v930 = vunpack.c.l.b16 %v528
      %v931 = vunpack.c.l.b16 %v529
      %v932 = vunpack.c.l.b16 %v530
      %v933 = vunpack.c.l.b16 %v531
      %v934 = vunpack.c.l.b16 %v532
      %v935 = vunpack.c.l.b16 %v533
      %v936 = vunpack.c.l.b16 %v534
      %v937 = vunpack.c.l.b16 %v535
      %v938 = vunpack.c.l.b16 %v536
      %v939 = vunpack.c.l.b16 %v537
      %v940 = vunpack.c.l.b16 %v538
      %v941 = vunpack.c.l.b16 %v539
      %v942 = vunpack.c.l.b16 %v540
      %v943 = vunpack.c.l.b16 %v541
      %v944 = vunpack.c.l.b16 %v542
      %v945 = vunpack.c.l.b16 %v543
      %v946 = vunpack.c.l.b16 %v544
      %v947 = vunpack.c.l.b16 %v545
      %v948 = vunpack.c.l.b16 %v546
      %v949 = vunpack.c.l.b16 %v547
      %v950 = vunpack.c.l.b16 %v548
      %v951 = vunpack.c.l.b16 %v549
      %v952 = vunpack.c.l.b16 %v550
      %v953 = vunpack.c.l.b16 %v551
      %v954 = vunpack.c.l.b16 %v552
      %v955 = vunpack.c.l.b16 %v553
      %v956 = vunpack.c.l.b16 %v554
      %v957 = vunpack.c.l.b16 %v555
      %v958 = vunpack.c.l.b16 %v556
      %v959 = vunpack.c.l.b16 %v557
      %v960 = vunpack.c.l.b16 %v558
      %v961 = vunpack.c.l.b16 %v559
      %v962 = vunpack.c.l.b16 %v560
      %v963 = vunpack.c.l.b16 %v561
      %v964 = vpack.c.b16 %v917, %v916
      %v965 = vpack.c.b16 %v919, %v918
      %v966 = vpack.c.b16 %v921, %v920
      %v967 = vpack.c.b16 %v923, %v922
      %v968 = vpack.c.b16 %v925, %v924
      %v969 = vpack.c.b16 %v927, %v926
      %v970 = vpack.c.b16 %v929, %v928
      %v971 = vpack.c.b16 %v931, %v930
      %v972 = vpack.c.b16 %v933, %v932
      %v973 = vpack.c.b16 %v935, %v934
      %v974 = vpack.c.b16 %v937, %v936
      %v975 = vpack.c.b16 %v939, %v938
      %v976 = vpack.c.b16 %v941, %v940
      %v977 = vpack.c.b16 %v943, %v942
      %v978 = vpack.c.b16 %v945, %v944
      %v979 = vpack.c.b16 %v947, %v946
      %v980 = vpack.c.b16 %v949, %v948
      %v981 = vpack.c.b16 %v951, %v950
      %v982 = vpack.c.b16 %v953, %v952
      %v983 = vpack.c.b16 %v955, %v954
      %v984 = vpack.c.b16 %v957, %v956
      %v985 = vpack.c.b16 %v959, %v958
      %v986 = vpack.c.b16 %v961, %v960
      %v987 = vpack.c.b16 %v963, %v962
      %1012 = vmatprep.subr.bf16.mxu0 0
      %1013 = vmatpush1.bf16.msra.mxu0 %v971
      %1014 = vmatprep.subr.bf16.mxu0 0
      %1015 = vmatpush1.bf16.msra.mxu0 %v970
      %1016 = vmatprep.subr.bf16.mxu0 0
      %1017 = vmatpush1.bf16.msra.mxu0 %v969
      %1018 = vmatprep.subr.bf16.mxu0 0
      %1019 = vmatpush1.bf16.msra.mxu0 %v968
      %1020 = vmatprep.subr.bf16.mxu0 0
      %1021 = vmatpush1.bf16.msra.mxu0 %v967
      %1022 = vmatprep.subr.bf16.mxu0 0
      %1023 = vmatpush1.bf16.msra.mxu0 %v966
      %1024 = vmatprep.subr.bf16.mxu0 0
      %1025 = vmatpush1.bf16.msra.mxu0 %v965
      %1026 = vmatprep.subr.bf16.mxu0 0
      %1027 = vmatpush1.bf16.msra.mxu0 %v964
      %1028 = vmatprep.subr.bf16.mxu0 0
      %1029 = vmatpush2.bf16.msra.mxu0 %v979
      %1030 = vmatprep.subr.bf16.mxu0 0
      %1031 = vmatpush2.bf16.msra.mxu0 %v978
      %1032 = vmatprep.subr.bf16.mxu0 0
      %1033 = vmatpush2.bf16.msra.mxu0 %v977
      %1034 = vmatprep.subr.bf16.mxu0 0
      %1035 = vmatpush2.bf16.msra.mxu0 %v976
      %1036 = vmatprep.subr.bf16.mxu0 0
      %1037 = vmatpush2.bf16.msra.mxu0 %v975
      %1038 = vmatprep.subr.bf16.mxu0 0
      %1039 = vmatpush2.bf16.msra.mxu0 %v974
      %1040 = vmatprep.subr.bf16.mxu0 0
      %1041 = vmatpush2.bf16.msra.mxu0 %v973
      %1042 = vmatprep.subr.bf16.mxu0 0
      %1043 = vmatpush2.bf16.msra.mxu0 %v972
      %1044 = vmatprep.mubr.bf16.mxu0 %v755
      %1045 = vmatmul.mubr.bf16.gmra.mxu0 %v754
      %v1046 = vpop.f32.mrf.mxu0
      %v1047 = vadd.f32 %v567, %v1046
      %v1048 = vpop.f32.mrf.mxu0
      %v1049 = vpop.f32.mrf.mxu0
      %v1050 = vadd.f32 %v567, %v1049
      %v1051 = vpop.f32.mrf.mxu0
      %1052 = vmatprep.mubr.bf16.mxu0 %v758
      %1053 = vmatmul.mubr.bf16.gmra.mxu0 %v757
      %v1054 = vpop.f32.mrf.mxu0
      %v1055 = vadd.f32 %v567, %v1054
      %v1056 = vpop.f32.mrf.mxu0
      %v1057 = vpop.f32.mrf.mxu0
      %v1058 = vadd.f32 %v567, %v1057
      %v1059 = vpop.f32.mrf.mxu0
      %1060 = vmatprep.mubr.bf16.mxu0 %v761
      %1061 = vmatmul.mubr.bf16.gmra.mxu0 %v760
      %v1062 = vpop.f32.mrf.mxu0
      %v1063 = vadd.f32 %v567, %v1062
      %v1064 = vpop.f32.mrf.mxu0
      %v1065 = vpop.f32.mrf.mxu0
      %v1066 = vadd.f32 %v567, %v1065
      %v1067 = vpop.f32.mrf.mxu0
      %1068 = vmatprep.mubr.bf16.mxu0 %v764
      %1069 = vmatmul.mubr.bf16.gmra.mxu0 %v763
      %v1070 = vpop.f32.mrf.mxu0
      %v1071 = vadd.f32 %v567, %v1070
      %v1072 = vpop.f32.mrf.mxu0
      %v1073 = vpop.f32.mrf.mxu0
      %v1074 = vadd.f32 %v567, %v1073
      %v1075 = vpop.f32.mrf.mxu0
      %1076 = vmatprep.mubr.bf16.mxu0 %v767
      %1077 = vmatmul.mubr.bf16.gmra.mxu0 %v766
      %v1078 = vpop.f32.mrf.mxu0
      %v1079 = vadd.f32 %v567, %v1078
      %v1080 = vpop.f32.mrf.mxu0
      %v1081 = vpop.f32.mrf.mxu0
      %v1082 = vadd.f32 %v567, %v1081
      %v1083 = vpop.f32.mrf.mxu0
      %1084 = vmatprep.mubr.bf16.mxu0 %v770
      %1085 = vmatmul.mubr.bf16.gmra.mxu0 %v769
      %v1086 = vpop.f32.mrf.mxu0
      %v1087 = vadd.f32 %v567, %v1086
      %v1088 = vpop.f32.mrf.mxu0
      %v1089 = vpop.f32.mrf.mxu0
      %v1090 = vadd.f32 %v567, %v1089
      %v1091 = vpop.f32.mrf.mxu0
      %1092 = vmatprep.mubr.bf16.mxu0 %v773
      %1093 = vmatmul.mubr.bf16.gmra.mxu0 %v772
      %v1094 = vpop.f32.mrf.mxu0
      %v1095 = vadd.f32 %v567, %v1094
      %v1096 = vpop.f32.mrf.mxu0
      %v1097 = vpop.f32.mrf.mxu0
      %v1098 = vadd.f32 %v567, %v1097
      %v1099 = vpop.f32.mrf.mxu0
      %1100 = vmatprep.mubr.bf16.mxu0 %v776
      %1101 = vmatmul.mubr.bf16.gmra.mxu0 %v775
      %v1102 = vpop.f32.mrf.mxu0
      %v1103 = vadd.f32 %v567, %v1102
      %v1104 = vpop.f32.mrf.mxu0
      %v1105 = vpop.f32.mrf.mxu0
      %v1106 = vadd.f32 %v567, %v1105
      %v1107 = vpop.f32.mrf.mxu0
      %1108 = vmatprep.mubr.bf16.mxu0 %v779
      %1109 = vmatmul.mubr.bf16.gmra.mxu0 %v778
      %v1110 = vpop.f32.mrf.mxu0
      %v1111 = vadd.f32 %v567, %v1110
      %v1112 = vpop.f32.mrf.mxu0
      %v1113 = vpop.f32.mrf.mxu0
      %v1114 = vadd.f32 %v567, %v1113
      %v1115 = vpop.f32.mrf.mxu0
      %1116 = vmatprep.mubr.bf16.mxu0 %v782
      %1117 = vmatmul.mubr.bf16.gmra.mxu0 %v781
      %v1118 = vpop.f32.mrf.mxu0
      %v1119 = vadd.f32 %v567, %v1118
      %v1120 = vpop.f32.mrf.mxu0
      %v1121 = vpop.f32.mrf.mxu0
      %v1122 = vadd.f32 %v567, %v1121
      %v1123 = vpop.f32.mrf.mxu0
      %1124 = vmatprep.mubr.bf16.mxu0 %v785
      %1125 = vmatmul.mubr.bf16.gmra.mxu0 %v784
      %v1126 = vpop.f32.mrf.mxu0
      %v1127 = vadd.f32 %v567, %v1126
      %v1128 = vpop.f32.mrf.mxu0
      %v1129 = vpop.f32.mrf.mxu0
      %v1130 = vadd.f32 %v567, %v1129
      %v1131 = vpop.f32.mrf.mxu0
      %1132 = vmatprep.mubr.bf16.mxu0 %v788
      %1133 = vmatmul.mubr.bf16.gmra.mxu0 %v787
      %v1134 = vpop.f32.mrf.mxu0
      %v1135 = vadd.f32 %v567, %v1134
      %v1136 = vpop.f32.mrf.mxu0
      %v1137 = vpop.f32.mrf.mxu0
      %v1138 = vadd.f32 %v567, %v1137
      %v1139 = vpop.f32.mrf.mxu0
      %1140 = vmatprep.mubr.bf16.mxu0 %v791
      %1141 = vmatmul.mubr.bf16.gmra.mxu0 %v790
      %v1142 = vpop.f32.mrf.mxu0
      %v1143 = vadd.f32 %v567, %v1142
      %v1144 = vpop.f32.mrf.mxu0
      %v1145 = vpop.f32.mrf.mxu0
      %v1146 = vadd.f32 %v567, %v1145
      %v1147 = vpop.f32.mrf.mxu0
      %1148 = vmatprep.mubr.bf16.mxu0 %v794
      %1149 = vmatmul.mubr.bf16.gmra.mxu0 %v793
      %v1150 = vpop.f32.mrf.mxu0
      %v1151 = vadd.f32 %v567, %v1150
      %v1152 = vpop.f32.mrf.mxu0
      %v1153 = vpop.f32.mrf.mxu0
      %v1154 = vadd.f32 %v567, %v1153
      %v1155 = vpop.f32.mrf.mxu0
      %1156 = vmatprep.mubr.bf16.mxu0 %v797
      %1157 = vmatmul.mubr.bf16.gmra.mxu0 %v796
      %v1158 = vpop.f32.mrf.mxu0
      %v1159 = vadd.f32 %v567, %v1158
      %v1160 = vpop.f32.mrf.mxu0
      %v1161 = vpop.f32.mrf.mxu0
      %v1162 = vadd.f32 %v567, %v1161
      %v1163 = vpop.f32.mrf.mxu0
      %1164 = vmatprep.mubr.bf16.mxu0 %v800
      %1165 = vmatmul.mubr.bf16.gmra.mxu0 %v799
      %v1166 = vpop.f32.mrf.mxu0
      %v1167 = vadd.f32 %v567, %v1166
      %v1168 = vpop.f32.mrf.mxu0
      %v1169 = vpop.f32.mrf.mxu0
      %v1170 = vadd.f32 %v567, %v1169
      %v1171 = vpop.f32.mrf.mxu0
      %1172 = vmatprep.mubr.bf16.mxu0 %v803
      %1173 = vmatmul.mubr.bf16.gmra.mxu0 %v802
      %v1174 = vpop.f32.mrf.mxu0
      %v1175 = vadd.f32 %v567, %v1174
      %v1176 = vpop.f32.mrf.mxu0
      %v1177 = vpop.f32.mrf.mxu0
      %v1178 = vadd.f32 %v567, %v1177
      %v1179 = vpop.f32.mrf.mxu0
      %1180 = vmatprep.mubr.bf16.mxu0 %v806
      %1181 = vmatmul.mubr.bf16.gmra.mxu0 %v805
      %v1182 = vpop.f32.mrf.mxu0
      %v1183 = vadd.f32 %v567, %v1182
      %v1184 = vpop.f32.mrf.mxu0
      %v1185 = vpop.f32.mrf.mxu0
      %v1186 = vadd.f32 %v567, %v1185
      %v1187 = vpop.f32.mrf.mxu0
      %1188 = vmatprep.mubr.bf16.mxu0 %v809
      %1189 = vmatmul.mubr.bf16.gmra.mxu0 %v808
      %v1190 = vpop.f32.mrf.mxu0
      %v1191 = vadd.f32 %v567, %v1190
      %v1192 = vpop.f32.mrf.mxu0
      %v1193 = vpop.f32.mrf.mxu0
      %v1194 = vpop.f32.mrf.mxu0
      %1195 = vdwg.mxu0
      %1196 = vmatprep.subr.bf16.mxu0 0
      %1197 = vmatpush1.bf16.msra.mxu0 %v987
      %1198 = vmatprep.subr.bf16.mxu0 0
      %1199 = vmatpush1.bf16.msra.mxu0 %v986
      %1200 = vmatprep.subr.bf16.mxu0 0
      %1201 = vmatpush1.bf16.msra.mxu0 %v985
      %1202 = vmatprep.subr.bf16.mxu0 0
      %1203 = vmatpush1.bf16.msra.mxu0 %v984
      %1204 = vmatprep.subr.bf16.mxu0 0
      %1205 = vmatpush1.bf16.msra.mxu0 %v983
      %1206 = vmatprep.subr.bf16.mxu0 0
      %1207 = vmatpush1.bf16.msra.mxu0 %v982
      %1208 = vmatprep.subr.bf16.mxu0 0
      %1209 = vmatpush1.bf16.msra.mxu0 %v981
      %1210 = vmatprep.subr.bf16.mxu0 0
      %1211 = vmatpush1.bf16.msra.mxu0 %v980
      %1212 = vmatprep.subr.bf16.mxu0 0
      %1213 = vmatpush2.bf16.msra.mxu0 0
      %1214 = vmatprep.subr.bf16.mxu0 0
      %1215 = vmatpush2.bf16.msra.mxu0 0
      %1216 = vmatprep.subr.bf16.mxu0 0
      %1217 = vmatpush2.bf16.msra.mxu0 0
      %1218 = vmatprep.subr.bf16.mxu0 0
      %1219 = vmatpush2.bf16.msra.mxu0 0
      %1220 = vmatprep.subr.bf16.mxu0 0
      %1221 = vmatpush2.bf16.msra.mxu0 0
      %1222 = vmatprep.subr.bf16.mxu0 0
      %1223 = vmatpush2.bf16.msra.mxu0 0
      %1224 = vmatprep.subr.bf16.mxu0 0
      %1225 = vmatpush2.bf16.msra.mxu0 0
      %1226 = vmatprep.subr.bf16.mxu0 0
      %1227 = vmatpush2.bf16.msra.mxu0 0
      %1228 = vmatprep.mubr.bf16.mxu0 0
      %1229 = vmatmul.mubr.bf16.gmra.mxu0 %v756
      %v1230 = vpop.f32.mrf.mxu0
      %v1231 = vadd.f32 %v1047, %v1230
      %v1232 = vpop.f32.mrf.mxu0
      %v1233 = vpop.f32.mrf.mxu0
      %v1234 = vadd.f32 %v1050, %v1233
      %v1235 = vpop.f32.mrf.mxu0
      %1236 = vmatprep.mubr.bf16.mxu0 0
      %1237 = vmatmul.mubr.bf16.gmra.mxu0 %v759
      %v1238 = vpop.f32.mrf.mxu0
      %v1239 = vadd.f32 %v1055, %v1238
      %v1240 = vpop.f32.mrf.mxu0
      %v1241 = vpop.f32.mrf.mxu0
      %v1242 = vadd.f32 %v1058, %v1241
      %v1243 = vpop.f32.mrf.mxu0
      %1244 = vmatprep.mubr.bf16.mxu0 0
      %1245 = vmatmul.mubr.bf16.gmra.mxu0 %v762
      %v1246 = vpop.f32.mrf.mxu0
      %v1247 = vadd.f32 %v1063, %v1246
      %v1248 = vpop.f32.mrf.mxu0
      %v1249 = vpop.f32.mrf.mxu0
      %v1250 = vadd.f32 %v1066, %v1249
      %v1251 = vpop.f32.mrf.mxu0
      %1252 = vmatprep.mubr.bf16.mxu0 0
      %1253 = vmatmul.mubr.bf16.gmra.mxu0 %v765
      %v1254 = vpop.f32.mrf.mxu0
      %v1255 = vadd.f32 %v1071, %v1254
      %v1256 = vpop.f32.mrf.mxu0
      %v1257 = vpop.f32.mrf.mxu0
      %v1258 = vadd.f32 %v1074, %v1257
      %v1259 = vpop.f32.mrf.mxu0
      %1260 = vmatprep.mubr.bf16.mxu0 0
      %1261 = vmatmul.mubr.bf16.gmra.mxu0 %v768
      %v1262 = vpop.f32.mrf.mxu0
      %v1263 = vadd.f32 %v1079, %v1262
      %v1264 = vpop.f32.mrf.mxu0
      %v1265 = vpop.f32.mrf.mxu0
      %v1266 = vadd.f32 %v1082, %v1265
      %v1267 = vpop.f32.mrf.mxu0
      %1268 = vmatprep.mubr.bf16.mxu0 0
      %1269 = vmatmul.mubr.bf16.gmra.mxu0 %v771
      %v1270 = vpop.f32.mrf.mxu0
      %v1271 = vadd.f32 %v1087, %v1270
      %v1272 = vpop.f32.mrf.mxu0
      %v1273 = vpop.f32.mrf.mxu0
      %v1274 = vadd.f32 %v1090, %v1273
      %v1275 = vpop.f32.mrf.mxu0
      %1276 = vmatprep.mubr.bf16.mxu0 0
      %1277 = vmatmul.mubr.bf16.gmra.mxu0 %v774
      %v1278 = vpop.f32.mrf.mxu0
      %v1279 = vadd.f32 %v1095, %v1278
      %v1280 = vpop.f32.mrf.mxu0
      %v1281 = vpop.f32.mrf.mxu0
      %v1282 = vadd.f32 %v1098, %v1281
      %v1283 = vpop.f32.mrf.mxu0
      %1284 = vmatprep.mubr.bf16.mxu0 0
      %1285 = vmatmul.mubr.bf16.gmra.mxu0 %v777
      %v1286 = vpop.f32.mrf.mxu0
      %v1287 = vadd.f32 %v1103, %v1286
      %v1288 = vpop.f32.mrf.mxu0
      %v1289 = vpop.f32.mrf.mxu0
      %v1290 = vadd.f32 %v1106, %v1289
      %v1291 = vpop.f32.mrf.mxu0
      %1292 = vmatprep.mubr.bf16.mxu0 0
      %1293 = vmatmul.mubr.bf16.gmra.mxu0 %v780
      %v1294 = vpop.f32.mrf.mxu0
      %v1295 = vadd.f32 %v1111, %v1294
      %v1296 = vpop.f32.mrf.mxu0
      %v1297 = vpop.f32.mrf.mxu0
      %v1298 = vadd.f32 %v1114, %v1297
      %v1299 = vpop.f32.mrf.mxu0
      %1300 = vmatprep.mubr.bf16.mxu0 0
      %1301 = vmatmul.mubr.bf16.gmra.mxu0 %v783
      %v1302 = vpop.f32.mrf.mxu0
      %v1303 = vadd.f32 %v1119, %v1302
      %v1304 = vpop.f32.mrf.mxu0
      %v1305 = vpop.f32.mrf.mxu0
      %v1306 = vadd.f32 %v1122, %v1305
      %v1307 = vpop.f32.mrf.mxu0
      %1308 = vmatprep.mubr.bf16.mxu0 0
      %1309 = vmatmul.mubr.bf16.gmra.mxu0 %v786
      %v1310 = vpop.f32.mrf.mxu0
      %v1311 = vadd.f32 %v1127, %v1310
      %v1312 = vpop.f32.mrf.mxu0
      %v1313 = vpop.f32.mrf.mxu0
      %v1314 = vadd.f32 %v1130, %v1313
      %v1315 = vpop.f32.mrf.mxu0
      %1316 = vmatprep.mubr.bf16.mxu0 0
      %1317 = vmatmul.mubr.bf16.gmra.mxu0 %v789
      %v1318 = vpop.f32.mrf.mxu0
      %v1319 = vadd.f32 %v1135, %v1318
      %v1320 = vpop.f32.mrf.mxu0
      %v1321 = vpop.f32.mrf.mxu0
      %v1322 = vadd.f32 %v1138, %v1321
      %v1323 = vpop.f32.mrf.mxu0
      %1324 = vmatprep.mubr.bf16.mxu0 0
      %1325 = vmatmul.mubr.bf16.gmra.mxu0 %v792
      %v1326 = vpop.f32.mrf.mxu0
      %v1327 = vadd.f32 %v1143, %v1326
      %v1328 = vpop.f32.mrf.mxu0
      %v1329 = vpop.f32.mrf.mxu0
      %v1330 = vadd.f32 %v1146, %v1329
      %v1331 = vpop.f32.mrf.mxu0
      %1332 = vmatprep.mubr.bf16.mxu0 0
      %1333 = vmatmul.mubr.bf16.gmra.mxu0 %v795
      %v1334 = vpop.f32.mrf.mxu0
      %v1335 = vadd.f32 %v1151, %v1334
      %v1336 = vpop.f32.mrf.mxu0
      %v1337 = vpop.f32.mrf.mxu0
      %v1338 = vadd.f32 %v1154, %v1337
      %v1339 = vpop.f32.mrf.mxu0
      %1340 = vmatprep.mubr.bf16.mxu0 0
      %1341 = vmatmul.mubr.bf16.gmra.mxu0 %v798
      %v1342 = vpop.f32.mrf.mxu0
      %v1343 = vadd.f32 %v1159, %v1342
      %v1344 = vpop.f32.mrf.mxu0
      %v1345 = vpop.f32.mrf.mxu0
      %v1346 = vadd.f32 %v1162, %v1345
      %v1347 = vpop.f32.mrf.mxu0
      %1348 = vmatprep.mubr.bf16.mxu0 0
      %1349 = vmatmul.mubr.bf16.gmra.mxu0 %v801
      %v1350 = vpop.f32.mrf.mxu0
      %v1351 = vadd.f32 %v1167, %v1350
      %v1352 = vpop.f32.mrf.mxu0
      %v1353 = vpop.f32.mrf.mxu0
      %v1354 = vadd.f32 %v1170, %v1353
      %v1355 = vpop.f32.mrf.mxu0
      %1356 = vmatprep.mubr.bf16.mxu0 0
      %1357 = vmatmul.mubr.bf16.gmra.mxu0 %v804
      %v1358 = vpop.f32.mrf.mxu0
      %v1359 = vadd.f32 %v1175, %v1358
      %v1360 = vpop.f32.mrf.mxu0
      %v1361 = vpop.f32.mrf.mxu0
      %v1362 = vadd.f32 %v1178, %v1361
      %v1363 = vpop.f32.mrf.mxu0
      %1364 = vmatprep.mubr.bf16.mxu0 0
      %1365 = vmatmul.mubr.bf16.gmra.mxu0 %v807
      %v1366 = vpop.f32.mrf.mxu0
      %v1367 = vadd.f32 %v1183, %v1366
      %v1368 = vpop.f32.mrf.mxu0
      %v1369 = vpop.f32.mrf.mxu0
      %v1370 = vadd.f32 %v1186, %v1369
      %v1371 = vpop.f32.mrf.mxu0
      %1372 = vmatprep.mubr.bf16.mxu0 0
      %1373 = vmatmul.mubr.bf16.gmra.mxu0 %v810
      %v1374 = vpop.f32.mrf.mxu0
      %v1375 = vadd.f32 %v1191, %v1374
      %v1376 = vpop.f32.mrf.mxu0
      %v1377 = vpop.f32.mrf.mxu0
      %v1378 = vpop.f32.mrf.mxu0
      %1379 = vdwg.mxu0
      %v1380 = vmax.f32 %v1231, 0.0
      %v1381 = vmax.f32 %v1234, 0.0
      %v1382 = vmax.f32 %v1239, 0.0
      %v1383 = vmax.f32 %v1242, 0.0
      %v1384 = vmax.f32 %v1247, 0.0
      %v1385 = vmax.f32 %v1250, 0.0
      %v1386 = vmax.f32 %v1255, 0.0
      %v1387 = vmax.f32 %v1258, 0.0
      %v1388 = vmax.f32 %v1263, 0.0
      %v1389 = vmax.f32 %v1266, 0.0
      %v1390 = vmax.f32 %v1271, 0.0
      %v1391 = vmax.f32 %v1274, 0.0
      %v1392 = vmax.f32 %v1279, 0.0
      %v1393 = vmax.f32 %v1282, 0.0
      %v1394 = vmax.f32 %v1287, 0.0
      %v1395 = vmax.f32 %v1290, 0.0
      %v1396 = vmax.f32 %v1295, 0.0
      %v1397 = vmax.f32 %v1298, 0.0
      %v1398 = vmax.f32 %v1303, 0.0
      %v1399 = vmax.f32 %v1306, 0.0
      %v1400 = vmax.f32 %v1311, 0.0
      %v1401 = vmax.f32 %v1314, 0.0
      %v1402 = vmax.f32 %v1319, 0.0
      %v1403 = vmax.f32 %v1322, 0.0
      %v1404 = vmax.f32 %v1327, 0.0
      %v1405 = vmax.f32 %v1330, 0.0
      %v1406 = vmax.f32 %v1335, 0.0
      %v1407 = vmax.f32 %v1338, 0.0
      %v1408 = vmax.f32 %v1343, 0.0
      %v1409 = vmax.f32 %v1346, 0.0
      %v1410 = vmax.f32 %v1351, 0.0
      %v1411 = vmax.f32 %v1354, 0.0
      %v1412 = vmax.f32 %v1359, 0.0
      %v1413 = vmax.f32 %v1362, 0.0
      %v1414 = vmax.f32 %v1367, 0.0
      %v1415 = vmax.f32 %v1370, 0.0
      %v1416 = vmax.f32 %v1375, 0.0
      %v1417 = vpack.c.bf16 %v1381, %v1380
      %v1418 = vpack.c.bf16 %v1383, %v1382
      %v1419 = vpack.c.bf16 %v1385, %v1384
      %v1420 = vpack.c.bf16 %v1387, %v1386
      %v1421 = vpack.c.bf16 %v1389, %v1388
      %v1422 = vpack.c.bf16 %v1391, %v1390
      %v1423 = vpack.c.bf16 %v1393, %v1392
      %v1424 = vpack.c.bf16 %v1395, %v1394
      %v1425 = vpack.c.bf16 %v1397, %v1396
      %v1426 = vpack.c.bf16 %v1399, %v1398
      %v1427 = vpack.c.bf16 %v1401, %v1400
      %v1428 = vpack.c.bf16 %v1403, %v1402
      %v1429 = vpack.c.bf16 %v1405, %v1404
      %v1430 = vpack.c.bf16 %v1407, %v1406
      %v1431 = vpack.c.bf16 %v1409, %v1408
      %v1432 = vpack.c.bf16 %v1411, %v1410
      %v1433 = vpack.c.bf16 %v1413, %v1412
      %v1434 = vpack.c.bf16 %v1415, %v1414
      %v1435 = vpack.c.bf16 %v1416, %v1416
      %vm1436 = vsmask.f32 7424
      %v1438 = vshrl.u32 %v1418, 16
      %v1440 = vshll.u32 %v1418, 16
      %v1442 = vrot.slane %v1440, 1
      %v1443 = vor.u32 %v1438, %v1442
      %v1445 = vshll.u32 %v1419, 16
      %v1447 = vrot.slane %v1445, 1
      %v1448 = vsel %vm1436, %v1443, %v1447
      %v1449 = vshrl.u32 %v1419, 16
      %v1453 = vmax.bf16 %v1417, %v1448
      %v1454 = vmax.bf16 %v1418, %v1449
      %vm1457 = vcmask 1046528
      %v1458 = vrot.slane %v1419, 1
      %v1459 = vrot.slane %v1420, 1
      %v1460 = vsel %vm1457, %v1458, %v1459
      %v1463 = vmax.bf16 %v1453, %v1460
      %v1464 = vmax.bf16 %v1454, %v1459
      %v1466 = vshrl.u32 %v1420, 16
      %v1468 = vshll.u32 %v1420, 16
      %v1470 = vrot.slane %v1468, 1
      %v1471 = vor.u32 %v1466, %v1470
      %v1473 = vshll.u32 %v1421, 16
      %v1475 = vrot.slane %v1473, 1
      %v1476 = vsel %vm1436, %v1471, %v1475
      %v1477 = vshrl.u32 %v1421, 16
      %v1479 = vor.u32 %v1477, %v1475
      %v1482 = vmax.bf16 %v1419, %v1476
      %v1483 = vmax.bf16 %v1420, %v1479
      %v1486 = vrot.slane %v1421, 1
      %v1487 = vrot.slane %v1422, 1
      %v1488 = vsel %vm1457, %v1486, %v1487
      %v1491 = vmax.bf16 %v1482, %v1488
      %v1492 = vmax.bf16 %v1483, %v1487
      %v1494 = vshrl.u32 %v1422, 16
      %v1496 = vshll.u32 %v1422, 16
      %v1498 = vrot.slane %v1496, 1
      %v1499 = vor.u32 %v1494, %v1498
      %v1501 = vshll.u32 %v1423, 16
      %v1503 = vrot.slane %v1501, 1
      %v1504 = vsel %vm1436, %v1499, %v1503
      %v1505 = vshrl.u32 %v1423, 16
      %v1507 = vor.u32 %v1505, %v1503
      %v1510 = vmax.bf16 %v1421, %v1504
      %v1511 = vmax.bf16 %v1422, %v1507
      %v1514 = vrot.slane %v1423, 1
      %v1515 = vrot.slane %v1424, 1
      %v1516 = vsel %vm1457, %v1514, %v1515
      %v1519 = vmax.bf16 %v1510, %v1516
      %v1520 = vmax.bf16 %v1511, %v1515
      %v1522 = vshrl.u32 %v1424, 16
      %v1524 = vshll.u32 %v1424, 16
      %v1526 = vrot.slane %v1524, 1
      %v1527 = vor.u32 %v1522, %v1526
      %v1529 = vshll.u32 %v1425, 16
      %v1531 = vrot.slane %v1529, 1
      %v1532 = vsel %vm1436, %v1527, %v1531
      %v1533 = vshrl.u32 %v1425, 16
      %v1535 = vor.u32 %v1533, %v1531
      %v1538 = vmax.bf16 %v1423, %v1532
      %v1539 = vmax.bf16 %v1424, %v1535
      %v1542 = vrot.slane %v1425, 1
      %v1543 = vrot.slane %v1426, 1
      %v1544 = vsel %vm1457, %v1542, %v1543
      %v1547 = vmax.bf16 %v1538, %v1544
      %v1548 = vmax.bf16 %v1539, %v1543
      %v1550 = vshrl.u32 %v1426, 16
      %v1552 = vshll.u32 %v1426, 16
      %v1554 = vrot.slane %v1552, 1
      %v1555 = vor.u32 %v1550, %v1554
      %v1557 = vshll.u32 %v1427, 16
      %v1559 = vrot.slane %v1557, 1
      %v1560 = vsel %vm1436, %v1555, %v1559
      %v1561 = vshrl.u32 %v1427, 16
      %v1563 = vor.u32 %v1561, %v1559
      %v1566 = vmax.bf16 %v1425, %v1560
      %v1567 = vmax.bf16 %v1426, %v1563
      %v1570 = vrot.slane %v1427, 1
      %v1571 = vrot.slane %v1428, 1
      %v1572 = vsel %vm1457, %v1570, %v1571
      %v1575 = vmax.bf16 %v1566, %v1572
      %v1576 = vmax.bf16 %v1567, %v1571
      %v1578 = vshrl.u32 %v1428, 16
      %v1580 = vshll.u32 %v1428, 16
      %v1582 = vrot.slane %v1580, 1
      %v1583 = vor.u32 %v1578, %v1582
      %v1585 = vshll.u32 %v1429, 16
      %v1587 = vrot.slane %v1585, 1
      %v1588 = vsel %vm1436, %v1583, %v1587
      %v1589 = vshrl.u32 %v1429, 16
      %v1591 = vor.u32 %v1589, %v1587
      %v1594 = vmax.bf16 %v1427, %v1588
      %v1595 = vmax.bf16 %v1428, %v1591
      %v1598 = vrot.slane %v1429, 1
      %v1599 = vrot.slane %v1430, 1
      %v1600 = vsel %vm1457, %v1598, %v1599
      %v1603 = vmax.bf16 %v1594, %v1600
      %v1604 = vmax.bf16 %v1595, %v1599
      %v1606 = vshrl.u32 %v1430, 16
      %v1608 = vshll.u32 %v1430, 16
      %v1610 = vrot.slane %v1608, 1
      %v1611 = vor.u32 %v1606, %v1610
      %v1613 = vshll.u32 %v1431, 16
      %v1615 = vrot.slane %v1613, 1
      %v1616 = vsel %vm1436, %v1611, %v1615
      %v1617 = vshrl.u32 %v1431, 16
      %v1619 = vor.u32 %v1617, %v1615
      %v1622 = vmax.bf16 %v1429, %v1616
      %v1623 = vmax.bf16 %v1430, %v1619
      %v1626 = vrot.slane %v1431, 1
      %v1627 = vrot.slane %v1432, 1
      %v1628 = vsel %vm1457, %v1626, %v1627
      %v1631 = vmax.bf16 %v1622, %v1628
      %v1632 = vmax.bf16 %v1623, %v1627
      %v1634 = vshrl.u32 %v1432, 16
      %v1637 = vshll.u32 %v1433, 16
      %v1639 = vrot.slane %v1637, 1
      %v1640 = vsel %vm1436, %v1634, %v1639
      %v1641 = vshrl.u32 %v1433, 16
      %v1643 = vor.u32 %v1641, %v1639
      %v1646 = vmax.bf16 %v1431, %v1640
      %v1647 = vmax.bf16 %v1432, %v1643
      %v1650 = vrot.slane %v1434, 1
      %v1651 = vrot.slane %v1435, 1
      %v1652 = vsel %vm1457, %v1650, %v1651
      %v1655 = vmax.bf16 %v1646, %v1650
      %v1656 = vmax.bf16 %v1647, %v1652
      %v1659 = vrot.slane %v1491, 1
      %v1660 = vrot.slane %v1492, 1
      %v1661 = vsel %vm1457, %v1659, %v1660
      %vm1665 = vcmask 1045504
      %v1666 = vrot.slane %v1519, 2
      %v1667 = vrot.slane %v1520, 2
      %v1668 = vsel %vm1665, %v1666, %v1667
      %vm1672 = vcmask 1044480
      %v1673 = vrot.slane %v1547, 3
      %v1674 = vrot.slane %v1548, 3
      %v1675 = vsel %vm1672, %v1673, %v1674
      %vm1679 = vcmask 1043456
      %v1680 = vrot.slane %v1575, 4
      %v1681 = vrot.slane %v1576, 4
      %v1682 = vsel %vm1679, %v1680, %v1681
      %vm1686 = vcmask 1042432
      %v1687 = vrot.slane %v1603, 5
      %v1688 = vrot.slane %v1604, 5
      %v1689 = vsel %vm1686, %v1687, %v1688
      %vm1693 = vcmask 1041408
      %v1694 = vrot.slane %v1631, 6
      %v1695 = vrot.slane %v1632, 6
      %v1696 = vsel %vm1693, %v1694, %v1695
      %vm1700 = vcmask 1040384
      %v1701 = vrot.slane %v1655, 7
      %v1702 = vrot.slane %v1656, 7
      %v1703 = vsel %vm1700, %v1701, %v1702
      %v1706 = vshrl.u32 %v1463, 16
      %v1708 = vshll.u32 %v1463, 16
      %v1710 = vrot.slane %v1708, 1
      %v1711 = vor.u32 %v1706, %v1710
      %v1713 = vshrl.u32 %v1661, 16
      %v1715 = vshll.u32 %v1661, 16
      %v1717 = vrot.slane %v1715, 1
      %v1718 = vor.u32 %v1713, %v1717
      %v1720 = vshrl.u32 %v1668, 16
      %v1722 = vshll.u32 %v1668, 16
      %v1724 = vrot.slane %v1722, 1
      %v1725 = vor.u32 %v1720, %v1724
      %v1727 = vshrl.u32 %v1675, 16
      %v1729 = vshll.u32 %v1675, 16
      %v1731 = vrot.slane %v1729, 1
      %v1732 = vor.u32 %v1727, %v1731
      %v1734 = vshrl.u32 %v1682, 16
      %v1736 = vshll.u32 %v1682, 16
      %v1738 = vrot.slane %v1736, 1
      %v1739 = vor.u32 %v1734, %v1738
      %v1741 = vshrl.u32 %v1689, 16
      %v1743 = vshll.u32 %v1689, 16
      %v1745 = vrot.slane %v1743, 1
      %v1746 = vor.u32 %v1741, %v1745
      %v1748 = vshrl.u32 %v1696, 16
      %v1750 = vshll.u32 %v1696, 16
      %v1752 = vrot.slane %v1750, 1
      %v1753 = vor.u32 %v1748, %v1752
      %v1755 = vshrl.u32 %v1703, 16
      %v1757 = vshll.u32 %v1703, 16
      %v1759 = vrot.slane %v1757, 1
      %v1760 = vor.u32 %v1755, %v1759
      %v1769 = vmax.bf16 %v1463, %v1711
      %v1770 = vmax.bf16 %v1661, %v1718
      %v1771 = vmax.bf16 %v1668, %v1725
      %v1772 = vmax.bf16 %v1675, %v1732
      %v1773 = vmax.bf16 %v1682, %v1739
      %v1774 = vmax.bf16 %v1689, %v1746
      %v1775 = vmax.bf16 %v1696, %v1753
      %v1776 = vmax.bf16 %v1703, %v1760
      %v1779 = vrot.slane %v1463, 1
      %v1780 = vrot.slane %v1464, 1
      %v1781 = vsel %vm1457, %v1779, %v1780
      %v1782 = vrot.slane %v1661, 1
      %v1783 = vrot.slane %v1660, 1
      %v1784 = vsel %vm1457, %v1782, %v1783
      %v1785 = vrot.slane %v1668, 1
      %v1786 = vrot.slane %v1667, 1
      %v1787 = vsel %vm1457, %v1785, %v1786
      %v1788 = vrot.slane %v1675, 1
      %v1789 = vrot.slane %v1674, 1
      %v1790 = vsel %vm1457, %v1788, %v1789
      %v1791 = vrot.slane %v1682, 1
      %v1792 = vrot.slane %v1681, 1
      %v1793 = vsel %vm1457, %v1791, %v1792
      %v1794 = vrot.slane %v1689, 1
      %v1795 = vrot.slane %v1688, 1
      %v1796 = vsel %vm1457, %v1794, %v1795
      %v1797 = vrot.slane %v1696, 1
      %v1798 = vrot.slane %v1695, 1
      %v1799 = vsel %vm1457, %v1797, %v1798
      %v1800 = vrot.slane %v1703, 1
      %v1801 = vrot.slane %v1702, 1
      %v1802 = vsel %vm1457, %v1800, %v1801
      %v1811 = vmax.bf16 %v1769, %v1781
      %v1812 = vmax.bf16 %v1770, %v1784
      %v1813 = vmax.bf16 %v1771, %v1787
      %v1814 = vmax.bf16 %v1772, %v1790
      %v1815 = vmax.bf16 %v1773, %v1793
      %v1816 = vmax.bf16 %v1774, %v1796
      %v1817 = vmax.bf16 %v1775, %v1799
      %v1818 = vmax.bf16 %v1776, %v1802
      %v1819 = vlaneseq
      %v1820 = vshrl.u32 %v1819, 7
      %v1821 = vlaneseq
      %v1822 = vand.u32 %v1821, 127
      %v1823 = vmul.u32 %v1820, 2
      %vm1824 = vcmp.eq.s32.totalorder %v1822, %v1823
      %v1825 = vsel %vm1824, 1, 0
      %v1826 = vcvt.s32.f32 %v1825
      %v1827 = vpack.c.bf16 %v1826, %v1826
      %vm1828 = vcmask 121856
      %v1830 = vsel %vm1828, %v1827, 0
      %vm1832 = vcmask 1046528
      %vm1833 = vcmask 1047552
      %v1834 = vsel %vm1832, 4294967295, 65535
      %v1835 = vsel %vm1833, %v1834, 0
      %v1837 = vand.u32 %v1811, %v1835
      %v1840 = vand.u32 %v1812, %v1835
      %v1843 = vand.u32 %v1813, %v1835
      %v1846 = vand.u32 %v1814, %v1835
      %v1849 = vand.u32 %v1815, %v1835
      %v1852 = vand.u32 %v1816, %v1835
      %v1855 = vand.u32 %v1817, %v1835
      %v1858 = vand.u32 %v1818, %v1835
      %1860 = vmatprep.subr.bf16.mxu0 0
      %1861 = vmatpush1.bf16.msra.mxu0 0
      %1862 = vmatprep.subr.bf16.mxu0 0
      %1863 = vmatpush1.bf16.msra.mxu0 0
      %1864 = vmatprep.subr.bf16.mxu0 0
      %1865 = vmatpush1.bf16.msra.mxu0 0
      %1866 = vmatprep.subr.bf16.mxu0 0
      %1867 = vmatpush1.bf16.msra.mxu0 0
      %1868 = vmatprep.subr.bf16.mxu0 0
      %1869 = vmatpush1.bf16.msra.mxu0 0
      %1870 = vmatprep.subr.bf16.mxu0 0
      %1871 = vmatpush1.bf16.msra.mxu0 0
      %1872 = vmatprep.subr.bf16.mxu0 0
      %1873 = vmatpush1.bf16.msra.mxu0 0
      %1874 = vmatprep.subr.bf16.mxu0 %v1840
      %1875 = vmatpush1.bf16.msra.mxu0 %v1837
      %1876 = vmatprep.subr.bf16.mxu0 0
      %1877 = vmatpush2.bf16.msra.mxu0 0
      %1878 = vmatprep.subr.bf16.mxu0 0
      %1879 = vmatpush2.bf16.msra.mxu0 0
      %1880 = vmatprep.subr.bf16.mxu0 0
      %1881 = vmatpush2.bf16.msra.mxu0 0
      %1882 = vmatprep.subr.bf16.mxu0 0
      %1883 = vmatpush2.bf16.msra.mxu0 0
      %1884 = vmatprep.subr.bf16.mxu0 0
      %1885 = vmatpush2.bf16.msra.mxu0 0
      %1886 = vmatprep.subr.bf16.mxu0 0
      %1887 = vmatpush2.bf16.msra.mxu0 0
      %1888 = vmatprep.subr.bf16.mxu0 0
      %1889 = vmatpush2.bf16.msra.mxu0 0
      %1890 = vmatprep.subr.bf16.mxu0 0
      %1891 = vmatpush2.bf16.msra.mxu0 0
      %1892 = vmatprep.mubr.bf16.mxu0 0
      %1893 = vmatmul.mubr.bf16.gmra.mxu0 %v1830
      %v1894 = vpop.f32.mrf.mxu0
      %v1895 = vadd.f32 0.0, %v1894
      %v1896 = vpop.f32.mrf.mxu0
      %v1897 = vadd.f32 0.0, %v1896
      %v1898 = vpop.f32.mrf.mxu0
      %v1899 = vpop.f32.mrf.mxu0
      %1900 = vdwg.mxu0
      %1901 = vmatprep.subr.bf16.mxu0 0
      %1902 = vmatpush1.bf16.msra.mxu0 0
      %1903 = vmatprep.subr.bf16.mxu0 0
      %1904 = vmatpush1.bf16.msra.mxu0 0
      %1905 = vmatprep.subr.bf16.mxu0 0
      %1906 = vmatpush1.bf16.msra.mxu0 0
      %1907 = vmatprep.subr.bf16.mxu0 0
      %1908 = vmatpush1.bf16.msra.mxu0 0
      %1909 = vmatprep.subr.bf16.mxu0 0
      %1910 = vmatpush1.bf16.msra.mxu0 0
      %1911 = vmatprep.subr.bf16.mxu0 0
      %1912 = vmatpush1.bf16.msra.mxu0 0
      %1913 = vmatprep.subr.bf16.mxu0 0
      %1914 = vmatpush1.bf16.msra.mxu0 0
      %1915 = vmatprep.subr.bf16.mxu0 %v1846
      %1916 = vmatpush1.bf16.msra.mxu0 %v1843
      %1917 = vmatprep.subr.bf16.mxu0 0
      %1918 = vmatpush2.bf16.msra.mxu0 0
      %1919 = vmatprep.subr.bf16.mxu0 0
      %1920 = vmatpush2.bf16.msra.mxu0 0
      %1921 = vmatprep.subr.bf16.mxu0 0
      %1922 = vmatpush2.bf16.msra.mxu0 0
      %1923 = vmatprep.subr.bf16.mxu0 0
      %1924 = vmatpush2.bf16.msra.mxu0 0
      %1925 = vmatprep.subr.bf16.mxu0 0
      %1926 = vmatpush2.bf16.msra.mxu0 0
      %1927 = vmatprep.subr.bf16.mxu0 0
      %1928 = vmatpush2.bf16.msra.mxu0 0
      %1929 = vmatprep.subr.bf16.mxu0 0
      %1930 = vmatpush2.bf16.msra.mxu0 0
      %1931 = vmatprep.subr.bf16.mxu0 0
      %1932 = vmatpush2.bf16.msra.mxu0 0
      %1933 = vmatprep.mubr.bf16.mxu0 0
      %1934 = vmatmul.mubr.bf16.gmra.mxu0 %v1830
      %v1935 = vpop.f32.mrf.mxu0
      %v1936 = vadd.f32 0.0, %v1935
      %v1937 = vpop.f32.mrf.mxu0
      %v1938 = vadd.f32 0.0, %v1937
      %v1939 = vpop.f32.mrf.mxu0
      %v1940 = vpop.f32.mrf.mxu0
      %1941 = vdwg.mxu0
      %1942 = vmatprep.subr.bf16.mxu0 0
      %1943 = vmatpush1.bf16.msra.mxu0 0
      %1944 = vmatprep.subr.bf16.mxu0 0
      %1945 = vmatpush1.bf16.msra.mxu0 0
      %1946 = vmatprep.subr.bf16.mxu0 0
      %1947 = vmatpush1.bf16.msra.mxu0 0
      %1948 = vmatprep.subr.bf16.mxu0 0
      %1949 = vmatpush1.bf16.msra.mxu0 0
      %1950 = vmatprep.subr.bf16.mxu0 0
      %1951 = vmatpush1.bf16.msra.mxu0 0
      %1952 = vmatprep.subr.bf16.mxu0 0
      %1953 = vmatpush1.bf16.msra.mxu0 0
      %1954 = vmatprep.subr.bf16.mxu0 0
      %1955 = vmatpush1.bf16.msra.mxu0 0
      %1956 = vmatprep.subr.bf16.mxu0 %v1852
      %1957 = vmatpush1.bf16.msra.mxu0 %v1849
      %1958 = vmatprep.subr.bf16.mxu0 0
      %1959 = vmatpush2.bf16.msra.mxu0 0
      %1960 = vmatprep.subr.bf16.mxu0 0
      %1961 = vmatpush2.bf16.msra.mxu0 0
      %1962 = vmatprep.subr.bf16.mxu0 0
      %1963 = vmatpush2.bf16.msra.mxu0 0
      %1964 = vmatprep.subr.bf16.mxu0 0
      %1965 = vmatpush2.bf16.msra.mxu0 0
      %1966 = vmatprep.subr.bf16.mxu0 0
      %1967 = vmatpush2.bf16.msra.mxu0 0
      %1968 = vmatprep.subr.bf16.mxu0 0
      %1969 = vmatpush2.bf16.msra.mxu0 0
      %1970 = vmatprep.subr.bf16.mxu0 0
      %1971 = vmatpush2.bf16.msra.mxu0 0
      %1972 = vmatprep.subr.bf16.mxu0 0
      %1973 = vmatpush2.bf16.msra.mxu0 0
      %1974 = vmatprep.mubr.bf16.mxu0 0
      %1975 = vmatmul.mubr.bf16.gmra.mxu0 %v1830
      %v1976 = vpop.f32.mrf.mxu0
      %v1977 = vadd.f32 0.0, %v1976
      %v1978 = vpop.f32.mrf.mxu0
      %v1979 = vadd.f32 0.0, %v1978
      %v1980 = vpop.f32.mrf.mxu0
      %v1981 = vpop.f32.mrf.mxu0
      %1982 = vdwg.mxu0
      %1983 = vmatprep.subr.bf16.mxu0 0
      %1984 = vmatpush1.bf16.msra.mxu0 0
      %1985 = vmatprep.subr.bf16.mxu0 0
      %1986 = vmatpush1.bf16.msra.mxu0 0
      %1987 = vmatprep.subr.bf16.mxu0 0
      %1988 = vmatpush1.bf16.msra.mxu0 0
      %1989 = vmatprep.subr.bf16.mxu0 0
      %1990 = vmatpush1.bf16.msra.mxu0 0
      %1991 = vmatprep.subr.bf16.mxu0 0
      %1992 = vmatpush1.bf16.msra.mxu0 0
      %1993 = vmatprep.subr.bf16.mxu0 0
      %1994 = vmatpush1.bf16.msra.mxu0 0
      %1995 = vmatprep.subr.bf16.mxu0 0
      %1996 = vmatpush1.bf16.msra.mxu0 0
      %1997 = vmatprep.subr.bf16.mxu0 %v1858
      %1998 = vmatpush1.bf16.msra.mxu0 %v1855
      %1999 = vmatprep.subr.bf16.mxu0 0
      %2000 = vmatpush2.bf16.msra.mxu0 0
      %2001 = vmatprep.subr.bf16.mxu0 0
      %2002 = vmatpush2.bf16.msra.mxu0 0
      %2003 = vmatprep.subr.bf16.mxu0 0
      %2004 = vmatpush2.bf16.msra.mxu0 0
      %2005 = vmatprep.subr.bf16.mxu0 0
      %2006 = vmatpush2.bf16.msra.mxu0 0
      %2007 = vmatprep.subr.bf16.mxu0 0
      %2008 = vmatpush2.bf16.msra.mxu0 0
      %2009 = vmatprep.subr.bf16.mxu0 0
      %2010 = vmatpush2.bf16.msra.mxu0 0
      %2011 = vmatprep.subr.bf16.mxu0 0
      %2012 = vmatpush2.bf16.msra.mxu0 0
      %2013 = vmatprep.subr.bf16.mxu0 0
      %2014 = vmatpush2.bf16.msra.mxu0 0
      %2015 = vmatprep.mubr.bf16.mxu0 0
      %2016 = vmatmul.mubr.bf16.gmra.mxu0 %v1830
      %v2017 = vpop.f32.mrf.mxu0
      %v2018 = vadd.f32 0.0, %v2017
      %v2019 = vpop.f32.mrf.mxu0
      %v2020 = vadd.f32 0.0, %v2019
      %v2021 = vpop.f32.mrf.mxu0
      %v2022 = vpop.f32.mrf.mxu0
      %2023 = vdwg.mxu0
      %v2024 = vpack.c.bf16 %v1895, %v1895
      %v2025 = vpack.c.bf16 %v1897, %v1897
      %v2026 = vpack.c.bf16 %v1936, %v1936
      %v2027 = vpack.c.bf16 %v1938, %v1938
      %v2028 = vpack.c.bf16 %v1977, %v1977
      %v2029 = vpack.c.bf16 %v1979, %v1979
      %v2030 = vpack.c.bf16 %v2018, %v2018
      %v2031 = vpack.c.bf16 %v2020, %v2020
      %v2033 = vshrl.u32 %v2024, 16
      %v2035 = vshll.u32 %v2024, 16
      %v2037 = vrot.slane %v2035, 1
      %v2038 = vor.u32 %v2033, %v2037
      %v2041 = vrot.slane %v2024, 1
      %v2044 = vshrl.u32 %v2025, 16
      %v2046 = vshll.u32 %v2025, 16
      %v2048 = vrot.slane %v2046, 1
      %v2049 = vor.u32 %v2044, %v2048
      %v2052 = vrot.slane %v2025, 1
      %v2055 = vshrl.u32 %v2026, 16
      %v2057 = vshll.u32 %v2026, 16
      %v2059 = vrot.slane %v2057, 1
      %v2060 = vor.u32 %v2055, %v2059
      %v2063 = vrot.slane %v2026, 1
      %v2065 = vld [vmem:[%s3] sm:$0xff]
      %v2066 = vld [vmem:[%s3 + $0x8] sm:$0xff]
      %v2067 = vld [vmem:[%s3 + $0x10] sm:$0xff]
      %v2068 = vld [vmem:[%s3 + $0x18] sm:$0xff]
      %v2069 = vld [vmem:[%s3 + $0x20] sm:$0xff]
      %v2070 = vld [vmem:[%s3 + $0x28] sm:$0xff]
      %v2071 = vld [vmem:[%s3 + $0x30] sm:$0xff]
      %v2072 = vld [vmem:[%s3 + $0x38] sm:$0xff]
      %v2073 = vld [vmem:[%s3 + $0x40] sm:$0xff]
      %v2074 = vld [vmem:[%s3 + $0x48] sm:$0xff]
      %v2075 = vld [vmem:[%s3 + $0x50] sm:$0xff]
      %v2076 = vld [vmem:[%s3 + $0x58] sm:$0xff]
      %v2077 = vld [vmem:[%s3 + $0x60] sm:$0xff]
      %v2078 = vld [vmem:[%s3 + $0x68] sm:$0xff]
      %v2079 = vld [vmem:[%s3 + $0x70] sm:$0xff]
      %v2080 = vld [vmem:[%s3 + $0x78] sm:$0xff]
      %v2081 = vld [vmem:[%s3 + $0x80] sm:$0xff]
      %v2082 = vld [vmem:[%s3 + $0x88] sm:$0xff]
      %v2083 = vld [vmem:[%s3 + $0x90] sm:$0xff]
      %v2084 = vld [vmem:[%s3 + $0x98] sm:$0xff]
      %v2085 = vld [vmem:[%s3 + $0xa0] sm:$0xff]
      %v2086 = vld [vmem:[%s3 + $0xa8] sm:$0xff]
      %v2087 = vld [vmem:[%s3 + $0xb0] sm:$0xff]
      %v2088 = vld [vmem:[%s3 + $0xb8] sm:$0xff]
      %v2089 = vld [vmem:[%s3 + $0xc0] sm:$0xff]
      %v2090 = vld [vmem:[%s3 + $0xc8] sm:$0xff]
      %v2091 = vld [vmem:[%s3 + $0xd0] sm:$0xff]
      %v2092 = vld [vmem:[%s3 + $0xd8] sm:$0xff]
      %v2093 = vld [vmem:[%s3 + $0xe0] sm:$0xff]
      %v2094 = vld [vmem:[%s3 + $0xe8] sm:$0xff]
      %v2095 = vld [vmem:[%s3 + $0xf0] sm:$0xff]
      %v2096 = vld [vmem:[%s3 + $0xf8] sm:$0xff]
      %v2097 = vld [vmem:[%s3 + $0x100] sm:$0xff]
      %v2098 = vld [vmem:[%s3 + $0x108] sm:$0xff]
      %v2099 = vld [vmem:[%s3 + $0x110] sm:$0xff]
      %v2100 = vld [vmem:[%s3 + $0x118] sm:$0xff]
      %v2101 = vld [vmem:[%s3 + $0x120] sm:$0xff]
      %v2102 = vld [vmem:[%s3 + $0x128] sm:$0xff]
      %v2103 = vld [vmem:[%s3 + $0x130] sm:$0xff]
      %v2104 = vld [vmem:[%s3 + $0x138] sm:$0xff]
      %v2105 = vld [vmem:[%s3 + $0x140] sm:$0xff]
      %v2106 = vld [vmem:[%s3 + $0x148] sm:$0xff]
      %v2107 = vld [vmem:[%s3 + $0x150] sm:$0xff]
      %v2108 = vld [vmem:[%s3 + $0x158] sm:$0xff]
      %v2109 = vld [vmem:[%s3 + $0x160] sm:$0xff]
      %v2110 = vld [vmem:[%s3 + $0x168] sm:$0xff]
      %v2111 = vld [vmem:[%s3 + $0x170] sm:$0xff]
      %v2112 = vld [vmem:[%s3 + $0x178] sm:$0xff]
      %v2113 = vld [vmem:[%s3 + $0x180] sm:$0xff]
      %v2114 = vld [vmem:[%s3 + $0x188] sm:$0xff]
      %v2115 = vld [vmem:[%s3 + $0x190] sm:$0xff]
      %v2116 = vld [vmem:[%s3 + $0x198] sm:$0xff]
      %v2117 = vld [vmem:[%s3 + $0x1a0] sm:$0xff]
      %v2118 = vld [vmem:[%s3 + $0x1a8] sm:$0xff]
      %v2119 = vld [vmem:[%s3 + $0x1b0] sm:$0xff]
      %v2120 = vld [vmem:[%s3 + $0x1b8] sm:$0xff]
      %v2121 = vld [vmem:[%s3 + $0x1c0] sm:$0xff]
      %v2122 = vld [vmem:[%s3 + $0x1c8] sm:$0xff]
      %v2123 = vld [vmem:[%s3 + $0x1d0] sm:$0xff]
      %v2124 = vld [vmem:[%s3 + $0x1d8] sm:$0xff]
      %v2125 = vld [vmem:[%s3 + $0x1e0] sm:$0xff]
      %v2126 = vld [vmem:[%s3 + $0x1e8] sm:$0xff]
      %v2127 = vld [vmem:[%s3 + $0x1f0] sm:$0xff]
      %v2128 = vld [vmem:[%s3 + $0x1f8] sm:$0xff]
      %v2129 = vld [vmem:[%s3 + $0x200] sm:$0xff]
      %v2130 = vld [vmem:[%s3 + $0x208] sm:$0xff]
      %v2131 = vld [vmem:[%s3 + $0x210] sm:$0xff]
      %v2132 = vld [vmem:[%s3 + $0x218] sm:$0xff]
      %v2133 = vld [vmem:[%s3 + $0x220] sm:$0xff]
      %v2134 = vld [vmem:[%s3 + $0x228] sm:$0xff]
      %v2135 = vld [vmem:[%s3 + $0x230] sm:$0xff]
      %v2136 = vld [vmem:[%s3 + $0x238] sm:$0xff]
      %v2137 = vld [vmem:[%s3 + $0x240] sm:$0xff]
      %v2138 = vld [vmem:[%s3 + $0x248] sm:$0xff]
      %v2139 = vld [vmem:[%s3 + $0x250] sm:$0xff]
      %v2140 = vld [vmem:[%s3 + $0x258] sm:$0xff]
      %v2141 = vld [vmem:[%s3 + $0x260] sm:$0xff]
      %v2142 = vld [vmem:[%s3 + $0x268] sm:$0xff]
      %v2143 = vld [vmem:[%s3 + $0x270] sm:$0xff]
      %v2144 = vld [vmem:[%s3 + $0x278] sm:$0xff]
      %v2145 = vld [vmem:[%s3 + $0x280] sm:$0xff]
      %v2146 = vld [vmem:[%s3 + $0x288] sm:$0xff]
      %v2147 = vld [vmem:[%s3 + $0x290] sm:$0xff]
      %v2148 = vld [vmem:[%s3 + $0x298] sm:$0xff]
      %v2149 = vld [vmem:[%s3 + $0x2a0] sm:$0xff]
      %v2150 = vld [vmem:[%s3 + $0x2a8] sm:$0xff]
      %v2151 = vld [vmem:[%s3 + $0x2b0] sm:$0xff]
      %v2152 = vld [vmem:[%s3 + $0x2b8] sm:$0xff]
      %v2153 = vld [vmem:[%s3 + $0x2c0] sm:$0xff]
      %v2154 = vld [vmem:[%s3 + $0x2c8] sm:$0xff]
      %v2155 = vld [vmem:[%s3 + $0x2d0] sm:$0xff]
      %v2156 = vld [vmem:[%s3 + $0x2d8] sm:$0xff]
      %v2157 = vld [vmem:[%s3 + $0x2e0] sm:$0xff]
      %v2158 = vld [vmem:[%s3 + $0x2e8] sm:$0xff]
      %v2159 = vld [vmem:[%s3 + $0x2f0] sm:$0xff]
      %v2160 = vld [vmem:[%s3 + $0x2f8] sm:$0xff]
      %v2161 = vld [vmem:[%s3 + $0x300] sm:$0xff]
      %v2162 = vld [vmem:[%s3 + $0x308] sm:$0xff]
      %v2163 = vld [vmem:[%s3 + $0x310] sm:$0xff]
      %v2164 = vld [vmem:[%s3 + $0x318] sm:$0xff]
      %v2165 = vld [vmem:[%s3 + $0x320] sm:$0xff]
      %v2166 = vld [vmem:[%s3 + $0x328] sm:$0xff]
      %v2167 = vld [vmem:[%s3 + $0x330] sm:$0xff]
      %v2168 = vld [vmem:[%s3 + $0x338] sm:$0xff]
      %v2169 = vld [vmem:[%s3 + $0x340] sm:$0xff]
      %v2170 = vld [vmem:[%s3 + $0x348] sm:$0xff]
      %v2171 = vld [vmem:[%s3 + $0x350] sm:$0xff]
      %v2172 = vld [vmem:[%s3 + $0x358] sm:$0xff]
      %v2173 = vld [vmem:[%s3 + $0x360] sm:$0xff]
      %v2174 = vld [vmem:[%s3 + $0x368] sm:$0xff]
      %v2175 = vld [vmem:[%s3 + $0x370] sm:$0xff]
      %v2176 = vld [vmem:[%s3 + $0x378] sm:$0xff]
      %v2177 = vld [vmem:[%s3 + $0x380] sm:$0xff]
      %v2178 = vld [vmem:[%s3 + $0x388] sm:$0xff]
      %v2179 = vld [vmem:[%s3 + $0x390] sm:$0xff]
      %v2180 = vld [vmem:[%s3 + $0x398] sm:$0xff]
      %v2181 = vld [vmem:[%s3 + $0x3a0] sm:$0xff]
      %v2182 = vld [vmem:[%s3 + $0x3a8] sm:$0xff]
      %v2183 = vld [vmem:[%s3 + $0x3b0] sm:$0xff]
      %v2184 = vld [vmem:[%s3 + $0x3b8] sm:$0xff]
      %v2185 = vld [vmem:[%s3 + $0x3c0] sm:$0xff]
      %v2186 = vld [vmem:[%s3 + $0x3c8] sm:$0xff]
      %v2187 = vld [vmem:[%s3 + $0x3d0] sm:$0xff]
      %v2188 = vld [vmem:[%s3 + $0x3d8] sm:$0xff]
      %v2189 = vld [vmem:[%s3 + $0x3e0] sm:$0xff]
      %v2190 = vld [vmem:[%s3 + $0x3e8] sm:$0xff]
      %v2191 = vld [vmem:[%s3 + $0x3f0] sm:$0xff]
      %v2192 = vld [vmem:[%s3 + $0x3f8] sm:$0xff]
      %v2193 = vld [vmem:[%s3 + $0x400] sm:$0xff]
      %v2194 = vld [vmem:[%s3 + $0x408] sm:$0xff]
      %v2195 = vld [vmem:[%s3 + $0x410] sm:$0xff]
      %v2196 = vld [vmem:[%s3 + $0x418] sm:$0xff]
      %v2197 = vld [vmem:[%s3 + $0x420] sm:$0xff]
      %v2198 = vld [vmem:[%s3 + $0x428] sm:$0xff]
      %v2199 = vld [vmem:[%s3 + $0x430] sm:$0xff]
      %v2200 = vld [vmem:[%s3 + $0x438] sm:$0xff]
      %v2201 = vld [vmem:[%s3 + $0x440] sm:$0xff]
      %v2202 = vld [vmem:[%s3 + $0x448] sm:$0xff]
      %v2203 = vld [vmem:[%s3 + $0x450] sm:$0xff]
      %v2204 = vld [vmem:[%s3 + $0x458] sm:$0xff]
      %v2205 = vld [vmem:[%s3 + $0x460] sm:$0xff]
      %v2206 = vld [vmem:[%s3 + $0x468] sm:$0xff]
      %v2207 = vld [vmem:[%s3 + $0x470] sm:$0xff]
      %v2208 = vld [vmem:[%s3 + $0x478] sm:$0xff]
      %v2209 = vld [vmem:[%s4] sm:$0x3]
      %v2211 = vlaneseq
      %v2212 = vshrl.u32 %v2211, 7
      %v2213 = vsub.s32 0, %v2212
      %v2214 = vrot.slane %v2209, %v2213
      %v2215 = vlaneseq
      %v2216 = vshrl.u32 %v2215, 7
      %v2217 = vsub.s32 1, %v2216
      %v2218 = vrot.slane %v2209, %v2217
      %v2365 = vunpack.c.l.b16 %v2065
      %v2366 = vunpack.c.h.b16 %v2065
      %v2367 = vunpack.c.l.b16 %v2066
      %v2368 = vunpack.c.h.b16 %v2066
      %v2369 = vunpack.c.l.b16 %v2067
      %v2370 = vunpack.c.h.b16 %v2067
      %v2371 = vunpack.c.l.b16 %v2068
      %v2372 = vunpack.c.h.b16 %v2068
      %v2373 = vunpack.c.l.b16 %v2069
      %v2374 = vunpack.c.h.b16 %v2069
      %v2375 = vunpack.c.l.b16 %v2070
      %v2376 = vunpack.c.h.b16 %v2070
      %v2377 = vunpack.c.l.b16 %v2071
      %v2378 = vunpack.c.h.b16 %v2071
      %v2379 = vunpack.c.l.b16 %v2072
      %v2380 = vunpack.c.h.b16 %v2072
      %v2381 = vunpack.c.l.b16 %v2073
      %v2382 = vunpack.c.h.b16 %v2073
      %v2383 = vunpack.c.l.b16 %v2074
      %v2384 = vunpack.c.h.b16 %v2074
      %v2385 = vunpack.c.l.b16 %v2075
      %v2386 = vunpack.c.h.b16 %v2075
      %v2387 = vunpack.c.l.b16 %v2076
      %v2388 = vunpack.c.h.b16 %v2076
      %v2389 = vunpack.c.l.b16 %v2077
      %v2390 = vunpack.c.h.b16 %v2077
      %v2391 = vunpack.c.l.b16 %v2078
      %v2392 = vunpack.c.h.b16 %v2078
      %v2393 = vunpack.c.l.b16 %v2079
      %v2394 = vunpack.c.h.b16 %v2079
      %v2395 = vunpack.c.l.b16 %v2080
      %v2396 = vunpack.c.h.b16 %v2080
      %v2397 = vunpack.c.l.b16 %v2081
      %v2398 = vunpack.c.h.b16 %v2081
      %v2399 = vunpack.c.l.b16 %v2082
      %v2400 = vunpack.c.h.b16 %v2082
      %v2401 = vunpack.c.l.b16 %v2083
      %v2402 = vunpack.c.h.b16 %v2083
      %v2403 = vunpack.c.l.b16 %v2084
      %v2404 = vunpack.c.h.b16 %v2084
      %v2405 = vunpack.c.l.b16 %v2085
      %v2406 = vunpack.c.h.b16 %v2085
      %v2407 = vunpack.c.l.b16 %v2086
      %v2408 = vunpack.c.h.b16 %v2086
      %v2409 = vunpack.c.l.b16 %v2087
      %v2410 = vunpack.c.h.b16 %v2087
      %v2411 = vunpack.c.l.b16 %v2088
      %v2412 = vunpack.c.h.b16 %v2088
      %v2413 = vunpack.c.l.b16 %v2089
      %v2414 = vunpack.c.h.b16 %v2089
      %v2415 = vunpack.c.l.b16 %v2090
      %v2416 = vunpack.c.h.b16 %v2090
      %v2417 = vunpack.c.l.b16 %v2091
      %v2418 = vunpack.c.h.b16 %v2091
      %v2419 = vunpack.c.l.b16 %v2092
      %v2420 = vunpack.c.h.b16 %v2092
      %v2421 = vunpack.c.l.b16 %v2093
      %v2422 = vunpack.c.h.b16 %v2093
      %v2423 = vunpack.c.l.b16 %v2094
      %v2424 = vunpack.c.h.b16 %v2094
      %v2425 = vunpack.c.l.b16 %v2095
      %v2426 = vunpack.c.h.b16 %v2095
      %v2427 = vunpack.c.l.b16 %v2096
      %v2428 = vunpack.c.h.b16 %v2096
      %v2429 = vunpack.c.l.b16 %v2097
      %v2430 = vunpack.c.h.b16 %v2097
      %v2431 = vunpack.c.l.b16 %v2098
      %v2432 = vunpack.c.h.b16 %v2098
      %v2433 = vunpack.c.l.b16 %v2099
      %v2434 = vunpack.c.h.b16 %v2099
      %v2435 = vunpack.c.l.b16 %v2100
      %v2436 = vunpack.c.h.b16 %v2100
      %v2437 = vunpack.c.l.b16 %v2101
      %v2438 = vunpack.c.h.b16 %v2101
      %v2439 = vunpack.c.l.b16 %v2102
      %v2440 = vunpack.c.h.b16 %v2102
      %v2441 = vunpack.c.l.b16 %v2103
      %v2442 = vunpack.c.h.b16 %v2103
      %v2443 = vunpack.c.l.b16 %v2104
      %v2444 = vunpack.c.h.b16 %v2104
      %v2445 = vunpack.c.l.b16 %v2105
      %v2446 = vunpack.c.h.b16 %v2105
      %v2447 = vunpack.c.l.b16 %v2106
      %v2448 = vunpack.c.h.b16 %v2106
      %v2449 = vunpack.c.l.b16 %v2107
      %v2450 = vunpack.c.h.b16 %v2107
      %v2451 = vunpack.c.l.b16 %v2108
      %v2452 = vunpack.c.h.b16 %v2108
      %v2453 = vunpack.c.l.b16 %v2109
      %v2454 = vunpack.c.h.b16 %v2109
      %v2455 = vunpack.c.l.b16 %v2110
      %v2456 = vunpack.c.h.b16 %v2110
      %v2457 = vunpack.c.l.b16 %v2111
      %v2458 = vunpack.c.h.b16 %v2111
      %v2459 = vunpack.c.l.b16 %v2112
      %v2460 = vunpack.c.h.b16 %v2112
      %v2461 = vunpack.c.l.b16 %v2113
      %v2462 = vunpack.c.h.b16 %v2113
      %v2463 = vunpack.c.l.b16 %v2114
      %v2464 = vunpack.c.h.b16 %v2114
      %v2465 = vunpack.c.l.b16 %v2115
      %v2466 = vunpack.c.h.b16 %v2115
      %v2467 = vunpack.c.l.b16 %v2116
      %v2468 = vunpack.c.h.b16 %v2116
      %v2469 = vunpack.c.l.b16 %v2117
      %v2470 = vunpack.c.h.b16 %v2117
      %v2471 = vunpack.c.l.b16 %v2118
      %v2472 = vunpack.c.h.b16 %v2118
      %v2473 = vunpack.c.l.b16 %v2119
      %v2474 = vunpack.c.h.b16 %v2119
      %v2475 = vunpack.c.l.b16 %v2120
      %v2476 = vunpack.c.h.b16 %v2120
      %v2477 = vunpack.c.l.b16 %v2121
      %v2478 = vunpack.c.h.b16 %v2121
      %v2479 = vunpack.c.l.b16 %v2122
      %v2480 = vunpack.c.h.b16 %v2122
      %v2481 = vunpack.c.l.b16 %v2123
      %v2482 = vunpack.c.h.b16 %v2123
      %v2483 = vunpack.c.l.b16 %v2124
      %v2484 = vunpack.c.h.b16 %v2124
      %v2485 = vunpack.c.l.b16 %v2125
      %v2486 = vunpack.c.h.b16 %v2125
      %v2487 = vunpack.c.l.b16 %v2126
      %v2488 = vunpack.c.h.b16 %v2126
      %v2489 = vunpack.c.l.b16 %v2127
      %v2490 = vunpack.c.h.b16 %v2127
      %v2491 = vunpack.c.l.b16 %v2128
      %v2492 = vunpack.c.h.b16 %v2128
      %v2493 = vunpack.c.l.b16 %v2129
      %v2494 = vunpack.c.h.b16 %v2129
      %v2495 = vunpack.c.l.b16 %v2130
      %v2496 = vunpack.c.h.b16 %v2130
      %v2497 = vunpack.c.l.b16 %v2131
      %v2498 = vunpack.c.h.b16 %v2131
      %v2499 = vunpack.c.l.b16 %v2132
      %v2500 = vunpack.c.h.b16 %v2132
      %v2501 = vunpack.c.l.b16 %v2133
      %v2502 = vunpack.c.h.b16 %v2133
      %v2503 = vunpack.c.l.b16 %v2134
      %v2504 = vunpack.c.h.b16 %v2134
      %v2505 = vunpack.c.l.b16 %v2135
      %v2506 = vunpack.c.h.b16 %v2135
      %v2507 = vunpack.c.l.b16 %v2136
      %v2508 = vunpack.c.h.b16 %v2136
      %v2509 = vunpack.c.l.b16 %v2137
      %v2510 = vunpack.c.h.b16 %v2137
      %v2511 = vunpack.c.l.b16 %v2138
      %v2512 = vunpack.c.h.b16 %v2138
      %v2513 = vunpack.c.l.b16 %v2139
      %v2514 = vunpack.c.h.b16 %v2139
      %v2515 = vunpack.c.l.b16 %v2140
      %v2516 = vunpack.c.h.b16 %v2140
      %v2517 = vunpack.c.l.b16 %v2141
      %v2518 = vunpack.c.h.b16 %v2141
      %v2519 = vunpack.c.l.b16 %v2142
      %v2520 = vunpack.c.h.b16 %v2142
      %v2521 = vunpack.c.l.b16 %v2143
      %v2522 = vunpack.c.h.b16 %v2143
      %v2523 = vunpack.c.l.b16 %v2144
      %v2524 = vunpack.c.h.b16 %v2144
      %v2525 = vunpack.c.l.b16 %v2145
      %v2526 = vunpack.c.h.b16 %v2145
      %v2527 = vunpack.c.l.b16 %v2146
      %v2528 = vunpack.c.h.b16 %v2146
      %v2529 = vunpack.c.l.b16 %v2147
      %v2530 = vunpack.c.h.b16 %v2147
      %v2531 = vunpack.c.l.b16 %v2148
      %v2532 = vunpack.c.h.b16 %v2148
      %v2533 = vunpack.c.l.b16 %v2149
      %v2534 = vunpack.c.h.b16 %v2149
      %v2535 = vunpack.c.l.b16 %v2150
      %v2536 = vunpack.c.h.b16 %v2150
      %v2537 = vunpack.c.l.b16 %v2151
      %v2538 = vunpack.c.h.b16 %v2151
      %v2539 = vunpack.c.l.b16 %v2152
      %v2540 = vunpack.c.h.b16 %v2152
      %v2541 = vunpack.c.l.b16 %v2153
      %v2542 = vunpack.c.h.b16 %v2153
      %v2543 = vunpack.c.l.b16 %v2154
      %v2544 = vunpack.c.h.b16 %v2154
      %v2545 = vunpack.c.l.b16 %v2155
      %v2546 = vunpack.c.h.b16 %v2155
      %v2547 = vunpack.c.l.b16 %v2156
      %v2548 = vunpack.c.h.b16 %v2156
      %v2549 = vunpack.c.l.b16 %v2157
      %v2550 = vunpack.c.h.b16 %v2157
      %v2551 = vunpack.c.l.b16 %v2158
      %v2552 = vunpack.c.h.b16 %v2158
      %v2553 = vunpack.c.l.b16 %v2159
      %v2554 = vunpack.c.h.b16 %v2159
      %v2555 = vunpack.c.l.b16 %v2160
      %v2556 = vunpack.c.h.b16 %v2160
      %v2557 = vunpack.c.l.b16 %v2161
      %v2558 = vunpack.c.h.b16 %v2161
      %v2559 = vunpack.c.l.b16 %v2162
      %v2560 = vunpack.c.h.b16 %v2162
      %v2561 = vunpack.c.l.b16 %v2163
      %v2562 = vunpack.c.h.b16 %v2163
      %v2563 = vunpack.c.l.b16 %v2164
      %v2564 = vunpack.c.h.b16 %v2164
      %v2565 = vunpack.c.l.b16 %v2165
      %v2566 = vunpack.c.h.b16 %v2165
      %v2567 = vunpack.c.l.b16 %v2166
      %v2568 = vunpack.c.h.b16 %v2166
      %v2569 = vunpack.c.l.b16 %v2167
      %v2570 = vunpack.c.h.b16 %v2167
      %v2571 = vunpack.c.l.b16 %v2168
      %v2572 = vunpack.c.h.b16 %v2168
      %v2573 = vunpack.c.l.b16 %v2169
      %v2574 = vunpack.c.h.b16 %v2169
      %v2575 = vunpack.c.l.b16 %v2170
      %v2576 = vunpack.c.h.b16 %v2170
      %v2577 = vunpack.c.l.b16 %v2171
      %v2578 = vunpack.c.h.b16 %v2171
      %v2579 = vunpack.c.l.b16 %v2172
      %v2580 = vunpack.c.h.b16 %v2172
      %v2581 = vunpack.c.l.b16 %v2173
      %v2582 = vunpack.c.h.b16 %v2173
      %v2583 = vunpack.c.l.b16 %v2174
      %v2584 = vunpack.c.h.b16 %v2174
      %v2585 = vunpack.c.l.b16 %v2175
      %v2586 = vunpack.c.h.b16 %v2175
      %v2587 = vunpack.c.l.b16 %v2176
      %v2588 = vunpack.c.h.b16 %v2176
      %v2589 = vunpack.c.l.b16 %v2177
      %v2590 = vunpack.c.h.b16 %v2177
      %v2591 = vunpack.c.l.b16 %v2178
      %v2592 = vunpack.c.h.b16 %v2178
      %v2593 = vunpack.c.l.b16 %v2179
      %v2594 = vunpack.c.h.b16 %v2179
      %v2595 = vunpack.c.l.b16 %v2180
      %v2596 = vunpack.c.h.b16 %v2180
      %v2597 = vunpack.c.l.b16 %v2181
      %v2598 = vunpack.c.h.b16 %v2181
      %v2599 = vunpack.c.l.b16 %v2182
      %v2600 = vunpack.c.h.b16 %v2182
      %v2601 = vunpack.c.l.b16 %v2183
      %v2602 = vunpack.c.h.b16 %v2183
      %v2603 = vunpack.c.l.b16 %v2184
      %v2604 = vunpack.c.h.b16 %v2184
      %v2605 = vunpack.c.l.b16 %v2185
      %v2606 = vunpack.c.h.b16 %v2185
      %v2607 = vunpack.c.l.b16 %v2186
      %v2608 = vunpack.c.h.b16 %v2186
      %v2609 = vunpack.c.l.b16 %v2187
      %v2610 = vunpack.c.h.b16 %v2187
      %v2611 = vunpack.c.l.b16 %v2188
      %v2612 = vunpack.c.h.b16 %v2188
      %v2613 = vunpack.c.l.b16 %v2189
      %v2614 = vunpack.c.h.b16 %v2189
      %v2615 = vunpack.c.l.b16 %v2190
      %v2616 = vunpack.c.h.b16 %v2190
      %v2617 = vunpack.c.l.b16 %v2191
      %v2618 = vunpack.c.h.b16 %v2191
      %v2619 = vunpack.c.l.b16 %v2192
      %v2620 = vunpack.c.h.b16 %v2192
      %v2621 = vunpack.c.l.b16 %v2193
      %v2622 = vunpack.c.h.b16 %v2193
      %v2623 = vunpack.c.l.b16 %v2194
      %v2624 = vunpack.c.h.b16 %v2194
      %v2625 = vunpack.c.l.b16 %v2195
      %v2626 = vunpack.c.h.b16 %v2195
      %v2627 = vunpack.c.l.b16 %v2196
      %v2628 = vunpack.c.h.b16 %v2196
      %v2629 = vunpack.c.l.b16 %v2197
      %v2630 = vunpack.c.h.b16 %v2197
      %v2631 = vunpack.c.l.b16 %v2198
      %v2632 = vunpack.c.h.b16 %v2198
      %v2633 = vunpack.c.l.b16 %v2199
      %v2634 = vunpack.c.h.b16 %v2199
      %v2635 = vunpack.c.l.b16 %v2200
      %v2636 = vunpack.c.h.b16 %v2200
      %v2637 = vunpack.c.l.b16 %v2201
      %v2638 = vunpack.c.h.b16 %v2201
      %v2639 = vunpack.c.l.b16 %v2202
      %v2640 = vunpack.c.h.b16 %v2202
      %v2641 = vunpack.c.l.b16 %v2203
      %v2642 = vunpack.c.h.b16 %v2203
      %v2643 = vunpack.c.l.b16 %v2204
      %v2644 = vunpack.c.h.b16 %v2204
      %v2645 = vunpack.c.l.b16 %v2205
      %v2646 = vunpack.c.h.b16 %v2205
      %v2647 = vunpack.c.l.b16 %v2206
      %v2648 = vunpack.c.h.b16 %v2206
      %v2649 = vunpack.c.l.b16 %v2207
      %v2650 = vunpack.c.h.b16 %v2207
      %v2651 = vunpack.c.l.b16 %v2208
      %v2652 = vunpack.c.h.b16 %v2208
      %v2653 = vpack.c.b16 %v2367, %v2365
      %v2654 = vpack.c.b16 %v2368, %v2366
      %v2655 = vpack.c.b16 %v2371, %v2369
      %v2656 = vpack.c.b16 %v2372, %v2370
      %v2657 = vpack.c.b16 %v2375, %v2373
      %v2658 = vpack.c.b16 %v2376, %v2374
      %v2659 = vpack.c.b16 %v2379, %v2377
      %v2660 = vpack.c.b16 %v2380, %v2378
      %v2661 = vpack.c.b16 %v2383, %v2381
      %v2662 = vpack.c.b16 %v2384, %v2382
      %v2663 = vpack.c.b16 %v2387, %v2385
      %v2664 = vpack.c.b16 %v2388, %v2386
      %v2665 = vpack.c.b16 %v2391, %v2389
      %v2666 = vpack.c.b16 %v2392, %v2390
      %v2667 = vpack.c.b16 %v2395, %v2393
      %v2668 = vpack.c.b16 %v2396, %v2394
      %v2669 = vpack.c.b16 %v2399, %v2397
      %v2670 = vpack.c.b16 %v2400, %v2398
      %v2671 = vpack.c.b16 %v2403, %v2401
      %v2672 = vpack.c.b16 %v2404, %v2402
      %v2673 = vpack.c.b16 %v2407, %v2405
      %v2674 = vpack.c.b16 %v2408, %v2406
      %v2675 = vpack.c.b16 %v2411, %v2409
      %v2676 = vpack.c.b16 %v2412, %v2410
      %v2677 = vpack.c.b16 %v2415, %v2413
      %v2678 = vpack.c.b16 %v2416, %v2414
      %v2679 = vpack.c.b16 %v2419, %v2417
      %v2680 = vpack.c.b16 %v2420, %v2418
      %v2681 = vpack.c.b16 %v2423, %v2421
      %v2682 = vpack.c.b16 %v2424, %v2422
      %v2683 = vpack.c.b16 %v2427, %v2425
      %v2684 = vpack.c.b16 %v2428, %v2426
      %v2685 = vpack.c.b16 %v2431, %v2429
      %v2686 = vpack.c.b16 %v2432, %v2430
      %v2687 = vpack.c.b16 %v2435, %v2433
      %v2688 = vpack.c.b16 %v2436, %v2434
      %v2689 = vpack.c.b16 %v2439, %v2437
      %v2690 = vpack.c.b16 %v2440, %v2438
      %v2691 = vpack.c.b16 %v2443, %v2441
      %v2692 = vpack.c.b16 %v2444, %v2442
      %v2693 = vpack.c.b16 %v2447, %v2445
      %v2694 = vpack.c.b16 %v2448, %v2446
      %v2695 = vpack.c.b16 %v2451, %v2449
      %v2696 = vpack.c.b16 %v2452, %v2450
      %v2697 = vpack.c.b16 %v2455, %v2453
      %v2698 = vpack.c.b16 %v2456, %v2454
      %v2699 = vpack.c.b16 %v2459, %v2457
      %v2700 = vpack.c.b16 %v2460, %v2458
      %v2701 = vpack.c.b16 %v2463, %v2461
      %v2702 = vpack.c.b16 %v2464, %v2462
      %v2703 = vpack.c.b16 %v2467, %v2465
      %v2704 = vpack.c.b16 %v2468, %v2466
      %v2705 = vpack.c.b16 %v2471, %v2469
      %v2706 = vpack.c.b16 %v2472, %v2470
      %v2707 = vpack.c.b16 %v2475, %v2473
      %v2708 = vpack.c.b16 %v2476, %v2474
      %v2709 = vpack.c.b16 %v2479, %v2477
      %v2710 = vpack.c.b16 %v2480, %v2478
      %v2711 = vpack.c.b16 %v2483, %v2481
      %v2712 = vpack.c.b16 %v2484, %v2482
      %v2713 = vpack.c.b16 %v2487, %v2485
      %v2714 = vpack.c.b16 %v2488, %v2486
      %v2715 = vpack.c.b16 %v2491, %v2489
      %v2716 = vpack.c.b16 %v2492, %v2490
      %v2717 = vpack.c.b16 %v2495, %v2493
      %v2718 = vpack.c.b16 %v2496, %v2494
      %v2719 = vpack.c.b16 %v2499, %v2497
      %v2720 = vpack.c.b16 %v2500, %v2498
      %v2721 = vpack.c.b16 %v2503, %v2501
      %v2722 = vpack.c.b16 %v2504, %v2502
      %v2723 = vpack.c.b16 %v2507, %v2505
      %v2724 = vpack.c.b16 %v2508, %v2506
      %v2725 = vpack.c.b16 %v2511, %v2509
      %v2726 = vpack.c.b16 %v2512, %v2510
      %v2727 = vpack.c.b16 %v2515, %v2513
      %v2728 = vpack.c.b16 %v2516, %v2514
      %v2729 = vpack.c.b16 %v2519, %v2517
      %v2730 = vpack.c.b16 %v2520, %v2518
      %v2731 = vpack.c.b16 %v2523, %v2521
      %v2732 = vpack.c.b16 %v2524, %v2522
      %v2733 = vpack.c.b16 %v2527, %v2525
      %v2734 = vpack.c.b16 %v2528, %v2526
      %v2735 = vpack.c.b16 %v2531, %v2529
      %v2736 = vpack.c.b16 %v2532, %v2530
      %v2737 = vpack.c.b16 %v2535, %v2533
      %v2738 = vpack.c.b16 %v2536, %v2534
      %v2739 = vpack.c.b16 %v2539, %v2537
      %v2740 = vpack.c.b16 %v2540, %v2538
      %v2741 = vpack.c.b16 %v2543, %v2541
      %v2742 = vpack.c.b16 %v2544, %v2542
      %v2743 = vpack.c.b16 %v2547, %v2545
      %v2744 = vpack.c.b16 %v2548, %v2546
      %v2745 = vpack.c.b16 %v2551, %v2549
      %v2746 = vpack.c.b16 %v2552, %v2550
      %v2747 = vpack.c.b16 %v2555, %v2553
      %v2748 = vpack.c.b16 %v2556, %v2554
      %v2749 = vpack.c.b16 %v2559, %v2557
      %v2750 = vpack.c.b16 %v2560, %v2558
      %v2751 = vpack.c.b16 %v2563, %v2561
      %v2752 = vpack.c.b16 %v2564, %v2562
      %v2753 = vpack.c.b16 %v2567, %v2565
      %v2754 = vpack.c.b16 %v2568, %v2566
      %v2755 = vpack.c.b16 %v2571, %v2569
      %v2756 = vpack.c.b16 %v2572, %v2570
      %v2757 = vpack.c.b16 %v2575, %v2573
      %v2758 = vpack.c.b16 %v2576, %v2574
      %v2759 = vpack.c.b16 %v2579, %v2577
      %v2760 = vpack.c.b16 %v2580, %v2578
      %v2761 = vpack.c.b16 %v2583, %v2581
      %v2762 = vpack.c.b16 %v2584, %v2582
      %v2763 = vpack.c.b16 %v2587, %v2585
      %v2764 = vpack.c.b16 %v2588, %v2586
      %v2765 = vpack.c.b16 %v2591, %v2589
      %v2766 = vpack.c.b16 %v2592, %v2590
      %v2767 = vpack.c.b16 %v2595, %v2593
      %v2768 = vpack.c.b16 %v2596, %v2594
      %v2769 = vpack.c.b16 %v2599, %v2597
      %v2770 = vpack.c.b16 %v2600, %v2598
      %v2771 = vpack.c.b16 %v2603, %v2601
      %v2772 = vpack.c.b16 %v2604, %v2602
      %v2773 = vpack.c.b16 %v2607, %v2605
      %v2774 = vpack.c.b16 %v2608, %v2606
      %v2775 = vpack.c.b16 %v2611, %v2609
      %v2776 = vpack.c.b16 %v2612, %v2610
      %v2777 = vpack.c.b16 %v2615, %v2613
      %v2778 = vpack.c.b16 %v2616, %v2614
      %v2779 = vpack.c.b16 %v2619, %v2617
      %v2780 = vpack.c.b16 %v2620, %v2618
      %v2781 = vpack.c.b16 %v2623, %v2621
      %v2782 = vpack.c.b16 %v2624, %v2622
      %v2783 = vpack.c.b16 %v2627, %v2625
      %v2784 = vpack.c.b16 %v2628, %v2626
      %v2785 = vpack.c.b16 %v2631, %v2629
      %v2786 = vpack.c.b16 %v2632, %v2630
      %v2787 = vpack.c.b16 %v2635, %v2633
      %v2788 = vpack.c.b16 %v2636, %v2634
      %v2789 = vpack.c.b16 %v2639, %v2637
      %v2790 = vpack.c.b16 %v2640, %v2638
      %v2791 = vpack.c.b16 %v2643, %v2641
      %v2792 = vpack.c.b16 %v2644, %v2642
      %v2793 = vpack.c.b16 %v2647, %v2645
      %v2794 = vpack.c.b16 %v2648, %v2646
      %v2795 = vpack.c.b16 %v2651, %v2649
      %v2796 = vpack.c.b16 %v2652, %v2650
      %2941 = vmatprep.subr.bf16.mxu0 %v2668
      %2942 = vmatpush1.bf16.msra.mxu0 %v2667
      %2943 = vmatprep.subr.bf16.mxu0 %v2666
      %2944 = vmatpush1.bf16.msra.mxu0 %v2665
      %2945 = vmatprep.subr.bf16.mxu0 %v2664
      %2946 = vmatpush1.bf16.msra.mxu0 %v2663
      %2947 = vmatprep.subr.bf16.mxu0 %v2662
      %2948 = vmatpush1.bf16.msra.mxu0 %v2661
      %2949 = vmatprep.subr.bf16.mxu0 %v2660
      %2950 = vmatpush1.bf16.msra.mxu0 %v2659
      %2951 = vmatprep.subr.bf16.mxu0 %v2658
      %2952 = vmatpush1.bf16.msra.mxu0 %v2657
      %2953 = vmatprep.subr.bf16.mxu0 %v2656
      %2954 = vmatpush1.bf16.msra.mxu0 %v2655
      %2955 = vmatprep.subr.bf16.mxu0 %v2654
      %2956 = vmatpush1.bf16.msra.mxu0 %v2653
      %2957 = vmatprep.subr.bf16.mxu0 %v2684
      %2958 = vmatpush2.bf16.msra.mxu0 %v2683
      %2959 = vmatprep.subr.bf16.mxu0 %v2682
      %2960 = vmatpush2.bf16.msra.mxu0 %v2681
      %2961 = vmatprep.subr.bf16.mxu0 %v2680
      %2962 = vmatpush2.bf16.msra.mxu0 %v2679
      %2963 = vmatprep.subr.bf16.mxu0 %v2678
      %2964 = vmatpush2.bf16.msra.mxu0 %v2677
      %2965 = vmatprep.subr.bf16.mxu0 %v2676
      %2966 = vmatpush2.bf16.msra.mxu0 %v2675
      %2967 = vmatprep.subr.bf16.mxu0 %v2674
      %2968 = vmatpush2.bf16.msra.mxu0 %v2673
      %2969 = vmatprep.subr.bf16.mxu0 %v2672
      %2970 = vmatpush2.bf16.msra.mxu0 %v2671
      %2971 = vmatprep.subr.bf16.mxu0 %v2670
      %2972 = vmatpush2.bf16.msra.mxu0 %v2669
      %2973 = vmatprep.mubr.bf16.mxu0 %v2038
      %2974 = vmatmul.mubr.bf16.gmra.mxu0 %v2024
      %v2975 = vpop.f32.mrf.mxu0
      %v2976 = vadd.f32 %v2214, %v2975
      %v2977 = vpop.f32.mrf.mxu0
      %v2978 = vadd.f32 %v2218, %v2977
      %v2979 = vpop.f32.mrf.mxu0
      %v2980 = vpop.f32.mrf.mxu0
      %2981 = vdwg.mxu0
      %2982 = vmatprep.subr.bf16.mxu0 %v2700
      %2983 = vmatpush1.bf16.msra.mxu0 %v2699
      %2984 = vmatprep.subr.bf16.mxu0 %v2698
      %2985 = vmatpush1.bf16.msra.mxu0 %v2697
      %2986 = vmatprep.subr.bf16.mxu0 %v2696
      %2987 = vmatpush1.bf16.msra.mxu0 %v2695
      %2988 = vmatprep.subr.bf16.mxu0 %v2694
      %2989 = vmatpush1.bf16.msra.mxu0 %v2693
      %2990 = vmatprep.subr.bf16.mxu0 %v2692
      %2991 = vmatpush1.bf16.msra.mxu0 %v2691
      %2992 = vmatprep.subr.bf16.mxu0 %v2690
      %2993 = vmatpush1.bf16.msra.mxu0 %v2689
      %2994 = vmatprep.subr.bf16.mxu0 %v2688
      %2995 = vmatpush1.bf16.msra.mxu0 %v2687
      %2996 = vmatprep.subr.bf16.mxu0 %v2686
      %2997 = vmatpush1.bf16.msra.mxu0 %v2685
      %2998 = vmatprep.subr.bf16.mxu0 %v2716
      %2999 = vmatpush2.bf16.msra.mxu0 %v2715
      %3000 = vmatprep.subr.bf16.mxu0 %v2714
      %3001 = vmatpush2.bf16.msra.mxu0 %v2713
      %3002 = vmatprep.subr.bf16.mxu0 %v2712
      %3003 = vmatpush2.bf16.msra.mxu0 %v2711
      %3004 = vmatprep.subr.bf16.mxu0 %v2710
      %3005 = vmatpush2.bf16.msra.mxu0 %v2709
      %3006 = vmatprep.subr.bf16.mxu0 %v2708
      %3007 = vmatpush2.bf16.msra.mxu0 %v2707
      %3008 = vmatprep.subr.bf16.mxu0 %v2706
      %3009 = vmatpush2.bf16.msra.mxu0 %v2705
      %3010 = vmatprep.subr.bf16.mxu0 %v2704
      %3011 = vmatpush2.bf16.msra.mxu0 %v2703
      %3012 = vmatprep.subr.bf16.mxu0 %v2702
      %3013 = vmatpush2.bf16.msra.mxu0 %v2701
      %3014 = vmatprep.mubr.bf16.mxu0 %v2025
      %3015 = vmatmul.mubr.bf16.gmra.mxu0 %v2041
      %v3016 = vpop.f32.mrf.mxu0
      %v3017 = vadd.f32 %v2976, %v3016
      %v3018 = vpop.f32.mrf.mxu0
      %v3019 = vadd.f32 %v2978, %v3018
      %v3020 = vpop.f32.mrf.mxu0
      %v3021 = vpop.f32.mrf.mxu0
      %3022 = vdwg.mxu0
      %3023 = vmatprep.subr.bf16.mxu0 %v2732
      %3024 = vmatpush1.bf16.msra.mxu0 %v2731
      %3025 = vmatprep.subr.bf16.mxu0 %v2730
      %3026 = vmatpush1.bf16.msra.mxu0 %v2729
      %3027 = vmatprep.subr.bf16.mxu0 %v2728
      %3028 = vmatpush1.bf16.msra.mxu0 %v2727
      %3029 = vmatprep.subr.bf16.mxu0 %v2726
      %3030 = vmatpush1.bf16.msra.mxu0 %v2725
      %3031 = vmatprep.subr.bf16.mxu0 %v2724
      %3032 = vmatpush1.bf16.msra.mxu0 %v2723
      %3033 = vmatprep.subr.bf16.mxu0 %v2722
      %3034 = vmatpush1.bf16.msra.mxu0 %v2721
      %3035 = vmatprep.subr.bf16.mxu0 %v2720
      %3036 = vmatpush1.bf16.msra.mxu0 %v2719
      %3037 = vmatprep.subr.bf16.mxu0 %v2718
      %3038 = vmatpush1.bf16.msra.mxu0 %v2717
      %3039 = vmatprep.subr.bf16.mxu0 %v2748
      %3040 = vmatpush2.bf16.msra.mxu0 %v2747
      %3041 = vmatprep.subr.bf16.mxu0 %v2746
      %3042 = vmatpush2.bf16.msra.mxu0 %v2745
      %3043 = vmatprep.subr.bf16.mxu0 %v2744
      %3044 = vmatpush2.bf16.msra.mxu0 %v2743
      %3045 = vmatprep.subr.bf16.mxu0 %v2742
      %3046 = vmatpush2.bf16.msra.mxu0 %v2741
      %3047 = vmatprep.subr.bf16.mxu0 %v2740
      %3048 = vmatpush2.bf16.msra.mxu0 %v2739
      %3049 = vmatprep.subr.bf16.mxu0 %v2738
      %3050 = vmatpush2.bf16.msra.mxu0 %v2737
      %3051 = vmatprep.subr.bf16.mxu0 %v2736
      %3052 = vmatpush2.bf16.msra.mxu0 %v2735
      %3053 = vmatprep.subr.bf16.mxu0 %v2734
      %3054 = vmatpush2.bf16.msra.mxu0 %v2733
      %3055 = vmatprep.mubr.bf16.mxu0 %v2052
      %3056 = vmatmul.mubr.bf16.gmra.mxu0 %v2049
      %v3057 = vpop.f32.mrf.mxu0
      %v3058 = vadd.f32 %v3017, %v3057
      %v3059 = vpop.f32.mrf.mxu0
      %v3060 = vadd.f32 %v3019, %v3059
      %v3061 = vpop.f32.mrf.mxu0
      %v3062 = vpop.f32.mrf.mxu0
      %3063 = vdwg.mxu0
      %3064 = vmatprep.subr.bf16.mxu0 %v2764
      %3065 = vmatpush1.bf16.msra.mxu0 %v2763
      %3066 = vmatprep.subr.bf16.mxu0 %v2762
      %3067 = vmatpush1.bf16.msra.mxu0 %v2761
      %3068 = vmatprep.subr.bf16.mxu0 %v2760
      %3069 = vmatpush1.bf16.msra.mxu0 %v2759
      %3070 = vmatprep.subr.bf16.mxu0 %v2758
      %3071 = vmatpush1.bf16.msra.mxu0 %v2757
      %3072 = vmatprep.subr.bf16.mxu0 %v2756
      %3073 = vmatpush1.bf16.msra.mxu0 %v2755
      %3074 = vmatprep.subr.bf16.mxu0 %v2754
      %3075 = vmatpush1.bf16.msra.mxu0 %v2753
      %3076 = vmatprep.subr.bf16.mxu0 %v2752
      %3077 = vmatpush1.bf16.msra.mxu0 %v2751
      %3078 = vmatprep.subr.bf16.mxu0 %v2750
      %3079 = vmatpush1.bf16.msra.mxu0 %v2749
      %3080 = vmatprep.subr.bf16.mxu0 %v2780
      %3081 = vmatpush2.bf16.msra.mxu0 %v2779
      %3082 = vmatprep.subr.bf16.mxu0 %v2778
      %3083 = vmatpush2.bf16.msra.mxu0 %v2777
      %3084 = vmatprep.subr.bf16.mxu0 %v2776
      %3085 = vmatpush2.bf16.msra.mxu0 %v2775
      %3086 = vmatprep.subr.bf16.mxu0 %v2774
      %3087 = vmatpush2.bf16.msra.mxu0 %v2773
      %3088 = vmatprep.subr.bf16.mxu0 %v2772
      %3089 = vmatpush2.bf16.msra.mxu0 %v2771
      %3090 = vmatprep.subr.bf16.mxu0 %v2770
      %3091 = vmatpush2.bf16.msra.mxu0 %v2769
      %3092 = vmatprep.subr.bf16.mxu0 %v2768
      %3093 = vmatpush2.bf16.msra.mxu0 %v2767
      %3094 = vmatprep.subr.bf16.mxu0 %v2766
      %3095 = vmatpush2.bf16.msra.mxu0 %v2765
      %3096 = vmatprep.mubr.bf16.mxu0 %v2060
      %3097 = vmatmul.mubr.bf16.gmra.mxu0 %v2026
      %v3098 = vpop.f32.mrf.mxu0
      %v3099 = vadd.f32 %v3058, %v3098
      %v3100 = vpop.f32.mrf.mxu0
      %v3101 = vadd.f32 %v3060, %v3100
      %v3102 = vpop.f32.mrf.mxu0
      %v3103 = vpop.f32.mrf.mxu0
      %3104 = vdwg.mxu0
      %3105 = vmatprep.subr.bf16.mxu0 %v2796
      %3106 = vmatpush1.bf16.msra.mxu0 %v2795
      %3107 = vmatprep.subr.bf16.mxu0 %v2794
      %3108 = vmatpush1.bf16.msra.mxu0 %v2793
      %3109 = vmatprep.subr.bf16.mxu0 %v2792
      %3110 = vmatpush1.bf16.msra.mxu0 %v2791
      %3111 = vmatprep.subr.bf16.mxu0 %v2790
      %3112 = vmatpush1.bf16.msra.mxu0 %v2789
      %3113 = vmatprep.subr.bf16.mxu0 %v2788
      %3114 = vmatpush1.bf16.msra.mxu0 %v2787
      %3115 = vmatprep.subr.bf16.mxu0 %v2786
      %3116 = vmatpush1.bf16.msra.mxu0 %v2785
      %3117 = vmatprep.subr.bf16.mxu0 %v2784
      %3118 = vmatpush1.bf16.msra.mxu0 %v2783
      %3119 = vmatprep.subr.bf16.mxu0 %v2782
      %3120 = vmatpush1.bf16.msra.mxu0 %v2781
      %3121 = vmatprep.subr.bf16.mxu0 0
      %3122 = vmatpush2.bf16.msra.mxu0 0
      %3123 = vmatprep.subr.bf16.mxu0 0
      %3124 = vmatpush2.bf16.msra.mxu0 0
      %3125 = vmatprep.subr.bf16.mxu0 0
      %3126 = vmatpush2.bf16.msra.mxu0 0
      %3127 = vmatprep.subr.bf16.mxu0 0
      %3128 = vmatpush2.bf16.msra.mxu0 0
      %3129 = vmatprep.subr.bf16.mxu0 0
      %3130 = vmatpush2.bf16.msra.mxu0 0
      %3131 = vmatprep.subr.bf16.mxu0 0
      %3132 = vmatpush2.bf16.msra.mxu0 0
      %3133 = vmatprep.subr.bf16.mxu0 0
      %3134 = vmatpush2.bf16.msra.mxu0 0
      %3135 = vmatprep.subr.bf16.mxu0 0
      %3136 = vmatpush2.bf16.msra.mxu0 0
      %3137 = vmatprep.mubr.bf16.mxu0 0
      %3138 = vmatmul.mubr.bf16.gmra.mxu0 %v2063
      %v3139 = vpop.f32.mrf.mxu0
      %v3140 = vadd.f32 %v3099, %v3139
      %v3141 = vpop.f32.mrf.mxu0
      %v3142 = vadd.f32 %v3101, %v3141
      %v3143 = vpop.f32.mrf.mxu0
      %v3144 = vpop.f32.mrf.mxu0
      %3145 = vdwg.mxu0
      %v3146 = vmax.f32 %v3140, 0.0
      %v3147 = vmax.f32 %v3142, 0.0
      %v3148 = vpack.c.bf16 %v3146, %v3146
      %v3149 = vpack.c.bf16 %v3147, %v3147
      %v3151 = vshrl.u32 %v2027, 16
      %v3153 = vshll.u32 %v2027, 16
      %v3155 = vrot.slane %v3153, 1
      %v3156 = vor.u32 %v3151, %v3155
      %v3159 = vrot.slane %v2027, 1
      %3161 = vmatprep.subr.bf16.mxu0 %v2668
      %3162 = vmatpush1.bf16.msra.mxu0 %v2667
      %3163 = vmatprep.subr.bf16.mxu0 %v2666
      %3164 = vmatpush1.bf16.msra.mxu0 %v2665
      %3165 = vmatprep.subr.bf16.mxu0 %v2664
      %3166 = vmatpush1.bf16.msra.mxu0 %v2663
      %3167 = vmatprep.subr.bf16.mxu0 %v2662
      %3168 = vmatpush1.bf16.msra.mxu0 %v2661
      %3169 = vmatprep.subr.bf16.mxu0 %v2660
      %3170 = vmatpush1.bf16.msra.mxu0 %v2659
      %3171 = vmatprep.subr.bf16.mxu0 %v2658
      %3172 = vmatpush1.bf16.msra.mxu0 %v2657
      %3173 = vmatprep.subr.bf16.mxu0 %v2656
      %3174 = vmatpush1.bf16.msra.mxu0 %v2655
      %3175 = vmatprep.subr.bf16.mxu0 %v2654
      %3176 = vmatpush1.bf16.msra.mxu0 %v2653
      %3177 = vmatprep.subr.bf16.mxu0 %v2684
      %3178 = vmatpush2.bf16.msra.mxu0 %v2683
      %3179 = vmatprep.subr.bf16.mxu0 %v2682
      %3180 = vmatpush2.bf16.msra.mxu0 %v2681
      %3181 = vmatprep.subr.bf16.mxu0 %v2680
      %3182 = vmatpush2.bf16.msra.mxu0 %v2679
      %3183 = vmatprep.subr.bf16.mxu0 %v2678
      %3184 = vmatpush2.bf16.msra.mxu0 %v2677
      %3185 = vmatprep.subr.bf16.mxu0 %v2676
      %3186 = vmatpush2.bf16.msra.mxu0 %v2675
      %3187 = vmatprep.subr.bf16.mxu0 %v2674
      %3188 = vmatpush2.bf16.msra.mxu0 %v2673
      %3189 = vmatprep.subr.bf16.mxu0 %v2672
      %3190 = vmatpush2.bf16.msra.mxu0 %v2671
      %3191 = vmatprep.subr.bf16.mxu0 %v2670
      %3192 = vmatpush2.bf16.msra.mxu0 %v2669
      %3193 = vmatprep.mubr.bf16.mxu0 %v2049
      %3194 = vmatmul.mubr.bf16.gmra.mxu0 %v2025
      %v3195 = vpop.f32.mrf.mxu0
      %v3196 = vadd.f32 %v2214, %v3195
      %v3197 = vpop.f32.mrf.mxu0
      %v3198 = vadd.f32 %v2218, %v3197
      %v3199 = vpop.f32.mrf.mxu0
      %v3200 = vpop.f32.mrf.mxu0
      %3201 = vdwg.mxu0
      %3202 = vmatprep.subr.bf16.mxu0 %v2700
      %3203 = vmatpush1.bf16.msra.mxu0 %v2699
      %3204 = vmatprep.subr.bf16.mxu0 %v2698
      %3205 = vmatpush1.bf16.msra.mxu0 %v2697
      %3206 = vmatprep.subr.bf16.mxu0 %v2696
      %3207 = vmatpush1.bf16.msra.mxu0 %v2695
      %3208 = vmatprep.subr.bf16.mxu0 %v2694
      %3209 = vmatpush1.bf16.msra.mxu0 %v2693
      %3210 = vmatprep.subr.bf16.mxu0 %v2692
      %3211 = vmatpush1.bf16.msra.mxu0 %v2691
      %3212 = vmatprep.subr.bf16.mxu0 %v2690
      %3213 = vmatpush1.bf16.msra.mxu0 %v2689
      %3214 = vmatprep.subr.bf16.mxu0 %v2688
      %3215 = vmatpush1.bf16.msra.mxu0 %v2687
      %3216 = vmatprep.subr.bf16.mxu0 %v2686
      %3217 = vmatpush1.bf16.msra.mxu0 %v2685
      %3218 = vmatprep.subr.bf16.mxu0 %v2716
      %3219 = vmatpush2.bf16.msra.mxu0 %v2715
      %3220 = vmatprep.subr.bf16.mxu0 %v2714
      %3221 = vmatpush2.bf16.msra.mxu0 %v2713
      %3222 = vmatprep.subr.bf16.mxu0 %v2712
      %3223 = vmatpush2.bf16.msra.mxu0 %v2711
      %3224 = vmatprep.subr.bf16.mxu0 %v2710
      %3225 = vmatpush2.bf16.msra.mxu0 %v2709
      %3226 = vmatprep.subr.bf16.mxu0 %v2708
      %3227 = vmatpush2.bf16.msra.mxu0 %v2707
      %3228 = vmatprep.subr.bf16.mxu0 %v2706
      %3229 = vmatpush2.bf16.msra.mxu0 %v2705
      %3230 = vmatprep.subr.bf16.mxu0 %v2704
      %3231 = vmatpush2.bf16.msra.mxu0 %v2703
      %3232 = vmatprep.subr.bf16.mxu0 %v2702
      %3233 = vmatpush2.bf16.msra.mxu0 %v2701
      %3234 = vmatprep.mubr.bf16.mxu0 %v2026
      %3235 = vmatmul.mubr.bf16.gmra.mxu0 %v2052
      %v3236 = vpop.f32.mrf.mxu0
      %v3237 = vadd.f32 %v3196, %v3236
      %v3238 = vpop.f32.mrf.mxu0
      %v3239 = vadd.f32 %v3198, %v3238
      %v3240 = vpop.f32.mrf.mxu0
      %v3241 = vpop.f32.mrf.mxu0
      %3242 = vdwg.mxu0
      %3243 = vmatprep.subr.bf16.mxu0 %v2732
      %3244 = vmatpush1.bf16.msra.mxu0 %v2731
      %3245 = vmatprep.subr.bf16.mxu0 %v2730
      %3246 = vmatpush1.bf16.msra.mxu0 %v2729
      %3247 = vmatprep.subr.bf16.mxu0 %v2728
      %3248 = vmatpush1.bf16.msra.mxu0 %v2727
      %3249 = vmatprep.subr.bf16.mxu0 %v2726
      %3250 = vmatpush1.bf16.msra.mxu0 %v2725
      %3251 = vmatprep.subr.bf16.mxu0 %v2724
      %3252 = vmatpush1.bf16.msra.mxu0 %v2723
      %3253 = vmatprep.subr.bf16.mxu0 %v2722
      %3254 = vmatpush1.bf16.msra.mxu0 %v2721
      %3255 = vmatprep.subr.bf16.mxu0 %v2720
      %3256 = vmatpush1.bf16.msra.mxu0 %v2719
      %3257 = vmatprep.subr.bf16.mxu0 %v2718
      %3258 = vmatpush1.bf16.msra.mxu0 %v2717
      %3259 = vmatprep.subr.bf16.mxu0 %v2748
      %3260 = vmatpush2.bf16.msra.mxu0 %v2747
      %3261 = vmatprep.subr.bf16.mxu0 %v2746
      %3262 = vmatpush2.bf16.msra.mxu0 %v2745
      %3263 = vmatprep.subr.bf16.mxu0 %v2744
      %3264 = vmatpush2.bf16.msra.mxu0 %v2743
      %3265 = vmatprep.subr.bf16.mxu0 %v2742
      %3266 = vmatpush2.bf16.msra.mxu0 %v2741
      %3267 = vmatprep.subr.bf16.mxu0 %v2740
      %3268 = vmatpush2.bf16.msra.mxu0 %v2739
      %3269 = vmatprep.subr.bf16.mxu0 %v2738
      %3270 = vmatpush2.bf16.msra.mxu0 %v2737
      %3271 = vmatprep.subr.bf16.mxu0 %v2736
      %3272 = vmatpush2.bf16.msra.mxu0 %v2735
      %3273 = vmatprep.subr.bf16.mxu0 %v2734
      %3274 = vmatpush2.bf16.msra.mxu0 %v2733
      %3275 = vmatprep.mubr.bf16.mxu0 %v2063
      %3276 = vmatmul.mubr.bf16.gmra.mxu0 %v2060
      %v3277 = vpop.f32.mrf.mxu0
      %v3278 = vadd.f32 %v3237, %v3277
      %v3279 = vpop.f32.mrf.mxu0
      %v3280 = vadd.f32 %v3239, %v3279
      %v3281 = vpop.f32.mrf.mxu0
      %v3282 = vpop.f32.mrf.mxu0
      %3283 = vdwg.mxu0
      %3284 = vmatprep.subr.bf16.mxu0 %v2764
      %3285 = vmatpush1.bf16.msra.mxu0 %v2763
      %3286 = vmatprep.subr.bf16.mxu0 %v2762
      %3287 = vmatpush1.bf16.msra.mxu0 %v2761
      %3288 = vmatprep.subr.bf16.mxu0 %v2760
      %3289 = vmatpush1.bf16.msra.mxu0 %v2759
      %3290 = vmatprep.subr.bf16.mxu0 %v2758
      %3291 = vmatpush1.bf16.msra.mxu0 %v2757
      %3292 = vmatprep.subr.bf16.mxu0 %v2756
      %3293 = vmatpush1.bf16.msra.mxu0 %v2755
      %3294 = vmatprep.subr.bf16.mxu0 %v2754
      %3295 = vmatpush1.bf16.msra.mxu0 %v2753
      %3296 = vmatprep.subr.bf16.mxu0 %v2752
      %3297 = vmatpush1.bf16.msra.mxu0 %v2751
      %3298 = vmatprep.subr.bf16.mxu0 %v2750
      %3299 = vmatpush1.bf16.msra.mxu0 %v2749
      %3300 = vmatprep.subr.bf16.mxu0 %v2780
      %3301 = vmatpush2.bf16.msra.mxu0 %v2779
      %3302 = vmatprep.subr.bf16.mxu0 %v2778
      %3303 = vmatpush2.bf16.msra.mxu0 %v2777
      %3304 = vmatprep.subr.bf16.mxu0 %v2776
      %3305 = vmatpush2.bf16.msra.mxu0 %v2775
      %3306 = vmatprep.subr.bf16.mxu0 %v2774
      %3307 = vmatpush2.bf16.msra.mxu0 %v2773
      %3308 = vmatprep.subr.bf16.mxu0 %v2772
      %3309 = vmatpush2.bf16.msra.mxu0 %v2771
      %3310 = vmatprep.subr.bf16.mxu0 %v2770
      %3311 = vmatpush2.bf16.msra.mxu0 %v2769
      %3312 = vmatprep.subr.bf16.mxu0 %v2768
      %3313 = vmatpush2.bf16.msra.mxu0 %v2767
      %3314 = vmatprep.subr.bf16.mxu0 %v2766
      %3315 = vmatpush2.bf16.msra.mxu0 %v2765
      %3316 = vmatprep.mubr.bf16.mxu0 %v3156
      %3317 = vmatmul.mubr.bf16.gmra.mxu0 %v2027
      %v3318 = vpop.f32.mrf.mxu0
      %v3319 = vadd.f32 %v3278, %v3318
      %v3320 = vpop.f32.mrf.mxu0
      %v3321 = vadd.f32 %v3280, %v3320
      %v3322 = vpop.f32.mrf.mxu0
      %v3323 = vpop.f32.mrf.mxu0
      %3324 = vdwg.mxu0
      %3325 = vmatprep.subr.bf16.mxu0 %v2796
      %3326 = vmatpush1.bf16.msra.mxu0 %v2795
      %3327 = vmatprep.subr.bf16.mxu0 %v2794
      %3328 = vmatpush1.bf16.msra.mxu0 %v2793
      %3329 = vmatprep.subr.bf16.mxu0 %v2792
      %3330 = vmatpush1.bf16.msra.mxu0 %v2791
      %3331 = vmatprep.subr.bf16.mxu0 %v2790
      %3332 = vmatpush1.bf16.msra.mxu0 %v2789
      %3333 = vmatprep.subr.bf16.mxu0 %v2788
      %3334 = vmatpush1.bf16.msra.mxu0 %v2787
      %3335 = vmatprep.subr.bf16.mxu0 %v2786
      %3336 = vmatpush1.bf16.msra.mxu0 %v2785
      %3337 = vmatprep.subr.bf16.mxu0 %v2784
      %3338 = vmatpush1.bf16.msra.mxu0 %v2783
      %3339 = vmatprep.subr.bf16.mxu0 %v2782
      %3340 = vmatpush1.bf16.msra.mxu0 %v2781
      %3341 = vmatprep.subr.bf16.mxu0 0
      %3342 = vmatpush2.bf16.msra.mxu0 0
      %3343 = vmatprep.subr.bf16.mxu0 0
      %3344 = vmatpush2.bf16.msra.mxu0 0
      %3345 = vmatprep.subr.bf16.mxu0 0
      %3346 = vmatpush2.bf16.msra.mxu0 0
      %3347 = vmatprep.subr.bf16.mxu0 0
      %3348 = vmatpush2.bf16.msra.mxu0 0
      %3349 = vmatprep.subr.bf16.mxu0 0
      %3350 = vmatpush2.bf16.msra.mxu0 0
      %3351 = vmatprep.subr.bf16.mxu0 0
      %3352 = vmatpush2.bf16.msra.mxu0 0
      %3353 = vmatprep.subr.bf16.mxu0 0
      %3354 = vmatpush2.bf16.msra.mxu0 0
      %3355 = vmatprep.subr.bf16.mxu0 0
      %3356 = vmatpush2.bf16.msra.mxu0 0
      %3357 = vmatprep.mubr.bf16.mxu0 0
      %3358 = vmatmul.mubr.bf16.gmra.mxu0 %v3159
      %v3359 = vpop.f32.mrf.mxu0
      %v3360 = vadd.f32 %v3319, %v3359
      %v3361 = vpop.f32.mrf.mxu0
      %v3362 = vadd.f32 %v3321, %v3361
      %v3363 = vpop.f32.mrf.mxu0
      %v3364 = vpop.f32.mrf.mxu0
      %3365 = vdwg.mxu0
      %v3366 = vmax.f32 %v3360, 0.0
      %v3367 = vmax.f32 %v3362, 0.0
      %v3368 = vpack.c.bf16 %v3366, %v3366
      %v3369 = vpack.c.bf16 %v3367, %v3367
      %v3371 = vshrl.u32 %v2028, 16
      %v3373 = vshll.u32 %v2028, 16
      %v3375 = vrot.slane %v3373, 1
      %v3376 = vor.u32 %v3371, %v3375
      %v3379 = vrot.slane %v2028, 1
      %3381 = vmatprep.subr.bf16.mxu0 %v2668
      %3382 = vmatpush1.bf16.msra.mxu0 %v2667
      %3383 = vmatprep.subr.bf16.mxu0 %v2666
      %3384 = vmatpush1.bf16.msra.mxu0 %v2665
      %3385 = vmatprep.subr.bf16.mxu0 %v2664
      %3386 = vmatpush1.bf16.msra.mxu0 %v2663
      %3387 = vmatprep.subr.bf16.mxu0 %v2662
      %3388 = vmatpush1.bf16.msra.mxu0 %v2661
      %3389 = vmatprep.subr.bf16.mxu0 %v2660
      %3390 = vmatpush1.bf16.msra.mxu0 %v2659
      %3391 = vmatprep.subr.bf16.mxu0 %v2658
      %3392 = vmatpush1.bf16.msra.mxu0 %v2657
      %3393 = vmatprep.subr.bf16.mxu0 %v2656
      %3394 = vmatpush1.bf16.msra.mxu0 %v2655
      %3395 = vmatprep.subr.bf16.mxu0 %v2654
      %3396 = vmatpush1.bf16.msra.mxu0 %v2653
      %3397 = vmatprep.subr.bf16.mxu0 %v2684
      %3398 = vmatpush2.bf16.msra.mxu0 %v2683
      %3399 = vmatprep.subr.bf16.mxu0 %v2682
      %3400 = vmatpush2.bf16.msra.mxu0 %v2681
      %3401 = vmatprep.subr.bf16.mxu0 %v2680
      %3402 = vmatpush2.bf16.msra.mxu0 %v2679
      %3403 = vmatprep.subr.bf16.mxu0 %v2678
      %3404 = vmatpush2.bf16.msra.mxu0 %v2677
      %3405 = vmatprep.subr.bf16.mxu0 %v2676
      %3406 = vmatpush2.bf16.msra.mxu0 %v2675
      %3407 = vmatprep.subr.bf16.mxu0 %v2674
      %3408 = vmatpush2.bf16.msra.mxu0 %v2673
      %3409 = vmatprep.subr.bf16.mxu0 %v2672
      %3410 = vmatpush2.bf16.msra.mxu0 %v2671
      %3411 = vmatprep.subr.bf16.mxu0 %v2670
      %3412 = vmatpush2.bf16.msra.mxu0 %v2669
      %3413 = vmatprep.mubr.bf16.mxu0 %v2060
      %3414 = vmatmul.mubr.bf16.gmra.mxu0 %v2026
      %v3415 = vpop.f32.mrf.mxu0
      %v3416 = vadd.f32 %v2214, %v3415
      %v3417 = vpop.f32.mrf.mxu0
      %v3418 = vadd.f32 %v2218, %v3417
      %v3419 = vpop.f32.mrf.mxu0
      %v3420 = vpop.f32.mrf.mxu0
      %3421 = vdwg.mxu0
      %3422 = vmatprep.subr.bf16.mxu0 %v2700
      %3423 = vmatpush1.bf16.msra.mxu0 %v2699
      %3424 = vmatprep.subr.bf16.mxu0 %v2698
      %3425 = vmatpush1.bf16.msra.mxu0 %v2697
      %3426 = vmatprep.subr.bf16.mxu0 %v2696
      %3427 = vmatpush1.bf16.msra.mxu0 %v2695
      %3428 = vmatprep.subr.bf16.mxu0 %v2694
      %3429 = vmatpush1.bf16.msra.mxu0 %v2693
      %3430 = vmatprep.subr.bf16.mxu0 %v2692
      %3431 = vmatpush1.bf16.msra.mxu0 %v2691
      %3432 = vmatprep.subr.bf16.mxu0 %v2690
      %3433 = vmatpush1.bf16.msra.mxu0 %v2689
      %3434 = vmatprep.subr.bf16.mxu0 %v2688
      %3435 = vmatpush1.bf16.msra.mxu0 %v2687
      %3436 = vmatprep.subr.bf16.mxu0 %v2686
      %3437 = vmatpush1.bf16.msra.mxu0 %v2685
      %3438 = vmatprep.subr.bf16.mxu0 %v2716
      %3439 = vmatpush2.bf16.msra.mxu0 %v2715
      %3440 = vmatprep.subr.bf16.mxu0 %v2714
      %3441 = vmatpush2.bf16.msra.mxu0 %v2713
      %3442 = vmatprep.subr.bf16.mxu0 %v2712
      %3443 = vmatpush2.bf16.msra.mxu0 %v2711
      %3444 = vmatprep.subr.bf16.mxu0 %v2710
      %3445 = vmatpush2.bf16.msra.mxu0 %v2709
      %3446 = vmatprep.subr.bf16.mxu0 %v2708
      %3447 = vmatpush2.bf16.msra.mxu0 %v2707
      %3448 = vmatprep.subr.bf16.mxu0 %v2706
      %3449 = vmatpush2.bf16.msra.mxu0 %v2705
      %3450 = vmatprep.subr.bf16.mxu0 %v2704
      %3451 = vmatpush2.bf16.msra.mxu0 %v2703
      %3452 = vmatprep.subr.bf16.mxu0 %v2702
      %3453 = vmatpush2.bf16.msra.mxu0 %v2701
      %3454 = vmatprep.mubr.bf16.mxu0 %v2027
      %3455 = vmatmul.mubr.bf16.gmra.mxu0 %v2063
      %v3456 = vpop.f32.mrf.mxu0
      %v3457 = vadd.f32 %v3416, %v3456
      %v3458 = vpop.f32.mrf.mxu0
      %v3459 = vadd.f32 %v3418, %v3458
      %v3460 = vpop.f32.mrf.mxu0
      %v3461 = vpop.f32.mrf.mxu0
      %3462 = vdwg.mxu0
      %3463 = vmatprep.subr.bf16.mxu0 %v2732
      %3464 = vmatpush1.bf16.msra.mxu0 %v2731
      %3465 = vmatprep.subr.bf16.mxu0 %v2730
      %3466 = vmatpush1.bf16.msra.mxu0 %v2729
      %3467 = vmatprep.subr.bf16.mxu0 %v2728
      %3468 = vmatpush1.bf16.msra.mxu0 %v2727
      %3469 = vmatprep.subr.bf16.mxu0 %v2726
      %3470 = vmatpush1.bf16.msra.mxu0 %v2725
      %3471 = vmatprep.subr.bf16.mxu0 %v2724
      %3472 = vmatpush1.bf16.msra.mxu0 %v2723
      %3473 = vmatprep.subr.bf16.mxu0 %v2722
      %3474 = vmatpush1.bf16.msra.mxu0 %v2721
      %3475 = vmatprep.subr.bf16.mxu0 %v2720
      %3476 = vmatpush1.bf16.msra.mxu0 %v2719
      %3477 = vmatprep.subr.bf16.mxu0 %v2718
      %3478 = vmatpush1.bf16.msra.mxu0 %v2717
      %3479 = vmatprep.subr.bf16.mxu0 %v2748
      %3480 = vmatpush2.bf16.msra.mxu0 %v2747
      %3481 = vmatprep.subr.bf16.mxu0 %v2746
      %3482 = vmatpush2.bf16.msra.mxu0 %v2745
      %3483 = vmatprep.subr.bf16.mxu0 %v2744
      %3484 = vmatpush2.bf16.msra.mxu0 %v2743
      %3485 = vmatprep.subr.bf16.mxu0 %v2742
      %3486 = vmatpush2.bf16.msra.mxu0 %v2741
      %3487 = vmatprep.subr.bf16.mxu0 %v2740
      %3488 = vmatpush2.bf16.msra.mxu0 %v2739
      %3489 = vmatprep.subr.bf16.mxu0 %v2738
      %3490 = vmatpush2.bf16.msra.mxu0 %v2737
      %3491 = vmatprep.subr.bf16.mxu0 %v2736
      %3492 = vmatpush2.bf16.msra.mxu0 %v2735
      %3493 = vmatprep.subr.bf16.mxu0 %v2734
      %3494 = vmatpush2.bf16.msra.mxu0 %v2733
      %3495 = vmatprep.mubr.bf16.mxu0 %v3159
      %3496 = vmatmul.mubr.bf16.gmra.mxu0 %v3156
      %v3497 = vpop.f32.mrf.mxu0
      %v3498 = vadd.f32 %v3457, %v3497
      %v3499 = vpop.f32.mrf.mxu0
      %v3500 = vadd.f32 %v3459, %v3499
      %v3501 = vpop.f32.mrf.mxu0
      %v3502 = vpop.f32.mrf.mxu0
      %3503 = vdwg.mxu0
      %3504 = vmatprep.subr.bf16.mxu0 %v2764
      %3505 = vmatpush1.bf16.msra.mxu0 %v2763
      %3506 = vmatprep.subr.bf16.mxu0 %v2762
      %3507 = vmatpush1.bf16.msra.mxu0 %v2761
      %3508 = vmatprep.subr.bf16.mxu0 %v2760
      %3509 = vmatpush1.bf16.msra.mxu0 %v2759
      %3510 = vmatprep.subr.bf16.mxu0 %v2758
      %3511 = vmatpush1.bf16.msra.mxu0 %v2757
      %3512 = vmatprep.subr.bf16.mxu0 %v2756
      %3513 = vmatpush1.bf16.msra.mxu0 %v2755
      %3514 = vmatprep.subr.bf16.mxu0 %v2754
      %3515 = vmatpush1.bf16.msra.mxu0 %v2753
      %3516 = vmatprep.subr.bf16.mxu0 %v2752
      %3517 = vmatpush1.bf16.msra.mxu0 %v2751
      %3518 = vmatprep.subr.bf16.mxu0 %v2750
      %3519 = vmatpush1.bf16.msra.mxu0 %v2749
      %3520 = vmatprep.subr.bf16.mxu0 %v2780
      %3521 = vmatpush2.bf16.msra.mxu0 %v2779
      %3522 = vmatprep.subr.bf16.mxu0 %v2778
      %3523 = vmatpush2.bf16.msra.mxu0 %v2777
      %3524 = vmatprep.subr.bf16.mxu0 %v2776
      %3525 = vmatpush2.bf16.msra.mxu0 %v2775
      %3526 = vmatprep.subr.bf16.mxu0 %v2774
      %3527 = vmatpush2.bf16.msra.mxu0 %v2773
      %3528 = vmatprep.subr.bf16.mxu0 %v2772
      %3529 = vmatpush2.bf16.msra.mxu0 %v2771
      %3530 = vmatprep.subr.bf16.mxu0 %v2770
      %3531 = vmatpush2.bf16.msra.mxu0 %v2769
      %3532 = vmatprep.subr.bf16.mxu0 %v2768
      %3533 = vmatpush2.bf16.msra.mxu0 %v2767
      %3534 = vmatprep.subr.bf16.mxu0 %v2766
      %3535 = vmatpush2.bf16.msra.mxu0 %v2765
      %3536 = vmatprep.mubr.bf16.mxu0 %v3376
      %3537 = vmatmul.mubr.bf16.gmra.mxu0 %v2028
      %v3538 = vpop.f32.mrf.mxu0
      %v3539 = vadd.f32 %v3498, %v3538
      %v3540 = vpop.f32.mrf.mxu0
      %v3541 = vadd.f32 %v3500, %v3540
      %v3542 = vpop.f32.mrf.mxu0
      %v3543 = vpop.f32.mrf.mxu0
      %3544 = vdwg.mxu0
      %3545 = vmatprep.subr.bf16.mxu0 %v2796
      %3546 = vmatpush1.bf16.msra.mxu0 %v2795
      %3547 = vmatprep.subr.bf16.mxu0 %v2794
      %3548 = vmatpush1.bf16.msra.mxu0 %v2793
      %3549 = vmatprep.subr.bf16.mxu0 %v2792
      %3550 = vmatpush1.bf16.msra.mxu0 %v2791
      %3551 = vmatprep.subr.bf16.mxu0 %v2790
      %3552 = vmatpush1.bf16.msra.mxu0 %v2789
      %3553 = vmatprep.subr.bf16.mxu0 %v2788
      %3554 = vmatpush1.bf16.msra.mxu0 %v2787
      %3555 = vmatprep.subr.bf16.mxu0 %v2786
      %3556 = vmatpush1.bf16.msra.mxu0 %v2785
      %3557 = vmatprep.subr.bf16.mxu0 %v2784
      %3558 = vmatpush1.bf16.msra.mxu0 %v2783
      %3559 = vmatprep.subr.bf16.mxu0 %v2782
      %3560 = vmatpush1.bf16.msra.mxu0 %v2781
      %3561 = vmatprep.subr.bf16.mxu0 0
      %3562 = vmatpush2.bf16.msra.mxu0 0
      %3563 = vmatprep.subr.bf16.mxu0 0
      %3564 = vmatpush2.bf16.msra.mxu0 0
      %3565 = vmatprep.subr.bf16.mxu0 0
      %3566 = vmatpush2.bf16.msra.mxu0 0
      %3567 = vmatprep.subr.bf16.mxu0 0
      %3568 = vmatpush2.bf16.msra.mxu0 0
      %3569 = vmatprep.subr.bf16.mxu0 0
      %3570 = vmatpush2.bf16.msra.mxu0 0
      %3571 = vmatprep.subr.bf16.mxu0 0
      %3572 = vmatpush2.bf16.msra.mxu0 0
      %3573 = vmatprep.subr.bf16.mxu0 0
      %3574 = vmatpush2.bf16.msra.mxu0 0
      %3575 = vmatprep.subr.bf16.mxu0 0
      %3576 = vmatpush2.bf16.msra.mxu0 0
      %3577 = vmatprep.mubr.bf16.mxu0 0
      %3578 = vmatmul.mubr.bf16.gmra.mxu0 %v3379
      %v3579 = vpop.f32.mrf.mxu0
      %v3580 = vadd.f32 %v3539, %v3579
      %v3581 = vpop.f32.mrf.mxu0
      %v3582 = vadd.f32 %v3541, %v3581
      %v3583 = vpop.f32.mrf.mxu0
      %v3584 = vpop.f32.mrf.mxu0
      %3585 = vdwg.mxu0
      %v3586 = vmax.f32 %v3580, 0.0
      %v3587 = vmax.f32 %v3582, 0.0
      %v3588 = vpack.c.bf16 %v3586, %v3586
      %v3589 = vpack.c.bf16 %v3587, %v3587
      %v3591 = vshrl.u32 %v2029, 16
      %v3593 = vshll.u32 %v2029, 16
      %v3595 = vrot.slane %v3593, 1
      %v3596 = vor.u32 %v3591, %v3595
      %v3599 = vrot.slane %v2029, 1
      %3601 = vmatprep.subr.bf16.mxu0 %v2668
      %3602 = vmatpush1.bf16.msra.mxu0 %v2667
      %3603 = vmatprep.subr.bf16.mxu0 %v2666
      %3604 = vmatpush1.bf16.msra.mxu0 %v2665
      %3605 = vmatprep.subr.bf16.mxu0 %v2664
      %3606 = vmatpush1.bf16.msra.mxu0 %v2663
      %3607 = vmatprep.subr.bf16.mxu0 %v2662
      %3608 = vmatpush1.bf16.msra.mxu0 %v2661
      %3609 = vmatprep.subr.bf16.mxu0 %v2660
      %3610 = vmatpush1.bf16.msra.mxu0 %v2659
      %3611 = vmatprep.subr.bf16.mxu0 %v2658
      %3612 = vmatpush1.bf16.msra.mxu0 %v2657
      %3613 = vmatprep.subr.bf16.mxu0 %v2656
      %3614 = vmatpush1.bf16.msra.mxu0 %v2655
      %3615 = vmatprep.subr.bf16.mxu0 %v2654
      %3616 = vmatpush1.bf16.msra.mxu0 %v2653
      %3617 = vmatprep.subr.bf16.mxu0 %v2684
      %3618 = vmatpush2.bf16.msra.mxu0 %v2683
      %3619 = vmatprep.subr.bf16.mxu0 %v2682
      %3620 = vmatpush2.bf16.msra.mxu0 %v2681
      %3621 = vmatprep.subr.bf16.mxu0 %v2680
      %3622 = vmatpush2.bf16.msra.mxu0 %v2679
      %3623 = vmatprep.subr.bf16.mxu0 %v2678
      %3624 = vmatpush2.bf16.msra.mxu0 %v2677
      %3625 = vmatprep.subr.bf16.mxu0 %v2676
      %3626 = vmatpush2.bf16.msra.mxu0 %v2675
      %3627 = vmatprep.subr.bf16.mxu0 %v2674
      %3628 = vmatpush2.bf16.msra.mxu0 %v2673
      %3629 = vmatprep.subr.bf16.mxu0 %v2672
      %3630 = vmatpush2.bf16.msra.mxu0 %v2671
      %3631 = vmatprep.subr.bf16.mxu0 %v2670
      %3632 = vmatpush2.bf16.msra.mxu0 %v2669
      %3633 = vmatprep.mubr.bf16.mxu0 %v3156
      %3634 = vmatmul.mubr.bf16.gmra.mxu0 %v2027
      %v3635 = vpop.f32.mrf.mxu0
      %v3636 = vadd.f32 %v2214, %v3635
      %v3637 = vpop.f32.mrf.mxu0
      %v3638 = vadd.f32 %v2218, %v3637
      %v3639 = vpop.f32.mrf.mxu0
      %v3640 = vpop.f32.mrf.mxu0
      %3641 = vdwg.mxu0
      %3642 = vmatprep.subr.bf16.mxu0 %v2700
      %3643 = vmatpush1.bf16.msra.mxu0 %v2699
      %3644 = vmatprep.subr.bf16.mxu0 %v2698
      %3645 = vmatpush1.bf16.msra.mxu0 %v2697
      %3646 = vmatprep.subr.bf16.mxu0 %v2696
      %3647 = vmatpush1.bf16.msra.mxu0 %v2695
      %3648 = vmatprep.subr.bf16.mxu0 %v2694
      %3649 = vmatpush1.bf16.msra.mxu0 %v2693
      %3650 = vmatprep.subr.bf16.mxu0 %v2692
      %3651 = vmatpush1.bf16.msra.mxu0 %v2691
      %3652 = vmatprep.subr.bf16.mxu0 %v2690
      %3653 = vmatpush1.bf16.msra.mxu0 %v2689
      %3654 = vmatprep.subr.bf16.mxu0 %v2688
      %3655 = vmatpush1.bf16.msra.mxu0 %v2687
      %3656 = vmatprep.subr.bf16.mxu0 %v2686
      %3657 = vmatpush1.bf16.msra.mxu0 %v2685
      %3658 = vmatprep.subr.bf16.mxu0 %v2716
      %3659 = vmatpush2.bf16.msra.mxu0 %v2715
      %3660 = vmatprep.subr.bf16.mxu0 %v2714
      %3661 = vmatpush2.bf16.msra.mxu0 %v2713
      %3662 = vmatprep.subr.bf16.mxu0 %v2712
      %3663 = vmatpush2.bf16.msra.mxu0 %v2711
      %3664 = vmatprep.subr.bf16.mxu0 %v2710
      %3665 = vmatpush2.bf16.msra.mxu0 %v2709
      %3666 = vmatprep.subr.bf16.mxu0 %v2708
      %3667 = vmatpush2.bf16.msra.mxu0 %v2707
      %3668 = vmatprep.subr.bf16.mxu0 %v2706
      %3669 = vmatpush2.bf16.msra.mxu0 %v2705
      %3670 = vmatprep.subr.bf16.mxu0 %v2704
      %3671 = vmatpush2.bf16.msra.mxu0 %v2703
      %3672 = vmatprep.subr.bf16.mxu0 %v2702
      %3673 = vmatpush2.bf16.msra.mxu0 %v2701
      %3674 = vmatprep.mubr.bf16.mxu0 %v2028
      %3675 = vmatmul.mubr.bf16.gmra.mxu0 %v3159
      %v3676 = vpop.f32.mrf.mxu0
      %v3677 = vadd.f32 %v3636, %v3676
      %v3678 = vpop.f32.mrf.mxu0
      %v3679 = vadd.f32 %v3638, %v3678
      %v3680 = vpop.f32.mrf.mxu0
      %v3681 = vpop.f32.mrf.mxu0
      %3682 = vdwg.mxu0
      %3683 = vmatprep.subr.bf16.mxu0 %v2732
      %3684 = vmatpush1.bf16.msra.mxu0 %v2731
      %3685 = vmatprep.subr.bf16.mxu0 %v2730
      %3686 = vmatpush1.bf16.msra.mxu0 %v2729
      %3687 = vmatprep.subr.bf16.mxu0 %v2728
      %3688 = vmatpush1.bf16.msra.mxu0 %v2727
      %3689 = vmatprep.subr.bf16.mxu0 %v2726
      %3690 = vmatpush1.bf16.msra.mxu0 %v2725
      %3691 = vmatprep.subr.bf16.mxu0 %v2724
      %3692 = vmatpush1.bf16.msra.mxu0 %v2723
      %3693 = vmatprep.subr.bf16.mxu0 %v2722
      %3694 = vmatpush1.bf16.msra.mxu0 %v2721
      %3695 = vmatprep.subr.bf16.mxu0 %v2720
      %3696 = vmatpush1.bf16.msra.mxu0 %v2719
      %3697 = vmatprep.subr.bf16.mxu0 %v2718
      %3698 = vmatpush1.bf16.msra.mxu0 %v2717
      %3699 = vmatprep.subr.bf16.mxu0 %v2748
      %3700 = vmatpush2.bf16.msra.mxu0 %v2747
      %3701 = vmatprep.subr.bf16.mxu0 %v2746
      %3702 = vmatpush2.bf16.msra.mxu0 %v2745
      %3703 = vmatprep.subr.bf16.mxu0 %v2744
      %3704 = vmatpush2.bf16.msra.mxu0 %v2743
      %3705 = vmatprep.subr.bf16.mxu0 %v2742
      %3706 = vmatpush2.bf16.msra.mxu0 %v2741
      %3707 = vmatprep.subr.bf16.mxu0 %v2740
      %3708 = vmatpush2.bf16.msra.mxu0 %v2739
      %3709 = vmatprep.subr.bf16.mxu0 %v2738
      %3710 = vmatpush2.bf16.msra.mxu0 %v2737
      %3711 = vmatprep.subr.bf16.mxu0 %v2736
      %3712 = vmatpush2.bf16.msra.mxu0 %v2735
      %3713 = vmatprep.subr.bf16.mxu0 %v2734
      %3714 = vmatpush2.bf16.msra.mxu0 %v2733
      %3715 = vmatprep.mubr.bf16.mxu0 %v3379
      %3716 = vmatmul.mubr.bf16.gmra.mxu0 %v3376
      %v3717 = vpop.f32.mrf.mxu0
      %v3718 = vadd.f32 %v3677, %v3717
      %v3719 = vpop.f32.mrf.mxu0
      %v3720 = vadd.f32 %v3679, %v3719
      %v3721 = vpop.f32.mrf.mxu0
      %v3722 = vpop.f32.mrf.mxu0
      %3723 = vdwg.mxu0
      %3724 = vmatprep.subr.bf16.mxu0 %v2764
      %3725 = vmatpush1.bf16.msra.mxu0 %v2763
      %3726 = vmatprep.subr.bf16.mxu0 %v2762
      %3727 = vmatpush1.bf16.msra.mxu0 %v2761
      %3728 = vmatprep.subr.bf16.mxu0 %v2760
      %3729 = vmatpush1.bf16.msra.mxu0 %v2759
      %3730 = vmatprep.subr.bf16.mxu0 %v2758
      %3731 = vmatpush1.bf16.msra.mxu0 %v2757
      %3732 = vmatprep.subr.bf16.mxu0 %v2756
      %3733 = vmatpush1.bf16.msra.mxu0 %v2755
      %3734 = vmatprep.subr.bf16.mxu0 %v2754
      %3735 = vmatpush1.bf16.msra.mxu0 %v2753
      %3736 = vmatprep.subr.bf16.mxu0 %v2752
      %3737 = vmatpush1.bf16.msra.mxu0 %v2751
      %3738 = vmatprep.subr.bf16.mxu0 %v2750
      %3739 = vmatpush1.bf16.msra.mxu0 %v2749
      %3740 = vmatprep.subr.bf16.mxu0 %v2780
      %3741 = vmatpush2.bf16.msra.mxu0 %v2779
      %3742 = vmatprep.subr.bf16.mxu0 %v2778
      %3743 = vmatpush2.bf16.msra.mxu0 %v2777
      %3744 = vmatprep.subr.bf16.mxu0 %v2776
      %3745 = vmatpush2.bf16.msra.mxu0 %v2775
      %3746 = vmatprep.subr.bf16.mxu0 %v2774
      %3747 = vmatpush2.bf16.msra.mxu0 %v2773
      %3748 = vmatprep.subr.bf16.mxu0 %v2772
      %3749 = vmatpush2.bf16.msra.mxu0 %v2771
      %3750 = vmatprep.subr.bf16.mxu0 %v2770
      %3751 = vmatpush2.bf16.msra.mxu0 %v2769
      %3752 = vmatprep.subr.bf16.mxu0 %v2768
      %3753 = vmatpush2.bf16.msra.mxu0 %v2767
      %3754 = vmatprep.subr.bf16.mxu0 %v2766
      %3755 = vmatpush2.bf16.msra.mxu0 %v2765
      %3756 = vmatprep.mubr.bf16.mxu0 %v3596
      %3757 = vmatmul.mubr.bf16.gmra.mxu0 %v2029
      %v3758 = vpop.f32.mrf.mxu0
      %v3759 = vadd.f32 %v3718, %v3758
      %v3760 = vpop.f32.mrf.mxu0
      %v3761 = vadd.f32 %v3720, %v3760
      %v3762 = vpop.f32.mrf.mxu0
      %v3763 = vpop.f32.mrf.mxu0
      %3764 = vdwg.mxu0
      %3765 = vmatprep.subr.bf16.mxu0 %v2796
      %3766 = vmatpush1.bf16.msra.mxu0 %v2795
      %3767 = vmatprep.subr.bf16.mxu0 %v2794
      %3768 = vmatpush1.bf16.msra.mxu0 %v2793
      %3769 = vmatprep.subr.bf16.mxu0 %v2792
      %3770 = vmatpush1.bf16.msra.mxu0 %v2791
      %3771 = vmatprep.subr.bf16.mxu0 %v2790
      %3772 = vmatpush1.bf16.msra.mxu0 %v2789
      %3773 = vmatprep.subr.bf16.mxu0 %v2788
      %3774 = vmatpush1.bf16.msra.mxu0 %v2787
      %3775 = vmatprep.subr.bf16.mxu0 %v2786
      %3776 = vmatpush1.bf16.msra.mxu0 %v2785
      %3777 = vmatprep.subr.bf16.mxu0 %v2784
      %3778 = vmatpush1.bf16.msra.mxu0 %v2783
      %3779 = vmatprep.subr.bf16.mxu0 %v2782
      %3780 = vmatpush1.bf16.msra.mxu0 %v2781
      %3781 = vmatprep.subr.bf16.mxu0 0
      %3782 = vmatpush2.bf16.msra.mxu0 0
      %3783 = vmatprep.subr.bf16.mxu0 0
      %3784 = vmatpush2.bf16.msra.mxu0 0
      %3785 = vmatprep.subr.bf16.mxu0 0
      %3786 = vmatpush2.bf16.msra.mxu0 0
      %3787 = vmatprep.subr.bf16.mxu0 0
      %3788 = vmatpush2.bf16.msra.mxu0 0
      %3789 = vmatprep.subr.bf16.mxu0 0
      %3790 = vmatpush2.bf16.msra.mxu0 0
      %3791 = vmatprep.subr.bf16.mxu0 0
      %3792 = vmatpush2.bf16.msra.mxu0 0
      %3793 = vmatprep.subr.bf16.mxu0 0
      %3794 = vmatpush2.bf16.msra.mxu0 0
      %3795 = vmatprep.subr.bf16.mxu0 0
      %3796 = vmatpush2.bf16.msra.mxu0 0
      %3797 = vmatprep.mubr.bf16.mxu0 0
      %3798 = vmatmul.mubr.bf16.gmra.mxu0 %v3599
      %v3799 = vpop.f32.mrf.mxu0
      %v3800 = vadd.f32 %v3759, %v3799
      %v3801 = vpop.f32.mrf.mxu0
      %v3802 = vadd.f32 %v3761, %v3801
      %v3803 = vpop.f32.mrf.mxu0
      %v3804 = vpop.f32.mrf.mxu0
      %3805 = vdwg.mxu0
      %v3806 = vmax.f32 %v3800, 0.0
      %v3807 = vmax.f32 %v3802, 0.0
      %v3808 = vpack.c.bf16 %v3806, %v3806
      %v3809 = vpack.c.bf16 %v3807, %v3807
      %v3811 = vshrl.u32 %v2030, 16
      %v3813 = vshll.u32 %v2030, 16
      %v3815 = vrot.slane %v3813, 1
      %v3816 = vor.u32 %v3811, %v3815
      %v3819 = vrot.slane %v2030, 1
      %3821 = vmatprep.subr.bf16.mxu0 %v2668
      %3822 = vmatpush1.bf16.msra.mxu0 %v2667
      %3823 = vmatprep.subr.bf16.mxu0 %v2666
      %3824 = vmatpush1.bf16.msra.mxu0 %v2665
      %3825 = vmatprep.subr.bf16.mxu0 %v2664
      %3826 = vmatpush1.bf16.msra.mxu0 %v2663
      %3827 = vmatprep.subr.bf16.mxu0 %v2662
      %3828 = vmatpush1.bf16.msra.mxu0 %v2661
      %3829 = vmatprep.subr.bf16.mxu0 %v2660
      %3830 = vmatpush1.bf16.msra.mxu0 %v2659
      %3831 = vmatprep.subr.bf16.mxu0 %v2658
      %3832 = vmatpush1.bf16.msra.mxu0 %v2657
      %3833 = vmatprep.subr.bf16.mxu0 %v2656
      %3834 = vmatpush1.bf16.msra.mxu0 %v2655
      %3835 = vmatprep.subr.bf16.mxu0 %v2654
      %3836 = vmatpush1.bf16.msra.mxu0 %v2653
      %3837 = vmatprep.subr.bf16.mxu0 %v2684
      %3838 = vmatpush2.bf16.msra.mxu0 %v2683
      %3839 = vmatprep.subr.bf16.mxu0 %v2682
      %3840 = vmatpush2.bf16.msra.mxu0 %v2681
      %3841 = vmatprep.subr.bf16.mxu0 %v2680
      %3842 = vmatpush2.bf16.msra.mxu0 %v2679
      %3843 = vmatprep.subr.bf16.mxu0 %v2678
      %3844 = vmatpush2.bf16.msra.mxu0 %v2677
      %3845 = vmatprep.subr.bf16.mxu0 %v2676
      %3846 = vmatpush2.bf16.msra.mxu0 %v2675
      %3847 = vmatprep.subr.bf16.mxu0 %v2674
      %3848 = vmatpush2.bf16.msra.mxu0 %v2673
      %3849 = vmatprep.subr.bf16.mxu0 %v2672
      %3850 = vmatpush2.bf16.msra.mxu0 %v2671
      %3851 = vmatprep.subr.bf16.mxu0 %v2670
      %3852 = vmatpush2.bf16.msra.mxu0 %v2669
      %3853 = vmatprep.mubr.bf16.mxu0 %v3376
      %3854 = vmatmul.mubr.bf16.gmra.mxu0 %v2028
      %v3855 = vpop.f32.mrf.mxu0
      %v3856 = vadd.f32 %v2214, %v3855
      %v3857 = vpop.f32.mrf.mxu0
      %v3858 = vadd.f32 %v2218, %v3857
      %v3859 = vpop.f32.mrf.mxu0
      %v3860 = vpop.f32.mrf.mxu0
      %3861 = vdwg.mxu0
      %3862 = vmatprep.subr.bf16.mxu0 %v2700
      %3863 = vmatpush1.bf16.msra.mxu0 %v2699
      %3864 = vmatprep.subr.bf16.mxu0 %v2698
      %3865 = vmatpush1.bf16.msra.mxu0 %v2697
      %3866 = vmatprep.subr.bf16.mxu0 %v2696
      %3867 = vmatpush1.bf16.msra.mxu0 %v2695
      %3868 = vmatprep.subr.bf16.mxu0 %v2694
      %3869 = vmatpush1.bf16.msra.mxu0 %v2693
      %3870 = vmatprep.subr.bf16.mxu0 %v2692
      %3871 = vmatpush1.bf16.msra.mxu0 %v2691
      %3872 = vmatprep.subr.bf16.mxu0 %v2690
      %3873 = vmatpush1.bf16.msra.mxu0 %v2689
      %3874 = vmatprep.subr.bf16.mxu0 %v2688
      %3875 = vmatpush1.bf16.msra.mxu0 %v2687
      %3876 = vmatprep.subr.bf16.mxu0 %v2686
      %3877 = vmatpush1.bf16.msra.mxu0 %v2685
      %3878 = vmatprep.subr.bf16.mxu0 %v2716
      %3879 = vmatpush2.bf16.msra.mxu0 %v2715
      %3880 = vmatprep.subr.bf16.mxu0 %v2714
      %3881 = vmatpush2.bf16.msra.mxu0 %v2713
      %3882 = vmatprep.subr.bf16.mxu0 %v2712
      %3883 = vmatpush2.bf16.msra.mxu0 %v2711
      %3884 = vmatprep.subr.bf16.mxu0 %v2710
      %3885 = vmatpush2.bf16.msra.mxu0 %v2709
      %3886 = vmatprep.subr.bf16.mxu0 %v2708
      %3887 = vmatpush2.bf16.msra.mxu0 %v2707
      %3888 = vmatprep.subr.bf16.mxu0 %v2706
      %3889 = vmatpush2.bf16.msra.mxu0 %v2705
      %3890 = vmatprep.subr.bf16.mxu0 %v2704
      %3891 = vmatpush2.bf16.msra.mxu0 %v2703
      %3892 = vmatprep.subr.bf16.mxu0 %v2702
      %3893 = vmatpush2.bf16.msra.mxu0 %v2701
      %3894 = vmatprep.mubr.bf16.mxu0 %v2029
      %3895 = vmatmul.mubr.bf16.gmra.mxu0 %v3379
      %v3896 = vpop.f32.mrf.mxu0
      %v3897 = vadd.f32 %v3856, %v3896
      %v3898 = vpop.f32.mrf.mxu0
      %v3899 = vadd.f32 %v3858, %v3898
      %v3900 = vpop.f32.mrf.mxu0
      %v3901 = vpop.f32.mrf.mxu0
      %3902 = vdwg.mxu0
      %3903 = vmatprep.subr.bf16.mxu0 %v2732
      %3904 = vmatpush1.bf16.msra.mxu0 %v2731
      %3905 = vmatprep.subr.bf16.mxu0 %v2730
      %3906 = vmatpush1.bf16.msra.mxu0 %v2729
      %3907 = vmatprep.subr.bf16.mxu0 %v2728
      %3908 = vmatpush1.bf16.msra.mxu0 %v2727
      %3909 = vmatprep.subr.bf16.mxu0 %v2726
      %3910 = vmatpush1.bf16.msra.mxu0 %v2725
      %3911 = vmatprep.subr.bf16.mxu0 %v2724
      %3912 = vmatpush1.bf16.msra.mxu0 %v2723
      %3913 = vmatprep.subr.bf16.mxu0 %v2722
      %3914 = vmatpush1.bf16.msra.mxu0 %v2721
      %3915 = vmatprep.subr.bf16.mxu0 %v2720
      %3916 = vmatpush1.bf16.msra.mxu0 %v2719
      %3917 = vmatprep.subr.bf16.mxu0 %v2718
      %3918 = vmatpush1.bf16.msra.mxu0 %v2717
      %3919 = vmatprep.subr.bf16.mxu0 %v2748
      %3920 = vmatpush2.bf16.msra.mxu0 %v2747
      %3921 = vmatprep.subr.bf16.mxu0 %v2746
      %3922 = vmatpush2.bf16.msra.mxu0 %v2745
      %3923 = vmatprep.subr.bf16.mxu0 %v2744
      %3924 = vmatpush2.bf16.msra.mxu0 %v2743
      %3925 = vmatprep.subr.bf16.mxu0 %v2742
      %3926 = vmatpush2.bf16.msra.mxu0 %v2741
      %3927 = vmatprep.subr.bf16.mxu0 %v2740
      %3928 = vmatpush2.bf16.msra.mxu0 %v2739
      %3929 = vmatprep.subr.bf16.mxu0 %v2738
      %3930 = vmatpush2.bf16.msra.mxu0 %v2737
      %3931 = vmatprep.subr.bf16.mxu0 %v2736
      %3932 = vmatpush2.bf16.msra.mxu0 %v2735
      %3933 = vmatprep.subr.bf16.mxu0 %v2734
      %3934 = vmatpush2.bf16.msra.mxu0 %v2733
      %3935 = vmatprep.mubr.bf16.mxu0 %v3599
      %3936 = vmatmul.mubr.bf16.gmra.mxu0 %v3596
      %v3937 = vpop.f32.mrf.mxu0
      %v3938 = vadd.f32 %v3897, %v3937
      %v3939 = vpop.f32.mrf.mxu0
      %v3940 = vadd.f32 %v3899, %v3939
      %v3941 = vpop.f32.mrf.mxu0
      %v3942 = vpop.f32.mrf.mxu0
      %3943 = vdwg.mxu0
      %3944 = vmatprep.subr.bf16.mxu0 %v2764
      %3945 = vmatpush1.bf16.msra.mxu0 %v2763
      %3946 = vmatprep.subr.bf16.mxu0 %v2762
      %3947 = vmatpush1.bf16.msra.mxu0 %v2761
      %3948 = vmatprep.subr.bf16.mxu0 %v2760
      %3949 = vmatpush1.bf16.msra.mxu0 %v2759
      %3950 = vmatprep.subr.bf16.mxu0 %v2758
      %3951 = vmatpush1.bf16.msra.mxu0 %v2757
      %3952 = vmatprep.subr.bf16.mxu0 %v2756
      %3953 = vmatpush1.bf16.msra.mxu0 %v2755
      %3954 = vmatprep.subr.bf16.mxu0 %v2754
      %3955 = vmatpush1.bf16.msra.mxu0 %v2753
      %3956 = vmatprep.subr.bf16.mxu0 %v2752
      %3957 = vmatpush1.bf16.msra.mxu0 %v2751
      %3958 = vmatprep.subr.bf16.mxu0 %v2750
      %3959 = vmatpush1.bf16.msra.mxu0 %v2749
      %3960 = vmatprep.subr.bf16.mxu0 %v2780
      %3961 = vmatpush2.bf16.msra.mxu0 %v2779
      %3962 = vmatprep.subr.bf16.mxu0 %v2778
      %3963 = vmatpush2.bf16.msra.mxu0 %v2777
      %3964 = vmatprep.subr.bf16.mxu0 %v2776
      %3965 = vmatpush2.bf16.msra.mxu0 %v2775
      %3966 = vmatprep.subr.bf16.mxu0 %v2774
      %3967 = vmatpush2.bf16.msra.mxu0 %v2773
      %3968 = vmatprep.subr.bf16.mxu0 %v2772
      %3969 = vmatpush2.bf16.msra.mxu0 %v2771
      %3970 = vmatprep.subr.bf16.mxu0 %v2770
      %3971 = vmatpush2.bf16.msra.mxu0 %v2769
      %3972 = vmatprep.subr.bf16.mxu0 %v2768
      %3973 = vmatpush2.bf16.msra.mxu0 %v2767
      %3974 = vmatprep.subr.bf16.mxu0 %v2766
      %3975 = vmatpush2.bf16.msra.mxu0 %v2765
      %3976 = vmatprep.mubr.bf16.mxu0 %v3816
      %3977 = vmatmul.mubr.bf16.gmra.mxu0 %v2030
      %v3978 = vpop.f32.mrf.mxu0
      %v3979 = vadd.f32 %v3938, %v3978
      %v3980 = vpop.f32.mrf.mxu0
      %v3981 = vadd.f32 %v3940, %v3980
      %v3982 = vpop.f32.mrf.mxu0
      %v3983 = vpop.f32.mrf.mxu0
      %3984 = vdwg.mxu0
      %3985 = vmatprep.subr.bf16.mxu0 %v2796
      %3986 = vmatpush1.bf16.msra.mxu0 %v2795
      %3987 = vmatprep.subr.bf16.mxu0 %v2794
      %3988 = vmatpush1.bf16.msra.mxu0 %v2793
      %3989 = vmatprep.subr.bf16.mxu0 %v2792
      %3990 = vmatpush1.bf16.msra.mxu0 %v2791
      %3991 = vmatprep.subr.bf16.mxu0 %v2790
      %3992 = vmatpush1.bf16.msra.mxu0 %v2789
      %3993 = vmatprep.subr.bf16.mxu0 %v2788
      %3994 = vmatpush1.bf16.msra.mxu0 %v2787
      %3995 = vmatprep.subr.bf16.mxu0 %v2786
      %3996 = vmatpush1.bf16.msra.mxu0 %v2785
      %3997 = vmatprep.subr.bf16.mxu0 %v2784
      %3998 = vmatpush1.bf16.msra.mxu0 %v2783
      %3999 = vmatprep.subr.bf16.mxu0 %v2782
      %4000 = vmatpush1.bf16.msra.mxu0 %v2781
      %4001 = vmatprep.subr.bf16.mxu0 0
      %4002 = vmatpush2.bf16.msra.mxu0 0
      %4003 = vmatprep.subr.bf16.mxu0 0
      %4004 = vmatpush2.bf16.msra.mxu0 0
      %4005 = vmatprep.subr.bf16.mxu0 0
      %4006 = vmatpush2.bf16.msra.mxu0 0
      %4007 = vmatprep.subr.bf16.mxu0 0
      %4008 = vmatpush2.bf16.msra.mxu0 0
      %4009 = vmatprep.subr.bf16.mxu0 0
      %4010 = vmatpush2.bf16.msra.mxu0 0
      %4011 = vmatprep.subr.bf16.mxu0 0
      %4012 = vmatpush2.bf16.msra.mxu0 0
      %4013 = vmatprep.subr.bf16.mxu0 0
      %4014 = vmatpush2.bf16.msra.mxu0 0
      %4015 = vmatprep.subr.bf16.mxu0 0
      %4016 = vmatpush2.bf16.msra.mxu0 0
      %4017 = vmatprep.mubr.bf16.mxu0 0
      %4018 = vmatmul.mubr.bf16.gmra.mxu0 %v3819
      %v4019 = vpop.f32.mrf.mxu0
      %v4020 = vadd.f32 %v3979, %v4019
      %v4021 = vpop.f32.mrf.mxu0
      %v4022 = vadd.f32 %v3981, %v4021
      %v4023 = vpop.f32.mrf.mxu0
      %v4024 = vpop.f32.mrf.mxu0
      %4025 = vdwg.mxu0
      %v4026 = vmax.f32 %v4020, 0.0
      %v4027 = vmax.f32 %v4022, 0.0
      %v4028 = vpack.c.bf16 %v4026, %v4026
      %v4029 = vpack.c.bf16 %v4027, %v4027
      %v4031 = vshrl.u32 %v2031, 16
      %v4033 = vshll.u32 %v2031, 16
      %v4035 = vrot.slane %v4033, 1
      %v4036 = vor.u32 %v4031, %v4035
      %v4039 = vrot.slane %v2031, 1
      %4041 = vmatprep.subr.bf16.mxu0 %v2668
      %4042 = vmatpush1.bf16.msra.mxu0 %v2667
      %4043 = vmatprep.subr.bf16.mxu0 %v2666
      %4044 = vmatpush1.bf16.msra.mxu0 %v2665
      %4045 = vmatprep.subr.bf16.mxu0 %v2664
      %4046 = vmatpush1.bf16.msra.mxu0 %v2663
      %4047 = vmatprep.subr.bf16.mxu0 %v2662
      %4048 = vmatpush1.bf16.msra.mxu0 %v2661
      %4049 = vmatprep.subr.bf16.mxu0 %v2660
      %4050 = vmatpush1.bf16.msra.mxu0 %v2659
      %4051 = vmatprep.subr.bf16.mxu0 %v2658
      %4052 = vmatpush1.bf16.msra.mxu0 %v2657
      %4053 = vmatprep.subr.bf16.mxu0 %v2656
      %4054 = vmatpush1.bf16.msra.mxu0 %v2655
      %4055 = vmatprep.subr.bf16.mxu0 %v2654
      %4056 = vmatpush1.bf16.msra.mxu0 %v2653
      %4057 = vmatprep.subr.bf16.mxu0 %v2684
      %4058 = vmatpush2.bf16.msra.mxu0 %v2683
      %4059 = vmatprep.subr.bf16.mxu0 %v2682
      %4060 = vmatpush2.bf16.msra.mxu0 %v2681
      %4061 = vmatprep.subr.bf16.mxu0 %v2680
      %4062 = vmatpush2.bf16.msra.mxu0 %v2679
      %4063 = vmatprep.subr.bf16.mxu0 %v2678
      %4064 = vmatpush2.bf16.msra.mxu0 %v2677
      %4065 = vmatprep.subr.bf16.mxu0 %v2676
      %4066 = vmatpush2.bf16.msra.mxu0 %v2675
      %4067 = vmatprep.subr.bf16.mxu0 %v2674
      %4068 = vmatpush2.bf16.msra.mxu0 %v2673
      %4069 = vmatprep.subr.bf16.mxu0 %v2672
      %4070 = vmatpush2.bf16.msra.mxu0 %v2671
      %4071 = vmatprep.subr.bf16.mxu0 %v2670
      %4072 = vmatpush2.bf16.msra.mxu0 %v2669
      %4073 = vmatprep.mubr.bf16.mxu0 %v3596
      %4074 = vmatmul.mubr.bf16.gmra.mxu0 %v2029
      %v4075 = vpop.f32.mrf.mxu0
      %v4076 = vadd.f32 %v2214, %v4075
      %v4077 = vpop.f32.mrf.mxu0
      %v4078 = vadd.f32 %v2218, %v4077
      %v4079 = vpop.f32.mrf.mxu0
      %v4080 = vpop.f32.mrf.mxu0
      %4081 = vdwg.mxu0
      %4082 = vmatprep.subr.bf16.mxu0 %v2700
      %4083 = vmatpush1.bf16.msra.mxu0 %v2699
      %4084 = vmatprep.subr.bf16.mxu0 %v2698
      %4085 = vmatpush1.bf16.msra.mxu0 %v2697
      %4086 = vmatprep.subr.bf16.mxu0 %v2696
      %4087 = vmatpush1.bf16.msra.mxu0 %v2695
      %4088 = vmatprep.subr.bf16.mxu0 %v2694
      %4089 = vmatpush1.bf16.msra.mxu0 %v2693
      %4090 = vmatprep.subr.bf16.mxu0 %v2692
      %4091 = vmatpush1.bf16.msra.mxu0 %v2691
      %4092 = vmatprep.subr.bf16.mxu0 %v2690
      %4093 = vmatpush1.bf16.msra.mxu0 %v2689
      %4094 = vmatprep.subr.bf16.mxu0 %v2688
      %4095 = vmatpush1.bf16.msra.mxu0 %v2687
      %4096 = vmatprep.subr.bf16.mxu0 %v2686
      %4097 = vmatpush1.bf16.msra.mxu0 %v2685
      %4098 = vmatprep.subr.bf16.mxu0 %v2716
      %4099 = vmatpush2.bf16.msra.mxu0 %v2715
      %4100 = vmatprep.subr.bf16.mxu0 %v2714
      %4101 = vmatpush2.bf16.msra.mxu0 %v2713
      %4102 = vmatprep.subr.bf16.mxu0 %v2712
      %4103 = vmatpush2.bf16.msra.mxu0 %v2711
      %4104 = vmatprep.subr.bf16.mxu0 %v2710
      %4105 = vmatpush2.bf16.msra.mxu0 %v2709
      %4106 = vmatprep.subr.bf16.mxu0 %v2708
      %4107 = vmatpush2.bf16.msra.mxu0 %v2707
      %4108 = vmatprep.subr.bf16.mxu0 %v2706
      %4109 = vmatpush2.bf16.msra.mxu0 %v2705
      %4110 = vmatprep.subr.bf16.mxu0 %v2704
      %4111 = vmatpush2.bf16.msra.mxu0 %v2703
      %4112 = vmatprep.subr.bf16.mxu0 %v2702
      %4113 = vmatpush2.bf16.msra.mxu0 %v2701
      %4114 = vmatprep.mubr.bf16.mxu0 %v2030
      %4115 = vmatmul.mubr.bf16.gmra.mxu0 %v3599
      %v4116 = vpop.f32.mrf.mxu0
      %v4117 = vadd.f32 %v4076, %v4116
      %v4118 = vpop.f32.mrf.mxu0
      %v4119 = vadd.f32 %v4078, %v4118
      %v4120 = vpop.f32.mrf.mxu0
      %v4121 = vpop.f32.mrf.mxu0
      %4122 = vdwg.mxu0
      %4123 = vmatprep.subr.bf16.mxu0 %v2732
      %4124 = vmatpush1.bf16.msra.mxu0 %v2731
      %4125 = vmatprep.subr.bf16.mxu0 %v2730
      %4126 = vmatpush1.bf16.msra.mxu0 %v2729
      %4127 = vmatprep.subr.bf16.mxu0 %v2728
      %4128 = vmatpush1.bf16.msra.mxu0 %v2727
      %4129 = vmatprep.subr.bf16.mxu0 %v2726
      %4130 = vmatpush1.bf16.msra.mxu0 %v2725
      %4131 = vmatprep.subr.bf16.mxu0 %v2724
      %4132 = vmatpush1.bf16.msra.mxu0 %v2723
      %4133 = vmatprep.subr.bf16.mxu0 %v2722
      %4134 = vmatpush1.bf16.msra.mxu0 %v2721
      %4135 = vmatprep.subr.bf16.mxu0 %v2720
      %4136 = vmatpush1.bf16.msra.mxu0 %v2719
      %4137 = vmatprep.subr.bf16.mxu0 %v2718
      %4138 = vmatpush1.bf16.msra.mxu0 %v2717
      %4139 = vmatprep.subr.bf16.mxu0 %v2748
      %4140 = vmatpush2.bf16.msra.mxu0 %v2747
      %4141 = vmatprep.subr.bf16.mxu0 %v2746
      %4142 = vmatpush2.bf16.msra.mxu0 %v2745
      %4143 = vmatprep.subr.bf16.mxu0 %v2744
      %4144 = vmatpush2.bf16.msra.mxu0 %v2743
      %4145 = vmatprep.subr.bf16.mxu0 %v2742
      %4146 = vmatpush2.bf16.msra.mxu0 %v2741
      %4147 = vmatprep.subr.bf16.mxu0 %v2740
      %4148 = vmatpush2.bf16.msra.mxu0 %v2739
      %4149 = vmatprep.subr.bf16.mxu0 %v2738
      %4150 = vmatpush2.bf16.msra.mxu0 %v2737
      %4151 = vmatprep.subr.bf16.mxu0 %v2736
      %4152 = vmatpush2.bf16.msra.mxu0 %v2735
      %4153 = vmatprep.subr.bf16.mxu0 %v2734
      %4154 = vmatpush2.bf16.msra.mxu0 %v2733
      %4155 = vmatprep.mubr.bf16.mxu0 %v3819
      %4156 = vmatmul.mubr.bf16.gmra.mxu0 %v3816
      %v4157 = vpop.f32.mrf.mxu0
      %v4158 = vadd.f32 %v4117, %v4157
      %v4159 = vpop.f32.mrf.mxu0
      %v4160 = vadd.f32 %v4119, %v4159
      %v4161 = vpop.f32.mrf.mxu0
      %v4162 = vpop.f32.mrf.mxu0
      %4163 = vdwg.mxu0
      %4164 = vmatprep.subr.bf16.mxu0 %v2764
      %4165 = vmatpush1.bf16.msra.mxu0 %v2763
      %4166 = vmatprep.subr.bf16.mxu0 %v2762
      %4167 = vmatpush1.bf16.msra.mxu0 %v2761
      %4168 = vmatprep.subr.bf16.mxu0 %v2760
      %4169 = vmatpush1.bf16.msra.mxu0 %v2759
      %4170 = vmatprep.subr.bf16.mxu0 %v2758
      %4171 = vmatpush1.bf16.msra.mxu0 %v2757
      %4172 = vmatprep.subr.bf16.mxu0 %v2756
      %4173 = vmatpush1.bf16.msra.mxu0 %v2755
      %4174 = vmatprep.subr.bf16.mxu0 %v2754
      %4175 = vmatpush1.bf16.msra.mxu0 %v2753
      %4176 = vmatprep.subr.bf16.mxu0 %v2752
      %4177 = vmatpush1.bf16.msra.mxu0 %v2751
      %4178 = vmatprep.subr.bf16.mxu0 %v2750
      %4179 = vmatpush1.bf16.msra.mxu0 %v2749
      %4180 = vmatprep.subr.bf16.mxu0 %v2780
      %4181 = vmatpush2.bf16.msra.mxu0 %v2779
      %4182 = vmatprep.subr.bf16.mxu0 %v2778
      %4183 = vmatpush2.bf16.msra.mxu0 %v2777
      %4184 = vmatprep.subr.bf16.mxu0 %v2776
      %4185 = vmatpush2.bf16.msra.mxu0 %v2775
      %4186 = vmatprep.subr.bf16.mxu0 %v2774
      %4187 = vmatpush2.bf16.msra.mxu0 %v2773
      %4188 = vmatprep.subr.bf16.mxu0 %v2772
      %4189 = vmatpush2.bf16.msra.mxu0 %v2771
      %4190 = vmatprep.subr.bf16.mxu0 %v2770
      %4191 = vmatpush2.bf16.msra.mxu0 %v2769
      %4192 = vmatprep.subr.bf16.mxu0 %v2768
      %4193 = vmatpush2.bf16.msra.mxu0 %v2767
      %4194 = vmatprep.subr.bf16.mxu0 %v2766
      %4195 = vmatpush2.bf16.msra.mxu0 %v2765
      %4196 = vmatprep.mubr.bf16.mxu0 %v4036
      %4197 = vmatmul.mubr.bf16.gmra.mxu0 %v2031
      %v4198 = vpop.f32.mrf.mxu0
      %v4199 = vadd.f32 %v4158, %v4198
      %v4200 = vpop.f32.mrf.mxu0
      %v4201 = vadd.f32 %v4160, %v4200
      %v4202 = vpop.f32.mrf.mxu0
      %v4203 = vpop.f32.mrf.mxu0
      %4204 = vdwg.mxu0
      %4205 = vmatprep.subr.bf16.mxu0 %v2796
      %4206 = vmatpush1.bf16.msra.mxu0 %v2795
      %4207 = vmatprep.subr.bf16.mxu0 %v2794
      %4208 = vmatpush1.bf16.msra.mxu0 %v2793
      %4209 = vmatprep.subr.bf16.mxu0 %v2792
      %4210 = vmatpush1.bf16.msra.mxu0 %v2791
      %4211 = vmatprep.subr.bf16.mxu0 %v2790
      %4212 = vmatpush1.bf16.msra.mxu0 %v2789
      %4213 = vmatprep.subr.bf16.mxu0 %v2788
      %4214 = vmatpush1.bf16.msra.mxu0 %v2787
      %4215 = vmatprep.subr.bf16.mxu0 %v2786
      %4216 = vmatpush1.bf16.msra.mxu0 %v2785
      %4217 = vmatprep.subr.bf16.mxu0 %v2784
      %4218 = vmatpush1.bf16.msra.mxu0 %v2783
      %4219 = vmatprep.subr.bf16.mxu0 %v2782
      %4220 = vmatpush1.bf16.msra.mxu0 %v2781
      %4221 = vmatprep.subr.bf16.mxu0 0
      %4222 = vmatpush2.bf16.msra.mxu0 0
      %4223 = vmatprep.subr.bf16.mxu0 0
      %4224 = vmatpush2.bf16.msra.mxu0 0
      %4225 = vmatprep.subr.bf16.mxu0 0
      %4226 = vmatpush2.bf16.msra.mxu0 0
      %4227 = vmatprep.subr.bf16.mxu0 0
      %4228 = vmatpush2.bf16.msra.mxu0 0
      %4229 = vmatprep.subr.bf16.mxu0 0
      %4230 = vmatpush2.bf16.msra.mxu0 0
      %4231 = vmatprep.subr.bf16.mxu0 0
      %4232 = vmatpush2.bf16.msra.mxu0 0
      %4233 = vmatprep.subr.bf16.mxu0 0
      %4234 = vmatpush2.bf16.msra.mxu0 0
      %4235 = vmatprep.subr.bf16.mxu0 0
      %4236 = vmatpush2.bf16.msra.mxu0 0
      %4237 = vmatprep.mubr.bf16.mxu0 0
      %4238 = vmatmul.mubr.bf16.gmra.mxu0 %v4039
      %v4239 = vpop.f32.mrf.mxu0
      %v4240 = vadd.f32 %v4199, %v4239
      %v4241 = vpop.f32.mrf.mxu0
      %v4242 = vadd.f32 %v4201, %v4241
      %v4243 = vpop.f32.mrf.mxu0
      %v4244 = vpop.f32.mrf.mxu0
      %4245 = vdwg.mxu0
      %v4246 = vmax.f32 %v4240, 0.0
      %v4247 = vmax.f32 %v4242, 0.0
      %v4248 = vpack.c.bf16 %v4246, %v4246
      %v4249 = vpack.c.bf16 %v4247, %v4247
      %v4250 = vmax.bf16 %v3148, %v3368
      %v4251 = vmax.bf16 %v3149, %v3369
      %v4253 = vshrl.u32 %v4250, 16
      %v4256 = vshrl.u32 %v4251, 16
      %v4260 = vmax.bf16 %v4250, %v4253
      %v4261 = vmax.bf16 %v4251, %v4256
      %v4262 = vmax.bf16 %v3588, %v3808
      %v4263 = vmax.bf16 %v3589, %v3809
      %v4265 = vshrl.u32 %v4262, 16
      %v4268 = vshrl.u32 %v4263, 16
      %v4272 = vmax.bf16 %v4262, %v4265
      %v4273 = vmax.bf16 %v4263, %v4268
      %v4274 = vmax.bf16 %v4028, %v4248
      %v4275 = vmax.bf16 %v4029, %v4249
      %v4277 = vshrl.u32 %v4274, 16
      %v4280 = vshrl.u32 %v4275, 16
      %v4284 = vmax.bf16 %v4274, %v4277
      %v4285 = vmax.bf16 %v4275, %v4280
      %v4288 = vrot.slane %v4260, 1
      %v4289 = vrot.slane %v4261, 1
      %v4292 = vrot.slane %v4260, 2
      %v4293 = vrot.slane %v4261, 2
      %v4298 = vrot.slane %v4272, 1
      %v4299 = vrot.slane %v4273, 1
      %v4302 = vrot.slane %v4272, 2
      %v4303 = vrot.slane %v4273, 2
      %v4308 = vrot.slane %v4284, 1
      %v4309 = vrot.slane %v4285, 1
      %v4312 = vrot.slane %v4284, 2
      %v4313 = vrot.slane %v4285, 2
      %v4316 = vld [vmem:[%s5] sm:$0xff]
      %v4317 = vld [vmem:[%s5 + $0x8] sm:$0xf]
      %v4318 = vld [vmem:[%s5 + $0xc] sm:$0xff]
      %v4319 = vld [vmem:[%s5 + $0x14] sm:$0xf]
      %v4320 = vld [vmem:[%s5 + $0x18] sm:$0xff]
      %v4321 = vld [vmem:[%s5 + $0x20] sm:$0xf]
      %v4322 = vld [vmem:[%s5 + $0x24] sm:$0xff]
      %v4323 = vld [vmem:[%s5 + $0x2c] sm:$0xf]
      %v4324 = vld [vmem:[%s5 + $0x30] sm:$0xff]
      %v4325 = vld [vmem:[%s5 + $0x38] sm:$0xf]
      %v4326 = vld [vmem:[%s5 + $0x3c] sm:$0xff]
      %v4327 = vld [vmem:[%s5 + $0x44] sm:$0xf]
      %v4328 = vld [vmem:[%s5 + $0x48] sm:$0xff]
      %v4329 = vld [vmem:[%s5 + $0x50] sm:$0xf]
      %v4330 = vld [vmem:[%s5 + $0x54] sm:$0xff]
      %v4331 = vld [vmem:[%s5 + $0x5c] sm:$0xf]
      %v4332 = vld [vmem:[%s5 + $0x60] sm:$0xff]
      %v4333 = vld [vmem:[%s5 + $0x68] sm:$0xf]
      %v4334 = vld [vmem:[%s5 + $0x6c] sm:$0xff]
      %v4335 = vld [vmem:[%s5 + $0x74] sm:$0xf]
      %v4336 = vld [vmem:[%s5 + $0x78] sm:$0xff]
      %v4337 = vld [vmem:[%s5 + $0x80] sm:$0xf]
      %v4338 = vld [vmem:[%s5 + $0x84] sm:$0xff]
      %v4339 = vld [vmem:[%s5 + $0x8c] sm:$0xf]
      %v4340 = vld [vmem:[%s5 + $0x90] sm:$0xff]
      %v4341 = vld [vmem:[%s5 + $0x98] sm:$0xf]
      %v4342 = vld [vmem:[%s5 + $0x9c] sm:$0xff]
      %v4343 = vld [vmem:[%s5 + $0xa4] sm:$0xf]
      %v4344 = vld [vmem:[%s5 + $0xa8] sm:$0xff]
      %v4345 = vld [vmem:[%s5 + $0xb0] sm:$0xf]
      %v4346 = vld [vmem:[%s5 + $0xb4] sm:$0xff]
      %v4347 = vld [vmem:[%s5 + $0xbc] sm:$0xf]
      %v4348 = vld [vmem:[%s5 + $0xc0] sm:$0xff]
      %v4349 = vld [vmem:[%s5 + $0xc8] sm:$0xf]
      %v4350 = vld [vmem:[%s5 + $0xcc] sm:$0xff]
      %v4351 = vld [vmem:[%s5 + $0xd4] sm:$0xf]
      %v4352 = vld [vmem:[%s5 + $0xd8] sm:$0xff]
      %v4353 = vld [vmem:[%s5 + $0xe0] sm:$0xf]
      %v4354 = vld [vmem:[%s5 + $0xe4] sm:$0xff]
      %v4355 = vld [vmem:[%s5 + $0xec] sm:$0xf]
      %v4356 = vld [vmem:[%s5 + $0xf0] sm:$0xff]
      %v4357 = vld [vmem:[%s5 + $0xf8] sm:$0xf]
      %v4358 = vld [vmem:[%s5 + $0xfc] sm:$0xff]
      %v4359 = vld [vmem:[%s5 + $0x104] sm:$0xf]
      %v4360 = vld [vmem:[%s5 + $0x108] sm:$0xff]
      %v4361 = vld [vmem:[%s5 + $0x110] sm:$0xf]
      %v4362 = vld [vmem:[%s5 + $0x114] sm:$0xff]
      %v4363 = vld [vmem:[%s5 + $0x11c] sm:$0xf]
      %v4364 = vld [vmem:[%s5 + $0x120] sm:$0xff]
      %v4365 = vld [vmem:[%s5 + $0x128] sm:$0xf]
      %v4366 = vld [vmem:[%s5 + $0x12c] sm:$0xff]
      %v4367 = vld [vmem:[%s5 + $0x134] sm:$0xf]
      %v4368 = vld [vmem:[%s5 + $0x138] sm:$0xff]
      %v4369 = vld [vmem:[%s5 + $0x140] sm:$0xf]
      %v4370 = vld [vmem:[%s5 + $0x144] sm:$0xff]
      %v4371 = vld [vmem:[%s5 + $0x14c] sm:$0xf]
      %v4372 = vld [vmem:[%s5 + $0x150] sm:$0xff]
      %v4373 = vld [vmem:[%s5 + $0x158] sm:$0xf]
      %v4374 = vld [vmem:[%s5 + $0x15c] sm:$0xff]
      %v4375 = vld [vmem:[%s5 + $0x164] sm:$0xf]
      %v4376 = vld [vmem:[%s5 + $0x168] sm:$0xff]
      %v4377 = vld [vmem:[%s5 + $0x170] sm:$0xf]
      %v4378 = vld [vmem:[%s5 + $0x174] sm:$0xff]
      %v4379 = vld [vmem:[%s5 + $0x17c] sm:$0xf]
      %v4380 = vld [vmem:[%s5 + $0x180] sm:$0xff]
      %v4381 = vld [vmem:[%s5 + $0x188] sm:$0xf]
      %v4382 = vld [vmem:[%s5 + $0x18c] sm:$0xff]
      %v4383 = vld [vmem:[%s5 + $0x194] sm:$0xf]
      %v4384 = vld [vmem:[%s5 + $0x198] sm:$0xff]
      %v4385 = vld [vmem:[%s5 + $0x1a0] sm:$0xf]
      %v4386 = vld [vmem:[%s5 + $0x1a4] sm:$0xff]
      %v4387 = vld [vmem:[%s5 + $0x1ac] sm:$0xf]
      %v4388 = vld [vmem:[%s5 + $0x1b0] sm:$0xff]
      %v4389 = vld [vmem:[%s5 + $0x1b8] sm:$0xf]
      %v4390 = vld [vmem:[%s5 + $0x1bc] sm:$0xff]
      %v4391 = vld [vmem:[%s5 + $0x1c4] sm:$0xf]
      %v4392 = vld [vmem:[%s5 + $0x1c8] sm:$0xff]
      %v4393 = vld [vmem:[%s5 + $0x1d0] sm:$0xf]
      %v4394 = vld [vmem:[%s5 + $0x1d4] sm:$0xff]
      %v4395 = vld [vmem:[%s5 + $0x1dc] sm:$0xf]
      %v4396 = vld [vmem:[%s5 + $0x1e0] sm:$0xff]
      %v4397 = vld [vmem:[%s5 + $0x1e8] sm:$0xf]
      %v4398 = vld [vmem:[%s5 + $0x1ec] sm:$0xff]
      %v4399 = vld [vmem:[%s5 + $0x1f4] sm:$0xf]
      %v4400 = vld [vmem:[%s5 + $0x1f8] sm:$0xff]
      %v4401 = vld [vmem:[%s5 + $0x200] sm:$0xf]
      %v4402 = vld [vmem:[%s5 + $0x204] sm:$0xff]
      %v4403 = vld [vmem:[%s5 + $0x20c] sm:$0xf]
      %v4404 = vld [vmem:[%s5 + $0x210] sm:$0xff]
      %v4405 = vld [vmem:[%s5 + $0x218] sm:$0xf]
      %v4406 = vld [vmem:[%s5 + $0x21c] sm:$0xff]
      %v4407 = vld [vmem:[%s5 + $0x224] sm:$0xf]
      %v4408 = vld [vmem:[%s5 + $0x228] sm:$0xff]
      %v4409 = vld [vmem:[%s5 + $0x230] sm:$0xf]
      %v4410 = vld [vmem:[%s5 + $0x234] sm:$0xff]
      %v4411 = vld [vmem:[%s5 + $0x23c] sm:$0xf]
      %v4412 = vld [vmem:[%s5 + $0x240] sm:$0xff]
      %v4413 = vld [vmem:[%s5 + $0x248] sm:$0xf]
      %v4414 = vld [vmem:[%s5 + $0x24c] sm:$0xff]
      %v4415 = vld [vmem:[%s5 + $0x254] sm:$0xf]
      %v4416 = vld [vmem:[%s5 + $0x258] sm:$0xff]
      %v4417 = vld [vmem:[%s5 + $0x260] sm:$0xf]
      %v4418 = vld [vmem:[%s5 + $0x264] sm:$0xff]
      %v4419 = vld [vmem:[%s5 + $0x26c] sm:$0xf]
      %v4420 = vld [vmem:[%s5 + $0x270] sm:$0xff]
      %v4421 = vld [vmem:[%s5 + $0x278] sm:$0xf]
      %v4422 = vld [vmem:[%s5 + $0x27c] sm:$0xff]
      %v4423 = vld [vmem:[%s5 + $0x284] sm:$0xf]
      %v4424 = vld [vmem:[%s5 + $0x288] sm:$0xff]
      %v4425 = vld [vmem:[%s5 + $0x290] sm:$0xf]
      %v4426 = vld [vmem:[%s5 + $0x294] sm:$0xff]
      %v4427 = vld [vmem:[%s5 + $0x29c] sm:$0xf]
      %v4428 = vld [vmem:[%s5 + $0x2a0] sm:$0xff]
      %v4429 = vld [vmem:[%s5 + $0x2a8] sm:$0xf]
      %v4430 = vld [vmem:[%s5 + $0x2ac] sm:$0xff]
      %v4431 = vld [vmem:[%s5 + $0x2b4] sm:$0xf]
      %v4432 = vld [vmem:[%s5 + $0x2b8] sm:$0xff]
      %v4433 = vld [vmem:[%s5 + $0x2c0] sm:$0xf]
      %v4434 = vld [vmem:[%s5 + $0x2c4] sm:$0xff]
      %v4435 = vld [vmem:[%s5 + $0x2cc] sm:$0xf]
      %v4436 = vld [vmem:[%s5 + $0x2d0] sm:$0xff]
      %v4437 = vld [vmem:[%s5 + $0x2d8] sm:$0xf]
      %v4438 = vld [vmem:[%s5 + $0x2dc] sm:$0xff]
      %v4439 = vld [vmem:[%s5 + $0x2e4] sm:$0xf]
      %v4440 = vld [vmem:[%s5 + $0x2e8] sm:$0xff]
      %v4441 = vld [vmem:[%s5 + $0x2f0] sm:$0xf]
      %v4442 = vld [vmem:[%s5 + $0x2f4] sm:$0xff]
      %v4443 = vld [vmem:[%s5 + $0x2fc] sm:$0xf]
      %v4444 = vld [vmem:[%s5 + $0x300] sm:$0xff]
      %v4445 = vld [vmem:[%s5 + $0x308] sm:$0xf]
      %v4446 = vld [vmem:[%s5 + $0x30c] sm:$0xff]
      %v4447 = vld [vmem:[%s5 + $0x314] sm:$0xf]
      %v4448 = vld [vmem:[%s5 + $0x318] sm:$0xff]
      %v4449 = vld [vmem:[%s5 + $0x320] sm:$0xf]
      %v4450 = vld [vmem:[%s5 + $0x324] sm:$0xff]
      %v4451 = vld [vmem:[%s5 + $0x32c] sm:$0xf]
      %v4452 = vld [vmem:[%s5 + $0x330] sm:$0xff]
      %v4453 = vld [vmem:[%s5 + $0x338] sm:$0xf]
      %v4454 = vld [vmem:[%s5 + $0x33c] sm:$0xff]
      %v4455 = vld [vmem:[%s5 + $0x344] sm:$0xf]
      %v4456 = vld [vmem:[%s5 + $0x348] sm:$0xff]
      %v4457 = vld [vmem:[%s5 + $0x350] sm:$0xf]
      %v4458 = vld [vmem:[%s5 + $0x354] sm:$0xff]
      %v4459 = vld [vmem:[%s5 + $0x35c] sm:$0xf]
      %v4460 = vld [vmem:[%s5 + $0x360] sm:$0xff]
      %v4461 = vld [vmem:[%s5 + $0x368] sm:$0xf]
      %v4462 = vld [vmem:[%s5 + $0x36c] sm:$0xff]
      %v4463 = vld [vmem:[%s5 + $0x374] sm:$0xf]
      %v4464 = vld [vmem:[%s5 + $0x378] sm:$0xff]
      %v4465 = vld [vmem:[%s5 + $0x380] sm:$0xf]
      %v4466 = vld [vmem:[%s5 + $0x384] sm:$0xff]
      %v4467 = vld [vmem:[%s5 + $0x38c] sm:$0xf]
      %v4468 = vld [vmem:[%s5 + $0x390] sm:$0xff]
      %v4469 = vld [vmem:[%s5 + $0x398] sm:$0xf]
      %v4470 = vld [vmem:[%s5 + $0x39c] sm:$0xff]
      %v4471 = vld [vmem:[%s5 + $0x3a4] sm:$0xf]
      %v4472 = vld [vmem:[%s5 + $0x3a8] sm:$0xff]
      %v4473 = vld [vmem:[%s5 + $0x3b0] sm:$0xf]
      %v4474 = vld [vmem:[%s5 + $0x3b4] sm:$0xff]
      %v4475 = vld [vmem:[%s5 + $0x3bc] sm:$0xf]
      %v4476 = vld [vmem:[%s5 + $0x3c0] sm:$0xff]
      %v4477 = vld [vmem:[%s5 + $0x3c8] sm:$0xf]
      %v4478 = vld [vmem:[%s5 + $0x3cc] sm:$0xff]
      %v4479 = vld [vmem:[%s5 + $0x3d4] sm:$0xf]
      %v4480 = vld [vmem:[%s5 + $0x3d8] sm:$0xff]
      %v4481 = vld [vmem:[%s5 + $0x3e0] sm:$0xf]
      %v4482 = vld [vmem:[%s5 + $0x3e4] sm:$0xff]
      %v4483 = vld [vmem:[%s5 + $0x3ec] sm:$0xf]
      %v4484 = vld [vmem:[%s5 + $0x3f0] sm:$0xff]
      %v4485 = vld [vmem:[%s5 + $0x3f8] sm:$0xf]
      %v4486 = vld [vmem:[%s5 + $0x3fc] sm:$0xff]
      %v4487 = vld [vmem:[%s5 + $0x404] sm:$0xf]
      %v4488 = vld [vmem:[%s5 + $0x408] sm:$0xff]
      %v4489 = vld [vmem:[%s5 + $0x410] sm:$0xf]
      %v4490 = vld [vmem:[%s5 + $0x414] sm:$0xff]
      %v4491 = vld [vmem:[%s5 + $0x41c] sm:$0xf]
      %v4492 = vld [vmem:[%s5 + $0x420] sm:$0xff]
      %v4493 = vld [vmem:[%s5 + $0x428] sm:$0xf]
      %v4494 = vld [vmem:[%s5 + $0x42c] sm:$0xff]
      %v4495 = vld [vmem:[%s5 + $0x434] sm:$0xf]
      %v4496 = vld [vmem:[%s5 + $0x438] sm:$0xff]
      %v4497 = vld [vmem:[%s5 + $0x440] sm:$0xf]
      %v4498 = vld [vmem:[%s5 + $0x444] sm:$0xff]
      %v4499 = vld [vmem:[%s5 + $0x44c] sm:$0xf]
      %v4500 = vld [vmem:[%s5 + $0x450] sm:$0xff]
      %v4501 = vld [vmem:[%s5 + $0x458] sm:$0xf]
      %v4502 = vld [vmem:[%s5 + $0x45c] sm:$0xff]
      %v4503 = vld [vmem:[%s5 + $0x464] sm:$0xf]
      %v4504 = vld [vmem:[%s5 + $0x468] sm:$0xff]
      %v4505 = vld [vmem:[%s5 + $0x470] sm:$0xf]
      %v4506 = vld [vmem:[%s5 + $0x474] sm:$0xff]
      %v4507 = vld [vmem:[%s5 + $0x47c] sm:$0xf]
      %v4508 = vld [vmem:[%s5 + $0x480] sm:$0xff]
      %v4509 = vld [vmem:[%s5 + $0x488] sm:$0xf]
      %v4510 = vld [vmem:[%s5 + $0x48c] sm:$0xff]
      %v4511 = vld [vmem:[%s5 + $0x494] sm:$0xf]
      %v4512 = vld [vmem:[%s5 + $0x498] sm:$0xff]
      %v4513 = vld [vmem:[%s5 + $0x4a0] sm:$0xf]
      %v4514 = vld [vmem:[%s5 + $0x4a4] sm:$0xff]
      %v4515 = vld [vmem:[%s5 + $0x4ac] sm:$0xf]
      %v4516 = vld [vmem:[%s5 + $0x4b0] sm:$0xff]
      %v4517 = vld [vmem:[%s5 + $0x4b8] sm:$0xf]
      %v4518 = vld [vmem:[%s5 + $0x4bc] sm:$0xff]
      %v4519 = vld [vmem:[%s5 + $0x4c4] sm:$0xf]
      %v4520 = vld [vmem:[%s5 + $0x4c8] sm:$0xff]
      %v4521 = vld [vmem:[%s5 + $0x4d0] sm:$0xf]
      %v4522 = vld [vmem:[%s5 + $0x4d4] sm:$0xff]
      %v4523 = vld [vmem:[%s5 + $0x4dc] sm:$0xf]
      %v4524 = vld [vmem:[%s5 + $0x4e0] sm:$0xff]
      %v4525 = vld [vmem:[%s5 + $0x4e8] sm:$0xf]
      %v4526 = vld [vmem:[%s5 + $0x4ec] sm:$0xff]
      %v4527 = vld [vmem:[%s5 + $0x4f4] sm:$0xf]
      %v4528 = vld [vmem:[%s5 + $0x4f8] sm:$0xff]
      %v4529 = vld [vmem:[%s5 + $0x500] sm:$0xf]
      %v4530 = vld [vmem:[%s5 + $0x504] sm:$0xff]
      %v4531 = vld [vmem:[%s5 + $0x50c] sm:$0xf]
      %v4532 = vld [vmem:[%s5 + $0x510] sm:$0xff]
      %v4533 = vld [vmem:[%s5 + $0x518] sm:$0xf]
      %v4534 = vld [vmem:[%s5 + $0x51c] sm:$0xff]
      %v4535 = vld [vmem:[%s5 + $0x524] sm:$0xf]
      %v4536 = vld [vmem:[%s5 + $0x528] sm:$0xff]
      %v4537 = vld [vmem:[%s5 + $0x530] sm:$0xf]
      %v4538 = vld [vmem:[%s5 + $0x534] sm:$0xff]
      %v4539 = vld [vmem:[%s5 + $0x53c] sm:$0xf]
      %v4540 = vld [vmem:[%s5 + $0x540] sm:$0xff]
      %v4541 = vld [vmem:[%s5 + $0x548] sm:$0xf]
      %v4542 = vld [vmem:[%s5 + $0x54c] sm:$0xff]
      %v4543 = vld [vmem:[%s5 + $0x554] sm:$0xf]
      %v4544 = vld [vmem:[%s5 + $0x558] sm:$0xff]
      %v4545 = vld [vmem:[%s5 + $0x560] sm:$0xf]
      %v4546 = vld [vmem:[%s5 + $0x564] sm:$0xff]
      %v4547 = vld [vmem:[%s5 + $0x56c] sm:$0xf]
      %v4548 = vld [vmem:[%s5 + $0x570] sm:$0xff]
      %v4549 = vld [vmem:[%s5 + $0x578] sm:$0xf]
      %v4550 = vld [vmem:[%s5 + $0x57c] sm:$0xff]
      %v4551 = vld [vmem:[%s5 + $0x584] sm:$0xf]
      %v4552 = vld [vmem:[%s5 + $0x588] sm:$0xff]
      %v4553 = vld [vmem:[%s5 + $0x590] sm:$0xf]
      %v4554 = vld [vmem:[%s5 + $0x594] sm:$0xff]
      %v4555 = vld [vmem:[%s5 + $0x59c] sm:$0xf]
      %v4556 = vld [vmem:[%s5 + $0x5a0] sm:$0xff]
      %v4557 = vld [vmem:[%s5 + $0x5a8] sm:$0xf]
      %v4558 = vld [vmem:[%s5 + $0x5ac] sm:$0xff]
      %v4559 = vld [vmem:[%s5 + $0x5b4] sm:$0xf]
      %v4560 = vld [vmem:[%s5 + $0x5b8] sm:$0xff]
      %v4561 = vld [vmem:[%s5 + $0x5c0] sm:$0xf]
      %v4562 = vld [vmem:[%s5 + $0x5c4] sm:$0xff]
      %v4563 = vld [vmem:[%s5 + $0x5cc] sm:$0xf]
      %v4564 = vld [vmem:[%s5 + $0x5d0] sm:$0xff]
      %v4565 = vld [vmem:[%s5 + $0x5d8] sm:$0xf]
      %v4566 = vld [vmem:[%s5 + $0x5dc] sm:$0xff]
      %v4567 = vld [vmem:[%s5 + $0x5e4] sm:$0xf]
      %v4568 = vld [vmem:[%s5 + $0x5e8] sm:$0xff]
      %v4569 = vld [vmem:[%s5 + $0x5f0] sm:$0xf]
      %v4570 = vld [vmem:[%s5 + $0x5f4] sm:$0xff]
      %v4571 = vld [vmem:[%s5 + $0x5fc] sm:$0xf]
      %v4572 = vld [vmem:[%s5 + $0x600] sm:$0xff]
      %v4573 = vld [vmem:[%s5 + $0x608] sm:$0xf]
      %v4574 = vld [vmem:[%s5 + $0x60c] sm:$0xff]
      %v4575 = vld [vmem:[%s5 + $0x614] sm:$0xf]
      %v4576 = vld [vmem:[%s5 + $0x618] sm:$0xff]
      %v4577 = vld [vmem:[%s5 + $0x620] sm:$0xf]
      %v4578 = vld [vmem:[%s5 + $0x624] sm:$0xff]
      %v4579 = vld [vmem:[%s5 + $0x62c] sm:$0xf]
      %v4580 = vld [vmem:[%s5 + $0x630] sm:$0xff]
      %v4581 = vld [vmem:[%s5 + $0x638] sm:$0xf]
      %v4582 = vld [vmem:[%s5 + $0x63c] sm:$0xff]
      %v4583 = vld [vmem:[%s5 + $0x644] sm:$0xf]
      %v4584 = vld [vmem:[%s5 + $0x648] sm:$0xff]
      %v4585 = vld [vmem:[%s5 + $0x650] sm:$0xf]
      %v4586 = vld [vmem:[%s5 + $0x654] sm:$0xff]
      %v4587 = vld [vmem:[%s5 + $0x65c] sm:$0xf]
      %v4588 = vld [vmem:[%s5 + $0x660] sm:$0xff]
      %v4589 = vld [vmem:[%s5 + $0x668] sm:$0xf]
      %v4590 = vld [vmem:[%s5 + $0x66c] sm:$0xff]
      %v4591 = vld [vmem:[%s5 + $0x674] sm:$0xf]
      %v4592 = vld [vmem:[%s5 + $0x678] sm:$0xff]
      %v4593 = vld [vmem:[%s5 + $0x680] sm:$0xf]
      %v4594 = vld [vmem:[%s5 + $0x684] sm:$0xff]
      %v4595 = vld [vmem:[%s5 + $0x68c] sm:$0xf]
      %v4596 = vld [vmem:[%s5 + $0x690] sm:$0xff]
      %v4597 = vld [vmem:[%s5 + $0x698] sm:$0xf]
      %v4598 = vld [vmem:[%s5 + $0x69c] sm:$0xff]
      %v4599 = vld [vmem:[%s5 + $0x6a4] sm:$0xf]
      %v4600 = vld [vmem:[%s5 + $0x6a8] sm:$0xff]
      %v4601 = vld [vmem:[%s5 + $0x6b0] sm:$0xf]
      %v4602 = vld [vmem:[%s5 + $0x6b4] sm:$0xff]
      %v4603 = vld [vmem:[%s5 + $0x6bc] sm:$0xf]
      %v4604 = vld [vmem:[%s5 + $0x6c0] sm:$0xff]
      %v4605 = vld [vmem:[%s5 + $0x6c8] sm:$0xf]
      %v4606 = vld [vmem:[%s5 + $0x6cc] sm:$0xff]
      %v4607 = vld [vmem:[%s5 + $0x6d4] sm:$0xf]
      %v4608 = vld [vmem:[%s5 + $0x6d8] sm:$0xff]
      %v4609 = vld [vmem:[%s5 + $0x6e0] sm:$0xf]
      %v4610 = vld [vmem:[%s5 + $0x6e4] sm:$0xff]
      %v4611 = vld [vmem:[%s5 + $0x6ec] sm:$0xf]
      %v4612 = vld [vmem:[%s5 + $0x6f0] sm:$0xff]
      %v4613 = vld [vmem:[%s5 + $0x6f8] sm:$0xf]
      %v4614 = vld [vmem:[%s5 + $0x6fc] sm:$0xff]
      %v4615 = vld [vmem:[%s5 + $0x704] sm:$0xf]
      %v4616 = vld [vmem:[%s5 + $0x708] sm:$0xff]
      %v4617 = vld [vmem:[%s5 + $0x710] sm:$0xf]
      %v4618 = vld [vmem:[%s5 + $0x714] sm:$0xff]
      %v4619 = vld [vmem:[%s5 + $0x71c] sm:$0xf]
      %v4620 = vld [vmem:[%s5 + $0x720] sm:$0xff]
      %v4621 = vld [vmem:[%s5 + $0x728] sm:$0xf]
      %v4622 = vld [vmem:[%s5 + $0x72c] sm:$0xff]
      %v4623 = vld [vmem:[%s5 + $0x734] sm:$0xf]
      %v4624 = vld [vmem:[%s5 + $0x738] sm:$0xff]
      %v4625 = vld [vmem:[%s5 + $0x740] sm:$0xf]
      %v4626 = vld [vmem:[%s5 + $0x744] sm:$0xff]
      %v4627 = vld [vmem:[%s5 + $0x74c] sm:$0xf]
      %v4628 = vld [vmem:[%s5 + $0x750] sm:$0xff]
      %v4629 = vld [vmem:[%s5 + $0x758] sm:$0xf]
      %v4630 = vld [vmem:[%s5 + $0x75c] sm:$0xff]
      %v4631 = vld [vmem:[%s5 + $0x764] sm:$0xf]
      %v4632 = vld [vmem:[%s5 + $0x768] sm:$0xff]
      %v4633 = vld [vmem:[%s5 + $0x770] sm:$0xf]
      %v4634 = vld [vmem:[%s5 + $0x774] sm:$0xff]
      %v4635 = vld [vmem:[%s5 + $0x77c] sm:$0xf]
      %v4636 = vld [vmem:[%s5 + $0x780] sm:$0xff]
      %v4637 = vld [vmem:[%s5 + $0x788] sm:$0xf]
      %v4638 = vld [vmem:[%s5 + $0x78c] sm:$0xff]
      %v4639 = vld [vmem:[%s5 + $0x794] sm:$0xf]
      %v4640 = vld [vmem:[%s5 + $0x798] sm:$0xff]
      %v4641 = vld [vmem:[%s5 + $0x7a0] sm:$0xf]
      %v4642 = vld [vmem:[%s5 + $0x7a4] sm:$0xff]
      %v4643 = vld [vmem:[%s5 + $0x7ac] sm:$0xf]
      %v4644 = vld [vmem:[%s5 + $0x7b0] sm:$0xff]
      %v4645 = vld [vmem:[%s5 + $0x7b8] sm:$0xf]
      %v4646 = vld [vmem:[%s5 + $0x7bc] sm:$0xff]
      %v4647 = vld [vmem:[%s5 + $0x7c4] sm:$0xf]
      %v4648 = vld [vmem:[%s5 + $0x7c8] sm:$0xff]
      %v4649 = vld [vmem:[%s5 + $0x7d0] sm:$0xf]
      %v4650 = vld [vmem:[%s5 + $0x7d4] sm:$0xff]
      %v4651 = vld [vmem:[%s5 + $0x7dc] sm:$0xf]
      %v4652 = vld [vmem:[%s5 + $0x7e0] sm:$0xff]
      %v4653 = vld [vmem:[%s5 + $0x7e8] sm:$0xf]
      %v4654 = vld [vmem:[%s5 + $0x7ec] sm:$0xff]
      %v4655 = vld [vmem:[%s5 + $0x7f4] sm:$0xf]
      %v4656 = vld [vmem:[%s5 + $0x7f8] sm:$0xff]
      %v4657 = vld [vmem:[%s5 + $0x800] sm:$0xf]
      %v4658 = vld [vmem:[%s5 + $0x804] sm:$0xff]
      %v4659 = vld [vmem:[%s5 + $0x80c] sm:$0xf]
      %v4660 = vld [vmem:[%s5 + $0x810] sm:$0xff]
      %v4661 = vld [vmem:[%s5 + $0x818] sm:$0xf]
      %v4662 = vld [vmem:[%s5 + $0x81c] sm:$0xff]
      %v4663 = vld [vmem:[%s5 + $0x824] sm:$0xf]
      %v4664 = vld [vmem:[%s5 + $0x828] sm:$0xff]
      %v4665 = vld [vmem:[%s5 + $0x830] sm:$0xf]
      %v4666 = vld [vmem:[%s5 + $0x834] sm:$0xff]
      %v4667 = vld [vmem:[%s5 + $0x83c] sm:$0xf]
      %v4668 = vld [vmem:[%s5 + $0x840] sm:$0xff]
      %v4669 = vld [vmem:[%s5 + $0x848] sm:$0xf]
      %v4670 = vld [vmem:[%s5 + $0x84c] sm:$0xff]
      %v4671 = vld [vmem:[%s5 + $0x854] sm:$0xf]
      %v4672 = vld [vmem:[%s5 + $0x858] sm:$0xff]
      %v4673 = vld [vmem:[%s5 + $0x860] sm:$0xf]
      %v4674 = vld [vmem:[%s5 + $0x864] sm:$0xff]
      %v4675 = vld [vmem:[%s5 + $0x86c] sm:$0xf]
      %v4676 = vld [vmem:[%s5 + $0x870] sm:$0xff]
      %v4677 = vld [vmem:[%s5 + $0x878] sm:$0xf]
      %v4678 = vld [vmem:[%s5 + $0x87c] sm:$0xff]
      %v4679 = vld [vmem:[%s5 + $0x884] sm:$0xf]
      %v4680 = vld [vmem:[%s5 + $0x888] sm:$0xff]
      %v4681 = vld [vmem:[%s5 + $0x890] sm:$0xf]
      %v4682 = vld [vmem:[%s5 + $0x894] sm:$0xff]
      %v4683 = vld [vmem:[%s5 + $0x89c] sm:$0xf]
      %v4684 = vld [vmem:[%s5 + $0x8a0] sm:$0xff]
      %v4685 = vld [vmem:[%s5 + $0x8a8] sm:$0xf]
      %v4686 = vld [vmem:[%s5 + $0x8ac] sm:$0xff]
      %v4687 = vld [vmem:[%s5 + $0x8b4] sm:$0xf]
      %v4688 = vld [vmem:[%s5 + $0x8b8] sm:$0xff]
      %v4689 = vld [vmem:[%s5 + $0x8c0] sm:$0xf]
      %v4690 = vld [vmem:[%s5 + $0x8c4] sm:$0xff]
      %v4691 = vld [vmem:[%s5 + $0x8cc] sm:$0xf]
      %v4692 = vld [vmem:[%s5 + $0x8d0] sm:$0xff]
      %v4693 = vld [vmem:[%s5 + $0x8d8] sm:$0xf]
      %v4694 = vld [vmem:[%s5 + $0x8dc] sm:$0xff]
      %v4695 = vld [vmem:[%s5 + $0x8e4] sm:$0xf]
      %v4696 = vld [vmem:[%s5 + $0x8e8] sm:$0xff]
      %v4697 = vld [vmem:[%s5 + $0x8f0] sm:$0xf]
      %v4698 = vld [vmem:[%s5 + $0x8f4] sm:$0xff]
      %v4699 = vld [vmem:[%s5 + $0x8fc] sm:$0xf]
      %v4700 = vld [vmem:[%s5 + $0x900] sm:$0xff]
      %v4701 = vld [vmem:[%s5 + $0x908] sm:$0xf]
      %v4702 = vld [vmem:[%s5 + $0x90c] sm:$0xff]
      %v4703 = vld [vmem:[%s5 + $0x914] sm:$0xf]
      %v4704 = vld [vmem:[%s5 + $0x918] sm:$0xff]
      %v4705 = vld [vmem:[%s5 + $0x920] sm:$0xf]
      %v4706 = vld [vmem:[%s5 + $0x924] sm:$0xff]
      %v4707 = vld [vmem:[%s5 + $0x92c] sm:$0xf]
      %v4708 = vld [vmem:[%s5 + $0x930] sm:$0xff]
      %v4709 = vld [vmem:[%s5 + $0x938] sm:$0xf]
      %v4710 = vld [vmem:[%s5 + $0x93c] sm:$0xff]
      %v4711 = vld [vmem:[%s5 + $0x944] sm:$0xf]
      %v4712 = vld [vmem:[%s5 + $0x948] sm:$0xff]
      %v4713 = vld [vmem:[%s5 + $0x950] sm:$0xf]
      %v4714 = vld [vmem:[%s5 + $0x954] sm:$0xff]
      %v4715 = vld [vmem:[%s5 + $0x95c] sm:$0xf]
      %v4716 = vld [vmem:[%s5 + $0x960] sm:$0xff]
      %v4717 = vld [vmem:[%s5 + $0x968] sm:$0xf]
      %v4718 = vld [vmem:[%s5 + $0x96c] sm:$0xff]
      %v4719 = vld [vmem:[%s5 + $0x974] sm:$0xf]
      %v4720 = vld [vmem:[%s5 + $0x978] sm:$0xff]
      %v4721 = vld [vmem:[%s5 + $0x980] sm:$0xf]
      %v4722 = vld [vmem:[%s5 + $0x984] sm:$0xff]
      %v4723 = vld [vmem:[%s5 + $0x98c] sm:$0xf]
      %v4724 = vld [vmem:[%s5 + $0x990] sm:$0xff]
      %v4725 = vld [vmem:[%s5 + $0x998] sm:$0xf]
      %v4726 = vld [vmem:[%s5 + $0x99c] sm:$0xff]
      %v4727 = vld [vmem:[%s5 + $0x9a4] sm:$0xf]
      %v4728 = vld [vmem:[%s5 + $0x9a8] sm:$0xff]
      %v4729 = vld [vmem:[%s5 + $0x9b0] sm:$0xf]
      %v4730 = vld [vmem:[%s5 + $0x9b4] sm:$0xff]
      %v4731 = vld [vmem:[%s5 + $0x9bc] sm:$0xf]
      %v4732 = vld [vmem:[%s5 + $0x9c0] sm:$0xff]
      %v4733 = vld [vmem:[%s5 + $0x9c8] sm:$0xf]
      %v4734 = vld [vmem:[%s5 + $0x9cc] sm:$0xff]
      %v4735 = vld [vmem:[%s5 + $0x9d4] sm:$0xf]
      %v4736 = vld [vmem:[%s5 + $0x9d8] sm:$0xff]
      %v4737 = vld [vmem:[%s5 + $0x9e0] sm:$0xf]
      %v4738 = vld [vmem:[%s5 + $0x9e4] sm:$0xff]
      %v4739 = vld [vmem:[%s5 + $0x9ec] sm:$0xf]
      %v4740 = vld [vmem:[%s5 + $0x9f0] sm:$0xff]
      %v4741 = vld [vmem:[%s5 + $0x9f8] sm:$0xf]
      %v4742 = vld [vmem:[%s5 + $0x9fc] sm:$0xff]
      %v4743 = vld [vmem:[%s5 + $0xa04] sm:$0xf]
      %v4744 = vld [vmem:[%s5 + $0xa08] sm:$0xff]
      %v4745 = vld [vmem:[%s5 + $0xa10] sm:$0xf]
      %v4746 = vld [vmem:[%s5 + $0xa14] sm:$0xff]
      %v4747 = vld [vmem:[%s5 + $0xa1c] sm:$0xf]
      %v4748 = vld [vmem:[%s5 + $0xa20] sm:$0xff]
      %v4749 = vld [vmem:[%s5 + $0xa28] sm:$0xf]
      %v4750 = vld [vmem:[%s5 + $0xa2c] sm:$0xff]
      %v4751 = vld [vmem:[%s5 + $0xa34] sm:$0xf]
      %v4752 = vld [vmem:[%s5 + $0xa38] sm:$0xff]
      %v4753 = vld [vmem:[%s5 + $0xa40] sm:$0xf]
      %v4754 = vld [vmem:[%s5 + $0xa44] sm:$0xff]
      %v4755 = vld [vmem:[%s5 + $0xa4c] sm:$0xf]
      %v4756 = vld [vmem:[%s5 + $0xa50] sm:$0xff]
      %v4757 = vld [vmem:[%s5 + $0xa58] sm:$0xf]
      %v4758 = vld [vmem:[%s5 + $0xa5c] sm:$0xff]
      %v4759 = vld [vmem:[%s5 + $0xa64] sm:$0xf]
      %v4760 = vld [vmem:[%s5 + $0xa68] sm:$0xff]
      %v4761 = vld [vmem:[%s5 + $0xa70] sm:$0xf]
      %v4762 = vld [vmem:[%s5 + $0xa74] sm:$0xff]
      %v4763 = vld [vmem:[%s5 + $0xa7c] sm:$0xf]
      %v4764 = vld [vmem:[%s5 + $0xa80] sm:$0xff]
      %v4765 = vld [vmem:[%s5 + $0xa88] sm:$0xf]
      %v4766 = vld [vmem:[%s5 + $0xa8c] sm:$0xff]
      %v4767 = vld [vmem:[%s5 + $0xa94] sm:$0xf]
      %v4768 = vld [vmem:[%s5 + $0xa98] sm:$0xff]
      %v4769 = vld [vmem:[%s5 + $0xaa0] sm:$0xf]
      %v4770 = vld [vmem:[%s5 + $0xaa4] sm:$0xff]
      %v4771 = vld [vmem:[%s5 + $0xaac] sm:$0xf]
      %v4772 = vld [vmem:[%s5 + $0xab0] sm:$0xff]
      %v4773 = vld [vmem:[%s5 + $0xab8] sm:$0xf]
      %v4774 = vld [vmem:[%s5 + $0xabc] sm:$0xff]
      %v4775 = vld [vmem:[%s5 + $0xac4] sm:$0xf]
      %v4776 = vld [vmem:[%s5 + $0xac8] sm:$0xff]
      %v4777 = vld [vmem:[%s5 + $0xad0] sm:$0xf]
      %v4778 = vld [vmem:[%s5 + $0xad4] sm:$0xff]
      %v4779 = vld [vmem:[%s5 + $0xadc] sm:$0xf]
      %v4780 = vld [vmem:[%s5 + $0xae0] sm:$0xff]
      %v4781 = vld [vmem:[%s5 + $0xae8] sm:$0xf]
      %v4782 = vld [vmem:[%s5 + $0xaec] sm:$0xff]
      %v4783 = vld [vmem:[%s5 + $0xaf4] sm:$0xf]
      %v4784 = vld [vmem:[%s5 + $0xaf8] sm:$0xff]
      %v4785 = vld [vmem:[%s5 + $0xb00] sm:$0xf]
      %v4786 = vld [vmem:[%s5 + $0xb04] sm:$0xff]
      %v4787 = vld [vmem:[%s5 + $0xb0c] sm:$0xf]
      %v4788 = vld [vmem:[%s5 + $0xb10] sm:$0xff]
      %v4789 = vld [vmem:[%s5 + $0xb18] sm:$0xf]
      %v4790 = vld [vmem:[%s5 + $0xb1c] sm:$0xff]
      %v4791 = vld [vmem:[%s5 + $0xb24] sm:$0xf]
      %v4792 = vld [vmem:[%s5 + $0xb28] sm:$0xff]
      %v4793 = vld [vmem:[%s5 + $0xb30] sm:$0xf]
      %v4794 = vld [vmem:[%s5 + $0xb34] sm:$0xff]
      %v4795 = vld [vmem:[%s5 + $0xb3c] sm:$0xf]
      %v4796 = vld [vmem:[%s5 + $0xb40] sm:$0xff]
      %v4797 = vld [vmem:[%s5 + $0xb48] sm:$0xf]
      %v4798 = vld [vmem:[%s5 + $0xb4c] sm:$0xff]
      %v4799 = vld [vmem:[%s5 + $0xb54] sm:$0xf]
      %v4800 = vld [vmem:[%s5 + $0xb58] sm:$0xff]
      %v4801 = vld [vmem:[%s5 + $0xb60] sm:$0xf]
      %v4802 = vld [vmem:[%s5 + $0xb64] sm:$0xff]
      %v4803 = vld [vmem:[%s5 + $0xb6c] sm:$0xf]
      %v4804 = vld [vmem:[%s5 + $0xb70] sm:$0xff]
      %v4805 = vld [vmem:[%s5 + $0xb78] sm:$0xf]
      %v4806 = vld [vmem:[%s5 + $0xb7c] sm:$0xff]
      %v4807 = vld [vmem:[%s5 + $0xb84] sm:$0xf]
      %v4808 = vld [vmem:[%s5 + $0xb88] sm:$0xff]
      %v4809 = vld [vmem:[%s5 + $0xb90] sm:$0xf]
      %v4810 = vld [vmem:[%s5 + $0xb94] sm:$0xff]
      %v4811 = vld [vmem:[%s5 + $0xb9c] sm:$0xf]
      %v4812 = vld [vmem:[%s5 + $0xba0] sm:$0xff]
      %v4813 = vld [vmem:[%s5 + $0xba8] sm:$0xf]
      %v4814 = vld [vmem:[%s5 + $0xbac] sm:$0xff]
      %v4815 = vld [vmem:[%s5 + $0xbb4] sm:$0xf]
      %v4816 = vld [vmem:[%s5 + $0xbb8] sm:$0xff]
      %v4817 = vld [vmem:[%s5 + $0xbc0] sm:$0xf]
      %v4818 = vld [vmem:[%s5 + $0xbc4] sm:$0xff]
      %v4819 = vld [vmem:[%s5 + $0xbcc] sm:$0xf]
      %v4820 = vld [vmem:[%s5 + $0xbd0] sm:$0xff]
      %v4821 = vld [vmem:[%s5 + $0xbd8] sm:$0xf]
      %v4822 = vld [vmem:[%s5 + $0xbdc] sm:$0xff]
      %v4823 = vld [vmem:[%s5 + $0xbe4] sm:$0xf]
      %v4824 = vld [vmem:[%s5 + $0xbe8] sm:$0xff]
      %v4825 = vld [vmem:[%s5 + $0xbf0] sm:$0xf]
      %v4826 = vld [vmem:[%s5 + $0xbf4] sm:$0xff]
      %v4827 = vld [vmem:[%s5 + $0xbfc] sm:$0xf]
      %v4828 = vld [vmem:[%s5 + $0xc00] sm:$0xff]
      %v4829 = vld [vmem:[%s5 + $0xc08] sm:$0xf]
      %v4830 = vld [vmem:[%s5 + $0xc0c] sm:$0xff]
      %v4831 = vld [vmem:[%s5 + $0xc14] sm:$0xf]
      %v4832 = vld [vmem:[%s5 + $0xc18] sm:$0xff]
      %v4833 = vld [vmem:[%s5 + $0xc20] sm:$0xf]
      %v4834 = vld [vmem:[%s5 + $0xc24] sm:$0xff]
      %v4835 = vld [vmem:[%s5 + $0xc2c] sm:$0xf]
      %v4836 = vld [vmem:[%s5 + $0xc30] sm:$0xff]
      %v4837 = vld [vmem:[%s5 + $0xc38] sm:$0xf]
      %v4838 = vld [vmem:[%s5 + $0xc3c] sm:$0xff]
      %v4839 = vld [vmem:[%s5 + $0xc44] sm:$0xf]
      %v4840 = vld [vmem:[%s5 + $0xc48] sm:$0xff]
      %v4841 = vld [vmem:[%s5 + $0xc50] sm:$0xf]
      %v4842 = vld [vmem:[%s5 + $0xc54] sm:$0xff]
      %v4843 = vld [vmem:[%s5 + $0xc5c] sm:$0xf]
      %v4844 = vld [vmem:[%s5 + $0xc60] sm:$0xff]
      %v4845 = vld [vmem:[%s5 + $0xc68] sm:$0xf]
      %v4846 = vld [vmem:[%s5 + $0xc6c] sm:$0xff]
      %v4847 = vld [vmem:[%s5 + $0xc74] sm:$0xf]
      %v4848 = vld [vmem:[%s5 + $0xc78] sm:$0xff]
      %v4849 = vld [vmem:[%s5 + $0xc80] sm:$0xf]
      %v4850 = vld [vmem:[%s5 + $0xc84] sm:$0xff]
      %v4851 = vld [vmem:[%s5 + $0xc8c] sm:$0xf]
      %v4852 = vld [vmem:[%s5 + $0xc90] sm:$0xff]
      %v4853 = vld [vmem:[%s5 + $0xc98] sm:$0xf]
      %v4854 = vld [vmem:[%s5 + $0xc9c] sm:$0xff]
      %v4855 = vld [vmem:[%s5 + $0xca4] sm:$0xf]
      %v4856 = vld [vmem:[%s5 + $0xca8] sm:$0xff]
      %v4857 = vld [vmem:[%s5 + $0xcb0] sm:$0xf]
      %v4858 = vld [vmem:[%s5 + $0xcb4] sm:$0xff]
      %v4859 = vld [vmem:[%s5 + $0xcbc] sm:$0xf]
      %v4860 = vld [vmem:[%s5 + $0xcc0] sm:$0xff]
      %v4861 = vld [vmem:[%s5 + $0xcc8] sm:$0xf]
      %v4862 = vld [vmem:[%s5 + $0xccc] sm:$0xff]
      %v4863 = vld [vmem:[%s5 + $0xcd4] sm:$0xf]
      %v4864 = vld [vmem:[%s5 + $0xcd8] sm:$0xff]
      %v4865 = vld [vmem:[%s5 + $0xce0] sm:$0xf]
      %v4866 = vld [vmem:[%s5 + $0xce4] sm:$0xff]
      %v4867 = vld [vmem:[%s5 + $0xcec] sm:$0xf]
      %v4868 = vld [vmem:[%s5 + $0xcf0] sm:$0xff]
      %v4869 = vld [vmem:[%s5 + $0xcf8] sm:$0xf]
      %v4870 = vld [vmem:[%s5 + $0xcfc] sm:$0xff]
      %v4871 = vld [vmem:[%s5 + $0xd04] sm:$0xf]
      %v4872 = vld [vmem:[%s5 + $0xd08] sm:$0xff]
      %v4873 = vld [vmem:[%s5 + $0xd10] sm:$0xf]
      %v4874 = vld [vmem:[%s5 + $0xd14] sm:$0xff]
      %v4875 = vld [vmem:[%s5 + $0xd1c] sm:$0xf]
      %v4876 = vld [vmem:[%s5 + $0xd20] sm:$0xff]
      %v4877 = vld [vmem:[%s5 + $0xd28] sm:$0xf]
      %v4878 = vld [vmem:[%s5 + $0xd2c] sm:$0xff]
      %v4879 = vld [vmem:[%s5 + $0xd34] sm:$0xf]
      %v4880 = vld [vmem:[%s5 + $0xd38] sm:$0xff]
      %v4881 = vld [vmem:[%s5 + $0xd40] sm:$0xf]
      %v4882 = vld [vmem:[%s5 + $0xd44] sm:$0xff]
      %v4883 = vld [vmem:[%s5 + $0xd4c] sm:$0xf]
      %v4884 = vld [vmem:[%s5 + $0xd50] sm:$0xff]
      %v4885 = vld [vmem:[%s5 + $0xd58] sm:$0xf]
      %v4886 = vld [vmem:[%s5 + $0xd5c] sm:$0xff]
      %v4887 = vld [vmem:[%s5 + $0xd64] sm:$0xf]
      %v4888 = vld [vmem:[%s5 + $0xd68] sm:$0xff]
      %v4889 = vld [vmem:[%s5 + $0xd70] sm:$0xf]
      %v4890 = vld [vmem:[%s5 + $0xd74] sm:$0xff]
      %v4891 = vld [vmem:[%s5 + $0xd7c] sm:$0xf]
      %v4892 = vld [vmem:[%s6] sm:$0x7]
      %v5469 = vunpack.c.l.b16 %v4316
      %v5470 = vunpack.c.h.b16 %v4316
      %v5471 = vunpack.c.l.b16 %v4317
      %v5472 = vunpack.c.l.b16 %v4318
      %v5473 = vunpack.c.h.b16 %v4318
      %v5474 = vunpack.c.l.b16 %v4319
      %v5475 = vunpack.c.l.b16 %v4320
      %v5476 = vunpack.c.h.b16 %v4320
      %v5477 = vunpack.c.l.b16 %v4321
      %v5478 = vunpack.c.l.b16 %v4322
      %v5479 = vunpack.c.h.b16 %v4322
      %v5480 = vunpack.c.l.b16 %v4323
      %v5481 = vunpack.c.l.b16 %v4324
      %v5482 = vunpack.c.h.b16 %v4324
      %v5483 = vunpack.c.l.b16 %v4325
      %v5484 = vunpack.c.l.b16 %v4326
      %v5485 = vunpack.c.h.b16 %v4326
      %v5486 = vunpack.c.l.b16 %v4327
      %v5487 = vunpack.c.l.b16 %v4328
      %v5488 = vunpack.c.h.b16 %v4328
      %v5489 = vunpack.c.l.b16 %v4329
      %v5490 = vunpack.c.l.b16 %v4330
      %v5491 = vunpack.c.h.b16 %v4330
      %v5492 = vunpack.c.l.b16 %v4331
      %v5493 = vunpack.c.l.b16 %v4332
      %v5494 = vunpack.c.h.b16 %v4332
      %v5495 = vunpack.c.l.b16 %v4333
      %v5496 = vunpack.c.l.b16 %v4334
      %v5497 = vunpack.c.h.b16 %v4334
      %v5498 = vunpack.c.l.b16 %v4335
      %v5499 = vunpack.c.l.b16 %v4336
      %v5500 = vunpack.c.h.b16 %v4336
      %v5501 = vunpack.c.l.b16 %v4337
      %v5502 = vunpack.c.l.b16 %v4338
      %v5503 = vunpack.c.h.b16 %v4338
      %v5504 = vunpack.c.l.b16 %v4339
      %v5505 = vunpack.c.l.b16 %v4340
      %v5506 = vunpack.c.h.b16 %v4340
      %v5507 = vunpack.c.l.b16 %v4341
      %v5508 = vunpack.c.l.b16 %v4342
      %v5509 = vunpack.c.h.b16 %v4342
      %v5510 = vunpack.c.l.b16 %v4343
      %v5511 = vunpack.c.l.b16 %v4344
      %v5512 = vunpack.c.h.b16 %v4344
      %v5513 = vunpack.c.l.b16 %v4345
      %v5514 = vunpack.c.l.b16 %v4346
      %v5515 = vunpack.c.h.b16 %v4346
      %v5516 = vunpack.c.l.b16 %v4347
      %v5517 = vunpack.c.l.b16 %v4348
      %v5518 = vunpack.c.h.b16 %v4348
      %v5519 = vunpack.c.l.b16 %v4349
      %v5520 = vunpack.c.l.b16 %v4350
      %v5521 = vunpack.c.h.b16 %v4350
      %v5522 = vunpack.c.l.b16 %v4351
      %v5523 = vunpack.c.l.b16 %v4352
      %v5524 = vunpack.c.h.b16 %v4352
      %v5525 = vunpack.c.l.b16 %v4353
      %v5526 = vunpack.c.l.b16 %v4354
      %v5527 = vunpack.c.h.b16 %v4354
      %v5528 = vunpack.c.l.b16 %v4355
      %v5529 = vunpack.c.l.b16 %v4356
      %v5530 = vunpack.c.h.b16 %v4356
      %v5531 = vunpack.c.l.b16 %v4357
      %v5532 = vunpack.c.l.b16 %v4358
      %v5533 = vunpack.c.h.b16 %v4358
      %v5534 = vunpack.c.l.b16 %v4359
      %v5535 = vunpack.c.l.b16 %v4360
      %v5536 = vunpack.c.h.b16 %v4360
      %v5537 = vunpack.c.l.b16 %v4361
      %v5538 = vunpack.c.l.b16 %v4362
      %v5539 = vunpack.c.h.b16 %v4362
      %v5540 = vunpack.c.l.b16 %v4363
      %v5541 = vunpack.c.l.b16 %v4364
      %v5542 = vunpack.c.h.b16 %v4364
      %v5543 = vunpack.c.l.b16 %v4365
      %v5544 = vunpack.c.l.b16 %v4366
      %v5545 = vunpack.c.h.b16 %v4366
      %v5546 = vunpack.c.l.b16 %v4367
      %v5547 = vunpack.c.l.b16 %v4368
      %v5548 = vunpack.c.h.b16 %v4368
      %v5549 = vunpack.c.l.b16 %v4369
      %v5550 = vunpack.c.l.b16 %v4370
      %v5551 = vunpack.c.h.b16 %v4370
      %v5552 = vunpack.c.l.b16 %v4371
      %v5553 = vunpack.c.l.b16 %v4372
      %v5554 = vunpack.c.h.b16 %v4372
      %v5555 = vunpack.c.l.b16 %v4373
      %v5556 = vunpack.c.l.b16 %v4374
      %v5557 = vunpack.c.h.b16 %v4374
      %v5558 = vunpack.c.l.b16 %v4375
      %v5559 = vunpack.c.l.b16 %v4376
      %v5560 = vunpack.c.h.b16 %v4376
      %v5561 = vunpack.c.l.b16 %v4377
      %v5562 = vunpack.c.l.b16 %v4378
      %v5563 = vunpack.c.h.b16 %v4378
      %v5564 = vunpack.c.l.b16 %v4379
      %v5565 = vunpack.c.l.b16 %v4380
      %v5566 = vunpack.c.h.b16 %v4380
      %v5567 = vunpack.c.l.b16 %v4381
      %v5568 = vunpack.c.l.b16 %v4382
      %v5569 = vunpack.c.h.b16 %v4382
      %v5570 = vunpack.c.l.b16 %v4383
      %v5571 = vunpack.c.l.b16 %v4384
      %v5572 = vunpack.c.h.b16 %v4384
      %v5573 = vunpack.c.l.b16 %v4385
      %v5574 = vunpack.c.l.b16 %v4386
      %v5575 = vunpack.c.h.b16 %v4386
      %v5576 = vunpack.c.l.b16 %v4387
      %v5577 = vunpack.c.l.b16 %v4388
      %v5578 = vunpack.c.h.b16 %v4388
      %v5579 = vunpack.c.l.b16 %v4389
      %v5580 = vunpack.c.l.b16 %v4390
      %v5581 = vunpack.c.h.b16 %v4390
      %v5582 = vunpack.c.l.b16 %v4391
      %v5583 = vunpack.c.l.b16 %v4392
      %v5584 = vunpack.c.h.b16 %v4392
      %v5585 = vunpack.c.l.b16 %v4393
      %v5586 = vunpack.c.l.b16 %v4394
      %v5587 = vunpack.c.h.b16 %v4394
      %v5588 = vunpack.c.l.b16 %v4395
      %v5589 = vunpack.c.l.b16 %v4396
      %v5590 = vunpack.c.h.b16 %v4396
      %v5591 = vunpack.c.l.b16 %v4397
      %v5592 = vunpack.c.l.b16 %v4398
      %v5593 = vunpack.c.h.b16 %v4398
      %v5594 = vunpack.c.l.b16 %v4399
      %v5595 = vunpack.c.l.b16 %v4400
      %v5596 = vunpack.c.h.b16 %v4400
      %v5597 = vunpack.c.l.b16 %v4401
      %v5598 = vunpack.c.l.b16 %v4402
      %v5599 = vunpack.c.h.b16 %v4402
      %v5600 = vunpack.c.l.b16 %v4403
      %v5601 = vunpack.c.l.b16 %v4404
      %v5602 = vunpack.c.h.b16 %v4404
      %v5603 = vunpack.c.l.b16 %v4405
      %v5604 = vunpack.c.l.b16 %v4406
      %v5605 = vunpack.c.h.b16 %v4406
      %v5606 = vunpack.c.l.b16 %v4407
      %v5607 = vunpack.c.l.b16 %v4408
      %v5608 = vunpack.c.h.b16 %v4408
      %v5609 = vunpack.c.l.b16 %v4409
      %v5610 = vunpack.c.l.b16 %v4410
      %v5611 = vunpack.c.h.b16 %v4410
      %v5612 = vunpack.c.l.b16 %v4411
      %v5613 = vunpack.c.l.b16 %v4412
      %v5614 = vunpack.c.h.b16 %v4412
      %v5615 = vunpack.c.l.b16 %v4413
      %v5616 = vunpack.c.l.b16 %v4414
      %v5617 = vunpack.c.h.b16 %v4414
      %v5618 = vunpack.c.l.b16 %v4415
      %v5619 = vunpack.c.l.b16 %v4416
      %v5620 = vunpack.c.h.b16 %v4416
      %v5621 = vunpack.c.l.b16 %v4417
      %v5622 = vunpack.c.l.b16 %v4418
      %v5623 = vunpack.c.h.b16 %v4418
      %v5624 = vunpack.c.l.b16 %v4419
      %v5625 = vunpack.c.l.b16 %v4420
      %v5626 = vunpack.c.h.b16 %v4420
      %v5627 = vunpack.c.l.b16 %v4421
      %v5628 = vunpack.c.l.b16 %v4422
      %v5629 = vunpack.c.h.b16 %v4422
      %v5630 = vunpack.c.l.b16 %v4423
      %v5631 = vunpack.c.l.b16 %v4424
      %v5632 = vunpack.c.h.b16 %v4424
      %v5633 = vunpack.c.l.b16 %v4425
      %v5634 = vunpack.c.l.b16 %v4426
      %v5635 = vunpack.c.h.b16 %v4426
      %v5636 = vunpack.c.l.b16 %v4427
      %v5637 = vunpack.c.l.b16 %v4428
      %v5638 = vunpack.c.h.b16 %v4428
      %v5639 = vunpack.c.l.b16 %v4429
      %v5640 = vunpack.c.l.b16 %v4430
      %v5641 = vunpack.c.h.b16 %v4430
      %v5642 = vunpack.c.l.b16 %v4431
      %v5643 = vunpack.c.l.b16 %v4432
      %v5644 = vunpack.c.h.b16 %v4432
      %v5645 = vunpack.c.l.b16 %v4433
      %v5646 = vunpack.c.l.b16 %v4434
      %v5647 = vunpack.c.h.b16 %v4434
      %v5648 = vunpack.c.l.b16 %v4435
      %v5649 = vunpack.c.l.b16 %v4436
      %v5650 = vunpack.c.h.b16 %v4436
      %v5651 = vunpack.c.l.b16 %v4437
      %v5652 = vunpack.c.l.b16 %v4438
      %v5653 = vunpack.c.h.b16 %v4438
      %v5654 = vunpack.c.l.b16 %v4439
      %v5655 = vunpack.c.l.b16 %v4440
      %v5656 = vunpack.c.h.b16 %v4440
      %v5657 = vunpack.c.l.b16 %v4441
      %v5658 = vunpack.c.l.b16 %v4442
      %v5659 = vunpack.c.h.b16 %v4442
      %v5660 = vunpack.c.l.b16 %v4443
      %v5661 = vunpack.c.l.b16 %v4444
      %v5662 = vunpack.c.h.b16 %v4444
      %v5663 = vunpack.c.l.b16 %v4445
      %v5664 = vunpack.c.l.b16 %v4446
      %v5665 = vunpack.c.h.b16 %v4446
      %v5666 = vunpack.c.l.b16 %v4447
      %v5667 = vunpack.c.l.b16 %v4448
      %v5668 = vunpack.c.h.b16 %v4448
      %v5669 = vunpack.c.l.b16 %v4449
      %v5670 = vunpack.c.l.b16 %v4450
      %v5671 = vunpack.c.h.b16 %v4450
      %v5672 = vunpack.c.l.b16 %v4451
      %v5673 = vunpack.c.l.b16 %v4452
      %v5674 = vunpack.c.h.b16 %v4452
      %v5675 = vunpack.c.l.b16 %v4453
      %v5676 = vunpack.c.l.b16 %v4454
      %v5677 = vunpack.c.h.b16 %v4454
      %v5678 = vunpack.c.l.b16 %v4455
      %v5679 = vunpack.c.l.b16 %v4456
      %v5680 = vunpack.c.h.b16 %v4456
      %v5681 = vunpack.c.l.b16 %v4457
      %v5682 = vunpack.c.l.b16 %v4458
      %v5683 = vunpack.c.h.b16 %v4458
      %v5684 = vunpack.c.l.b16 %v4459
      %v5685 = vunpack.c.l.b16 %v4460
      %v5686 = vunpack.c.h.b16 %v4460
      %v5687 = vunpack.c.l.b16 %v4461
      %v5688 = vunpack.c.l.b16 %v4462
      %v5689 = vunpack.c.h.b16 %v4462
      %v5690 = vunpack.c.l.b16 %v4463
      %v5691 = vunpack.c.l.b16 %v4464
      %v5692 = vunpack.c.h.b16 %v4464
      %v5693 = vunpack.c.l.b16 %v4465
      %v5694 = vunpack.c.l.b16 %v4466
      %v5695 = vunpack.c.h.b16 %v4466
      %v5696 = vunpack.c.l.b16 %v4467
      %v5697 = vunpack.c.l.b16 %v4468
      %v5698 = vunpack.c.h.b16 %v4468
      %v5699 = vunpack.c.l.b16 %v4469
      %v5700 = vunpack.c.l.b16 %v4470
      %v5701 = vunpack.c.h.b16 %v4470
      %v5702 = vunpack.c.l.b16 %v4471
      %v5703 = vunpack.c.l.b16 %v4472
      %v5704 = vunpack.c.h.b16 %v4472
      %v5705 = vunpack.c.l.b16 %v4473
      %v5706 = vunpack.c.l.b16 %v4474
      %v5707 = vunpack.c.h.b16 %v4474
      %v5708 = vunpack.c.l.b16 %v4475
      %v5709 = vunpack.c.l.b16 %v4476
      %v5710 = vunpack.c.h.b16 %v4476
      %v5711 = vunpack.c.l.b16 %v4477
      %v5712 = vunpack.c.l.b16 %v4478
      %v5713 = vunpack.c.h.b16 %v4478
      %v5714 = vunpack.c.l.b16 %v4479
      %v5715 = vunpack.c.l.b16 %v4480
      %v5716 = vunpack.c.h.b16 %v4480
      %v5717 = vunpack.c.l.b16 %v4481
      %v5718 = vunpack.c.l.b16 %v4482
      %v5719 = vunpack.c.h.b16 %v4482
      %v5720 = vunpack.c.l.b16 %v4483
      %v5721 = vunpack.c.l.b16 %v4484
      %v5722 = vunpack.c.h.b16 %v4484
      %v5723 = vunpack.c.l.b16 %v4485
      %v5724 = vunpack.c.l.b16 %v4486
      %v5725 = vunpack.c.h.b16 %v4486
      %v5726 = vunpack.c.l.b16 %v4487
      %v5727 = vunpack.c.l.b16 %v4488
      %v5728 = vunpack.c.h.b16 %v4488
      %v5729 = vunpack.c.l.b16 %v4489
      %v5730 = vunpack.c.l.b16 %v4490
      %v5731 = vunpack.c.h.b16 %v4490
      %v5732 = vunpack.c.l.b16 %v4491
      %v5733 = vunpack.c.l.b16 %v4492
      %v5734 = vunpack.c.h.b16 %v4492
      %v5735 = vunpack.c.l.b16 %v4493
      %v5736 = vunpack.c.l.b16 %v4494
      %v5737 = vunpack.c.h.b16 %v4494
      %v5738 = vunpack.c.l.b16 %v4495
      %v5739 = vunpack.c.l.b16 %v4496
      %v5740 = vunpack.c.h.b16 %v4496
      %v5741 = vunpack.c.l.b16 %v4497
      %v5742 = vunpack.c.l.b16 %v4498
      %v5743 = vunpack.c.h.b16 %v4498
      %v5744 = vunpack.c.l.b16 %v4499
      %v5745 = vunpack.c.l.b16 %v4500
      %v5746 = vunpack.c.h.b16 %v4500
      %v5747 = vunpack.c.l.b16 %v4501
      %v5748 = vunpack.c.l.b16 %v4502
      %v5749 = vunpack.c.h.b16 %v4502
      %v5750 = vunpack.c.l.b16 %v4503
      %v5751 = vunpack.c.l.b16 %v4504
      %v5752 = vunpack.c.h.b16 %v4504
      %v5753 = vunpack.c.l.b16 %v4505
      %v5754 = vunpack.c.l.b16 %v4506
      %v5755 = vunpack.c.h.b16 %v4506
      %v5756 = vunpack.c.l.b16 %v4507
      %v5757 = vunpack.c.l.b16 %v4508
      %v5758 = vunpack.c.h.b16 %v4508
      %v5759 = vunpack.c.l.b16 %v4509
      %v5760 = vunpack.c.l.b16 %v4510
      %v5761 = vunpack.c.h.b16 %v4510
      %v5762 = vunpack.c.l.b16 %v4511
      %v5763 = vunpack.c.l.b16 %v4512
      %v5764 = vunpack.c.h.b16 %v4512
      %v5765 = vunpack.c.l.b16 %v4513
      %v5766 = vunpack.c.l.b16 %v4514
      %v5767 = vunpack.c.h.b16 %v4514
      %v5768 = vunpack.c.l.b16 %v4515
      %v5769 = vunpack.c.l.b16 %v4516
      %v5770 = vunpack.c.h.b16 %v4516
      %v5771 = vunpack.c.l.b16 %v4517
      %v5772 = vunpack.c.l.b16 %v4518
      %v5773 = vunpack.c.h.b16 %v4518
      %v5774 = vunpack.c.l.b16 %v4519
      %v5775 = vunpack.c.l.b16 %v4520
      %v5776 = vunpack.c.h.b16 %v4520
      %v5777 = vunpack.c.l.b16 %v4521
      %v5778 = vunpack.c.l.b16 %v4522
      %v5779 = vunpack.c.h.b16 %v4522
      %v5780 = vunpack.c.l.b16 %v4523
      %v5781 = vunpack.c.l.b16 %v4524
      %v5782 = vunpack.c.h.b16 %v4524
      %v5783 = vunpack.c.l.b16 %v4525
      %v5784 = vunpack.c.l.b16 %v4526
      %v5785 = vunpack.c.h.b16 %v4526
      %v5786 = vunpack.c.l.b16 %v4527
      %v5787 = vunpack.c.l.b16 %v4528
      %v5788 = vunpack.c.h.b16 %v4528
      %v5789 = vunpack.c.l.b16 %v4529
      %v5790 = vunpack.c.l.b16 %v4530
      %v5791 = vunpack.c.h.b16 %v4530
      %v5792 = vunpack.c.l.b16 %v4531
      %v5793 = vunpack.c.l.b16 %v4532
      %v5794 = vunpack.c.h.b16 %v4532
      %v5795 = vunpack.c.l.b16 %v4533
      %v5796 = vunpack.c.l.b16 %v4534
      %v5797 = vunpack.c.h.b16 %v4534
      %v5798 = vunpack.c.l.b16 %v4535
      %v5799 = vunpack.c.l.b16 %v4536
      %v5800 = vunpack.c.h.b16 %v4536
      %v5801 = vunpack.c.l.b16 %v4537
      %v5802 = vunpack.c.l.b16 %v4538
      %v5803 = vunpack.c.h.b16 %v4538
      %v5804 = vunpack.c.l.b16 %v4539
      %v5805 = vunpack.c.l.b16 %v4540
      %v5806 = vunpack.c.h.b16 %v4540
      %v5807 = vunpack.c.l.b16 %v4541
      %v5808 = vunpack.c.l.b16 %v4542
      %v5809 = vunpack.c.h.b16 %v4542
      %v5810 = vunpack.c.l.b16 %v4543
      %v5811 = vunpack.c.l.b16 %v4544
      %v5812 = vunpack.c.h.b16 %v4544
      %v5813 = vunpack.c.l.b16 %v4545
      %v5814 = vunpack.c.l.b16 %v4546
      %v5815 = vunpack.c.h.b16 %v4546
      %v5816 = vunpack.c.l.b16 %v4547
      %v5817 = vunpack.c.l.b16 %v4548
      %v5818 = vunpack.c.h.b16 %v4548
      %v5819 = vunpack.c.l.b16 %v4549
      %v5820 = vunpack.c.l.b16 %v4550
      %v5821 = vunpack.c.h.b16 %v4550
      %v5822 = vunpack.c.l.b16 %v4551
      %v5823 = vunpack.c.l.b16 %v4552
      %v5824 = vunpack.c.h.b16 %v4552
      %v5825 = vunpack.c.l.b16 %v4553
      %v5826 = vunpack.c.l.b16 %v4554
      %v5827 = vunpack.c.h.b16 %v4554
      %v5828 = vunpack.c.l.b16 %v4555
      %v5829 = vunpack.c.l.b16 %v4556
      %v5830 = vunpack.c.h.b16 %v4556
      %v5831 = vunpack.c.l.b16 %v4557
      %v5832 = vunpack.c.l.b16 %v4558
      %v5833 = vunpack.c.h.b16 %v4558
      %v5834 = vunpack.c.l.b16 %v4559
      %v5835 = vunpack.c.l.b16 %v4560
      %v5836 = vunpack.c.h.b16 %v4560
      %v5837 = vunpack.c.l.b16 %v4561
      %v5838 = vunpack.c.l.b16 %v4562
      %v5839 = vunpack.c.h.b16 %v4562
      %v5840 = vunpack.c.l.b16 %v4563
      %v5841 = vunpack.c.l.b16 %v4564
      %v5842 = vunpack.c.h.b16 %v4564
      %v5843 = vunpack.c.l.b16 %v4565
      %v5844 = vunpack.c.l.b16 %v4566
      %v5845 = vunpack.c.h.b16 %v4566
      %v5846 = vunpack.c.l.b16 %v4567
      %v5847 = vunpack.c.l.b16 %v4568
      %v5848 = vunpack.c.h.b16 %v4568
      %v5849 = vunpack.c.l.b16 %v4569
      %v5850 = vunpack.c.l.b16 %v4570
      %v5851 = vunpack.c.h.b16 %v4570
      %v5852 = vunpack.c.l.b16 %v4571
      %v5853 = vunpack.c.l.b16 %v4572
      %v5854 = vunpack.c.h.b16 %v4572
      %v5855 = vunpack.c.l.b16 %v4573
      %v5856 = vunpack.c.l.b16 %v4574
      %v5857 = vunpack.c.h.b16 %v4574
      %v5858 = vunpack.c.l.b16 %v4575
      %v5859 = vunpack.c.l.b16 %v4576
      %v5860 = vunpack.c.h.b16 %v4576
      %v5861 = vunpack.c.l.b16 %v4577
      %v5862 = vunpack.c.l.b16 %v4578
      %v5863 = vunpack.c.h.b16 %v4578
      %v5864 = vunpack.c.l.b16 %v4579
      %v5865 = vunpack.c.l.b16 %v4580
      %v5866 = vunpack.c.h.b16 %v4580
      %v5867 = vunpack.c.l.b16 %v4581
      %v5868 = vunpack.c.l.b16 %v4582
      %v5869 = vunpack.c.h.b16 %v4582
      %v5870 = vunpack.c.l.b16 %v4583
      %v5871 = vunpack.c.l.b16 %v4584
      %v5872 = vunpack.c.h.b16 %v4584
      %v5873 = vunpack.c.l.b16 %v4585
      %v5874 = vunpack.c.l.b16 %v4586
      %v5875 = vunpack.c.h.b16 %v4586
      %v5876 = vunpack.c.l.b16 %v4587
      %v5877 = vunpack.c.l.b16 %v4588
      %v5878 = vunpack.c.h.b16 %v4588
      %v5879 = vunpack.c.l.b16 %v4589
      %v5880 = vunpack.c.l.b16 %v4590
      %v5881 = vunpack.c.h.b16 %v4590
      %v5882 = vunpack.c.l.b16 %v4591
      %v5883 = vunpack.c.l.b16 %v4592
      %v5884 = vunpack.c.h.b16 %v4592
      %v5885 = vunpack.c.l.b16 %v4593
      %v5886 = vunpack.c.l.b16 %v4594
      %v5887 = vunpack.c.h.b16 %v4594
      %v5888 = vunpack.c.l.b16 %v4595
      %v5889 = vunpack.c.l.b16 %v4596
      %v5890 = vunpack.c.h.b16 %v4596
      %v5891 = vunpack.c.l.b16 %v4597
      %v5892 = vunpack.c.l.b16 %v4598
      %v5893 = vunpack.c.h.b16 %v4598
      %v5894 = vunpack.c.l.b16 %v4599
      %v5895 = vunpack.c.l.b16 %v4600
      %v5896 = vunpack.c.h.b16 %v4600
      %v5897 = vunpack.c.l.b16 %v4601
      %v5898 = vunpack.c.l.b16 %v4602
      %v5899 = vunpack.c.h.b16 %v4602
      %v5900 = vunpack.c.l.b16 %v4603
      %v5901 = vunpack.c.l.b16 %v4604
      %v5902 = vunpack.c.h.b16 %v4604
      %v5903 = vunpack.c.l.b16 %v4605
      %v5904 = vunpack.c.l.b16 %v4606
      %v5905 = vunpack.c.h.b16 %v4606
      %v5906 = vunpack.c.l.b16 %v4607
      %v5907 = vunpack.c.l.b16 %v4608
      %v5908 = vunpack.c.h.b16 %v4608
      %v5909 = vunpack.c.l.b16 %v4609
      %v5910 = vunpack.c.l.b16 %v4610
      %v5911 = vunpack.c.h.b16 %v4610
      %v5912 = vunpack.c.l.b16 %v4611
      %v5913 = vunpack.c.l.b16 %v4612
      %v5914 = vunpack.c.h.b16 %v4612
      %v5915 = vunpack.c.l.b16 %v4613
      %v5916 = vunpack.c.l.b16 %v4614
      %v5917 = vunpack.c.h.b16 %v4614
      %v5918 = vunpack.c.l.b16 %v4615
      %v5919 = vunpack.c.l.b16 %v4616
      %v5920 = vunpack.c.h.b16 %v4616
      %v5921 = vunpack.c.l.b16 %v4617
      %v5922 = vunpack.c.l.b16 %v4618
      %v5923 = vunpack.c.h.b16 %v4618
      %v5924 = vunpack.c.l.b16 %v4619
      %v5925 = vunpack.c.l.b16 %v4620
      %v5926 = vunpack.c.h.b16 %v4620
      %v5927 = vunpack.c.l.b16 %v4621
      %v5928 = vunpack.c.l.b16 %v4622
      %v5929 = vunpack.c.h.b16 %v4622
      %v5930 = vunpack.c.l.b16 %v4623
      %v5931 = vunpack.c.l.b16 %v4624
      %v5932 = vunpack.c.h.b16 %v4624
      %v5933 = vunpack.c.l.b16 %v4625
      %v5934 = vunpack.c.l.b16 %v4626
      %v5935 = vunpack.c.h.b16 %v4626
      %v5936 = vunpack.c.l.b16 %v4627
      %v5937 = vunpack.c.l.b16 %v4628
      %v5938 = vunpack.c.h.b16 %v4628
      %v5939 = vunpack.c.l.b16 %v4629
      %v5940 = vunpack.c.l.b16 %v4630
      %v5941 = vunpack.c.h.b16 %v4630
      %v5942 = vunpack.c.l.b16 %v4631
      %v5943 = vunpack.c.l.b16 %v4632
      %v5944 = vunpack.c.h.b16 %v4632
      %v5945 = vunpack.c.l.b16 %v4633
      %v5946 = vunpack.c.l.b16 %v4634
      %v5947 = vunpack.c.h.b16 %v4634
      %v5948 = vunpack.c.l.b16 %v4635
      %v5949 = vunpack.c.l.b16 %v4636
      %v5950 = vunpack.c.h.b16 %v4636
      %v5951 = vunpack.c.l.b16 %v4637
      %v5952 = vunpack.c.l.b16 %v4638
      %v5953 = vunpack.c.h.b16 %v4638
      %v5954 = vunpack.c.l.b16 %v4639
      %v5955 = vunpack.c.l.b16 %v4640
      %v5956 = vunpack.c.h.b16 %v4640
      %v5957 = vunpack.c.l.b16 %v4641
      %v5958 = vunpack.c.l.b16 %v4642
      %v5959 = vunpack.c.h.b16 %v4642
      %v5960 = vunpack.c.l.b16 %v4643
      %v5961 = vunpack.c.l.b16 %v4644
      %v5962 = vunpack.c.h.b16 %v4644
      %v5963 = vunpack.c.l.b16 %v4645
      %v5964 = vunpack.c.l.b16 %v4646
      %v5965 = vunpack.c.h.b16 %v4646
      %v5966 = vunpack.c.l.b16 %v4647
      %v5967 = vunpack.c.l.b16 %v4648
      %v5968 = vunpack.c.h.b16 %v4648
      %v5969 = vunpack.c.l.b16 %v4649
      %v5970 = vunpack.c.l.b16 %v4650
      %v5971 = vunpack.c.h.b16 %v4650
      %v5972 = vunpack.c.l.b16 %v4651
      %v5973 = vunpack.c.l.b16 %v4652
      %v5974 = vunpack.c.h.b16 %v4652
      %v5975 = vunpack.c.l.b16 %v4653
      %v5976 = vunpack.c.l.b16 %v4654
      %v5977 = vunpack.c.h.b16 %v4654
      %v5978 = vunpack.c.l.b16 %v4655
      %v5979 = vunpack.c.l.b16 %v4656
      %v5980 = vunpack.c.h.b16 %v4656
      %v5981 = vunpack.c.l.b16 %v4657
      %v5982 = vunpack.c.l.b16 %v4658
      %v5983 = vunpack.c.h.b16 %v4658
      %v5984 = vunpack.c.l.b16 %v4659
      %v5985 = vunpack.c.l.b16 %v4660
      %v5986 = vunpack.c.h.b16 %v4660
      %v5987 = vunpack.c.l.b16 %v4661
      %v5988 = vunpack.c.l.b16 %v4662
      %v5989 = vunpack.c.h.b16 %v4662
      %v5990 = vunpack.c.l.b16 %v4663
      %v5991 = vunpack.c.l.b16 %v4664
      %v5992 = vunpack.c.h.b16 %v4664
      %v5993 = vunpack.c.l.b16 %v4665
      %v5994 = vunpack.c.l.b16 %v4666
      %v5995 = vunpack.c.h.b16 %v4666
      %v5996 = vunpack.c.l.b16 %v4667
      %v5997 = vunpack.c.l.b16 %v4668
      %v5998 = vunpack.c.h.b16 %v4668
      %v5999 = vunpack.c.l.b16 %v4669
      %v6000 = vunpack.c.l.b16 %v4670
      %v6001 = vunpack.c.h.b16 %v4670
      %v6002 = vunpack.c.l.b16 %v4671
      %v6003 = vunpack.c.l.b16 %v4672
      %v6004 = vunpack.c.h.b16 %v4672
      %v6005 = vunpack.c.l.b16 %v4673
      %v6006 = vunpack.c.l.b16 %v4674
      %v6007 = vunpack.c.h.b16 %v4674
      %v6008 = vunpack.c.l.b16 %v4675
      %v6009 = vunpack.c.l.b16 %v4676
      %v6010 = vunpack.c.h.b16 %v4676
      %v6011 = vunpack.c.l.b16 %v4677
      %v6012 = vunpack.c.l.b16 %v4678
      %v6013 = vunpack.c.h.b16 %v4678
      %v6014 = vunpack.c.l.b16 %v4679
      %v6015 = vunpack.c.l.b16 %v4680
      %v6016 = vunpack.c.h.b16 %v4680
      %v6017 = vunpack.c.l.b16 %v4681
      %v6018 = vunpack.c.l.b16 %v4682
      %v6019 = vunpack.c.h.b16 %v4682
      %v6020 = vunpack.c.l.b16 %v4683
      %v6021 = vunpack.c.l.b16 %v4684
      %v6022 = vunpack.c.h.b16 %v4684
      %v6023 = vunpack.c.l.b16 %v4685
      %v6024 = vunpack.c.l.b16 %v4686
      %v6025 = vunpack.c.h.b16 %v4686
      %v6026 = vunpack.c.l.b16 %v4687
      %v6027 = vunpack.c.l.b16 %v4688
      %v6028 = vunpack.c.h.b16 %v4688
      %v6029 = vunpack.c.l.b16 %v4689
      %v6030 = vunpack.c.l.b16 %v4690
      %v6031 = vunpack.c.h.b16 %v4690
      %v6032 = vunpack.c.l.b16 %v4691
      %v6033 = vunpack.c.l.b16 %v4692
      %v6034 = vunpack.c.h.b16 %v4692
      %v6035 = vunpack.c.l.b16 %v4693
      %v6036 = vunpack.c.l.b16 %v4694
      %v6037 = vunpack.c.h.b16 %v4694
      %v6038 = vunpack.c.l.b16 %v4695
      %v6039 = vunpack.c.l.b16 %v4696
      %v6040 = vunpack.c.h.b16 %v4696
      %v6041 = vunpack.c.l.b16 %v4697
      %v6042 = vunpack.c.l.b16 %v4698
      %v6043 = vunpack.c.h.b16 %v4698
      %v6044 = vunpack.c.l.b16 %v4699
      %v6045 = vunpack.c.l.b16 %v4700
      %v6046 = vunpack.c.h.b16 %v4700
      %v6047 = vunpack.c.l.b16 %v4701
      %v6048 = vunpack.c.l.b16 %v4702
      %v6049 = vunpack.c.h.b16 %v4702
      %v6050 = vunpack.c.l.b16 %v4703
      %v6051 = vunpack.c.l.b16 %v4704
      %v6052 = vunpack.c.h.b16 %v4704
      %v6053 = vunpack.c.l.b16 %v4705
      %v6054 = vunpack.c.l.b16 %v4706
      %v6055 = vunpack.c.h.b16 %v4706
      %v6056 = vunpack.c.l.b16 %v4707
      %v6057 = vunpack.c.l.b16 %v4708
      %v6058 = vunpack.c.h.b16 %v4708
      %v6059 = vunpack.c.l.b16 %v4709
      %v6060 = vunpack.c.l.b16 %v4710
      %v6061 = vunpack.c.h.b16 %v4710
      %v6062 = vunpack.c.l.b16 %v4711
      %v6063 = vunpack.c.l.b16 %v4712
      %v6064 = vunpack.c.h.b16 %v4712
      %v6065 = vunpack.c.l.b16 %v4713
      %v6066 = vunpack.c.l.b16 %v4714
      %v6067 = vunpack.c.h.b16 %v4714
      %v6068 = vunpack.c.l.b16 %v4715
      %v6069 = vunpack.c.l.b16 %v4716
      %v6070 = vunpack.c.h.b16 %v4716
      %v6071 = vunpack.c.l.b16 %v4717
      %v6072 = vunpack.c.l.b16 %v4718
      %v6073 = vunpack.c.h.b16 %v4718
      %v6074 = vunpack.c.l.b16 %v4719
      %v6075 = vunpack.c.l.b16 %v4720
      %v6076 = vunpack.c.h.b16 %v4720
      %v6077 = vunpack.c.l.b16 %v4721
      %v6078 = vunpack.c.l.b16 %v4722
      %v6079 = vunpack.c.h.b16 %v4722
      %v6080 = vunpack.c.l.b16 %v4723
      %v6081 = vunpack.c.l.b16 %v4724
      %v6082 = vunpack.c.h.b16 %v4724
      %v6083 = vunpack.c.l.b16 %v4725
      %v6084 = vunpack.c.l.b16 %v4726
      %v6085 = vunpack.c.h.b16 %v4726
      %v6086 = vunpack.c.l.b16 %v4727
      %v6087 = vunpack.c.l.b16 %v4728
      %v6088 = vunpack.c.h.b16 %v4728
      %v6089 = vunpack.c.l.b16 %v4729
      %v6090 = vunpack.c.l.b16 %v4730
      %v6091 = vunpack.c.h.b16 %v4730
      %v6092 = vunpack.c.l.b16 %v4731
      %v6093 = vunpack.c.l.b16 %v4732
      %v6094 = vunpack.c.h.b16 %v4732
      %v6095 = vunpack.c.l.b16 %v4733
      %v6096 = vunpack.c.l.b16 %v4734
      %v6097 = vunpack.c.h.b16 %v4734
      %v6098 = vunpack.c.l.b16 %v4735
      %v6099 = vunpack.c.l.b16 %v4736
      %v6100 = vunpack.c.h.b16 %v4736
      %v6101 = vunpack.c.l.b16 %v4737
      %v6102 = vunpack.c.l.b16 %v4738
      %v6103 = vunpack.c.h.b16 %v4738
      %v6104 = vunpack.c.l.b16 %v4739
      %v6105 = vunpack.c.l.b16 %v4740
      %v6106 = vunpack.c.h.b16 %v4740
      %v6107 = vunpack.c.l.b16 %v4741
      %v6108 = vunpack.c.l.b16 %v4742
      %v6109 = vunpack.c.h.b16 %v4742
      %v6110 = vunpack.c.l.b16 %v4743
      %v6111 = vunpack.c.l.b16 %v4744
      %v6112 = vunpack.c.h.b16 %v4744
      %v6113 = vunpack.c.l.b16 %v4745
      %v6114 = vunpack.c.l.b16 %v4746
      %v6115 = vunpack.c.h.b16 %v4746
      %v6116 = vunpack.c.l.b16 %v4747
      %v6117 = vunpack.c.l.b16 %v4748
      %v6118 = vunpack.c.h.b16 %v4748
      %v6119 = vunpack.c.l.b16 %v4749
      %v6120 = vunpack.c.l.b16 %v4750
      %v6121 = vunpack.c.h.b16 %v4750
      %v6122 = vunpack.c.l.b16 %v4751
      %v6123 = vunpack.c.l.b16 %v4752
      %v6124 = vunpack.c.h.b16 %v4752
      %v6125 = vunpack.c.l.b16 %v4753
      %v6126 = vunpack.c.l.b16 %v4754
      %v6127 = vunpack.c.h.b16 %v4754
      %v6128 = vunpack.c.l.b16 %v4755
      %v6129 = vunpack.c.l.b16 %v4756
      %v6130 = vunpack.c.h.b16 %v4756
      %v6131 = vunpack.c.l.b16 %v4757
      %v6132 = vunpack.c.l.b16 %v4758
      %v6133 = vunpack.c.h.b16 %v4758
      %v6134 = vunpack.c.l.b16 %v4759
      %v6135 = vunpack.c.l.b16 %v4760
      %v6136 = vunpack.c.h.b16 %v4760
      %v6137 = vunpack.c.l.b16 %v4761
      %v6138 = vunpack.c.l.b16 %v4762
      %v6139 = vunpack.c.h.b16 %v4762
      %v6140 = vunpack.c.l.b16 %v4763
      %v6141 = vunpack.c.l.b16 %v4764
      %v6142 = vunpack.c.h.b16 %v4764
      %v6143 = vunpack.c.l.b16 %v4765
      %v6144 = vunpack.c.l.b16 %v4766
      %v6145 = vunpack.c.h.b16 %v4766
      %v6146 = vunpack.c.l.b16 %v4767
      %v6147 = vunpack.c.l.b16 %v4768
      %v6148 = vunpack.c.h.b16 %v4768
      %v6149 = vunpack.c.l.b16 %v4769
      %v6150 = vunpack.c.l.b16 %v4770
      %v6151 = vunpack.c.h.b16 %v4770
      %v6152 = vunpack.c.l.b16 %v4771
      %v6153 = vunpack.c.l.b16 %v4772
      %v6154 = vunpack.c.h.b16 %v4772
      %v6155 = vunpack.c.l.b16 %v4773
      %v6156 = vunpack.c.l.b16 %v4774
      %v6157 = vunpack.c.h.b16 %v4774
      %v6158 = vunpack.c.l.b16 %v4775
      %v6159 = vunpack.c.l.b16 %v4776
      %v6160 = vunpack.c.h.b16 %v4776
      %v6161 = vunpack.c.l.b16 %v4777
      %v6162 = vunpack.c.l.b16 %v4778
      %v6163 = vunpack.c.h.b16 %v4778
      %v6164 = vunpack.c.l.b16 %v4779
      %v6165 = vunpack.c.l.b16 %v4780
      %v6166 = vunpack.c.h.b16 %v4780
      %v6167 = vunpack.c.l.b16 %v4781
      %v6168 = vunpack.c.l.b16 %v4782
      %v6169 = vunpack.c.h.b16 %v4782
      %v6170 = vunpack.c.l.b16 %v4783
      %v6171 = vunpack.c.l.b16 %v4784
      %v6172 = vunpack.c.h.b16 %v4784
      %v6173 = vunpack.c.l.b16 %v4785
      %v6174 = vunpack.c.l.b16 %v4786
      %v6175 = vunpack.c.h.b16 %v4786
      %v6176 = vunpack.c.l.b16 %v4787
      %v6177 = vunpack.c.l.b16 %v4788
      %v6178 = vunpack.c.h.b16 %v4788
      %v6179 = vunpack.c.l.b16 %v4789
      %v6180 = vunpack.c.l.b16 %v4790
      %v6181 = vunpack.c.h.b16 %v4790
      %v6182 = vunpack.c.l.b16 %v4791
      %v6183 = vunpack.c.l.b16 %v4792
      %v6184 = vunpack.c.h.b16 %v4792
      %v6185 = vunpack.c.l.b16 %v4793
      %v6186 = vunpack.c.l.b16 %v4794
      %v6187 = vunpack.c.h.b16 %v4794
      %v6188 = vunpack.c.l.b16 %v4795
      %v6189 = vunpack.c.l.b16 %v4796
      %v6190 = vunpack.c.h.b16 %v4796
      %v6191 = vunpack.c.l.b16 %v4797
      %v6192 = vunpack.c.l.b16 %v4798
      %v6193 = vunpack.c.h.b16 %v4798
      %v6194 = vunpack.c.l.b16 %v4799
      %v6195 = vunpack.c.l.b16 %v4800
      %v6196 = vunpack.c.h.b16 %v4800
      %v6197 = vunpack.c.l.b16 %v4801
      %v6198 = vunpack.c.l.b16 %v4802
      %v6199 = vunpack.c.h.b16 %v4802
      %v6200 = vunpack.c.l.b16 %v4803
      %v6201 = vunpack.c.l.b16 %v4804
      %v6202 = vunpack.c.h.b16 %v4804
      %v6203 = vunpack.c.l.b16 %v4805
      %v6204 = vunpack.c.l.b16 %v4806
      %v6205 = vunpack.c.h.b16 %v4806
      %v6206 = vunpack.c.l.b16 %v4807
      %v6207 = vunpack.c.l.b16 %v4808
      %v6208 = vunpack.c.h.b16 %v4808
      %v6209 = vunpack.c.l.b16 %v4809
      %v6210 = vunpack.c.l.b16 %v4810
      %v6211 = vunpack.c.h.b16 %v4810
      %v6212 = vunpack.c.l.b16 %v4811
      %v6213 = vunpack.c.l.b16 %v4812
      %v6214 = vunpack.c.h.b16 %v4812
      %v6215 = vunpack.c.l.b16 %v4813
      %v6216 = vunpack.c.l.b16 %v4814
      %v6217 = vunpack.c.h.b16 %v4814
      %v6218 = vunpack.c.l.b16 %v4815
      %v6219 = vunpack.c.l.b16 %v4816
      %v6220 = vunpack.c.h.b16 %v4816
      %v6221 = vunpack.c.l.b16 %v4817
      %v6222 = vunpack.c.l.b16 %v4818
      %v6223 = vunpack.c.h.b16 %v4818
      %v6224 = vunpack.c.l.b16 %v4819
      %v6225 = vunpack.c.l.b16 %v4820
      %v6226 = vunpack.c.h.b16 %v4820
      %v6227 = vunpack.c.l.b16 %v4821
      %v6228 = vunpack.c.l.b16 %v4822
      %v6229 = vunpack.c.h.b16 %v4822
      %v6230 = vunpack.c.l.b16 %v4823
      %v6231 = vunpack.c.l.b16 %v4824
      %v6232 = vunpack.c.h.b16 %v4824
      %v6233 = vunpack.c.l.b16 %v4825
      %v6234 = vunpack.c.l.b16 %v4826
      %v6235 = vunpack.c.h.b16 %v4826
      %v6236 = vunpack.c.l.b16 %v4827
      %v6237 = vunpack.c.l.b16 %v4828
      %v6238 = vunpack.c.h.b16 %v4828
      %v6239 = vunpack.c.l.b16 %v4829
      %v6240 = vunpack.c.l.b16 %v4830
      %v6241 = vunpack.c.h.b16 %v4830
      %v6242 = vunpack.c.l.b16 %v4831
      %v6243 = vunpack.c.l.b16 %v4832
      %v6244 = vunpack.c.h.b16 %v4832
      %v6245 = vunpack.c.l.b16 %v4833
      %v6246 = vunpack.c.l.b16 %v4834
      %v6247 = vunpack.c.h.b16 %v4834
      %v6248 = vunpack.c.l.b16 %v4835
      %v6249 = vunpack.c.l.b16 %v4836
      %v6250 = vunpack.c.h.b16 %v4836
      %v6251 = vunpack.c.l.b16 %v4837
      %v6252 = vunpack.c.l.b16 %v4838
      %v6253 = vunpack.c.h.b16 %v4838
      %v6254 = vunpack.c.l.b16 %v4839
      %v6255 = vunpack.c.l.b16 %v4840
      %v6256 = vunpack.c.h.b16 %v4840
      %v6257 = vunpack.c.l.b16 %v4841
      %v6258 = vunpack.c.l.b16 %v4842
      %v6259 = vunpack.c.h.b16 %v4842
      %v6260 = vunpack.c.l.b16 %v4843
      %v6261 = vunpack.c.l.b16 %v4844
      %v6262 = vunpack.c.h.b16 %v4844
      %v6263 = vunpack.c.l.b16 %v4845
      %v6264 = vunpack.c.l.b16 %v4846
      %v6265 = vunpack.c.h.b16 %v4846
      %v6266 = vunpack.c.l.b16 %v4847
      %v6267 = vunpack.c.l.b16 %v4848
      %v6268 = vunpack.c.h.b16 %v4848
      %v6269 = vunpack.c.l.b16 %v4849
      %v6270 = vunpack.c.l.b16 %v4850
      %v6271 = vunpack.c.h.b16 %v4850
      %v6272 = vunpack.c.l.b16 %v4851
      %v6273 = vunpack.c.l.b16 %v4852
      %v6274 = vunpack.c.h.b16 %v4852
      %v6275 = vunpack.c.l.b16 %v4853
      %v6276 = vunpack.c.l.b16 %v4854
      %v6277 = vunpack.c.h.b16 %v4854
      %v6278 = vunpack.c.l.b16 %v4855
      %v6279 = vunpack.c.l.b16 %v4856
      %v6280 = vunpack.c.h.b16 %v4856
      %v6281 = vunpack.c.l.b16 %v4857
      %v6282 = vunpack.c.l.b16 %v4858
      %v6283 = vunpack.c.h.b16 %v4858
      %v6284 = vunpack.c.l.b16 %v4859
      %v6285 = vunpack.c.l.b16 %v4860
      %v6286 = vunpack.c.h.b16 %v4860
      %v6287 = vunpack.c.l.b16 %v4861
      %v6288 = vunpack.c.l.b16 %v4862
      %v6289 = vunpack.c.h.b16 %v4862
      %v6290 = vunpack.c.l.b16 %v4863
      %v6291 = vunpack.c.l.b16 %v4864
      %v6292 = vunpack.c.h.b16 %v4864
      %v6293 = vunpack.c.l.b16 %v4865
      %v6294 = vunpack.c.l.b16 %v4866
      %v6295 = vunpack.c.h.b16 %v4866
      %v6296 = vunpack.c.l.b16 %v4867
      %v6297 = vunpack.c.l.b16 %v4868
      %v6298 = vunpack.c.h.b16 %v4868
      %v6299 = vunpack.c.l.b16 %v4869
      %v6300 = vunpack.c.l.b16 %v4870
      %v6301 = vunpack.c.h.b16 %v4870
      %v6302 = vunpack.c.l.b16 %v4871
      %v6303 = vunpack.c.l.b16 %v4872
      %v6304 = vunpack.c.h.b16 %v4872
      %v6305 = vunpack.c.l.b16 %v4873
      %v6306 = vunpack.c.l.b16 %v4874
      %v6307 = vunpack.c.h.b16 %v4874
      %v6308 = vunpack.c.l.b16 %v4875
      %v6309 = vunpack.c.l.b16 %v4876
      %v6310 = vunpack.c.h.b16 %v4876
      %v6311 = vunpack.c.l.b16 %v4877
      %v6312 = vunpack.c.l.b16 %v4878
      %v6313 = vunpack.c.h.b16 %v4878
      %v6314 = vunpack.c.l.b16 %v4879
      %v6315 = vunpack.c.l.b16 %v4880
      %v6316 = vunpack.c.h.b16 %v4880
      %v6317 = vunpack.c.l.b16 %v4881
      %v6318 = vunpack.c.l.b16 %v4882
      %v6319 = vunpack.c.h.b16 %v4882
      %v6320 = vunpack.c.l.b16 %v4883
      %v6321 = vunpack.c.l.b16 %v4884
      %v6322 = vunpack.c.h.b16 %v4884
      %v6323 = vunpack.c.l.b16 %v4885
      %v6324 = vunpack.c.l.b16 %v4886
      %v6325 = vunpack.c.h.b16 %v4886
      %v6326 = vunpack.c.l.b16 %v4887
      %v6327 = vunpack.c.l.b16 %v4888
      %v6328 = vunpack.c.h.b16 %v4888
      %v6329 = vunpack.c.l.b16 %v4889
      %v6330 = vunpack.c.l.b16 %v4890
      %v6331 = vunpack.c.h.b16 %v4890
      %v6332 = vunpack.c.l.b16 %v4891
      %v6333 = vpack.c.b16 %v5472, %v5469
      %v6334 = vpack.c.b16 %v5473, %v5470
      %v6335 = vpack.c.b16 %v5474, %v5471
      %v6336 = vpack.c.b16 %v5478, %v5475
      %v6337 = vpack.c.b16 %v5479, %v5476
      %v6338 = vpack.c.b16 %v5480, %v5477
      %v6339 = vpack.c.b16 %v5484, %v5481
      %v6340 = vpack.c.b16 %v5485, %v5482
      %v6341 = vpack.c.b16 %v5486, %v5483
      %v6342 = vpack.c.b16 %v5490, %v5487
      %v6343 = vpack.c.b16 %v5491, %v5488
      %v6344 = vpack.c.b16 %v5492, %v5489
      %v6345 = vpack.c.b16 %v5496, %v5493
      %v6346 = vpack.c.b16 %v5497, %v5494
      %v6347 = vpack.c.b16 %v5498, %v5495
      %v6348 = vpack.c.b16 %v5502, %v5499
      %v6349 = vpack.c.b16 %v5503, %v5500
      %v6350 = vpack.c.b16 %v5504, %v5501
      %v6351 = vpack.c.b16 %v5508, %v5505
      %v6352 = vpack.c.b16 %v5509, %v5506
      %v6353 = vpack.c.b16 %v5510, %v5507
      %v6354 = vpack.c.b16 %v5514, %v5511
      %v6355 = vpack.c.b16 %v5515, %v5512
      %v6356 = vpack.c.b16 %v5516, %v5513
      %v6357 = vpack.c.b16 %v5520, %v5517
      %v6358 = vpack.c.b16 %v5521, %v5518
      %v6359 = vpack.c.b16 %v5522, %v5519
      %v6360 = vpack.c.b16 %v5526, %v5523
      %v6361 = vpack.c.b16 %v5527, %v5524
      %v6362 = vpack.c.b16 %v5528, %v5525
      %v6363 = vpack.c.b16 %v5532, %v5529
      %v6364 = vpack.c.b16 %v5533, %v5530
      %v6365 = vpack.c.b16 %v5534, %v5531
      %v6366 = vpack.c.b16 %v5538, %v5535
      %v6367 = vpack.c.b16 %v5539, %v5536
      %v6368 = vpack.c.b16 %v5540, %v5537
      %v6369 = vpack.c.b16 %v5544, %v5541
      %v6370 = vpack.c.b16 %v5545, %v5542
      %v6371 = vpack.c.b16 %v5546, %v5543
      %v6372 = vpack.c.b16 %v5550, %v5547
      %v6373 = vpack.c.b16 %v5551, %v5548
      %v6374 = vpack.c.b16 %v5552, %v5549
      %v6375 = vpack.c.b16 %v5556, %v5553
      %v6376 = vpack.c.b16 %v5557, %v5554
      %v6377 = vpack.c.b16 %v5558, %v5555
      %v6378 = vpack.c.b16 %v5562, %v5559
      %v6379 = vpack.c.b16 %v5563, %v5560
      %v6380 = vpack.c.b16 %v5564, %v5561
      %v6381 = vpack.c.b16 %v5568, %v5565
      %v6382 = vpack.c.b16 %v5569, %v5566
      %v6383 = vpack.c.b16 %v5570, %v5567
      %v6384 = vpack.c.b16 %v5574, %v5571
      %v6385 = vpack.c.b16 %v5575, %v5572
      %v6386 = vpack.c.b16 %v5576, %v5573
      %v6387 = vpack.c.b16 %v5580, %v5577
      %v6388 = vpack.c.b16 %v5581, %v5578
      %v6389 = vpack.c.b16 %v5582, %v5579
      %v6390 = vpack.c.b16 %v5586, %v5583
      %v6391 = vpack.c.b16 %v5587, %v5584
      %v6392 = vpack.c.b16 %v5588, %v5585
      %v6393 = vpack.c.b16 %v5592, %v5589
      %v6394 = vpack.c.b16 %v5593, %v5590
      %v6395 = vpack.c.b16 %v5594, %v5591
      %v6396 = vpack.c.b16 %v5598, %v5595
      %v6397 = vpack.c.b16 %v5599, %v5596
      %v6398 = vpack.c.b16 %v5600, %v5597
      %v6399 = vpack.c.b16 %v5604, %v5601
      %v6400 = vpack.c.b16 %v5605, %v5602
      %v6401 = vpack.c.b16 %v5606, %v5603
      %v6402 = vpack.c.b16 %v5610, %v5607
      %v6403 = vpack.c.b16 %v5611, %v5608
      %v6404 = vpack.c.b16 %v5612, %v5609
      %v6405 = vpack.c.b16 %v5616, %v5613
      %v6406 = vpack.c.b16 %v5617, %v5614
      %v6407 = vpack.c.b16 %v5618, %v5615
      %v6408 = vpack.c.b16 %v5622, %v5619
      %v6409 = vpack.c.b16 %v5623, %v5620
      %v6410 = vpack.c.b16 %v5624, %v5621
      %v6411 = vpack.c.b16 %v5628, %v5625
      %v6412 = vpack.c.b16 %v5629, %v5626
      %v6413 = vpack.c.b16 %v5630, %v5627
      %v6414 = vpack.c.b16 %v5634, %v5631
      %v6415 = vpack.c.b16 %v5635, %v5632
      %v6416 = vpack.c.b16 %v5636, %v5633
      %v6417 = vpack.c.b16 %v5640, %v5637
      %v6418 = vpack.c.b16 %v5641, %v5638
      %v6419 = vpack.c.b16 %v5642, %v5639
      %v6420 = vpack.c.b16 %v5646, %v5643
      %v6421 = vpack.c.b16 %v5647, %v5644
      %v6422 = vpack.c.b16 %v5648, %v5645
      %v6423 = vpack.c.b16 %v5652, %v5649
      %v6424 = vpack.c.b16 %v5653, %v5650
      %v6425 = vpack.c.b16 %v5654, %v5651
      %v6426 = vpack.c.b16 %v5658, %v5655
      %v6427 = vpack.c.b16 %v5659, %v5656
      %v6428 = vpack.c.b16 %v5660, %v5657
      %v6429 = vpack.c.b16 %v5664, %v5661
      %v6430 = vpack.c.b16 %v5665, %v5662
      %v6431 = vpack.c.b16 %v5666, %v5663
      %v6432 = vpack.c.b16 %v5670, %v5667
      %v6433 = vpack.c.b16 %v5671, %v5668
      %v6434 = vpack.c.b16 %v5672, %v5669
      %v6435 = vpack.c.b16 %v5676, %v5673
      %v6436 = vpack.c.b16 %v5677, %v5674
      %v6437 = vpack.c.b16 %v5678, %v5675
      %v6438 = vpack.c.b16 %v5682, %v5679
      %v6439 = vpack.c.b16 %v5683, %v5680
      %v6440 = vpack.c.b16 %v5684, %v5681
      %v6441 = vpack.c.b16 %v5688, %v5685
      %v6442 = vpack.c.b16 %v5689, %v5686
      %v6443 = vpack.c.b16 %v5690, %v5687
      %v6444 = vpack.c.b16 %v5694, %v5691
      %v6445 = vpack.c.b16 %v5695, %v5692
      %v6446 = vpack.c.b16 %v5696, %v5693
      %v6447 = vpack.c.b16 %v5700, %v5697
      %v6448 = vpack.c.b16 %v5701, %v5698
      %v6449 = vpack.c.b16 %v5702, %v5699
      %v6450 = vpack.c.b16 %v5706, %v5703
      %v6451 = vpack.c.b16 %v5707, %v5704
      %v6452 = vpack.c.b16 %v5708, %v5705
      %v6453 = vpack.c.b16 %v5712, %v5709
      %v6454 = vpack.c.b16 %v5713, %v5710
      %v6455 = vpack.c.b16 %v5714, %v5711
      %v6456 = vpack.c.b16 %v5718, %v5715
      %v6457 = vpack.c.b16 %v5719, %v5716
      %v6458 = vpack.c.b16 %v5720, %v5717
      %v6459 = vpack.c.b16 %v5724, %v5721
      %v6460 = vpack.c.b16 %v5725, %v5722
      %v6461 = vpack.c.b16 %v5726, %v5723
      %v6462 = vpack.c.b16 %v5730, %v5727
      %v6463 = vpack.c.b16 %v5731, %v5728
      %v6464 = vpack.c.b16 %v5732, %v5729
      %v6465 = vpack.c.b16 %v5736, %v5733
      %v6466 = vpack.c.b16 %v5737, %v5734
      %v6467 = vpack.c.b16 %v5738, %v5735
      %v6468 = vpack.c.b16 %v5742, %v5739
      %v6469 = vpack.c.b16 %v5743, %v5740
      %v6470 = vpack.c.b16 %v5744, %v5741
      %v6471 = vpack.c.b16 %v5748, %v5745
      %v6472 = vpack.c.b16 %v5749, %v5746
      %v6473 = vpack.c.b16 %v5750, %v5747
      %v6474 = vpack.c.b16 %v5754, %v5751
      %v6475 = vpack.c.b16 %v5755, %v5752
      %v6476 = vpack.c.b16 %v5756, %v5753
      %v6477 = vpack.c.b16 %v5760, %v5757
      %v6478 = vpack.c.b16 %v5761, %v5758
      %v6479 = vpack.c.b16 %v5762, %v5759
      %v6480 = vpack.c.b16 %v5766, %v5763
      %v6481 = vpack.c.b16 %v5767, %v5764
      %v6482 = vpack.c.b16 %v5768, %v5765
      %v6483 = vpack.c.b16 %v5772, %v5769
      %v6484 = vpack.c.b16 %v5773, %v5770
      %v6485 = vpack.c.b16 %v5774, %v5771
      %v6486 = vpack.c.b16 %v5778, %v5775
      %v6487 = vpack.c.b16 %v5779, %v5776
      %v6488 = vpack.c.b16 %v5780, %v5777
      %v6489 = vpack.c.b16 %v5784, %v5781
      %v6490 = vpack.c.b16 %v5785, %v5782
      %v6491 = vpack.c.b16 %v5786, %v5783
      %v6492 = vpack.c.b16 %v5790, %v5787
      %v6493 = vpack.c.b16 %v5791, %v5788
      %v6494 = vpack.c.b16 %v5792, %v5789
      %v6495 = vpack.c.b16 %v5796, %v5793
      %v6496 = vpack.c.b16 %v5797, %v5794
      %v6497 = vpack.c.b16 %v5798, %v5795
      %v6498 = vpack.c.b16 %v5802, %v5799
      %v6499 = vpack.c.b16 %v5803, %v5800
      %v6500 = vpack.c.b16 %v5804, %v5801
      %v6501 = vpack.c.b16 %v5808, %v5805
      %v6502 = vpack.c.b16 %v5809, %v5806
      %v6503 = vpack.c.b16 %v5810, %v5807
      %v6504 = vpack.c.b16 %v5814, %v5811
      %v6505 = vpack.c.b16 %v5815, %v5812
      %v6506 = vpack.c.b16 %v5816, %v5813
      %v6507 = vpack.c.b16 %v5820, %v5817
      %v6508 = vpack.c.b16 %v5821, %v5818
      %v6509 = vpack.c.b16 %v5822, %v5819
      %v6510 = vpack.c.b16 %v5826, %v5823
      %v6511 = vpack.c.b16 %v5827, %v5824
      %v6512 = vpack.c.b16 %v5828, %v5825
      %v6513 = vpack.c.b16 %v5832, %v5829
      %v6514 = vpack.c.b16 %v5833, %v5830
      %v6515 = vpack.c.b16 %v5834, %v5831
      %v6516 = vpack.c.b16 %v5838, %v5835
      %v6517 = vpack.c.b16 %v5839, %v5836
      %v6518 = vpack.c.b16 %v5840, %v5837
      %v6519 = vpack.c.b16 %v5844, %v5841
      %v6520 = vpack.c.b16 %v5845, %v5842
      %v6521 = vpack.c.b16 %v5846, %v5843
      %v6522 = vpack.c.b16 %v5850, %v5847
      %v6523 = vpack.c.b16 %v5851, %v5848
      %v6524 = vpack.c.b16 %v5852, %v5849
      %v6525 = vpack.c.b16 %v5856, %v5853
      %v6526 = vpack.c.b16 %v5857, %v5854
      %v6527 = vpack.c.b16 %v5858, %v5855
      %v6528 = vpack.c.b16 %v5862, %v5859
      %v6529 = vpack.c.b16 %v5863, %v5860
      %v6530 = vpack.c.b16 %v5864, %v5861
      %v6531 = vpack.c.b16 %v5868, %v5865
      %v6532 = vpack.c.b16 %v5869, %v5866
      %v6533 = vpack.c.b16 %v5870, %v5867
      %v6534 = vpack.c.b16 %v5874, %v5871
      %v6535 = vpack.c.b16 %v5875, %v5872
      %v6536 = vpack.c.b16 %v5876, %v5873
      %v6537 = vpack.c.b16 %v5880, %v5877
      %v6538 = vpack.c.b16 %v5881, %v5878
      %v6539 = vpack.c.b16 %v5882, %v5879
      %v6540 = vpack.c.b16 %v5886, %v5883
      %v6541 = vpack.c.b16 %v5887, %v5884
      %v6542 = vpack.c.b16 %v5888, %v5885
      %v6543 = vpack.c.b16 %v5892, %v5889
      %v6544 = vpack.c.b16 %v5893, %v5890
      %v6545 = vpack.c.b16 %v5894, %v5891
      %v6546 = vpack.c.b16 %v5898, %v5895
      %v6547 = vpack.c.b16 %v5899, %v5896
      %v6548 = vpack.c.b16 %v5900, %v5897
      %v6549 = vpack.c.b16 %v5904, %v5901
      %v6550 = vpack.c.b16 %v5905, %v5902
      %v6551 = vpack.c.b16 %v5906, %v5903
      %v6552 = vpack.c.b16 %v5910, %v5907
      %v6553 = vpack.c.b16 %v5911, %v5908
      %v6554 = vpack.c.b16 %v5912, %v5909
      %v6555 = vpack.c.b16 %v5916, %v5913
      %v6556 = vpack.c.b16 %v5917, %v5914
      %v6557 = vpack.c.b16 %v5918, %v5915
      %v6558 = vpack.c.b16 %v5922, %v5919
      %v6559 = vpack.c.b16 %v5923, %v5920
      %v6560 = vpack.c.b16 %v5924, %v5921
      %v6561 = vpack.c.b16 %v5928, %v5925
      %v6562 = vpack.c.b16 %v5929, %v5926
      %v6563 = vpack.c.b16 %v5930, %v5927
      %v6564 = vpack.c.b16 %v5934, %v5931
      %v6565 = vpack.c.b16 %v5935, %v5932
      %v6566 = vpack.c.b16 %v5936, %v5933
      %v6567 = vpack.c.b16 %v5940, %v5937
      %v6568 = vpack.c.b16 %v5941, %v5938
      %v6569 = vpack.c.b16 %v5942, %v5939
      %v6570 = vpack.c.b16 %v5946, %v5943
      %v6571 = vpack.c.b16 %v5947, %v5944
      %v6572 = vpack.c.b16 %v5948, %v5945
      %v6573 = vpack.c.b16 %v5952, %v5949
      %v6574 = vpack.c.b16 %v5953, %v5950
      %v6575 = vpack.c.b16 %v5954, %v5951
      %v6576 = vpack.c.b16 %v5958, %v5955
      %v6577 = vpack.c.b16 %v5959, %v5956
      %v6578 = vpack.c.b16 %v5960, %v5957
      %v6579 = vpack.c.b16 %v5964, %v5961
      %v6580 = vpack.c.b16 %v5965, %v5962
      %v6581 = vpack.c.b16 %v5966, %v5963
      %v6582 = vpack.c.b16 %v5970, %v5967
      %v6583 = vpack.c.b16 %v5971, %v5968
      %v6584 = vpack.c.b16 %v5972, %v5969
      %v6585 = vpack.c.b16 %v5976, %v5973
      %v6586 = vpack.c.b16 %v5977, %v5974
      %v6587 = vpack.c.b16 %v5978, %v5975
      %v6588 = vpack.c.b16 %v5982, %v5979
      %v6589 = vpack.c.b16 %v5983, %v5980
      %v6590 = vpack.c.b16 %v5984, %v5981
      %v6591 = vpack.c.b16 %v5988, %v5985
      %v6592 = vpack.c.b16 %v5989, %v5986
      %v6593 = vpack.c.b16 %v5990, %v5987
      %v6594 = vpack.c.b16 %v5994, %v5991
      %v6595 = vpack.c.b16 %v5995, %v5992
      %v6596 = vpack.c.b16 %v5996, %v5993
      %v6597 = vpack.c.b16 %v6000, %v5997
      %v6598 = vpack.c.b16 %v6001, %v5998
      %v6599 = vpack.c.b16 %v6002, %v5999
      %v6600 = vpack.c.b16 %v6006, %v6003
      %v6601 = vpack.c.b16 %v6007, %v6004
      %v6602 = vpack.c.b16 %v6008, %v6005
      %v6603 = vpack.c.b16 %v6012, %v6009
      %v6604 = vpack.c.b16 %v6013, %v6010
      %v6605 = vpack.c.b16 %v6014, %v6011
      %v6606 = vpack.c.b16 %v6018, %v6015
      %v6607 = vpack.c.b16 %v6019, %v6016
      %v6608 = vpack.c.b16 %v6020, %v6017
      %v6609 = vpack.c.b16 %v6024, %v6021
      %v6610 = vpack.c.b16 %v6025, %v6022
      %v6611 = vpack.c.b16 %v6026, %v6023
      %v6612 = vpack.c.b16 %v6030, %v6027
      %v6613 = vpack.c.b16 %v6031, %v6028
      %v6614 = vpack.c.b16 %v6032, %v6029
      %v6615 = vpack.c.b16 %v6036, %v6033
      %v6616 = vpack.c.b16 %v6037, %v6034
      %v6617 = vpack.c.b16 %v6038, %v6035
      %v6618 = vpack.c.b16 %v6042, %v6039
      %v6619 = vpack.c.b16 %v6043, %v6040
      %v6620 = vpack.c.b16 %v6044, %v6041
      %v6621 = vpack.c.b16 %v6048, %v6045
      %v6622 = vpack.c.b16 %v6049, %v6046
      %v6623 = vpack.c.b16 %v6050, %v6047
      %v6624 = vpack.c.b16 %v6054, %v6051
      %v6625 = vpack.c.b16 %v6055, %v6052
      %v6626 = vpack.c.b16 %v6056, %v6053
      %v6627 = vpack.c.b16 %v6060, %v6057
      %v6628 = vpack.c.b16 %v6061, %v6058
      %v6629 = vpack.c.b16 %v6062, %v6059
      %v6630 = vpack.c.b16 %v6066, %v6063
      %v6631 = vpack.c.b16 %v6067, %v6064
      %v6632 = vpack.c.b16 %v6068, %v6065
      %v6633 = vpack.c.b16 %v6072, %v6069
      %v6634 = vpack.c.b16 %v6073, %v6070
      %v6635 = vpack.c.b16 %v6074, %v6071
      %v6636 = vpack.c.b16 %v6078, %v6075
      %v6637 = vpack.c.b16 %v6079, %v6076
      %v6638 = vpack.c.b16 %v6080, %v6077
      %v6639 = vpack.c.b16 %v6084, %v6081
      %v6640 = vpack.c.b16 %v6085, %v6082
      %v6641 = vpack.c.b16 %v6086, %v6083
      %v6642 = vpack.c.b16 %v6090, %v6087
      %v6643 = vpack.c.b16 %v6091, %v6088
      %v6644 = vpack.c.b16 %v6092, %v6089
      %v6645 = vpack.c.b16 %v6096, %v6093
      %v6646 = vpack.c.b16 %v6097, %v6094
      %v6647 = vpack.c.b16 %v6098, %v6095
      %v6648 = vpack.c.b16 %v6102, %v6099
      %v6649 = vpack.c.b16 %v6103, %v6100
      %v6650 = vpack.c.b16 %v6104, %v6101
      %v6651 = vpack.c.b16 %v6108, %v6105
      %v6652 = vpack.c.b16 %v6109, %v6106
      %v6653 = vpack.c.b16 %v6110, %v6107
      %v6654 = vpack.c.b16 %v6114, %v6111
      %v6655 = vpack.c.b16 %v6115, %v6112
      %v6656 = vpack.c.b16 %v6116, %v6113
      %v6657 = vpack.c.b16 %v6120, %v6117
      %v6658 = vpack.c.b16 %v6121, %v6118
      %v6659 = vpack.c.b16 %v6122, %v6119
      %v6660 = vpack.c.b16 %v6126, %v6123
      %v6661 = vpack.c.b16 %v6127, %v6124
      %v6662 = vpack.c.b16 %v6128, %v6125
      %v6663 = vpack.c.b16 %v6132, %v6129
      %v6664 = vpack.c.b16 %v6133, %v6130
      %v6665 = vpack.c.b16 %v6134, %v6131
      %v6666 = vpack.c.b16 %v6138, %v6135
      %v6667 = vpack.c.b16 %v6139, %v6136
      %v6668 = vpack.c.b16 %v6140, %v6137
      %v6669 = vpack.c.b16 %v6144, %v6141
      %v6670 = vpack.c.b16 %v6145, %v6142
      %v6671 = vpack.c.b16 %v6146, %v6143
      %v6672 = vpack.c.b16 %v6150, %v6147
      %v6673 = vpack.c.b16 %v6151, %v6148
      %v6674 = vpack.c.b16 %v6152, %v6149
      %v6675 = vpack.c.b16 %v6156, %v6153
      %v6676 = vpack.c.b16 %v6157, %v6154
      %v6677 = vpack.c.b16 %v6158, %v6155
      %v6678 = vpack.c.b16 %v6162, %v6159
      %v6679 = vpack.c.b16 %v6163, %v6160
      %v6680 = vpack.c.b16 %v6164, %v6161
      %v6681 = vpack.c.b16 %v6168, %v6165
      %v6682 = vpack.c.b16 %v6169, %v6166
      %v6683 = vpack.c.b16 %v6170, %v6167
      %v6684 = vpack.c.b16 %v6174, %v6171
      %v6685 = vpack.c.b16 %v6175, %v6172
      %v6686 = vpack.c.b16 %v6176, %v6173
      %v6687 = vpack.c.b16 %v6180, %v6177
      %v6688 = vpack.c.b16 %v6181, %v6178
      %v6689 = vpack.c.b16 %v6182, %v6179
      %v6690 = vpack.c.b16 %v6186, %v6183
      %v6691 = vpack.c.b16 %v6187, %v6184
      %v6692 = vpack.c.b16 %v6188, %v6185
      %v6693 = vpack.c.b16 %v6192, %v6189
      %v6694 = vpack.c.b16 %v6193, %v6190
      %v6695 = vpack.c.b16 %v6194, %v6191
      %v6696 = vpack.c.b16 %v6198, %v6195
      %v6697 = vpack.c.b16 %v6199, %v6196
      %v6698 = vpack.c.b16 %v6200, %v6197
      %v6699 = vpack.c.b16 %v6204, %v6201
      %v6700 = vpack.c.b16 %v6205, %v6202
      %v6701 = vpack.c.b16 %v6206, %v6203
      %v6702 = vpack.c.b16 %v6210, %v6207
      %v6703 = vpack.c.b16 %v6211, %v6208
      %v6704 = vpack.c.b16 %v6212, %v6209
      %v6705 = vpack.c.b16 %v6216, %v6213
      %v6706 = vpack.c.b16 %v6217, %v6214
      %v6707 = vpack.c.b16 %v6218, %v6215
      %v6708 = vpack.c.b16 %v6222, %v6219
      %v6709 = vpack.c.b16 %v6223, %v6220
      %v6710 = vpack.c.b16 %v6224, %v6221
      %v6711 = vpack.c.b16 %v6228, %v6225
      %v6712 = vpack.c.b16 %v6229, %v6226
      %v6713 = vpack.c.b16 %v6230, %v6227
      %v6714 = vpack.c.b16 %v6234, %v6231
      %v6715 = vpack.c.b16 %v6235, %v6232
      %v6716 = vpack.c.b16 %v6236, %v6233
      %v6717 = vpack.c.b16 %v6240, %v6237
      %v6718 = vpack.c.b16 %v6241, %v6238
      %v6719 = vpack.c.b16 %v6242, %v6239
      %v6720 = vpack.c.b16 %v6246, %v6243
      %v6721 = vpack.c.b16 %v6247, %v6244
      %v6722 = vpack.c.b16 %v6248, %v6245
      %v6723 = vpack.c.b16 %v6252, %v6249
      %v6724 = vpack.c.b16 %v6253, %v6250
      %v6725 = vpack.c.b16 %v6254, %v6251
      %v6726 = vpack.c.b16 %v6258, %v6255
      %v6727 = vpack.c.b16 %v6259, %v6256
      %v6728 = vpack.c.b16 %v6260, %v6257
      %v6729 = vpack.c.b16 %v6264, %v6261
      %v6730 = vpack.c.b16 %v6265, %v6262
      %v6731 = vpack.c.b16 %v6266, %v6263
      %v6732 = vpack.c.b16 %v6270, %v6267
      %v6733 = vpack.c.b16 %v6271, %v6268
      %v6734 = vpack.c.b16 %v6272, %v6269
      %v6735 = vpack.c.b16 %v6276, %v6273
      %v6736 = vpack.c.b16 %v6277, %v6274
      %v6737 = vpack.c.b16 %v6278, %v6275
      %v6738 = vpack.c.b16 %v6282, %v6279
      %v6739 = vpack.c.b16 %v6283, %v6280
      %v6740 = vpack.c.b16 %v6284, %v6281
      %v6741 = vpack.c.b16 %v6288, %v6285
      %v6742 = vpack.c.b16 %v6289, %v6286
      %v6743 = vpack.c.b16 %v6290, %v6287
      %v6744 = vpack.c.b16 %v6294, %v6291
      %v6745 = vpack.c.b16 %v6295, %v6292
      %v6746 = vpack.c.b16 %v6296, %v6293
      %v6747 = vpack.c.b16 %v6300, %v6297
      %v6748 = vpack.c.b16 %v6301, %v6298
      %v6749 = vpack.c.b16 %v6302, %v6299
      %v6750 = vpack.c.b16 %v6306, %v6303
      %v6751 = vpack.c.b16 %v6307, %v6304
      %v6752 = vpack.c.b16 %v6308, %v6305
      %v6753 = vpack.c.b16 %v6312, %v6309
      %v6754 = vpack.c.b16 %v6313, %v6310
      %v6755 = vpack.c.b16 %v6314, %v6311
      %v6756 = vpack.c.b16 %v6318, %v6315
      %v6757 = vpack.c.b16 %v6319, %v6316
      %v6758 = vpack.c.b16 %v6320, %v6317
      %v6759 = vpack.c.b16 %v6324, %v6321
      %v6760 = vpack.c.b16 %v6325, %v6322
      %v6761 = vpack.c.b16 %v6326, %v6323
      %v6762 = vpack.c.b16 %v6330, %v6327
      %v6763 = vpack.c.b16 %v6331, %v6328
      %v6764 = vpack.c.b16 %v6332, %v6329
      %v7198 = vlaneseq
      %v7199 = vshrl.u32 %v7198, 7
      %v7200 = vsub.s32 0, %v7199
      %v7201 = vrot.slane %v4892, %v7200
      %v7202 = vlaneseq
      %v7203 = vshrl.u32 %v7202, 7
      %v7204 = vsub.s32 1, %v7203
      %v7205 = vrot.slane %v4892, %v7204
      %v7206 = vlaneseq
      %v7207 = vshrl.u32 %v7206, 7
      %v7208 = vsub.s32 2, %v7207
      %v7209 = vrot.slane %v4892, %v7208
      %7213 = vmatprep.subr.bf16.mxu0 %v6355
      %7214 = vmatpush1.bf16.msra.mxu0 %v6354
      %7215 = vmatprep.subr.bf16.mxu0 %v6352
      %7216 = vmatpush1.bf16.msra.mxu0 %v6351
      %7217 = vmatprep.subr.bf16.mxu0 %v6349
      %7218 = vmatpush1.bf16.msra.mxu0 %v6348
      %7219 = vmatprep.subr.bf16.mxu0 %v6346
      %7220 = vmatpush1.bf16.msra.mxu0 %v6345
      %7221 = vmatprep.subr.bf16.mxu0 %v6343
      %7222 = vmatpush1.bf16.msra.mxu0 %v6342
      %7223 = vmatprep.subr.bf16.mxu0 %v6340
      %7224 = vmatpush1.bf16.msra.mxu0 %v6339
      %7225 = vmatprep.subr.bf16.mxu0 %v6337
      %7226 = vmatpush1.bf16.msra.mxu0 %v6336
      %7227 = vmatprep.subr.bf16.mxu0 %v6334
      %7228 = vmatpush1.bf16.msra.mxu0 %v6333
      %7229 = vmatprep.subr.bf16.mxu0 %v6379
      %7230 = vmatpush2.bf16.msra.mxu0 %v6378
      %7231 = vmatprep.subr.bf16.mxu0 %v6376
      %7232 = vmatpush2.bf16.msra.mxu0 %v6375
      %7233 = vmatprep.subr.bf16.mxu0 %v6373
      %7234 = vmatpush2.bf16.msra.mxu0 %v6372
      %7235 = vmatprep.subr.bf16.mxu0 %v6370
      %7236 = vmatpush2.bf16.msra.mxu0 %v6369
      %7237 = vmatprep.subr.bf16.mxu0 %v6367
      %7238 = vmatpush2.bf16.msra.mxu0 %v6366
      %7239 = vmatprep.subr.bf16.mxu0 %v6364
      %7240 = vmatpush2.bf16.msra.mxu0 %v6363
      %7241 = vmatprep.subr.bf16.mxu0 %v6361
      %7242 = vmatpush2.bf16.msra.mxu0 %v6360
      %7243 = vmatprep.subr.bf16.mxu0 %v6358
      %7244 = vmatpush2.bf16.msra.mxu0 %v6357
      %7245 = vmatprep.mubr.bf16.mxu0 %v4261
      %7246 = vmatmul.mubr.bf16.gmra.mxu0 %v4260
      %v7247 = vpop.f32.mrf.mxu0
      %v7248 = vadd.f32 %v7201, %v7247
      %v7249 = vpop.f32.mrf.mxu0
      %v7250 = vadd.f32 %v7205, %v7249
      %v7251 = vpop.f32.mrf.mxu0
      %v7252 = vpop.f32.mrf.mxu0
      %7253 = vdwg.mxu0
      %7254 = vmatprep.subr.bf16.mxu0 %v6403
      %7255 = vmatpush1.bf16.msra.mxu0 %v6402
      %7256 = vmatprep.subr.bf16.mxu0 %v6400
      %7257 = vmatpush1.bf16.msra.mxu0 %v6399
      %7258 = vmatprep.subr.bf16.mxu0 %v6397
      %7259 = vmatpush1.bf16.msra.mxu0 %v6396
      %7260 = vmatprep.subr.bf16.mxu0 %v6394
      %7261 = vmatpush1.bf16.msra.mxu0 %v6393
      %7262 = vmatprep.subr.bf16.mxu0 %v6391
      %7263 = vmatpush1.bf16.msra.mxu0 %v6390
      %7264 = vmatprep.subr.bf16.mxu0 %v6388
      %7265 = vmatpush1.bf16.msra.mxu0 %v6387
      %7266 = vmatprep.subr.bf16.mxu0 %v6385
      %7267 = vmatpush1.bf16.msra.mxu0 %v6384
      %7268 = vmatprep.subr.bf16.mxu0 %v6382
      %7269 = vmatpush1.bf16.msra.mxu0 %v6381
      %7270 = vmatprep.subr.bf16.mxu0 %v6427
      %7271 = vmatpush2.bf16.msra.mxu0 %v6426
      %7272 = vmatprep.subr.bf16.mxu0 %v6424
      %7273 = vmatpush2.bf16.msra.mxu0 %v6423
      %7274 = vmatprep.subr.bf16.mxu0 %v6421
      %7275 = vmatpush2.bf16.msra.mxu0 %v6420
      %7276 = vmatprep.subr.bf16.mxu0 %v6418
      %7277 = vmatpush2.bf16.msra.mxu0 %v6417
      %7278 = vmatprep.subr.bf16.mxu0 %v6415
      %7279 = vmatpush2.bf16.msra.mxu0 %v6414
      %7280 = vmatprep.subr.bf16.mxu0 %v6412
      %7281 = vmatpush2.bf16.msra.mxu0 %v6411
      %7282 = vmatprep.subr.bf16.mxu0 %v6409
      %7283 = vmatpush2.bf16.msra.mxu0 %v6408
      %7284 = vmatprep.subr.bf16.mxu0 %v6406
      %7285 = vmatpush2.bf16.msra.mxu0 %v6405
      %7286 = vmatprep.mubr.bf16.mxu0 %v4289
      %7287 = vmatmul.mubr.bf16.gmra.mxu0 %v4288
      %v7288 = vpop.f32.mrf.mxu0
      %v7289 = vadd.f32 %v7248, %v7288
      %v7290 = vpop.f32.mrf.mxu0
      %v7291 = vadd.f32 %v7250, %v7290
      %v7292 = vpop.f32.mrf.mxu0
      %v7293 = vpop.f32.mrf.mxu0
      %7294 = vdwg.mxu0
      %7295 = vmatprep.subr.bf16.mxu0 %v6451
      %7296 = vmatpush1.bf16.msra.mxu0 %v6450
      %7297 = vmatprep.subr.bf16.mxu0 %v6448
      %7298 = vmatpush1.bf16.msra.mxu0 %v6447
      %7299 = vmatprep.subr.bf16.mxu0 %v6445
      %7300 = vmatpush1.bf16.msra.mxu0 %v6444
      %7301 = vmatprep.subr.bf16.mxu0 %v6442
      %7302 = vmatpush1.bf16.msra.mxu0 %v6441
      %7303 = vmatprep.subr.bf16.mxu0 %v6439
      %7304 = vmatpush1.bf16.msra.mxu0 %v6438
      %7305 = vmatprep.subr.bf16.mxu0 %v6436
      %7306 = vmatpush1.bf16.msra.mxu0 %v6435
      %7307 = vmatprep.subr.bf16.mxu0 %v6433
      %7308 = vmatpush1.bf16.msra.mxu0 %v6432
      %7309 = vmatprep.subr.bf16.mxu0 %v6430
      %7310 = vmatpush1.bf16.msra.mxu0 %v6429
      %7311 = vmatprep.subr.bf16.mxu0 %v6475
      %7312 = vmatpush2.bf16.msra.mxu0 %v6474
      %7313 = vmatprep.subr.bf16.mxu0 %v6472
      %7314 = vmatpush2.bf16.msra.mxu0 %v6471
      %7315 = vmatprep.subr.bf16.mxu0 %v6469
      %7316 = vmatpush2.bf16.msra.mxu0 %v6468
      %7317 = vmatprep.subr.bf16.mxu0 %v6466
      %7318 = vmatpush2.bf16.msra.mxu0 %v6465
      %7319 = vmatprep.subr.bf16.mxu0 %v6463
      %7320 = vmatpush2.bf16.msra.mxu0 %v6462
      %7321 = vmatprep.subr.bf16.mxu0 %v6460
      %7322 = vmatpush2.bf16.msra.mxu0 %v6459
      %7323 = vmatprep.subr.bf16.mxu0 %v6457
      %7324 = vmatpush2.bf16.msra.mxu0 %v6456
      %7325 = vmatprep.subr.bf16.mxu0 %v6454
      %7326 = vmatpush2.bf16.msra.mxu0 %v6453
      %7327 = vmatprep.mubr.bf16.mxu0 %v4293
      %7328 = vmatmul.mubr.bf16.gmra.mxu0 %v4292
      %v7329 = vpop.f32.mrf.mxu0
      %v7330 = vadd.f32 %v7289, %v7329
      %v7331 = vpop.f32.mrf.mxu0
      %v7332 = vadd.f32 %v7291, %v7331
      %v7333 = vpop.f32.mrf.mxu0
      %v7334 = vpop.f32.mrf.mxu0
      %7335 = vdwg.mxu0
      %7336 = vmatprep.subr.bf16.mxu0 %v6499
      %7337 = vmatpush1.bf16.msra.mxu0 %v6498
      %7338 = vmatprep.subr.bf16.mxu0 %v6496
      %7339 = vmatpush1.bf16.msra.mxu0 %v6495
      %7340 = vmatprep.subr.bf16.mxu0 %v6493
      %7341 = vmatpush1.bf16.msra.mxu0 %v6492
      %7342 = vmatprep.subr.bf16.mxu0 %v6490
      %7343 = vmatpush1.bf16.msra.mxu0 %v6489
      %7344 = vmatprep.subr.bf16.mxu0 %v6487
      %7345 = vmatpush1.bf16.msra.mxu0 %v6486
      %7346 = vmatprep.subr.bf16.mxu0 %v6484
      %7347 = vmatpush1.bf16.msra.mxu0 %v6483
      %7348 = vmatprep.subr.bf16.mxu0 %v6481
      %7349 = vmatpush1.bf16.msra.mxu0 %v6480
      %7350 = vmatprep.subr.bf16.mxu0 %v6478
      %7351 = vmatpush1.bf16.msra.mxu0 %v6477
      %7352 = vmatprep.subr.bf16.mxu0 %v6523
      %7353 = vmatpush2.bf16.msra.mxu0 %v6522
      %7354 = vmatprep.subr.bf16.mxu0 %v6520
      %7355 = vmatpush2.bf16.msra.mxu0 %v6519
      %7356 = vmatprep.subr.bf16.mxu0 %v6517
      %7357 = vmatpush2.bf16.msra.mxu0 %v6516
      %7358 = vmatprep.subr.bf16.mxu0 %v6514
      %7359 = vmatpush2.bf16.msra.mxu0 %v6513
      %7360 = vmatprep.subr.bf16.mxu0 %v6511
      %7361 = vmatpush2.bf16.msra.mxu0 %v6510
      %7362 = vmatprep.subr.bf16.mxu0 %v6508
      %7363 = vmatpush2.bf16.msra.mxu0 %v6507
      %7364 = vmatprep.subr.bf16.mxu0 %v6505
      %7365 = vmatpush2.bf16.msra.mxu0 %v6504
      %7366 = vmatprep.subr.bf16.mxu0 %v6502
      %7367 = vmatpush2.bf16.msra.mxu0 %v6501
      %7368 = vmatprep.mubr.bf16.mxu0 %v4273
      %7369 = vmatmul.mubr.bf16.gmra.mxu0 %v4272
      %v7370 = vpop.f32.mrf.mxu0
      %v7371 = vadd.f32 %v7330, %v7370
      %v7372 = vpop.f32.mrf.mxu0
      %v7373 = vadd.f32 %v7332, %v7372
      %v7374 = vpop.f32.mrf.mxu0
      %v7375 = vpop.f32.mrf.mxu0
      %7376 = vdwg.mxu0
      %7377 = vmatprep.subr.bf16.mxu0 %v6547
      %7378 = vmatpush1.bf16.msra.mxu0 %v6546
      %7379 = vmatprep.subr.bf16.mxu0 %v6544
      %7380 = vmatpush1.bf16.msra.mxu0 %v6543
      %7381 = vmatprep.subr.bf16.mxu0 %v6541
      %7382 = vmatpush1.bf16.msra.mxu0 %v6540
      %7383 = vmatprep.subr.bf16.mxu0 %v6538
      %7384 = vmatpush1.bf16.msra.mxu0 %v6537
      %7385 = vmatprep.subr.bf16.mxu0 %v6535
      %7386 = vmatpush1.bf16.msra.mxu0 %v6534
      %7387 = vmatprep.subr.bf16.mxu0 %v6532
      %7388 = vmatpush1.bf16.msra.mxu0 %v6531
      %7389 = vmatprep.subr.bf16.mxu0 %v6529
      %7390 = vmatpush1.bf16.msra.mxu0 %v6528
      %7391 = vmatprep.subr.bf16.mxu0 %v6526
      %7392 = vmatpush1.bf16.msra.mxu0 %v6525
      %7393 = vmatprep.subr.bf16.mxu0 %v6571
      %7394 = vmatpush2.bf16.msra.mxu0 %v6570
      %7395 = vmatprep.subr.bf16.mxu0 %v6568
      %7396 = vmatpush2.bf16.msra.mxu0 %v6567
      %7397 = vmatprep.subr.bf16.mxu0 %v6565
      %7398 = vmatpush2.bf16.msra.mxu0 %v6564
      %7399 = vmatprep.subr.bf16.mxu0 %v6562
      %7400 = vmatpush2.bf16.msra.mxu0 %v6561
      %7401 = vmatprep.subr.bf16.mxu0 %v6559
      %7402 = vmatpush2.bf16.msra.mxu0 %v6558
      %7403 = vmatprep.subr.bf16.mxu0 %v6556
      %7404 = vmatpush2.bf16.msra.mxu0 %v6555
      %7405 = vmatprep.subr.bf16.mxu0 %v6553
      %7406 = vmatpush2.bf16.msra.mxu0 %v6552
      %7407 = vmatprep.subr.bf16.mxu0 %v6550
      %7408 = vmatpush2.bf16.msra.mxu0 %v6549
      %7409 = vmatprep.mubr.bf16.mxu0 %v4299
      %7410 = vmatmul.mubr.bf16.gmra.mxu0 %v4298
      %v7411 = vpop.f32.mrf.mxu0
      %v7412 = vadd.f32 %v7371, %v7411
      %v7413 = vpop.f32.mrf.mxu0
      %v7414 = vadd.f32 %v7373, %v7413
      %v7415 = vpop.f32.mrf.mxu0
      %v7416 = vpop.f32.mrf.mxu0
      %7417 = vdwg.mxu0
      %7418 = vmatprep.subr.bf16.mxu0 %v6595
      %7419 = vmatpush1.bf16.msra.mxu0 %v6594
      %7420 = vmatprep.subr.bf16.mxu0 %v6592
      %7421 = vmatpush1.bf16.msra.mxu0 %v6591
      %7422 = vmatprep.subr.bf16.mxu0 %v6589
      %7423 = vmatpush1.bf16.msra.mxu0 %v6588
      %7424 = vmatprep.subr.bf16.mxu0 %v6586
      %7425 = vmatpush1.bf16.msra.mxu0 %v6585
      %7426 = vmatprep.subr.bf16.mxu0 %v6583
      %7427 = vmatpush1.bf16.msra.mxu0 %v6582
      %7428 = vmatprep.subr.bf16.mxu0 %v6580
      %7429 = vmatpush1.bf16.msra.mxu0 %v6579
      %7430 = vmatprep.subr.bf16.mxu0 %v6577
      %7431 = vmatpush1.bf16.msra.mxu0 %v6576
      %7432 = vmatprep.subr.bf16.mxu0 %v6574
      %7433 = vmatpush1.bf16.msra.mxu0 %v6573
      %7434 = vmatprep.subr.bf16.mxu0 %v6619
      %7435 = vmatpush2.bf16.msra.mxu0 %v6618
      %7436 = vmatprep.subr.bf16.mxu0 %v6616
      %7437 = vmatpush2.bf16.msra.mxu0 %v6615
      %7438 = vmatprep.subr.bf16.mxu0 %v6613
      %7439 = vmatpush2.bf16.msra.mxu0 %v6612
      %7440 = vmatprep.subr.bf16.mxu0 %v6610
      %7441 = vmatpush2.bf16.msra.mxu0 %v6609
      %7442 = vmatprep.subr.bf16.mxu0 %v6607
      %7443 = vmatpush2.bf16.msra.mxu0 %v6606
      %7444 = vmatprep.subr.bf16.mxu0 %v6604
      %7445 = vmatpush2.bf16.msra.mxu0 %v6603
      %7446 = vmatprep.subr.bf16.mxu0 %v6601
      %7447 = vmatpush2.bf16.msra.mxu0 %v6600
      %7448 = vmatprep.subr.bf16.mxu0 %v6598
      %7449 = vmatpush2.bf16.msra.mxu0 %v6597
      %7450 = vmatprep.mubr.bf16.mxu0 %v4303
      %7451 = vmatmul.mubr.bf16.gmra.mxu0 %v4302
      %v7452 = vpop.f32.mrf.mxu0
      %v7453 = vadd.f32 %v7412, %v7452
      %v7454 = vpop.f32.mrf.mxu0
      %v7455 = vadd.f32 %v7414, %v7454
      %v7456 = vpop.f32.mrf.mxu0
      %v7457 = vpop.f32.mrf.mxu0
      %7458 = vdwg.mxu0
      %7459 = vmatprep.subr.bf16.mxu0 %v6643
      %7460 = vmatpush1.bf16.msra.mxu0 %v6642
      %7461 = vmatprep.subr.bf16.mxu0 %v6640
      %7462 = vmatpush1.bf16.msra.mxu0 %v6639
      %7463 = vmatprep.subr.bf16.mxu0 %v6637
      %7464 = vmatpush1.bf16.msra.mxu0 %v6636
      %7465 = vmatprep.subr.bf16.mxu0 %v6634
      %7466 = vmatpush1.bf16.msra.mxu0 %v6633
      %7467 = vmatprep.subr.bf16.mxu0 %v6631
      %7468 = vmatpush1.bf16.msra.mxu0 %v6630
      %7469 = vmatprep.subr.bf16.mxu0 %v6628
      %7470 = vmatpush1.bf16.msra.mxu0 %v6627
      %7471 = vmatprep.subr.bf16.mxu0 %v6625
      %7472 = vmatpush1.bf16.msra.mxu0 %v6624
      %7473 = vmatprep.subr.bf16.mxu0 %v6622
      %7474 = vmatpush1.bf16.msra.mxu0 %v6621
      %7475 = vmatprep.subr.bf16.mxu0 %v6667
      %7476 = vmatpush2.bf16.msra.mxu0 %v6666
      %7477 = vmatprep.subr.bf16.mxu0 %v6664
      %7478 = vmatpush2.bf16.msra.mxu0 %v6663
      %7479 = vmatprep.subr.bf16.mxu0 %v6661
      %7480 = vmatpush2.bf16.msra.mxu0 %v6660
      %7481 = vmatprep.subr.bf16.mxu0 %v6658
      %7482 = vmatpush2.bf16.msra.mxu0 %v6657
      %7483 = vmatprep.subr.bf16.mxu0 %v6655
      %7484 = vmatpush2.bf16.msra.mxu0 %v6654
      %7485 = vmatprep.subr.bf16.mxu0 %v6652
      %7486 = vmatpush2.bf16.msra.mxu0 %v6651
      %7487 = vmatprep.subr.bf16.mxu0 %v6649
      %7488 = vmatpush2.bf16.msra.mxu0 %v6648
      %7489 = vmatprep.subr.bf16.mxu0 %v6646
      %7490 = vmatpush2.bf16.msra.mxu0 %v6645
      %7491 = vmatprep.mubr.bf16.mxu0 %v4285
      %7492 = vmatmul.mubr.bf16.gmra.mxu0 %v4284
      %v7493 = vpop.f32.mrf.mxu0
      %v7494 = vadd.f32 %v7453, %v7493
      %v7495 = vpop.f32.mrf.mxu0
      %v7496 = vadd.f32 %v7455, %v7495
      %v7497 = vpop.f32.mrf.mxu0
      %v7498 = vpop.f32.mrf.mxu0
      %7499 = vdwg.mxu0
      %7500 = vmatprep.subr.bf16.mxu0 %v6691
      %7501 = vmatpush1.bf16.msra.mxu0 %v6690
      %7502 = vmatprep.subr.bf16.mxu0 %v6688
      %7503 = vmatpush1.bf16.msra.mxu0 %v6687
      %7504 = vmatprep.subr.bf16.mxu0 %v6685
      %7505 = vmatpush1.bf16.msra.mxu0 %v6684
      %7506 = vmatprep.subr.bf16.mxu0 %v6682
      %7507 = vmatpush1.bf16.msra.mxu0 %v6681
      %7508 = vmatprep.subr.bf16.mxu0 %v6679
      %7509 = vmatpush1.bf16.msra.mxu0 %v6678
      %7510 = vmatprep.subr.bf16.mxu0 %v6676
      %7511 = vmatpush1.bf16.msra.mxu0 %v6675
      %7512 = vmatprep.subr.bf16.mxu0 %v6673
      %7513 = vmatpush1.bf16.msra.mxu0 %v6672
      %7514 = vmatprep.subr.bf16.mxu0 %v6670
      %7515 = vmatpush1.bf16.msra.mxu0 %v6669
      %7516 = vmatprep.subr.bf16.mxu0 %v6715
      %7517 = vmatpush2.bf16.msra.mxu0 %v6714
      %7518 = vmatprep.subr.bf16.mxu0 %v6712
      %7519 = vmatpush2.bf16.msra.mxu0 %v6711
      %7520 = vmatprep.subr.bf16.mxu0 %v6709
      %7521 = vmatpush2.bf16.msra.mxu0 %v6708
      %7522 = vmatprep.subr.bf16.mxu0 %v6706
      %7523 = vmatpush2.bf16.msra.mxu0 %v6705
      %7524 = vmatprep.subr.bf16.mxu0 %v6703
      %7525 = vmatpush2.bf16.msra.mxu0 %v6702
      %7526 = vmatprep.subr.bf16.mxu0 %v6700
      %7527 = vmatpush2.bf16.msra.mxu0 %v6699
      %7528 = vmatprep.subr.bf16.mxu0 %v6697
      %7529 = vmatpush2.bf16.msra.mxu0 %v6696
      %7530 = vmatprep.subr.bf16.mxu0 %v6694
      %7531 = vmatpush2.bf16.msra.mxu0 %v6693
      %7532 = vmatprep.mubr.bf16.mxu0 %v4309
      %7533 = vmatmul.mubr.bf16.gmra.mxu0 %v4308
      %v7534 = vpop.f32.mrf.mxu0
      %v7535 = vadd.f32 %v7494, %v7534
      %v7536 = vpop.f32.mrf.mxu0
      %v7537 = vadd.f32 %v7496, %v7536
      %v7538 = vpop.f32.mrf.mxu0
      %v7539 = vpop.f32.mrf.mxu0
      %7540 = vdwg.mxu0
      %7541 = vmatprep.subr.bf16.mxu0 %v6739
      %7542 = vmatpush1.bf16.msra.mxu0 %v6738
      %7543 = vmatprep.subr.bf16.mxu0 %v6736
      %7544 = vmatpush1.bf16.msra.mxu0 %v6735
      %7545 = vmatprep.subr.bf16.mxu0 %v6733
      %7546 = vmatpush1.bf16.msra.mxu0 %v6732
      %7547 = vmatprep.subr.bf16.mxu0 %v6730
      %7548 = vmatpush1.bf16.msra.mxu0 %v6729
      %7549 = vmatprep.subr.bf16.mxu0 %v6727
      %7550 = vmatpush1.bf16.msra.mxu0 %v6726
      %7551 = vmatprep.subr.bf16.mxu0 %v6724
      %7552 = vmatpush1.bf16.msra.mxu0 %v6723
      %7553 = vmatprep.subr.bf16.mxu0 %v6721
      %7554 = vmatpush1.bf16.msra.mxu0 %v6720
      %7555 = vmatprep.subr.bf16.mxu0 %v6718
      %7556 = vmatpush1.bf16.msra.mxu0 %v6717
      %7557 = vmatprep.subr.bf16.mxu0 %v6763
      %7558 = vmatpush2.bf16.msra.mxu0 %v6762
      %7559 = vmatprep.subr.bf16.mxu0 %v6760
      %7560 = vmatpush2.bf16.msra.mxu0 %v6759
      %7561 = vmatprep.subr.bf16.mxu0 %v6757
      %7562 = vmatpush2.bf16.msra.mxu0 %v6756
      %7563 = vmatprep.subr.bf16.mxu0 %v6754
      %7564 = vmatpush2.bf16.msra.mxu0 %v6753
      %7565 = vmatprep.subr.bf16.mxu0 %v6751
      %7566 = vmatpush2.bf16.msra.mxu0 %v6750
      %7567 = vmatprep.subr.bf16.mxu0 %v6748
      %7568 = vmatpush2.bf16.msra.mxu0 %v6747
      %7569 = vmatprep.subr.bf16.mxu0 %v6745
      %7570 = vmatpush2.bf16.msra.mxu0 %v6744
      %7571 = vmatprep.subr.bf16.mxu0 %v6742
      %7572 = vmatpush2.bf16.msra.mxu0 %v6741
      %7573 = vmatprep.mubr.bf16.mxu0 %v4313
      %7574 = vmatmul.mubr.bf16.gmra.mxu0 %v4312
      %v7575 = vpop.f32.mrf.mxu0
      %v7576 = vadd.f32 %v7535, %v7575
      %v7577 = vpop.f32.mrf.mxu0
      %v7578 = vadd.f32 %v7537, %v7577
      %v7579 = vpop.f32.mrf.mxu0
      %v7580 = vpop.f32.mrf.mxu0
      %7581 = vdwg.mxu0
      %7582 = vmatprep.subr.bf16.mxu0 0
      %7583 = vmatpush1.bf16.msra.mxu0 %v6356
      %7584 = vmatprep.subr.bf16.mxu0 0
      %7585 = vmatpush1.bf16.msra.mxu0 %v6353
      %7586 = vmatprep.subr.bf16.mxu0 0
      %7587 = vmatpush1.bf16.msra.mxu0 %v6350
      %7588 = vmatprep.subr.bf16.mxu0 0
      %7589 = vmatpush1.bf16.msra.mxu0 %v6347
      %7590 = vmatprep.subr.bf16.mxu0 0
      %7591 = vmatpush1.bf16.msra.mxu0 %v6344
      %7592 = vmatprep.subr.bf16.mxu0 0
      %7593 = vmatpush1.bf16.msra.mxu0 %v6341
      %7594 = vmatprep.subr.bf16.mxu0 0
      %7595 = vmatpush1.bf16.msra.mxu0 %v6338
      %7596 = vmatprep.subr.bf16.mxu0 0
      %7597 = vmatpush1.bf16.msra.mxu0 %v6335
      %7598 = vmatprep.subr.bf16.mxu0 0
      %7599 = vmatpush2.bf16.msra.mxu0 %v6380
      %7600 = vmatprep.subr.bf16.mxu0 0
      %7601 = vmatpush2.bf16.msra.mxu0 %v6377
      %7602 = vmatprep.subr.bf16.mxu0 0
      %7603 = vmatpush2.bf16.msra.mxu0 %v6374
      %7604 = vmatprep.subr.bf16.mxu0 0
      %7605 = vmatpush2.bf16.msra.mxu0 %v6371
      %7606 = vmatprep.subr.bf16.mxu0 0
      %7607 = vmatpush2.bf16.msra.mxu0 %v6368
      %7608 = vmatprep.subr.bf16.mxu0 0
      %7609 = vmatpush2.bf16.msra.mxu0 %v6365
      %7610 = vmatprep.subr.bf16.mxu0 0
      %7611 = vmatpush2.bf16.msra.mxu0 %v6362
      %7612 = vmatprep.subr.bf16.mxu0 0
      %7613 = vmatpush2.bf16.msra.mxu0 %v6359
      %7614 = vmatprep.mubr.bf16.mxu0 %v4261
      %7615 = vmatmul.mubr.bf16.gmra.mxu0 %v4260
      %v7616 = vpop.f32.mrf.mxu0
      %v7617 = vadd.f32 %v7209, %v7616
      %v7618 = vpop.f32.mrf.mxu0
      %v7619 = vpop.f32.mrf.mxu0
      %v7620 = vpop.f32.mrf.mxu0
      %7621 = vdwg.mxu0
      %7622 = vmatprep.subr.bf16.mxu0 0
      %7623 = vmatpush1.bf16.msra.mxu0 %v6404
      %7624 = vmatprep.subr.bf16.mxu0 0
      %7625 = vmatpush1.bf16.msra.mxu0 %v6401
      %7626 = vmatprep.subr.bf16.mxu0 0
      %7627 = vmatpush1.bf16.msra.mxu0 %v6398
      %7628 = vmatprep.subr.bf16.mxu0 0
      %7629 = vmatpush1.bf16.msra.mxu0 %v6395
      %7630 = vmatprep.subr.bf16.mxu0 0
      %7631 = vmatpush1.bf16.msra.mxu0 %v6392
      %7632 = vmatprep.subr.bf16.mxu0 0
      %7633 = vmatpush1.bf16.msra.mxu0 %v6389
      %7634 = vmatprep.subr.bf16.mxu0 0
      %7635 = vmatpush1.bf16.msra.mxu0 %v6386
      %7636 = vmatprep.subr.bf16.mxu0 0
      %7637 = vmatpush1.bf16.msra.mxu0 %v6383
      %7638 = vmatprep.subr.bf16.mxu0 0
      %7639 = vmatpush2.bf16.msra.mxu0 %v6428
      %7640 = vmatprep.subr.bf16.mxu0 0
      %7641 = vmatpush2.bf16.msra.mxu0 %v6425
      %7642 = vmatprep.subr.bf16.mxu0 0
      %7643 = vmatpush2.bf16.msra.mxu0 %v6422
      %7644 = vmatprep.subr.bf16.mxu0 0
      %7645 = vmatpush2.bf16.msra.mxu0 %v6419
      %7646 = vmatprep.subr.bf16.mxu0 0
      %7647 = vmatpush2.bf16.msra.mxu0 %v6416
      %7648 = vmatprep.subr.bf16.mxu0 0
      %7649 = vmatpush2.bf16.msra.mxu0 %v6413
      %7650 = vmatprep.subr.bf16.mxu0 0
      %7651 = vmatpush2.bf16.msra.mxu0 %v6410
      %7652 = vmatprep.subr.bf16.mxu0 0
      %7653 = vmatpush2.bf16.msra.mxu0 %v6407
      %7654 = vmatprep.mubr.bf16.mxu0 %v4289
      %7655 = vmatmul.mubr.bf16.gmra.mxu0 %v4288
      %v7656 = vpop.f32.mrf.mxu0
      %v7657 = vadd.f32 %v7617, %v7656
      %v7658 = vpop.f32.mrf.mxu0
      %v7659 = vpop.f32.mrf.mxu0
      %v7660 = vpop.f32.mrf.mxu0
      %7661 = vdwg.mxu0
      %7662 = vmatprep.subr.bf16.mxu0 0
      %7663 = vmatpush1.bf16.msra.mxu0 %v6452
      %7664 = vmatprep.subr.bf16.mxu0 0
      %7665 = vmatpush1.bf16.msra.mxu0 %v6449
      %7666 = vmatprep.subr.bf16.mxu0 0
      %7667 = vmatpush1.bf16.msra.mxu0 %v6446
      %7668 = vmatprep.subr.bf16.mxu0 0
      %7669 = vmatpush1.bf16.msra.mxu0 %v6443
      %7670 = vmatprep.subr.bf16.mxu0 0
      %7671 = vmatpush1.bf16.msra.mxu0 %v6440
      %7672 = vmatprep.subr.bf16.mxu0 0
      %7673 = vmatpush1.bf16.msra.mxu0 %v6437
      %7674 = vmatprep.subr.bf16.mxu0 0
      %7675 = vmatpush1.bf16.msra.mxu0 %v6434
      %7676 = vmatprep.subr.bf16.mxu0 0
      %7677 = vmatpush1.bf16.msra.mxu0 %v6431
      %7678 = vmatprep.subr.bf16.mxu0 0
      %7679 = vmatpush2.bf16.msra.mxu0 %v6476
      %7680 = vmatprep.subr.bf16.mxu0 0
      %7681 = vmatpush2.bf16.msra.mxu0 %v6473
      %7682 = vmatprep.subr.bf16.mxu0 0
      %7683 = vmatpush2.bf16.msra.mxu0 %v6470
      %7684 = vmatprep.subr.bf16.mxu0 0
      %7685 = vmatpush2.bf16.msra.mxu0 %v6467
      %7686 = vmatprep.subr.bf16.mxu0 0
      %7687 = vmatpush2.bf16.msra.mxu0 %v6464
      %7688 = vmatprep.subr.bf16.mxu0 0
      %7689 = vmatpush2.bf16.msra.mxu0 %v6461
      %7690 = vmatprep.subr.bf16.mxu0 0
      %7691 = vmatpush2.bf16.msra.mxu0 %v6458
      %7692 = vmatprep.subr.bf16.mxu0 0
      %7693 = vmatpush2.bf16.msra.mxu0 %v6455
      %7694 = vmatprep.mubr.bf16.mxu0 %v4293
      %7695 = vmatmul.mubr.bf16.gmra.mxu0 %v4292
      %v7696 = vpop.f32.mrf.mxu0
      %v7697 = vadd.f32 %v7657, %v7696
      %v7698 = vpop.f32.mrf.mxu0
      %v7699 = vpop.f32.mrf.mxu0
      %v7700 = vpop.f32.mrf.mxu0
      %7701 = vdwg.mxu0
      %7702 = vmatprep.subr.bf16.mxu0 0
      %7703 = vmatpush1.bf16.msra.mxu0 %v6500
      %7704 = vmatprep.subr.bf16.mxu0 0
      %7705 = vmatpush1.bf16.msra.mxu0 %v6497
      %7706 = vmatprep.subr.bf16.mxu0 0
      %7707 = vmatpush1.bf16.msra.mxu0 %v6494
      %7708 = vmatprep.subr.bf16.mxu0 0
      %7709 = vmatpush1.bf16.msra.mxu0 %v6491
      %7710 = vmatprep.subr.bf16.mxu0 0
      %7711 = vmatpush1.bf16.msra.mxu0 %v6488
      %7712 = vmatprep.subr.bf16.mxu0 0
      %7713 = vmatpush1.bf16.msra.mxu0 %v6485
      %7714 = vmatprep.subr.bf16.mxu0 0
      %7715 = vmatpush1.bf16.msra.mxu0 %v6482
      %7716 = vmatprep.subr.bf16.mxu0 0
      %7717 = vmatpush1.bf16.msra.mxu0 %v6479
      %7718 = vmatprep.subr.bf16.mxu0 0
      %7719 = vmatpush2.bf16.msra.mxu0 %v6524
      %7720 = vmatprep.subr.bf16.mxu0 0
      %7721 = vmatpush2.bf16.msra.mxu0 %v6521
      %7722 = vmatprep.subr.bf16.mxu0 0
      %7723 = vmatpush2.bf16.msra.mxu0 %v6518
      %7724 = vmatprep.subr.bf16.mxu0 0
      %7725 = vmatpush2.bf16.msra.mxu0 %v6515
      %7726 = vmatprep.subr.bf16.mxu0 0
      %7727 = vmatpush2.bf16.msra.mxu0 %v6512
      %7728 = vmatprep.subr.bf16.mxu0 0
      %7729 = vmatpush2.bf16.msra.mxu0 %v6509
      %7730 = vmatprep.subr.bf16.mxu0 0
      %7731 = vmatpush2.bf16.msra.mxu0 %v6506
      %7732 = vmatprep.subr.bf16.mxu0 0
      %7733 = vmatpush2.bf16.msra.mxu0 %v6503
      %7734 = vmatprep.mubr.bf16.mxu0 %v4273
      %7735 = vmatmul.mubr.bf16.gmra.mxu0 %v4272
      %v7736 = vpop.f32.mrf.mxu0
      %v7737 = vadd.f32 %v7697, %v7736
      %v7738 = vpop.f32.mrf.mxu0
      %v7739 = vpop.f32.mrf.mxu0
      %v7740 = vpop.f32.mrf.mxu0
      %7741 = vdwg.mxu0
      %7742 = vmatprep.subr.bf16.mxu0 0
      %7743 = vmatpush1.bf16.msra.mxu0 %v6548
      %7744 = vmatprep.subr.bf16.mxu0 0
      %7745 = vmatpush1.bf16.msra.mxu0 %v6545
      %7746 = vmatprep.subr.bf16.mxu0 0
      %7747 = vmatpush1.bf16.msra.mxu0 %v6542
      %7748 = vmatprep.subr.bf16.mxu0 0
      %7749 = vmatpush1.bf16.msra.mxu0 %v6539
      %7750 = vmatprep.subr.bf16.mxu0 0
      %7751 = vmatpush1.bf16.msra.mxu0 %v6536
      %7752 = vmatprep.subr.bf16.mxu0 0
      %7753 = vmatpush1.bf16.msra.mxu0 %v6533
      %7754 = vmatprep.subr.bf16.mxu0 0
      %7755 = vmatpush1.bf16.msra.mxu0 %v6530
      %7756 = vmatprep.subr.bf16.mxu0 0
      %7757 = vmatpush1.bf16.msra.mxu0 %v6527
      %7758 = vmatprep.subr.bf16.mxu0 0
      %7759 = vmatpush2.bf16.msra.mxu0 %v6572
      %7760 = vmatprep.subr.bf16.mxu0 0
      %7761 = vmatpush2.bf16.msra.mxu0 %v6569
      %7762 = vmatprep.subr.bf16.mxu0 0
      %7763 = vmatpush2.bf16.msra.mxu0 %v6566
      %7764 = vmatprep.subr.bf16.mxu0 0
      %7765 = vmatpush2.bf16.msra.mxu0 %v6563
      %7766 = vmatprep.subr.bf16.mxu0 0
      %7767 = vmatpush2.bf16.msra.mxu0 %v6560
      %7768 = vmatprep.subr.bf16.mxu0 0
      %7769 = vmatpush2.bf16.msra.mxu0 %v6557
      %7770 = vmatprep.subr.bf16.mxu0 0
      %7771 = vmatpush2.bf16.msra.mxu0 %v6554
      %7772 = vmatprep.subr.bf16.mxu0 0
      %7773 = vmatpush2.bf16.msra.mxu0 %v6551
      %7774 = vmatprep.mubr.bf16.mxu0 %v4299
      %7775 = vmatmul.mubr.bf16.gmra.mxu0 %v4298
      %v7776 = vpop.f32.mrf.mxu0
      %v7777 = vadd.f32 %v7737, %v7776
      %v7778 = vpop.f32.mrf.mxu0
      %v7779 = vpop.f32.mrf.mxu0
      %v7780 = vpop.f32.mrf.mxu0
      %7781 = vdwg.mxu0
      %7782 = vmatprep.subr.bf16.mxu0 0
      %7783 = vmatpush1.bf16.msra.mxu0 %v6596
      %7784 = vmatprep.subr.bf16.mxu0 0
      %7785 = vmatpush1.bf16.msra.mxu0 %v6593
      %7786 = vmatprep.subr.bf16.mxu0 0
      %7787 = vmatpush1.bf16.msra.mxu0 %v6590
      %7788 = vmatprep.subr.bf16.mxu0 0
      %7789 = vmatpush1.bf16.msra.mxu0 %v6587
      %7790 = vmatprep.subr.bf16.mxu0 0
      %7791 = vmatpush1.bf16.msra.mxu0 %v6584
      %7792 = vmatprep.subr.bf16.mxu0 0
      %7793 = vmatpush1.bf16.msra.mxu0 %v6581
      %7794 = vmatprep.subr.bf16.mxu0 0
      %7795 = vmatpush1.bf16.msra.mxu0 %v6578
      %7796 = vmatprep.subr.bf16.mxu0 0
      %7797 = vmatpush1.bf16.msra.mxu0 %v6575
      %7798 = vmatprep.subr.bf16.mxu0 0
      %7799 = vmatpush2.bf16.msra.mxu0 %v6620
      %7800 = vmatprep.subr.bf16.mxu0 0
      %7801 = vmatpush2.bf16.msra.mxu0 %v6617
      %7802 = vmatprep.subr.bf16.mxu0 0
      %7803 = vmatpush2.bf16.msra.mxu0 %v6614
      %7804 = vmatprep.subr.bf16.mxu0 0
      %7805 = vmatpush2.bf16.msra.mxu0 %v6611
      %7806 = vmatprep.subr.bf16.mxu0 0
      %7807 = vmatpush2.bf16.msra.mxu0 %v6608
      %7808 = vmatprep.subr.bf16.mxu0 0
      %7809 = vmatpush2.bf16.msra.mxu0 %v6605
      %7810 = vmatprep.subr.bf16.mxu0 0
      %7811 = vmatpush2.bf16.msra.mxu0 %v6602
      %7812 = vmatprep.subr.bf16.mxu0 0
      %7813 = vmatpush2.bf16.msra.mxu0 %v6599
      %7814 = vmatprep.mubr.bf16.mxu0 %v4303
      %7815 = vmatmul.mubr.bf16.gmra.mxu0 %v4302
      %v7816 = vpop.f32.mrf.mxu0
      %v7817 = vadd.f32 %v7777, %v7816
      %v7818 = vpop.f32.mrf.mxu0
      %v7819 = vpop.f32.mrf.mxu0
      %v7820 = vpop.f32.mrf.mxu0
      %7821 = vdwg.mxu0
      %7822 = vmatprep.subr.bf16.mxu0 0
      %7823 = vmatpush1.bf16.msra.mxu0 %v6644
      %7824 = vmatprep.subr.bf16.mxu0 0
      %7825 = vmatpush1.bf16.msra.mxu0 %v6641
      %7826 = vmatprep.subr.bf16.mxu0 0
      %7827 = vmatpush1.bf16.msra.mxu0 %v6638
      %7828 = vmatprep.subr.bf16.mxu0 0
      %7829 = vmatpush1.bf16.msra.mxu0 %v6635
      %7830 = vmatprep.subr.bf16.mxu0 0
      %7831 = vmatpush1.bf16.msra.mxu0 %v6632
      %7832 = vmatprep.subr.bf16.mxu0 0
      %7833 = vmatpush1.bf16.msra.mxu0 %v6629
      %7834 = vmatprep.subr.bf16.mxu0 0
      %7835 = vmatpush1.bf16.msra.mxu0 %v6626
      %7836 = vmatprep.subr.bf16.mxu0 0
      %7837 = vmatpush1.bf16.msra.mxu0 %v6623
      %7838 = vmatprep.subr.bf16.mxu0 0
      %7839 = vmatpush2.bf16.msra.mxu0 %v6668
      %7840 = vmatprep.subr.bf16.mxu0 0
      %7841 = vmatpush2.bf16.msra.mxu0 %v6665
      %7842 = vmatprep.subr.bf16.mxu0 0
      %7843 = vmatpush2.bf16.msra.mxu0 %v6662
      %7844 = vmatprep.subr.bf16.mxu0 0
      %7845 = vmatpush2.bf16.msra.mxu0 %v6659
      %7846 = vmatprep.subr.bf16.mxu0 0
      %7847 = vmatpush2.bf16.msra.mxu0 %v6656
      %7848 = vmatprep.subr.bf16.mxu0 0
      %7849 = vmatpush2.bf16.msra.mxu0 %v6653
      %7850 = vmatprep.subr.bf16.mxu0 0
      %7851 = vmatpush2.bf16.msra.mxu0 %v6650
      %7852 = vmatprep.subr.bf16.mxu0 0
      %7853 = vmatpush2.bf16.msra.mxu0 %v6647
      %7854 = vmatprep.mubr.bf16.mxu0 %v4285
      %7855 = vmatmul.mubr.bf16.gmra.mxu0 %v4284
      %v7856 = vpop.f32.mrf.mxu0
      %v7857 = vadd.f32 %v7817, %v7856
      %v7858 = vpop.f32.mrf.mxu0
      %v7859 = vpop.f32.mrf.mxu0
      %v7860 = vpop.f32.mrf.mxu0
      %7861 = vdwg.mxu0
      %7862 = vmatprep.subr.bf16.mxu0 0
      %7863 = vmatpush1.bf16.msra.mxu0 %v6692
      %7864 = vmatprep.subr.bf16.mxu0 0
      %7865 = vmatpush1.bf16.msra.mxu0 %v6689
      %7866 = vmatprep.subr.bf16.mxu0 0
      %7867 = vmatpush1.bf16.msra.mxu0 %v6686
      %7868 = vmatprep.subr.bf16.mxu0 0
      %7869 = vmatpush1.bf16.msra.mxu0 %v6683
      %7870 = vmatprep.subr.bf16.mxu0 0
      %7871 = vmatpush1.bf16.msra.mxu0 %v6680
      %7872 = vmatprep.subr.bf16.mxu0 0
      %7873 = vmatpush1.bf16.msra.mxu0 %v6677
      %7874 = vmatprep.subr.bf16.mxu0 0
      %7875 = vmatpush1.bf16.msra.mxu0 %v6674
      %7876 = vmatprep.subr.bf16.mxu0 0
      %7877 = vmatpush1.bf16.msra.mxu0 %v6671
      %7878 = vmatprep.subr.bf16.mxu0 0
      %7879 = vmatpush2.bf16.msra.mxu0 %v6716
      %7880 = vmatprep.subr.bf16.mxu0 0
      %7881 = vmatpush2.bf16.msra.mxu0 %v6713
      %7882 = vmatprep.subr.bf16.mxu0 0
      %7883 = vmatpush2.bf16.msra.mxu0 %v6710
      %7884 = vmatprep.subr.bf16.mxu0 0
      %7885 = vmatpush2.bf16.msra.mxu0 %v6707
      %7886 = vmatprep.subr.bf16.mxu0 0
      %7887 = vmatpush2.bf16.msra.mxu0 %v6704
      %7888 = vmatprep.subr.bf16.mxu0 0
      %7889 = vmatpush2.bf16.msra.mxu0 %v6701
      %7890 = vmatprep.subr.bf16.mxu0 0
      %7891 = vmatpush2.bf16.msra.mxu0 %v6698
      %7892 = vmatprep.subr.bf16.mxu0 0
      %7893 = vmatpush2.bf16.msra.mxu0 %v6695
      %7894 = vmatprep.mubr.bf16.mxu0 %v4309
      %7895 = vmatmul.mubr.bf16.gmra.mxu0 %v4308
      %v7896 = vpop.f32.mrf.mxu0
      %v7897 = vadd.f32 %v7857, %v7896
      %v7898 = vpop.f32.mrf.mxu0
      %v7899 = vpop.f32.mrf.mxu0
      %v7900 = vpop.f32.mrf.mxu0
      %7901 = vdwg.mxu0
      %7902 = vmatprep.subr.bf16.mxu0 0
      %7903 = vmatpush1.bf16.msra.mxu0 %v6740
      %7904 = vmatprep.subr.bf16.mxu0 0
      %7905 = vmatpush1.bf16.msra.mxu0 %v6737
      %7906 = vmatprep.subr.bf16.mxu0 0
      %7907 = vmatpush1.bf16.msra.mxu0 %v6734
      %7908 = vmatprep.subr.bf16.mxu0 0
      %7909 = vmatpush1.bf16.msra.mxu0 %v6731
      %7910 = vmatprep.subr.bf16.mxu0 0
      %7911 = vmatpush1.bf16.msra.mxu0 %v6728
      %7912 = vmatprep.subr.bf16.mxu0 0
      %7913 = vmatpush1.bf16.msra.mxu0 %v6725
      %7914 = vmatprep.subr.bf16.mxu0 0
      %7915 = vmatpush1.bf16.msra.mxu0 %v6722
      %7916 = vmatprep.subr.bf16.mxu0 0
      %7917 = vmatpush1.bf16.msra.mxu0 %v6719
      %7918 = vmatprep.subr.bf16.mxu0 0
      %7919 = vmatpush2.bf16.msra.mxu0 %v6764
      %7920 = vmatprep.subr.bf16.mxu0 0
      %7921 = vmatpush2.bf16.msra.mxu0 %v6761
      %7922 = vmatprep.subr.bf16.mxu0 0
      %7923 = vmatpush2.bf16.msra.mxu0 %v6758
      %7924 = vmatprep.subr.bf16.mxu0 0
      %7925 = vmatpush2.bf16.msra.mxu0 %v6755
      %7926 = vmatprep.subr.bf16.mxu0 0
      %7927 = vmatpush2.bf16.msra.mxu0 %v6752
      %7928 = vmatprep.subr.bf16.mxu0 0
      %7929 = vmatpush2.bf16.msra.mxu0 %v6749
      %7930 = vmatprep.subr.bf16.mxu0 0
      %7931 = vmatpush2.bf16.msra.mxu0 %v6746
      %7932 = vmatprep.subr.bf16.mxu0 0
      %7933 = vmatpush2.bf16.msra.mxu0 %v6743
      %7934 = vmatprep.mubr.bf16.mxu0 %v4313
      %7935 = vmatmul.mubr.bf16.gmra.mxu0 %v4312
      %v7936 = vpop.f32.mrf.mxu0
      %v7937 = vadd.f32 %v7897, %v7936
      %v7938 = vpop.f32.mrf.mxu0
      %v7939 = vpop.f32.mrf.mxu0
      %v7940 = vpop.f32.mrf.mxu0
      %7941 = vdwg.mxu0
      %v7942 = vmax.f32 %v7576, 0.0
      %v7943 = vmax.f32 %v7578, 0.0
      %v7944 = vmax.f32 %v7937, 0.0
      %v7945 = vpack.c.bf16 %v7942, %v7942
      %v7946 = vpack.c.bf16 %v7943, %v7943
      %v7947 = vpack.c.bf16 %v7944, %v7944
      %v7948 = vld [vmem:[%s7] sm:$0xff]
      %v7949 = vld [vmem:[%s7 + $0x8] sm:$0xff]
      %v7950 = vld [vmem:[%s7 + $0x10] sm:$0xff]
      %v7951 = vld [vmem:[%s7 + $0x18] sm:$0xff]
      %v7952 = vld [vmem:[%s7 + $0x20] sm:$0xff]
      %v7953 = vld [vmem:[%s7 + $0x28] sm:$0xff]
      %v7954 = vld [vmem:[%s7 + $0x30] sm:$0xff]
      %v7955 = vld [vmem:[%s7 + $0x38] sm:$0xff]
      %v7956 = vld [vmem:[%s7 + $0x40] sm:$0xff]
      %v7957 = vld [vmem:[%s7 + $0x48] sm:$0xff]
      %v7958 = vld [vmem:[%s7 + $0x50] sm:$0xff]
      %v7959 = vld [vmem:[%s7 + $0x58] sm:$0xff]
      %v7960 = vld [vmem:[%s7 + $0x60] sm:$0xff]
      %v7961 = vld [vmem:[%s7 + $0x68] sm:$0xff]
      %v7962 = vld [vmem:[%s7 + $0x70] sm:$0xff]
      %v7963 = vld [vmem:[%s7 + $0x78] sm:$0xff]
      %v7964 = vld [vmem:[%s7 + $0x80] sm:$0xff]
      %v7965 = vld [vmem:[%s7 + $0x88] sm:$0xff]
      %v7966 = vld [vmem:[%s7 + $0x90] sm:$0xff]
      %v7967 = vld [vmem:[%s7 + $0x98] sm:$0xff]
      %v7968 = vld [vmem:[%s7 + $0xa0] sm:$0xff]
      %v7969 = vld [vmem:[%s7 + $0xa8] sm:$0xff]
      %v7970 = vld [vmem:[%s7 + $0xb0] sm:$0xff]
      %v7971 = vld [vmem:[%s7 + $0xb8] sm:$0xff]
      %v7972 = vld [vmem:[%s7 + $0xc0] sm:$0xff]
      %v7973 = vld [vmem:[%s7 + $0xc8] sm:$0xff]
      %v7974 = vld [vmem:[%s7 + $0xd0] sm:$0xff]
      %v7975 = vld [vmem:[%s7 + $0xd8] sm:$0xff]
      %v7976 = vld [vmem:[%s7 + $0xe0] sm:$0xff]
      %v7977 = vld [vmem:[%s7 + $0xe8] sm:$0xff]
      %v7978 = vld [vmem:[%s7 + $0xf0] sm:$0xff]
      %v7979 = vld [vmem:[%s7 + $0xf8] sm:$0xff]
      %v7980 = vld [vmem:[%s7 + $0x100] sm:$0xff]
      %v7981 = vld [vmem:[%s7 + $0x108] sm:$0xff]
      %v7982 = vld [vmem:[%s7 + $0x110] sm:$0xff]
      %v7983 = vld [vmem:[%s7 + $0x118] sm:$0xff]
      %v7984 = vld [vmem:[%s7 + $0x120] sm:$0xff]
      %v7985 = vld [vmem:[%s7 + $0x128] sm:$0xff]
      %v7986 = vld [vmem:[%s7 + $0x130] sm:$0xff]
      %v7987 = vld [vmem:[%s7 + $0x138] sm:$0xff]
      %v7988 = vld [vmem:[%s7 + $0x140] sm:$0xff]
      %v7989 = vld [vmem:[%s7 + $0x148] sm:$0xff]
      %v7990 = vld [vmem:[%s7 + $0x150] sm:$0xff]
      %v7991 = vld [vmem:[%s7 + $0x158] sm:$0xff]
      %v7992 = vld [vmem:[%s7 + $0x160] sm:$0xff]
      %v7993 = vld [vmem:[%s7 + $0x168] sm:$0xff]
      %v7994 = vld [vmem:[%s7 + $0x170] sm:$0xff]
      %v7995 = vld [vmem:[%s7 + $0x178] sm:$0xff]
      %v7996 = vld [vmem:[%s7 + $0x180] sm:$0xff]
      %v7997 = vld [vmem:[%s7 + $0x188] sm:$0xff]
      %v7998 = vld [vmem:[%s7 + $0x190] sm:$0xff]
      %v7999 = vld [vmem:[%s7 + $0x198] sm:$0xff]
      %v8000 = vld [vmem:[%s7 + $0x1a0] sm:$0xff]
      %v8001 = vld [vmem:[%s7 + $0x1a8] sm:$0xff]
      %v8002 = vld [vmem:[%s7 + $0x1b0] sm:$0xff]
      %v8003 = vld [vmem:[%s7 + $0x1b8] sm:$0xff]
      %v8004 = vld [vmem:[%s7 + $0x1c0] sm:$0xff]
      %v8005 = vld [vmem:[%s7 + $0x1c8] sm:$0xff]
      %v8006 = vld [vmem:[%s7 + $0x1d0] sm:$0xff]
      %v8007 = vld [vmem:[%s7 + $0x1d8] sm:$0xff]
      %v8008 = vld [vmem:[%s7 + $0x1e0] sm:$0xff]
      %v8009 = vld [vmem:[%s7 + $0x1e8] sm:$0xff]
      %v8010 = vld [vmem:[%s7 + $0x1f0] sm:$0xff]
      %v8011 = vld [vmem:[%s7 + $0x1f8] sm:$0xff]
      %v8012 = vld [vmem:[%s7 + $0x200] sm:$0xff]
      %v8013 = vld [vmem:[%s7 + $0x208] sm:$0xff]
      %v8014 = vld [vmem:[%s7 + $0x210] sm:$0xff]
      %v8015 = vld [vmem:[%s7 + $0x218] sm:$0xff]
      %v8016 = vld [vmem:[%s7 + $0x220] sm:$0xff]
      %v8017 = vld [vmem:[%s7 + $0x228] sm:$0xff]
      %v8018 = vld [vmem:[%s7 + $0x230] sm:$0xff]
      %v8019 = vld [vmem:[%s7 + $0x238] sm:$0xff]
      %v8020 = vld [vmem:[%s7 + $0x240] sm:$0xff]
      %v8021 = vld [vmem:[%s7 + $0x248] sm:$0xff]
      %v8022 = vld [vmem:[%s7 + $0x250] sm:$0xff]
      %v8023 = vld [vmem:[%s7 + $0x258] sm:$0xff]
      %v8024 = vld [vmem:[%s7 + $0x260] sm:$0xff]
      %v8025 = vld [vmem:[%s7 + $0x268] sm:$0xff]
      %v8026 = vld [vmem:[%s7 + $0x270] sm:$0xff]
      %v8027 = vld [vmem:[%s7 + $0x278] sm:$0xff]
      %v8028 = vld [vmem:[%s7 + $0x280] sm:$0xff]
      %v8029 = vld [vmem:[%s7 + $0x288] sm:$0xff]
      %v8030 = vld [vmem:[%s7 + $0x290] sm:$0xff]
      %v8031 = vld [vmem:[%s7 + $0x298] sm:$0xff]
      %v8032 = vld [vmem:[%s7 + $0x2a0] sm:$0xff]
      %v8033 = vld [vmem:[%s7 + $0x2a8] sm:$0xff]
      %v8034 = vld [vmem:[%s7 + $0x2b0] sm:$0xff]
      %v8035 = vld [vmem:[%s7 + $0x2b8] sm:$0xff]
      %v8036 = vld [vmem:[%s7 + $0x2c0] sm:$0xff]
      %v8037 = vld [vmem:[%s7 + $0x2c8] sm:$0xff]
      %v8038 = vld [vmem:[%s7 + $0x2d0] sm:$0xff]
      %v8039 = vld [vmem:[%s7 + $0x2d8] sm:$0xff]
      %v8040 = vld [vmem:[%s7 + $0x2e0] sm:$0xff]
      %v8041 = vld [vmem:[%s7 + $0x2e8] sm:$0xff]
      %v8042 = vld [vmem:[%s7 + $0x2f0] sm:$0xff]
      %v8043 = vld [vmem:[%s7 + $0x2f8] sm:$0xff]
      %v8044 = vld [vmem:[%s7 + $0x300] sm:$0xff]
      %v8045 = vld [vmem:[%s7 + $0x308] sm:$0xff]
      %v8046 = vld [vmem:[%s7 + $0x310] sm:$0xff]
      %v8047 = vld [vmem:[%s7 + $0x318] sm:$0xff]
      %v8048 = vld [vmem:[%s7 + $0x320] sm:$0xff]
      %v8049 = vld [vmem:[%s7 + $0x328] sm:$0xff]
      %v8050 = vld [vmem:[%s7 + $0x330] sm:$0xff]
      %v8051 = vld [vmem:[%s7 + $0x338] sm:$0xff]
      %v8052 = vld [vmem:[%s7 + $0x340] sm:$0xff]
      %v8053 = vld [vmem:[%s7 + $0x348] sm:$0xff]
      %v8054 = vld [vmem:[%s7 + $0x350] sm:$0xff]
      %v8055 = vld [vmem:[%s7 + $0x358] sm:$0xff]
      %v8056 = vld [vmem:[%s7 + $0x360] sm:$0xff]
      %v8057 = vld [vmem:[%s7 + $0x368] sm:$0xff]
      %v8058 = vld [vmem:[%s7 + $0x370] sm:$0xff]
      %v8059 = vld [vmem:[%s7 + $0x378] sm:$0xff]
      %v8060 = vld [vmem:[%s7 + $0x380] sm:$0xff]
      %v8061 = vld [vmem:[%s7 + $0x388] sm:$0xff]
      %v8062 = vld [vmem:[%s7 + $0x390] sm:$0xff]
      %v8063 = vld [vmem:[%s7 + $0x398] sm:$0xff]
      %v8064 = vld [vmem:[%s7 + $0x3a0] sm:$0xff]
      %v8065 = vld [vmem:[%s7 + $0x3a8] sm:$0xff]
      %v8066 = vld [vmem:[%s7 + $0x3b0] sm:$0xff]
      %v8067 = vld [vmem:[%s7 + $0x3b8] sm:$0xff]
      %v8068 = vld [vmem:[%s7 + $0x3c0] sm:$0xff]
      %v8069 = vld [vmem:[%s7 + $0x3c8] sm:$0xff]
      %v8070 = vld [vmem:[%s7 + $0x3d0] sm:$0xff]
      %v8071 = vld [vmem:[%s7 + $0x3d8] sm:$0xff]
      %v8072 = vld [vmem:[%s7 + $0x3e0] sm:$0xff]
      %v8073 = vld [vmem:[%s7 + $0x3e8] sm:$0xff]
      %v8074 = vld [vmem:[%s7 + $0x3f0] sm:$0xff]
      %v8075 = vld [vmem:[%s7 + $0x3f8] sm:$0xff]
      %v8076 = vld [vmem:[%s7 + $0x400] sm:$0xff]
      %v8077 = vld [vmem:[%s7 + $0x408] sm:$0xff]
      %v8078 = vld [vmem:[%s7 + $0x410] sm:$0xff]
      %v8079 = vld [vmem:[%s7 + $0x418] sm:$0xff]
      %v8080 = vld [vmem:[%s7 + $0x420] sm:$0xff]
      %v8081 = vld [vmem:[%s7 + $0x428] sm:$0xff]
      %v8082 = vld [vmem:[%s7 + $0x430] sm:$0xff]
      %v8083 = vld [vmem:[%s7 + $0x438] sm:$0xff]
      %v8084 = vld [vmem:[%s7 + $0x440] sm:$0xff]
      %v8085 = vld [vmem:[%s7 + $0x448] sm:$0xff]
      %v8086 = vld [vmem:[%s7 + $0x450] sm:$0xff]
      %v8087 = vld [vmem:[%s7 + $0x458] sm:$0xff]
      %v8088 = vld [vmem:[%s7 + $0x460] sm:$0xff]
      %v8089 = vld [vmem:[%s7 + $0x468] sm:$0xff]
      %v8090 = vld [vmem:[%s7 + $0x470] sm:$0xff]
      %v8091 = vld [vmem:[%s7 + $0x478] sm:$0xff]
      %v8092 = vld [vmem:[%s7 + $0x480] sm:$0xff]
      %v8093 = vld [vmem:[%s7 + $0x488] sm:$0xff]
      %v8094 = vld [vmem:[%s7 + $0x490] sm:$0xff]
      %v8095 = vld [vmem:[%s7 + $0x498] sm:$0xff]
      %v8096 = vld [vmem:[%s7 + $0x4a0] sm:$0xff]
      %v8097 = vld [vmem:[%s7 + $0x4a8] sm:$0xff]
      %v8098 = vld [vmem:[%s7 + $0x4b0] sm:$0xff]
      %v8099 = vld [vmem:[%s7 + $0x4b8] sm:$0xff]
      %v8100 = vld [vmem:[%s7 + $0x4c0] sm:$0xff]
      %v8101 = vld [vmem:[%s7 + $0x4c8] sm:$0xff]
      %v8102 = vld [vmem:[%s7 + $0x4d0] sm:$0xff]
      %v8103 = vld [vmem:[%s7 + $0x4d8] sm:$0xff]
      %v8104 = vld [vmem:[%s7 + $0x4e0] sm:$0xff]
      %v8105 = vld [vmem:[%s7 + $0x4e8] sm:$0xff]
      %v8106 = vld [vmem:[%s7 + $0x4f0] sm:$0xff]
      %v8107 = vld [vmem:[%s7 + $0x4f8] sm:$0xff]
      %v8108 = vld [vmem:[%s7 + $0x500] sm:$0xff]
      %v8109 = vld [vmem:[%s7 + $0x508] sm:$0xff]
      %v8110 = vld [vmem:[%s7 + $0x510] sm:$0xff]
      %v8111 = vld [vmem:[%s7 + $0x518] sm:$0xff]
      %v8112 = vld [vmem:[%s7 + $0x520] sm:$0xff]
      %v8113 = vld [vmem:[%s7 + $0x528] sm:$0xff]
      %v8114 = vld [vmem:[%s7 + $0x530] sm:$0xff]
      %v8115 = vld [vmem:[%s7 + $0x538] sm:$0xff]
      %v8116 = vld [vmem:[%s7 + $0x540] sm:$0xff]
      %v8117 = vld [vmem:[%s7 + $0x548] sm:$0xff]
      %v8118 = vld [vmem:[%s7 + $0x550] sm:$0xff]
      %v8119 = vld [vmem:[%s7 + $0x558] sm:$0xff]
      %v8120 = vld [vmem:[%s7 + $0x560] sm:$0xff]
      %v8121 = vld [vmem:[%s7 + $0x568] sm:$0xff]
      %v8122 = vld [vmem:[%s7 + $0x570] sm:$0xff]
      %v8123 = vld [vmem:[%s7 + $0x578] sm:$0xff]
      %v8124 = vld [vmem:[%s7 + $0x580] sm:$0xff]
      %v8125 = vld [vmem:[%s7 + $0x588] sm:$0xff]
      %v8126 = vld [vmem:[%s7 + $0x590] sm:$0xff]
      %v8127 = vld [vmem:[%s7 + $0x598] sm:$0xff]
      %v8128 = vld [vmem:[%s7 + $0x5a0] sm:$0xff]
      %v8129 = vld [vmem:[%s7 + $0x5a8] sm:$0xff]
      %v8130 = vld [vmem:[%s7 + $0x5b0] sm:$0xff]
      %v8131 = vld [vmem:[%s7 + $0x5b8] sm:$0xff]
      %v8132 = vld [vmem:[%s7 + $0x5c0] sm:$0xff]
      %v8133 = vld [vmem:[%s7 + $0x5c8] sm:$0xff]
      %v8134 = vld [vmem:[%s7 + $0x5d0] sm:$0xff]
      %v8135 = vld [vmem:[%s7 + $0x5d8] sm:$0xff]
      %v8136 = vld [vmem:[%s7 + $0x5e0] sm:$0xff]
      %v8137 = vld [vmem:[%s7 + $0x5e8] sm:$0xff]
      %v8138 = vld [vmem:[%s7 + $0x5f0] sm:$0xff]
      %v8139 = vld [vmem:[%s7 + $0x5f8] sm:$0xff]
      %v8140 = vld [vmem:[%s8] sm:$0xff]
      %v8333 = vunpack.c.l.b16 %v7948
      %v8334 = vunpack.c.h.b16 %v7948
      %v8335 = vunpack.c.l.b16 %v7949
      %v8336 = vunpack.c.h.b16 %v7949
      %v8337 = vunpack.c.l.b16 %v7950
      %v8338 = vunpack.c.h.b16 %v7950
      %v8339 = vunpack.c.l.b16 %v7951
      %v8340 = vunpack.c.h.b16 %v7951
      %v8341 = vunpack.c.l.b16 %v7952
      %v8342 = vunpack.c.h.b16 %v7952
      %v8343 = vunpack.c.l.b16 %v7953
      %v8344 = vunpack.c.h.b16 %v7953
      %v8345 = vunpack.c.l.b16 %v7954
      %v8346 = vunpack.c.h.b16 %v7954
      %v8347 = vunpack.c.l.b16 %v7955
      %v8348 = vunpack.c.h.b16 %v7955
      %v8349 = vunpack.c.l.b16 %v7956
      %v8350 = vunpack.c.h.b16 %v7956
      %v8351 = vunpack.c.l.b16 %v7957
      %v8352 = vunpack.c.h.b16 %v7957
      %v8353 = vunpack.c.l.b16 %v7958
      %v8354 = vunpack.c.h.b16 %v7958
      %v8355 = vunpack.c.l.b16 %v7959
      %v8356 = vunpack.c.h.b16 %v7959
      %v8357 = vunpack.c.l.b16 %v7960
      %v8358 = vunpack.c.h.b16 %v7960
      %v8359 = vunpack.c.l.b16 %v7961
      %v8360 = vunpack.c.h.b16 %v7961
      %v8361 = vunpack.c.l.b16 %v7962
      %v8362 = vunpack.c.h.b16 %v7962
      %v8363 = vunpack.c.l.b16 %v7963
      %v8364 = vunpack.c.h.b16 %v7963
      %v8365 = vunpack.c.l.b16 %v7964
      %v8366 = vunpack.c.h.b16 %v7964
      %v8367 = vunpack.c.l.b16 %v7965
      %v8368 = vunpack.c.h.b16 %v7965
      %v8369 = vunpack.c.l.b16 %v7966
      %v8370 = vunpack.c.h.b16 %v7966
      %v8371 = vunpack.c.l.b16 %v7967
      %v8372 = vunpack.c.h.b16 %v7967
      %v8373 = vunpack.c.l.b16 %v7968
      %v8374 = vunpack.c.h.b16 %v7968
      %v8375 = vunpack.c.l.b16 %v7969
      %v8376 = vunpack.c.h.b16 %v7969
      %v8377 = vunpack.c.l.b16 %v7970
      %v8378 = vunpack.c.h.b16 %v7970
      %v8379 = vunpack.c.l.b16 %v7971
      %v8380 = vunpack.c.h.b16 %v7971
      %v8381 = vunpack.c.l.b16 %v7972
      %v8382 = vunpack.c.h.b16 %v7972
      %v8383 = vunpack.c.l.b16 %v7973
      %v8384 = vunpack.c.h.b16 %v7973
      %v8385 = vunpack.c.l.b16 %v7974
      %v8386 = vunpack.c.h.b16 %v7974
      %v8387 = vunpack.c.l.b16 %v7975
      %v8388 = vunpack.c.h.b16 %v7975
      %v8389 = vunpack.c.l.b16 %v7976
      %v8390 = vunpack.c.h.b16 %v7976
      %v8391 = vunpack.c.l.b16 %v7977
      %v8392 = vunpack.c.h.b16 %v7977
      %v8393 = vunpack.c.l.b16 %v7978
      %v8394 = vunpack.c.h.b16 %v7978
      %v8395 = vunpack.c.l.b16 %v7979
      %v8396 = vunpack.c.h.b16 %v7979
      %v8397 = vunpack.c.l.b16 %v7980
      %v8398 = vunpack.c.h.b16 %v7980
      %v8399 = vunpack.c.l.b16 %v7981
      %v8400 = vunpack.c.h.b16 %v7981
      %v8401 = vunpack.c.l.b16 %v7982
      %v8402 = vunpack.c.h.b16 %v7982
      %v8403 = vunpack.c.l.b16 %v7983
      %v8404 = vunpack.c.h.b16 %v7983
      %v8405 = vunpack.c.l.b16 %v7984
      %v8406 = vunpack.c.h.b16 %v7984
      %v8407 = vunpack.c.l.b16 %v7985
      %v8408 = vunpack.c.h.b16 %v7985
      %v8409 = vunpack.c.l.b16 %v7986
      %v8410 = vunpack.c.h.b16 %v7986
      %v8411 = vunpack.c.l.b16 %v7987
      %v8412 = vunpack.c.h.b16 %v7987
      %v8413 = vunpack.c.l.b16 %v7988
      %v8414 = vunpack.c.h.b16 %v7988
      %v8415 = vunpack.c.l.b16 %v7989
      %v8416 = vunpack.c.h.b16 %v7989
      %v8417 = vunpack.c.l.b16 %v7990
      %v8418 = vunpack.c.h.b16 %v7990
      %v8419 = vunpack.c.l.b16 %v7991
      %v8420 = vunpack.c.h.b16 %v7991
      %v8421 = vunpack.c.l.b16 %v7992
      %v8422 = vunpack.c.h.b16 %v7992
      %v8423 = vunpack.c.l.b16 %v7993
      %v8424 = vunpack.c.h.b16 %v7993
      %v8425 = vunpack.c.l.b16 %v7994
      %v8426 = vunpack.c.h.b16 %v7994
      %v8427 = vunpack.c.l.b16 %v7995
      %v8428 = vunpack.c.h.b16 %v7995
      %v8429 = vunpack.c.l.b16 %v7996
      %v8430 = vunpack.c.h.b16 %v7996
      %v8431 = vunpack.c.l.b16 %v7997
      %v8432 = vunpack.c.h.b16 %v7997
      %v8433 = vunpack.c.l.b16 %v7998
      %v8434 = vunpack.c.h.b16 %v7998
      %v8435 = vunpack.c.l.b16 %v7999
      %v8436 = vunpack.c.h.b16 %v7999
      %v8437 = vunpack.c.l.b16 %v8000
      %v8438 = vunpack.c.h.b16 %v8000
      %v8439 = vunpack.c.l.b16 %v8001
      %v8440 = vunpack.c.h.b16 %v8001
      %v8441 = vunpack.c.l.b16 %v8002
      %v8442 = vunpack.c.h.b16 %v8002
      %v8443 = vunpack.c.l.b16 %v8003
      %v8444 = vunpack.c.h.b16 %v8003
      %v8445 = vunpack.c.l.b16 %v8004
      %v8446 = vunpack.c.h.b16 %v8004
      %v8447 = vunpack.c.l.b16 %v8005
      %v8448 = vunpack.c.h.b16 %v8005
      %v8449 = vunpack.c.l.b16 %v8006
      %v8450 = vunpack.c.h.b16 %v8006
      %v8451 = vunpack.c.l.b16 %v8007
      %v8452 = vunpack.c.h.b16 %v8007
      %v8453 = vunpack.c.l.b16 %v8008
      %v8454 = vunpack.c.h.b16 %v8008
      %v8455 = vunpack.c.l.b16 %v8009
      %v8456 = vunpack.c.h.b16 %v8009
      %v8457 = vunpack.c.l.b16 %v8010
      %v8458 = vunpack.c.h.b16 %v8010
      %v8459 = vunpack.c.l.b16 %v8011
      %v8460 = vunpack.c.h.b16 %v8011
      %v8461 = vunpack.c.l.b16 %v8012
      %v8462 = vunpack.c.h.b16 %v8012
      %v8463 = vunpack.c.l.b16 %v8013
      %v8464 = vunpack.c.h.b16 %v8013
      %v8465 = vunpack.c.l.b16 %v8014
      %v8466 = vunpack.c.h.b16 %v8014
      %v8467 = vunpack.c.l.b16 %v8015
      %v8468 = vunpack.c.h.b16 %v8015
      %v8469 = vunpack.c.l.b16 %v8016
      %v8470 = vunpack.c.h.b16 %v8016
      %v8471 = vunpack.c.l.b16 %v8017
      %v8472 = vunpack.c.h.b16 %v8017
      %v8473 = vunpack.c.l.b16 %v8018
      %v8474 = vunpack.c.h.b16 %v8018
      %v8475 = vunpack.c.l.b16 %v8019
      %v8476 = vunpack.c.h.b16 %v8019
      %v8477 = vunpack.c.l.b16 %v8020
      %v8478 = vunpack.c.h.b16 %v8020
      %v8479 = vunpack.c.l.b16 %v8021
      %v8480 = vunpack.c.h.b16 %v8021
      %v8481 = vunpack.c.l.b16 %v8022
      %v8482 = vunpack.c.h.b16 %v8022
      %v8483 = vunpack.c.l.b16 %v8023
      %v8484 = vunpack.c.h.b16 %v8023
      %v8485 = vunpack.c.l.b16 %v8024
      %v8486 = vunpack.c.h.b16 %v8024
      %v8487 = vunpack.c.l.b16 %v8025
      %v8488 = vunpack.c.h.b16 %v8025
      %v8489 = vunpack.c.l.b16 %v8026
      %v8490 = vunpack.c.h.b16 %v8026
      %v8491 = vunpack.c.l.b16 %v8027
      %v8492 = vunpack.c.h.b16 %v8027
      %v8493 = vunpack.c.l.b16 %v8028
      %v8494 = vunpack.c.h.b16 %v8028
      %v8495 = vunpack.c.l.b16 %v8029
      %v8496 = vunpack.c.h.b16 %v8029
      %v8497 = vunpack.c.l.b16 %v8030
      %v8498 = vunpack.c.h.b16 %v8030
      %v8499 = vunpack.c.l.b16 %v8031
      %v8500 = vunpack.c.h.b16 %v8031
      %v8501 = vunpack.c.l.b16 %v8032
      %v8502 = vunpack.c.h.b16 %v8032
      %v8503 = vunpack.c.l.b16 %v8033
      %v8504 = vunpack.c.h.b16 %v8033
      %v8505 = vunpack.c.l.b16 %v8034
      %v8506 = vunpack.c.h.b16 %v8034
      %v8507 = vunpack.c.l.b16 %v8035
      %v8508 = vunpack.c.h.b16 %v8035
      %v8509 = vunpack.c.l.b16 %v8036
      %v8510 = vunpack.c.h.b16 %v8036
      %v8511 = vunpack.c.l.b16 %v8037
      %v8512 = vunpack.c.h.b16 %v8037
      %v8513 = vunpack.c.l.b16 %v8038
      %v8514 = vunpack.c.h.b16 %v8038
      %v8515 = vunpack.c.l.b16 %v8039
      %v8516 = vunpack.c.h.b16 %v8039
      %v8517 = vunpack.c.l.b16 %v8040
      %v8518 = vunpack.c.h.b16 %v8040
      %v8519 = vunpack.c.l.b16 %v8041
      %v8520 = vunpack.c.h.b16 %v8041
      %v8521 = vunpack.c.l.b16 %v8042
      %v8522 = vunpack.c.h.b16 %v8042
      %v8523 = vunpack.c.l.b16 %v8043
      %v8524 = vunpack.c.h.b16 %v8043
      %v8525 = vunpack.c.l.b16 %v8044
      %v8526 = vunpack.c.h.b16 %v8044
      %v8527 = vunpack.c.l.b16 %v8045
      %v8528 = vunpack.c.h.b16 %v8045
      %v8529 = vunpack.c.l.b16 %v8046
      %v8530 = vunpack.c.h.b16 %v8046
      %v8531 = vunpack.c.l.b16 %v8047
      %v8532 = vunpack.c.h.b16 %v8047
      %v8533 = vunpack.c.l.b16 %v8048
      %v8534 = vunpack.c.h.b16 %v8048
      %v8535 = vunpack.c.l.b16 %v8049
      %v8536 = vunpack.c.h.b16 %v8049
      %v8537 = vunpack.c.l.b16 %v8050
      %v8538 = vunpack.c.h.b16 %v8050
      %v8539 = vunpack.c.l.b16 %v8051
      %v8540 = vunpack.c.h.b16 %v8051
      %v8541 = vunpack.c.l.b16 %v8052
      %v8542 = vunpack.c.h.b16 %v8052
      %v8543 = vunpack.c.l.b16 %v8053
      %v8544 = vunpack.c.h.b16 %v8053
      %v8545 = vunpack.c.l.b16 %v8054
      %v8546 = vunpack.c.h.b16 %v8054
      %v8547 = vunpack.c.l.b16 %v8055
      %v8548 = vunpack.c.h.b16 %v8055
      %v8549 = vunpack.c.l.b16 %v8056
      %v8550 = vunpack.c.h.b16 %v8056
      %v8551 = vunpack.c.l.b16 %v8057
      %v8552 = vunpack.c.h.b16 %v8057
      %v8553 = vunpack.c.l.b16 %v8058
      %v8554 = vunpack.c.h.b16 %v8058
      %v8555 = vunpack.c.l.b16 %v8059
      %v8556 = vunpack.c.h.b16 %v8059
      %v8557 = vunpack.c.l.b16 %v8060
      %v8558 = vunpack.c.h.b16 %v8060
      %v8559 = vunpack.c.l.b16 %v8061
      %v8560 = vunpack.c.h.b16 %v8061
      %v8561 = vunpack.c.l.b16 %v8062
      %v8562 = vunpack.c.h.b16 %v8062
      %v8563 = vunpack.c.l.b16 %v8063
      %v8564 = vunpack.c.h.b16 %v8063
      %v8565 = vunpack.c.l.b16 %v8064
      %v8566 = vunpack.c.h.b16 %v8064
      %v8567 = vunpack.c.l.b16 %v8065
      %v8568 = vunpack.c.h.b16 %v8065
      %v8569 = vunpack.c.l.b16 %v8066
      %v8570 = vunpack.c.h.b16 %v8066
      %v8571 = vunpack.c.l.b16 %v8067
      %v8572 = vunpack.c.h.b16 %v8067
      %v8573 = vunpack.c.l.b16 %v8068
      %v8574 = vunpack.c.h.b16 %v8068
      %v8575 = vunpack.c.l.b16 %v8069
      %v8576 = vunpack.c.h.b16 %v8069
      %v8577 = vunpack.c.l.b16 %v8070
      %v8578 = vunpack.c.h.b16 %v8070
      %v8579 = vunpack.c.l.b16 %v8071
      %v8580 = vunpack.c.h.b16 %v8071
      %v8581 = vunpack.c.l.b16 %v8072
      %v8582 = vunpack.c.h.b16 %v8072
      %v8583 = vunpack.c.l.b16 %v8073
      %v8584 = vunpack.c.h.b16 %v8073
      %v8585 = vunpack.c.l.b16 %v8074
      %v8586 = vunpack.c.h.b16 %v8074
      %v8587 = vunpack.c.l.b16 %v8075
      %v8588 = vunpack.c.h.b16 %v8075
      %v8589 = vunpack.c.l.b16 %v8076
      %v8590 = vunpack.c.h.b16 %v8076
      %v8591 = vunpack.c.l.b16 %v8077
      %v8592 = vunpack.c.h.b16 %v8077
      %v8593 = vunpack.c.l.b16 %v8078
      %v8594 = vunpack.c.h.b16 %v8078
      %v8595 = vunpack.c.l.b16 %v8079
      %v8596 = vunpack.c.h.b16 %v8079
      %v8597 = vunpack.c.l.b16 %v8080
      %v8598 = vunpack.c.h.b16 %v8080
      %v8599 = vunpack.c.l.b16 %v8081
      %v8600 = vunpack.c.h.b16 %v8081
      %v8601 = vunpack.c.l.b16 %v8082
      %v8602 = vunpack.c.h.b16 %v8082
      %v8603 = vunpack.c.l.b16 %v8083
      %v8604 = vunpack.c.h.b16 %v8083
      %v8605 = vunpack.c.l.b16 %v8084
      %v8606 = vunpack.c.h.b16 %v8084
      %v8607 = vunpack.c.l.b16 %v8085
      %v8608 = vunpack.c.h.b16 %v8085
      %v8609 = vunpack.c.l.b16 %v8086
      %v8610 = vunpack.c.h.b16 %v8086
      %v8611 = vunpack.c.l.b16 %v8087
      %v8612 = vunpack.c.h.b16 %v8087
      %v8613 = vunpack.c.l.b16 %v8088
      %v8614 = vunpack.c.h.b16 %v8088
      %v8615 = vunpack.c.l.b16 %v8089
      %v8616 = vunpack.c.h.b16 %v8089
      %v8617 = vunpack.c.l.b16 %v8090
      %v8618 = vunpack.c.h.b16 %v8090
      %v8619 = vunpack.c.l.b16 %v8091
      %v8620 = vunpack.c.h.b16 %v8091
      %v8621 = vunpack.c.l.b16 %v8092
      %v8622 = vunpack.c.h.b16 %v8092
      %v8623 = vunpack.c.l.b16 %v8093
      %v8624 = vunpack.c.h.b16 %v8093
      %v8625 = vunpack.c.l.b16 %v8094
      %v8626 = vunpack.c.h.b16 %v8094
      %v8627 = vunpack.c.l.b16 %v8095
      %v8628 = vunpack.c.h.b16 %v8095
      %v8629 = vunpack.c.l.b16 %v8096
      %v8630 = vunpack.c.h.b16 %v8096
      %v8631 = vunpack.c.l.b16 %v8097
      %v8632 = vunpack.c.h.b16 %v8097
      %v8633 = vunpack.c.l.b16 %v8098
      %v8634 = vunpack.c.h.b16 %v8098
      %v8635 = vunpack.c.l.b16 %v8099
      %v8636 = vunpack.c.h.b16 %v8099
      %v8637 = vunpack.c.l.b16 %v8100
      %v8638 = vunpack.c.h.b16 %v8100
      %v8639 = vunpack.c.l.b16 %v8101
      %v8640 = vunpack.c.h.b16 %v8101
      %v8641 = vunpack.c.l.b16 %v8102
      %v8642 = vunpack.c.h.b16 %v8102
      %v8643 = vunpack.c.l.b16 %v8103
      %v8644 = vunpack.c.h.b16 %v8103
      %v8645 = vunpack.c.l.b16 %v8104
      %v8646 = vunpack.c.h.b16 %v8104
      %v8647 = vunpack.c.l.b16 %v8105
      %v8648 = vunpack.c.h.b16 %v8105
      %v8649 = vunpack.c.l.b16 %v8106
      %v8650 = vunpack.c.h.b16 %v8106
      %v8651 = vunpack.c.l.b16 %v8107
      %v8652 = vunpack.c.h.b16 %v8107
      %v8653 = vunpack.c.l.b16 %v8108
      %v8654 = vunpack.c.h.b16 %v8108
      %v8655 = vunpack.c.l.b16 %v8109
      %v8656 = vunpack.c.h.b16 %v8109
      %v8657 = vunpack.c.l.b16 %v8110
      %v8658 = vunpack.c.h.b16 %v8110
      %v8659 = vunpack.c.l.b16 %v8111
      %v8660 = vunpack.c.h.b16 %v8111
      %v8661 = vunpack.c.l.b16 %v8112
      %v8662 = vunpack.c.h.b16 %v8112
      %v8663 = vunpack.c.l.b16 %v8113
      %v8664 = vunpack.c.h.b16 %v8113
      %v8665 = vunpack.c.l.b16 %v8114
      %v8666 = vunpack.c.h.b16 %v8114
      %v8667 = vunpack.c.l.b16 %v8115
      %v8668 = vunpack.c.h.b16 %v8115
      %v8669 = vunpack.c.l.b16 %v8116
      %v8670 = vunpack.c.h.b16 %v8116
      %v8671 = vunpack.c.l.b16 %v8117
      %v8672 = vunpack.c.h.b16 %v8117
      %v8673 = vunpack.c.l.b16 %v8118
      %v8674 = vunpack.c.h.b16 %v8118
      %v8675 = vunpack.c.l.b16 %v8119
      %v8676 = vunpack.c.h.b16 %v8119
      %v8677 = vunpack.c.l.b16 %v8120
      %v8678 = vunpack.c.h.b16 %v8120
      %v8679 = vunpack.c.l.b16 %v8121
      %v8680 = vunpack.c.h.b16 %v8121
      %v8681 = vunpack.c.l.b16 %v8122
      %v8682 = vunpack.c.h.b16 %v8122
      %v8683 = vunpack.c.l.b16 %v8123
      %v8684 = vunpack.c.h.b16 %v8123
      %v8685 = vunpack.c.l.b16 %v8124
      %v8686 = vunpack.c.h.b16 %v8124
      %v8687 = vunpack.c.l.b16 %v8125
      %v8688 = vunpack.c.h.b16 %v8125
      %v8689 = vunpack.c.l.b16 %v8126
      %v8690 = vunpack.c.h.b16 %v8126
      %v8691 = vunpack.c.l.b16 %v8127
      %v8692 = vunpack.c.h.b16 %v8127
      %v8693 = vunpack.c.l.b16 %v8128
      %v8694 = vunpack.c.h.b16 %v8128
      %v8695 = vunpack.c.l.b16 %v8129
      %v8696 = vunpack.c.h.b16 %v8129
      %v8697 = vunpack.c.l.b16 %v8130
      %v8698 = vunpack.c.h.b16 %v8130
      %v8699 = vunpack.c.l.b16 %v8131
      %v8700 = vunpack.c.h.b16 %v8131
      %v8701 = vunpack.c.l.b16 %v8132
      %v8702 = vunpack.c.h.b16 %v8132
      %v8703 = vunpack.c.l.b16 %v8133
      %v8704 = vunpack.c.h.b16 %v8133
      %v8705 = vunpack.c.l.b16 %v8134
      %v8706 = vunpack.c.h.b16 %v8134
      %v8707 = vunpack.c.l.b16 %v8135
      %v8708 = vunpack.c.h.b16 %v8135
      %v8709 = vunpack.c.l.b16 %v8136
      %v8710 = vunpack.c.h.b16 %v8136
      %v8711 = vunpack.c.l.b16 %v8137
      %v8712 = vunpack.c.h.b16 %v8137
      %v8713 = vunpack.c.l.b16 %v8138
      %v8714 = vunpack.c.h.b16 %v8138
      %v8715 = vunpack.c.l.b16 %v8139
      %v8716 = vunpack.c.h.b16 %v8139
      %v8717 = vpack.c.b16 %v8341, %v8333
      %v8718 = vpack.c.b16 %v8342, %v8334
      %v8719 = vpack.c.b16 %v8343, %v8335
      %v8720 = vpack.c.b16 %v8344, %v8336
      %v8721 = vpack.c.b16 %v8345, %v8337
      %v8722 = vpack.c.b16 %v8346, %v8338
      %v8723 = vpack.c.b16 %v8347, %v8339
      %v8724 = vpack.c.b16 %v8348, %v8340
      %v8725 = vpack.c.b16 %v8357, %v8349
      %v8726 = vpack.c.b16 %v8358, %v8350
      %v8727 = vpack.c.b16 %v8359, %v8351
      %v8728 = vpack.c.b16 %v8360, %v8352
      %v8729 = vpack.c.b16 %v8361, %v8353
      %v8730 = vpack.c.b16 %v8362, %v8354
      %v8731 = vpack.c.b16 %v8363, %v8355
      %v8732 = vpack.c.b16 %v8364, %v8356
      %v8733 = vpack.c.b16 %v8373, %v8365
      %v8734 = vpack.c.b16 %v8374, %v8366
      %v8735 = vpack.c.b16 %v8375, %v8367
      %v8736 = vpack.c.b16 %v8376, %v8368
      %v8737 = vpack.c.b16 %v8377, %v8369
      %v8738 = vpack.c.b16 %v8378, %v8370
      %v8739 = vpack.c.b16 %v8379, %v8371
      %v8740 = vpack.c.b16 %v8380, %v8372
      %v8741 = vpack.c.b16 %v8389, %v8381
      %v8742 = vpack.c.b16 %v8390, %v8382
      %v8743 = vpack.c.b16 %v8391, %v8383
      %v8744 = vpack.c.b16 %v8392, %v8384
      %v8745 = vpack.c.b16 %v8393, %v8385
      %v8746 = vpack.c.b16 %v8394, %v8386
      %v8747 = vpack.c.b16 %v8395, %v8387
      %v8748 = vpack.c.b16 %v8396, %v8388
      %v8749 = vpack.c.b16 %v8405, %v8397
      %v8750 = vpack.c.b16 %v8406, %v8398
      %v8751 = vpack.c.b16 %v8407, %v8399
      %v8752 = vpack.c.b16 %v8408, %v8400
      %v8753 = vpack.c.b16 %v8409, %v8401
      %v8754 = vpack.c.b16 %v8410, %v8402
      %v8755 = vpack.c.b16 %v8411, %v8403
      %v8756 = vpack.c.b16 %v8412, %v8404
      %v8757 = vpack.c.b16 %v8421, %v8413
      %v8758 = vpack.c.b16 %v8422, %v8414
      %v8759 = vpack.c.b16 %v8423, %v8415
      %v8760 = vpack.c.b16 %v8424, %v8416
      %v8761 = vpack.c.b16 %v8425, %v8417
      %v8762 = vpack.c.b16 %v8426, %v8418
      %v8763 = vpack.c.b16 %v8427, %v8419
      %v8764 = vpack.c.b16 %v8428, %v8420
      %v8765 = vpack.c.b16 %v8437, %v8429
      %v8766 = vpack.c.b16 %v8438, %v8430
      %v8767 = vpack.c.b16 %v8439, %v8431
      %v8768 = vpack.c.b16 %v8440, %v8432
      %v8769 = vpack.c.b16 %v8441, %v8433
      %v8770 = vpack.c.b16 %v8442, %v8434
      %v8771 = vpack.c.b16 %v8443, %v8435
      %v8772 = vpack.c.b16 %v8444, %v8436
      %v8773 = vpack.c.b16 %v8453, %v8445
      %v8774 = vpack.c.b16 %v8454, %v8446
      %v8775 = vpack.c.b16 %v8455, %v8447
      %v8776 = vpack.c.b16 %v8456, %v8448
      %v8777 = vpack.c.b16 %v8457, %v8449
      %v8778 = vpack.c.b16 %v8458, %v8450
      %v8779 = vpack.c.b16 %v8459, %v8451
      %v8780 = vpack.c.b16 %v8460, %v8452
      %v8781 = vpack.c.b16 %v8469, %v8461
      %v8782 = vpack.c.b16 %v8470, %v8462
      %v8783 = vpack.c.b16 %v8471, %v8463
      %v8784 = vpack.c.b16 %v8472, %v8464
      %v8785 = vpack.c.b16 %v8473, %v8465
      %v8786 = vpack.c.b16 %v8474, %v8466
      %v8787 = vpack.c.b16 %v8475, %v8467
      %v8788 = vpack.c.b16 %v8476, %v8468
      %v8789 = vpack.c.b16 %v8485, %v8477
      %v8790 = vpack.c.b16 %v8486, %v8478
      %v8791 = vpack.c.b16 %v8487, %v8479
      %v8792 = vpack.c.b16 %v8488, %v8480
      %v8793 = vpack.c.b16 %v8489, %v8481
      %v8794 = vpack.c.b16 %v8490, %v8482
      %v8795 = vpack.c.b16 %v8491, %v8483
      %v8796 = vpack.c.b16 %v8492, %v8484
      %v8797 = vpack.c.b16 %v8501, %v8493
      %v8798 = vpack.c.b16 %v8502, %v8494
      %v8799 = vpack.c.b16 %v8503, %v8495
      %v8800 = vpack.c.b16 %v8504, %v8496
      %v8801 = vpack.c.b16 %v8505, %v8497
      %v8802 = vpack.c.b16 %v8506, %v8498
      %v8803 = vpack.c.b16 %v8507, %v8499
      %v8804 = vpack.c.b16 %v8508, %v8500
      %v8805 = vpack.c.b16 %v8517, %v8509
      %v8806 = vpack.c.b16 %v8518, %v8510
      %v8807 = vpack.c.b16 %v8519, %v8511
      %v8808 = vpack.c.b16 %v8520, %v8512
      %v8809 = vpack.c.b16 %v8521, %v8513
      %v8810 = vpack.c.b16 %v8522, %v8514
      %v8811 = vpack.c.b16 %v8523, %v8515
      %v8812 = vpack.c.b16 %v8524, %v8516
      %v8813 = vpack.c.b16 %v8533, %v8525
      %v8814 = vpack.c.b16 %v8534, %v8526
      %v8815 = vpack.c.b16 %v8535, %v8527
      %v8816 = vpack.c.b16 %v8536, %v8528
      %v8817 = vpack.c.b16 %v8537, %v8529
      %v8818 = vpack.c.b16 %v8538, %v8530
      %v8819 = vpack.c.b16 %v8539, %v8531
      %v8820 = vpack.c.b16 %v8540, %v8532
      %v8821 = vpack.c.b16 %v8549, %v8541
      %v8822 = vpack.c.b16 %v8550, %v8542
      %v8823 = vpack.c.b16 %v8551, %v8543
      %v8824 = vpack.c.b16 %v8552, %v8544
      %v8825 = vpack.c.b16 %v8553, %v8545
      %v8826 = vpack.c.b16 %v8554, %v8546
      %v8827 = vpack.c.b16 %v8555, %v8547
      %v8828 = vpack.c.b16 %v8556, %v8548
      %v8829 = vpack.c.b16 %v8565, %v8557
      %v8830 = vpack.c.b16 %v8566, %v8558
      %v8831 = vpack.c.b16 %v8567, %v8559
      %v8832 = vpack.c.b16 %v8568, %v8560
      %v8833 = vpack.c.b16 %v8569, %v8561
      %v8834 = vpack.c.b16 %v8570, %v8562
      %v8835 = vpack.c.b16 %v8571, %v8563
      %v8836 = vpack.c.b16 %v8572, %v8564
      %v8837 = vpack.c.b16 %v8581, %v8573
      %v8838 = vpack.c.b16 %v8582, %v8574
      %v8839 = vpack.c.b16 %v8583, %v8575
      %v8840 = vpack.c.b16 %v8584, %v8576
      %v8841 = vpack.c.b16 %v8585, %v8577
      %v8842 = vpack.c.b16 %v8586, %v8578
      %v8843 = vpack.c.b16 %v8587, %v8579
      %v8844 = vpack.c.b16 %v8588, %v8580
      %v8845 = vpack.c.b16 %v8597, %v8589
      %v8846 = vpack.c.b16 %v8598, %v8590
      %v8847 = vpack.c.b16 %v8599, %v8591
      %v8848 = vpack.c.b16 %v8600, %v8592
      %v8849 = vpack.c.b16 %v8601, %v8593
      %v8850 = vpack.c.b16 %v8602, %v8594
      %v8851 = vpack.c.b16 %v8603, %v8595
      %v8852 = vpack.c.b16 %v8604, %v8596
      %v8853 = vpack.c.b16 %v8613, %v8605
      %v8854 = vpack.c.b16 %v8614, %v8606
      %v8855 = vpack.c.b16 %v8615, %v8607
      %v8856 = vpack.c.b16 %v8616, %v8608
      %v8857 = vpack.c.b16 %v8617, %v8609
      %v8858 = vpack.c.b16 %v8618, %v8610
      %v8859 = vpack.c.b16 %v8619, %v8611
      %v8860 = vpack.c.b16 %v8620, %v8612
      %v8861 = vpack.c.b16 %v8629, %v8621
      %v8862 = vpack.c.b16 %v8630, %v8622
      %v8863 = vpack.c.b16 %v8631, %v8623
      %v8864 = vpack.c.b16 %v8632, %v8624
      %v8865 = vpack.c.b16 %v8633, %v8625
      %v8866 = vpack.c.b16 %v8634, %v8626
      %v8867 = vpack.c.b16 %v8635, %v8627
      %v8868 = vpack.c.b16 %v8636, %v8628
      %v8869 = vpack.c.b16 %v8645, %v8637
      %v8870 = vpack.c.b16 %v8646, %v8638
      %v8871 = vpack.c.b16 %v8647, %v8639
      %v8872 = vpack.c.b16 %v8648, %v8640
      %v8873 = vpack.c.b16 %v8649, %v8641
      %v8874 = vpack.c.b16 %v8650, %v8642
      %v8875 = vpack.c.b16 %v8651, %v8643
      %v8876 = vpack.c.b16 %v8652, %v8644
      %v8877 = vpack.c.b16 %v8661, %v8653
      %v8878 = vpack.c.b16 %v8662, %v8654
      %v8879 = vpack.c.b16 %v8663, %v8655
      %v8880 = vpack.c.b16 %v8664, %v8656
      %v8881 = vpack.c.b16 %v8665, %v8657
      %v8882 = vpack.c.b16 %v8666, %v8658
      %v8883 = vpack.c.b16 %v8667, %v8659
      %v8884 = vpack.c.b16 %v8668, %v8660
      %v8885 = vpack.c.b16 %v8677, %v8669
      %v8886 = vpack.c.b16 %v8678, %v8670
      %v8887 = vpack.c.b16 %v8679, %v8671
      %v8888 = vpack.c.b16 %v8680, %v8672
      %v8889 = vpack.c.b16 %v8681, %v8673
      %v8890 = vpack.c.b16 %v8682, %v8674
      %v8891 = vpack.c.b16 %v8683, %v8675
      %v8892 = vpack.c.b16 %v8684, %v8676
      %v8893 = vpack.c.b16 %v8693, %v8685
      %v8894 = vpack.c.b16 %v8694, %v8686
      %v8895 = vpack.c.b16 %v8695, %v8687
      %v8896 = vpack.c.b16 %v8696, %v8688
      %v8897 = vpack.c.b16 %v8697, %v8689
      %v8898 = vpack.c.b16 %v8698, %v8690
      %v8899 = vpack.c.b16 %v8699, %v8691
      %v8900 = vpack.c.b16 %v8700, %v8692
      %v8901 = vpack.c.b16 %v8709, %v8701
      %v8902 = vpack.c.b16 %v8710, %v8702
      %v8903 = vpack.c.b16 %v8711, %v8703
      %v8904 = vpack.c.b16 %v8712, %v8704
      %v8905 = vpack.c.b16 %v8713, %v8705
      %v8906 = vpack.c.b16 %v8714, %v8706
      %v8907 = vpack.c.b16 %v8715, %v8707
      %v8908 = vpack.c.b16 %v8716, %v8708
      %v9102 = vlaneseq
      %v9103 = vshrl.u32 %v9102, 7
      %v9104 = vsub.s32 0, %v9103
      %v9105 = vrot.slane %v8140, %v9104
      %v9106 = vlaneseq
      %v9107 = vshrl.u32 %v9106, 7
      %v9108 = vsub.s32 1, %v9107
      %v9109 = vrot.slane %v8140, %v9108
      %v9110 = vlaneseq
      %v9111 = vshrl.u32 %v9110, 7
      %v9112 = vsub.s32 2, %v9111
      %v9113 = vrot.slane %v8140, %v9112
      %v9114 = vlaneseq
      %v9115 = vshrl.u32 %v9114, 7
      %v9116 = vsub.s32 3, %v9115
      %v9117 = vrot.slane %v8140, %v9116
      %v9118 = vlaneseq
      %v9119 = vshrl.u32 %v9118, 7
      %v9120 = vsub.s32 4, %v9119
      %v9121 = vrot.slane %v8140, %v9120
      %v9122 = vlaneseq
      %v9123 = vshrl.u32 %v9122, 7
      %v9124 = vsub.s32 5, %v9123
      %v9125 = vrot.slane %v8140, %v9124
      %v9126 = vlaneseq
      %v9127 = vshrl.u32 %v9126, 7
      %v9128 = vsub.s32 6, %v9127
      %v9129 = vrot.slane %v8140, %v9128
      %v9130 = vlaneseq
      %v9131 = vshrl.u32 %v9130, 7
      %v9132 = vsub.s32 7, %v9131
      %v9133 = vrot.slane %v8140, %v9132
      %9142 = vmatprep.subr.bf16.mxu0 %v8774
      %9143 = vmatpush1.bf16.msra.mxu0 %v8773
      %9144 = vmatprep.subr.bf16.mxu0 %v8766
      %9145 = vmatpush1.bf16.msra.mxu0 %v8765
      %9146 = vmatprep.subr.bf16.mxu0 %v8758
      %9147 = vmatpush1.bf16.msra.mxu0 %v8757
      %9148 = vmatprep.subr.bf16.mxu0 %v8750
      %9149 = vmatpush1.bf16.msra.mxu0 %v8749
      %9150 = vmatprep.subr.bf16.mxu0 %v8742
      %9151 = vmatpush1.bf16.msra.mxu0 %v8741
      %9152 = vmatprep.subr.bf16.mxu0 %v8734
      %9153 = vmatpush1.bf16.msra.mxu0 %v8733
      %9154 = vmatprep.subr.bf16.mxu0 %v8726
      %9155 = vmatpush1.bf16.msra.mxu0 %v8725
      %9156 = vmatprep.subr.bf16.mxu0 %v8718
      %9157 = vmatpush1.bf16.msra.mxu0 %v8717
      %9158 = vmatprep.subr.bf16.mxu0 %v8838
      %9159 = vmatpush2.bf16.msra.mxu0 %v8837
      %9160 = vmatprep.subr.bf16.mxu0 %v8830
      %9161 = vmatpush2.bf16.msra.mxu0 %v8829
      %9162 = vmatprep.subr.bf16.mxu0 %v8822
      %9163 = vmatpush2.bf16.msra.mxu0 %v8821
      %9164 = vmatprep.subr.bf16.mxu0 %v8814
      %9165 = vmatpush2.bf16.msra.mxu0 %v8813
      %9166 = vmatprep.subr.bf16.mxu0 %v8806
      %9167 = vmatpush2.bf16.msra.mxu0 %v8805
      %9168 = vmatprep.subr.bf16.mxu0 %v8798
      %9169 = vmatpush2.bf16.msra.mxu0 %v8797
      %9170 = vmatprep.subr.bf16.mxu0 %v8790
      %9171 = vmatpush2.bf16.msra.mxu0 %v8789
      %9172 = vmatprep.subr.bf16.mxu0 %v8782
      %9173 = vmatpush2.bf16.msra.mxu0 %v8781
      %9174 = vmatprep.mubr.bf16.mxu0 %v7946
      %9175 = vmatmul.mubr.bf16.gmra.mxu0 %v7945
      %v9176 = vpop.f32.mrf.mxu0
      %v9177 = vadd.f32 %v9105, %v9176
      %v9178 = vpop.f32.mrf.mxu0
      %v9179 = vadd.f32 %v9109, %v9178
      %v9180 = vpop.f32.mrf.mxu0
      %v9181 = vpop.f32.mrf.mxu0
      %9182 = vdwg.mxu0
      %9183 = vmatprep.subr.bf16.mxu0 %v8902
      %9184 = vmatpush1.bf16.msra.mxu0 %v8901
      %9185 = vmatprep.subr.bf16.mxu0 %v8894
      %9186 = vmatpush1.bf16.msra.mxu0 %v8893
      %9187 = vmatprep.subr.bf16.mxu0 %v8886
      %9188 = vmatpush1.bf16.msra.mxu0 %v8885
      %9189 = vmatprep.subr.bf16.mxu0 %v8878
      %9190 = vmatpush1.bf16.msra.mxu0 %v8877
      %9191 = vmatprep.subr.bf16.mxu0 %v8870
      %9192 = vmatpush1.bf16.msra.mxu0 %v8869
      %9193 = vmatprep.subr.bf16.mxu0 %v8862
      %9194 = vmatpush1.bf16.msra.mxu0 %v8861
      %9195 = vmatprep.subr.bf16.mxu0 %v8854
      %9196 = vmatpush1.bf16.msra.mxu0 %v8853
      %9197 = vmatprep.subr.bf16.mxu0 %v8846
      %9198 = vmatpush1.bf16.msra.mxu0 %v8845
      %9199 = vmatprep.subr.bf16.mxu0 0
      %9200 = vmatpush2.bf16.msra.mxu0 0
      %9201 = vmatprep.subr.bf16.mxu0 0
      %9202 = vmatpush2.bf16.msra.mxu0 0
      %9203 = vmatprep.subr.bf16.mxu0 0
      %9204 = vmatpush2.bf16.msra.mxu0 0
      %9205 = vmatprep.subr.bf16.mxu0 0
      %9206 = vmatpush2.bf16.msra.mxu0 0
      %9207 = vmatprep.subr.bf16.mxu0 0
      %9208 = vmatpush2.bf16.msra.mxu0 0
      %9209 = vmatprep.subr.bf16.mxu0 0
      %9210 = vmatpush2.bf16.msra.mxu0 0
      %9211 = vmatprep.subr.bf16.mxu0 0
      %9212 = vmatpush2.bf16.msra.mxu0 0
      %9213 = vmatprep.subr.bf16.mxu0 0
      %9214 = vmatpush2.bf16.msra.mxu0 0
      %9215 = vmatprep.mubr.bf16.mxu0 0
      %9216 = vmatmul.mubr.bf16.gmra.mxu0 %v7947
      %v9217 = vpop.f32.mrf.mxu0
      %v9218 = vadd.f32 %v9177, %v9217
      %v9219 = vpop.f32.mrf.mxu0
      %v9220 = vadd.f32 %v9179, %v9219
      %v9221 = vpop.f32.mrf.mxu0
      %v9222 = vpop.f32.mrf.mxu0
      %9223 = vdwg.mxu0
      %9224 = vmatprep.subr.bf16.mxu0 %v8776
      %9225 = vmatpush1.bf16.msra.mxu0 %v8775
      %9226 = vmatprep.subr.bf16.mxu0 %v8768
      %9227 = vmatpush1.bf16.msra.mxu0 %v8767
      %9228 = vmatprep.subr.bf16.mxu0 %v8760
      %9229 = vmatpush1.bf16.msra.mxu0 %v8759
      %9230 = vmatprep.subr.bf16.mxu0 %v8752
      %9231 = vmatpush1.bf16.msra.mxu0 %v8751
      %9232 = vmatprep.subr.bf16.mxu0 %v8744
      %9233 = vmatpush1.bf16.msra.mxu0 %v8743
      %9234 = vmatprep.subr.bf16.mxu0 %v8736
      %9235 = vmatpush1.bf16.msra.mxu0 %v8735
      %9236 = vmatprep.subr.bf16.mxu0 %v8728
      %9237 = vmatpush1.bf16.msra.mxu0 %v8727
      %9238 = vmatprep.subr.bf16.mxu0 %v8720
      %9239 = vmatpush1.bf16.msra.mxu0 %v8719
      %9240 = vmatprep.subr.bf16.mxu0 %v8840
      %9241 = vmatpush2.bf16.msra.mxu0 %v8839
      %9242 = vmatprep.subr.bf16.mxu0 %v8832
      %9243 = vmatpush2.bf16.msra.mxu0 %v8831
      %9244 = vmatprep.subr.bf16.mxu0 %v8824
      %9245 = vmatpush2.bf16.msra.mxu0 %v8823
      %9246 = vmatprep.subr.bf16.mxu0 %v8816
      %9247 = vmatpush2.bf16.msra.mxu0 %v8815
      %9248 = vmatprep.subr.bf16.mxu0 %v8808
      %9249 = vmatpush2.bf16.msra.mxu0 %v8807
      %9250 = vmatprep.subr.bf16.mxu0 %v8800
      %9251 = vmatpush2.bf16.msra.mxu0 %v8799
      %9252 = vmatprep.subr.bf16.mxu0 %v8792
      %9253 = vmatpush2.bf16.msra.mxu0 %v8791
      %9254 = vmatprep.subr.bf16.mxu0 %v8784
      %9255 = vmatpush2.bf16.msra.mxu0 %v8783
      %9256 = vmatprep.mubr.bf16.mxu0 %v7946
      %9257 = vmatmul.mubr.bf16.gmra.mxu0 %v7945
      %v9258 = vpop.f32.mrf.mxu0
      %v9259 = vadd.f32 %v9113, %v9258
      %v9260 = vpop.f32.mrf.mxu0
      %v9261 = vadd.f32 %v9117, %v9260
      %v9262 = vpop.f32.mrf.mxu0
      %v9263 = vpop.f32.mrf.mxu0
      %9264 = vdwg.mxu0
      %9265 = vmatprep.subr.bf16.mxu0 %v8904
      %9266 = vmatpush1.bf16.msra.mxu0 %v8903
      %9267 = vmatprep.subr.bf16.mxu0 %v8896
      %9268 = vmatpush1.bf16.msra.mxu0 %v8895
      %9269 = vmatprep.subr.bf16.mxu0 %v8888
      %9270 = vmatpush1.bf16.msra.mxu0 %v8887
      %9271 = vmatprep.subr.bf16.mxu0 %v8880
      %9272 = vmatpush1.bf16.msra.mxu0 %v8879
      %9273 = vmatprep.subr.bf16.mxu0 %v8872
      %9274 = vmatpush1.bf16.msra.mxu0 %v8871
      %9275 = vmatprep.subr.bf16.mxu0 %v8864
      %9276 = vmatpush1.bf16.msra.mxu0 %v8863
      %9277 = vmatprep.subr.bf16.mxu0 %v8856
      %9278 = vmatpush1.bf16.msra.mxu0 %v8855
      %9279 = vmatprep.subr.bf16.mxu0 %v8848
      %9280 = vmatpush1.bf16.msra.mxu0 %v8847
      %9281 = vmatprep.subr.bf16.mxu0 0
      %9282 = vmatpush2.bf16.msra.mxu0 0
      %9283 = vmatprep.subr.bf16.mxu0 0
      %9284 = vmatpush2.bf16.msra.mxu0 0
      %9285 = vmatprep.subr.bf16.mxu0 0
      %9286 = vmatpush2.bf16.msra.mxu0 0
      %9287 = vmatprep.subr.bf16.mxu0 0
      %9288 = vmatpush2.bf16.msra.mxu0 0
      %9289 = vmatprep.subr.bf16.mxu0 0
      %9290 = vmatpush2.bf16.msra.mxu0 0
      %9291 = vmatprep.subr.bf16.mxu0 0
      %9292 = vmatpush2.bf16.msra.mxu0 0
      %9293 = vmatprep.subr.bf16.mxu0 0
      %9294 = vmatpush2.bf16.msra.mxu0 0
      %9295 = vmatprep.subr.bf16.mxu0 0
      %9296 = vmatpush2.bf16.msra.mxu0 0
      %9297 = vmatprep.mubr.bf16.mxu0 0
      %9298 = vmatmul.mubr.bf16.gmra.mxu0 %v7947
      %v9299 = vpop.f32.mrf.mxu0
      %v9300 = vadd.f32 %v9259, %v9299
      %v9301 = vpop.f32.mrf.mxu0
      %v9302 = vadd.f32 %v9261, %v9301
      %v9303 = vpop.f32.mrf.mxu0
      %v9304 = vpop.f32.mrf.mxu0
      %9305 = vdwg.mxu0
      %9306 = vmatprep.subr.bf16.mxu0 %v8778
      %9307 = vmatpush1.bf16.msra.mxu0 %v8777
      %9308 = vmatprep.subr.bf16.mxu0 %v8770
      %9309 = vmatpush1.bf16.msra.mxu0 %v8769
      %9310 = vmatprep.subr.bf16.mxu0 %v8762
      %9311 = vmatpush1.bf16.msra.mxu0 %v8761
      %9312 = vmatprep.subr.bf16.mxu0 %v8754
      %9313 = vmatpush1.bf16.msra.mxu0 %v8753
      %9314 = vmatprep.subr.bf16.mxu0 %v8746
      %9315 = vmatpush1.bf16.msra.mxu0 %v8745
      %9316 = vmatprep.subr.bf16.mxu0 %v8738
      %9317 = vmatpush1.bf16.msra.mxu0 %v8737
      %9318 = vmatprep.subr.bf16.mxu0 %v8730
      %9319 = vmatpush1.bf16.msra.mxu0 %v8729
      %9320 = vmatprep.subr.bf16.mxu0 %v8722
      %9321 = vmatpush1.bf16.msra.mxu0 %v8721
      %9322 = vmatprep.subr.bf16.mxu0 %v8842
      %9323 = vmatpush2.bf16.msra.mxu0 %v8841
      %9324 = vmatprep.subr.bf16.mxu0 %v8834
      %9325 = vmatpush2.bf16.msra.mxu0 %v8833
      %9326 = vmatprep.subr.bf16.mxu0 %v8826
      %9327 = vmatpush2.bf16.msra.mxu0 %v8825
      %9328 = vmatprep.subr.bf16.mxu0 %v8818
      %9329 = vmatpush2.bf16.msra.mxu0 %v8817
      %9330 = vmatprep.subr.bf16.mxu0 %v8810
      %9331 = vmatpush2.bf16.msra.mxu0 %v8809
      %9332 = vmatprep.subr.bf16.mxu0 %v8802
      %9333 = vmatpush2.bf16.msra.mxu0 %v8801
      %9334 = vmatprep.subr.bf16.mxu0 %v8794
      %9335 = vmatpush2.bf16.msra.mxu0 %v8793
      %9336 = vmatprep.subr.bf16.mxu0 %v8786
      %9337 = vmatpush2.bf16.msra.mxu0 %v8785
      %9338 = vmatprep.mubr.bf16.mxu0 %v7946
      %9339 = vmatmul.mubr.bf16.gmra.mxu0 %v7945
      %v9340 = vpop.f32.mrf.mxu0
      %v9341 = vadd.f32 %v9121, %v9340
      %v9342 = vpop.f32.mrf.mxu0
      %v9343 = vadd.f32 %v9125, %v9342
      %v9344 = vpop.f32.mrf.mxu0
      %v9345 = vpop.f32.mrf.mxu0
      %9346 = vdwg.mxu0
      %9347 = vmatprep.subr.bf16.mxu0 %v8906
      %9348 = vmatpush1.bf16.msra.mxu0 %v8905
      %9349 = vmatprep.subr.bf16.mxu0 %v8898
      %9350 = vmatpush1.bf16.msra.mxu0 %v8897
      %9351 = vmatprep.subr.bf16.mxu0 %v8890
      %9352 = vmatpush1.bf16.msra.mxu0 %v8889
      %9353 = vmatprep.subr.bf16.mxu0 %v8882
      %9354 = vmatpush1.bf16.msra.mxu0 %v8881
      %9355 = vmatprep.subr.bf16.mxu0 %v8874
      %9356 = vmatpush1.bf16.msra.mxu0 %v8873
      %9357 = vmatprep.subr.bf16.mxu0 %v8866
      %9358 = vmatpush1.bf16.msra.mxu0 %v8865
      %9359 = vmatprep.subr.bf16.mxu0 %v8858
      %9360 = vmatpush1.bf16.msra.mxu0 %v8857
      %9361 = vmatprep.subr.bf16.mxu0 %v8850
      %9362 = vmatpush1.bf16.msra.mxu0 %v8849
      %9363 = vmatprep.subr.bf16.mxu0 0
      %9364 = vmatpush2.bf16.msra.mxu0 0
      %9365 = vmatprep.subr.bf16.mxu0 0
      %9366 = vmatpush2.bf16.msra.mxu0 0
      %9367 = vmatprep.subr.bf16.mxu0 0
      %9368 = vmatpush2.bf16.msra.mxu0 0
      %9369 = vmatprep.subr.bf16.mxu0 0
      %9370 = vmatpush2.bf16.msra.mxu0 0
      %9371 = vmatprep.subr.bf16.mxu0 0
      %9372 = vmatpush2.bf16.msra.mxu0 0
      %9373 = vmatprep.subr.bf16.mxu0 0
      %9374 = vmatpush2.bf16.msra.mxu0 0
      %9375 = vmatprep.subr.bf16.mxu0 0
      %9376 = vmatpush2.bf16.msra.mxu0 0
      %9377 = vmatprep.subr.bf16.mxu0 0
      %9378 = vmatpush2.bf16.msra.mxu0 0
      %9379 = vmatprep.mubr.bf16.mxu0 0
      %9380 = vmatmul.mubr.bf16.gmra.mxu0 %v7947
      %v9381 = vpop.f32.mrf.mxu0
      %v9382 = vadd.f32 %v9341, %v9381
      %v9383 = vpop.f32.mrf.mxu0
      %v9384 = vadd.f32 %v9343, %v9383
      %v9385 = vpop.f32.mrf.mxu0
      %v9386 = vpop.f32.mrf.mxu0
      %9387 = vdwg.mxu0
      %9388 = vmatprep.subr.bf16.mxu0 %v8780
      %9389 = vmatpush1.bf16.msra.mxu0 %v8779
      %9390 = vmatprep.subr.bf16.mxu0 %v8772
      %9391 = vmatpush1.bf16.msra.mxu0 %v8771
      %9392 = vmatprep.subr.bf16.mxu0 %v8764
      %9393 = vmatpush1.bf16.msra.mxu0 %v8763
      %9394 = vmatprep.subr.bf16.mxu0 %v8756
      %9395 = vmatpush1.bf16.msra.mxu0 %v8755
      %9396 = vmatprep.subr.bf16.mxu0 %v8748
      %9397 = vmatpush1.bf16.msra.mxu0 %v8747
      %9398 = vmatprep.subr.bf16.mxu0 %v8740
      %9399 = vmatpush1.bf16.msra.mxu0 %v8739
      %9400 = vmatprep.subr.bf16.mxu0 %v8732
      %9401 = vmatpush1.bf16.msra.mxu0 %v8731
      %9402 = vmatprep.subr.bf16.mxu0 %v8724
      %9403 = vmatpush1.bf16.msra.mxu0 %v8723
      %9404 = vmatprep.subr.bf16.mxu0 %v8844
      %9405 = vmatpush2.bf16.msra.mxu0 %v8843
      %9406 = vmatprep.subr.bf16.mxu0 %v8836
      %9407 = vmatpush2.bf16.msra.mxu0 %v8835
      %9408 = vmatprep.subr.bf16.mxu0 %v8828
      %9409 = vmatpush2.bf16.msra.mxu0 %v8827
      %9410 = vmatprep.subr.bf16.mxu0 %v8820
      %9411 = vmatpush2.bf16.msra.mxu0 %v8819
      %9412 = vmatprep.subr.bf16.mxu0 %v8812
      %9413 = vmatpush2.bf16.msra.mxu0 %v8811
      %9414 = vmatprep.subr.bf16.mxu0 %v8804
      %9415 = vmatpush2.bf16.msra.mxu0 %v8803
      %9416 = vmatprep.subr.bf16.mxu0 %v8796
      %9417 = vmatpush2.bf16.msra.mxu0 %v8795
      %9418 = vmatprep.subr.bf16.mxu0 %v8788
      %9419 = vmatpush2.bf16.msra.mxu0 %v8787
      %9420 = vmatprep.mubr.bf16.mxu0 %v7946
      %9421 = vmatmul.mubr.bf16.gmra.mxu0 %v7945
      %v9422 = vpop.f32.mrf.mxu0
      %v9423 = vadd.f32 %v9129, %v9422
      %v9424 = vpop.f32.mrf.mxu0
      %v9425 = vadd.f32 %v9133, %v9424
      %v9426 = vpop.f32.mrf.mxu0
      %v9427 = vpop.f32.mrf.mxu0
      %9428 = vdwg.mxu0
      %9429 = vmatprep.subr.bf16.mxu0 %v8908
      %9430 = vmatpush1.bf16.msra.mxu0 %v8907
      %9431 = vmatprep.subr.bf16.mxu0 %v8900
      %9432 = vmatpush1.bf16.msra.mxu0 %v8899
      %9433 = vmatprep.subr.bf16.mxu0 %v8892
      %9434 = vmatpush1.bf16.msra.mxu0 %v8891
      %9435 = vmatprep.subr.bf16.mxu0 %v8884
      %9436 = vmatpush1.bf16.msra.mxu0 %v8883
      %9437 = vmatprep.subr.bf16.mxu0 %v8876
      %9438 = vmatpush1.bf16.msra.mxu0 %v8875
      %9439 = vmatprep.subr.bf16.mxu0 %v8868
      %9440 = vmatpush1.bf16.msra.mxu0 %v8867
      %9441 = vmatprep.subr.bf16.mxu0 %v8860
      %9442 = vmatpush1.bf16.msra.mxu0 %v8859
      %9443 = vmatprep.subr.bf16.mxu0 %v8852
      %9444 = vmatpush1.bf16.msra.mxu0 %v8851
      %9445 = vmatprep.subr.bf16.mxu0 0
      %9446 = vmatpush2.bf16.msra.mxu0 0
      %9447 = vmatprep.subr.bf16.mxu0 0
      %9448 = vmatpush2.bf16.msra.mxu0 0
      %9449 = vmatprep.subr.bf16.mxu0 0
      %9450 = vmatpush2.bf16.msra.mxu0 0
      %9451 = vmatprep.subr.bf16.mxu0 0
      %9452 = vmatpush2.bf16.msra.mxu0 0
      %9453 = vmatprep.subr.bf16.mxu0 0
      %9454 = vmatpush2.bf16.msra.mxu0 0
      %9455 = vmatprep.subr.bf16.mxu0 0
      %9456 = vmatpush2.bf16.msra.mxu0 0
      %9457 = vmatprep.subr.bf16.mxu0 0
      %9458 = vmatpush2.bf16.msra.mxu0 0
      %9459 = vmatprep.subr.bf16.mxu0 0
      %9460 = vmatpush2.bf16.msra.mxu0 0
      %9461 = vmatprep.mubr.bf16.mxu0 0
      %9462 = vmatmul.mubr.bf16.gmra.mxu0 %v7947
      %v9463 = vpop.f32.mrf.mxu0
      %v9464 = vadd.f32 %v9423, %v9463
      %v9465 = vpop.f32.mrf.mxu0
      %v9466 = vadd.f32 %v9425, %v9465
      %v9467 = vpop.f32.mrf.mxu0
      %v9468 = vpop.f32.mrf.mxu0
      %9469 = vdwg.mxu0
      %v9470 = vmax.f32 %v9218, 0.0
      %v9471 = vmax.f32 %v9220, 0.0
      %v9472 = vmax.f32 %v9300, 0.0
      %v9473 = vmax.f32 %v9302, 0.0
      %v9474 = vmax.f32 %v9382, 0.0
      %v9475 = vmax.f32 %v9384, 0.0
      %v9476 = vmax.f32 %v9464, 0.0
      %v9477 = vmax.f32 %v9466, 0.0
      %v9478 = vpack.c.bf16 %v9470, %v9470
      %v9479 = vpack.c.bf16 %v9471, %v9471
      %v9480 = vpack.c.bf16 %v9472, %v9472
      %v9481 = vpack.c.bf16 %v9473, %v9473
      %v9482 = vpack.c.bf16 %v9474, %v9474
      %v9483 = vpack.c.bf16 %v9475, %v9475
      %v9484 = vpack.c.bf16 %v9476, %v9476
      %v9485 = vpack.c.bf16 %v9477, %v9477
      %v9486 = vld [vmem:[%s9] sm:$0xf]
      %v9487 = vld [vmem:[%s9 + $0x4] sm:$0xf]
      %v9488 = vld [vmem:[%s9 + $0x8] sm:$0xf]
      %v9489 = vld [vmem:[%s9 + $0xc] sm:$0xf]
      %v9490 = vld [vmem:[%s9 + $0x10] sm:$0xf]
      %v9491 = vld [vmem:[%s9 + $0x14] sm:$0xf]
      %v9492 = vld [vmem:[%s9 + $0x18] sm:$0xf]
      %v9493 = vld [vmem:[%s9 + $0x1c] sm:$0xf]
      %v9494 = vld [vmem:[%s9 + $0x20] sm:$0xf]
      %v9495 = vld [vmem:[%s9 + $0x24] sm:$0xf]
      %v9496 = vld [vmem:[%s9 + $0x28] sm:$0xf]
      %v9497 = vld [vmem:[%s9 + $0x2c] sm:$0xf]
      %v9498 = vld [vmem:[%s9 + $0x30] sm:$0xf]
      %v9499 = vld [vmem:[%s9 + $0x34] sm:$0xf]
      %v9500 = vld [vmem:[%s9 + $0x38] sm:$0xf]
      %v9501 = vld [vmem:[%s9 + $0x3c] sm:$0xf]
      %v9502 = vld [vmem:[%s9 + $0x40] sm:$0xf]
      %v9503 = vld [vmem:[%s9 + $0x44] sm:$0xf]
      %v9504 = vld [vmem:[%s9 + $0x48] sm:$0xf]
      %v9505 = vld [vmem:[%s9 + $0x4c] sm:$0xf]
      %v9506 = vld [vmem:[%s9 + $0x50] sm:$0xf]
      %v9507 = vld [vmem:[%s9 + $0x54] sm:$0xf]
      %v9508 = vld [vmem:[%s9 + $0x58] sm:$0xf]
      %v9509 = vld [vmem:[%s9 + $0x5c] sm:$0xf]
      %v9510 = vld [vmem:[%s9 + $0x60] sm:$0xf]
      %v9511 = vld [vmem:[%s9 + $0x64] sm:$0xf]
      %v9512 = vld [vmem:[%s9 + $0x68] sm:$0xf]
      %v9513 = vld [vmem:[%s9 + $0x6c] sm:$0xf]
      %v9514 = vld [vmem:[%s9 + $0x70] sm:$0xf]
      %v9515 = vld [vmem:[%s9 + $0x74] sm:$0xf]
      %v9516 = vld [vmem:[%s9 + $0x78] sm:$0xf]
      %v9517 = vld [vmem:[%s9 + $0x7c] sm:$0xf]
      %v9518 = vld [vmem:[%s9 + $0x80] sm:$0xf]
      %v9519 = vld [vmem:[%s9 + $0x84] sm:$0xf]
      %v9520 = vld [vmem:[%s9 + $0x88] sm:$0xf]
      %v9521 = vld [vmem:[%s9 + $0x8c] sm:$0xf]
      %v9522 = vld [vmem:[%s9 + $0x90] sm:$0xf]
      %v9523 = vld [vmem:[%s9 + $0x94] sm:$0xf]
      %v9524 = vld [vmem:[%s9 + $0x98] sm:$0xf]
      %v9525 = vld [vmem:[%s9 + $0x9c] sm:$0xf]
      %v9526 = vld [vmem:[%s9 + $0xa0] sm:$0xf]
      %v9527 = vld [vmem:[%s9 + $0xa4] sm:$0xf]
      %v9528 = vld [vmem:[%s9 + $0xa8] sm:$0xf]
      %v9529 = vld [vmem:[%s9 + $0xac] sm:$0xf]
      %v9530 = vld [vmem:[%s9 + $0xb0] sm:$0xf]
      %v9531 = vld [vmem:[%s9 + $0xb4] sm:$0xf]
      %v9532 = vld [vmem:[%s9 + $0xb8] sm:$0xf]
      %v9533 = vld [vmem:[%s9 + $0xbc] sm:$0xf]
      %v9534 = vld [vmem:[%s9 + $0xc0] sm:$0xf]
      %v9535 = vld [vmem:[%s9 + $0xc4] sm:$0xf]
      %v9536 = vld [vmem:[%s9 + $0xc8] sm:$0xf]
      %v9537 = vld [vmem:[%s9 + $0xcc] sm:$0xf]
      %v9538 = vld [vmem:[%s9 + $0xd0] sm:$0xf]
      %v9539 = vld [vmem:[%s9 + $0xd4] sm:$0xf]
      %v9540 = vld [vmem:[%s9 + $0xd8] sm:$0xf]
      %v9541 = vld [vmem:[%s9 + $0xdc] sm:$0xf]
      %v9542 = vld [vmem:[%s9 + $0xe0] sm:$0xf]
      %v9543 = vld [vmem:[%s9 + $0xe4] sm:$0xf]
      %v9544 = vld [vmem:[%s9 + $0xe8] sm:$0xf]
      %v9545 = vld [vmem:[%s9 + $0xec] sm:$0xf]
      %v9546 = vld [vmem:[%s9 + $0xf0] sm:$0xf]
      %v9547 = vld [vmem:[%s9 + $0xf4] sm:$0xf]
      %v9548 = vld [vmem:[%s9 + $0xf8] sm:$0xf]
      %v9549 = vld [vmem:[%s9 + $0xfc] sm:$0xf]
      %v9550 = vld [vmem:[%s9 + $0x100] sm:$0xf]
      %v9551 = vld [vmem:[%s9 + $0x104] sm:$0xf]
      %v9552 = vld [vmem:[%s9 + $0x108] sm:$0xf]
      %v9553 = vld [vmem:[%s9 + $0x10c] sm:$0xf]
      %v9554 = vld [vmem:[%s9 + $0x110] sm:$0xf]
      %v9555 = vld [vmem:[%s9 + $0x114] sm:$0xf]
      %v9556 = vld [vmem:[%s9 + $0x118] sm:$0xf]
      %v9557 = vld [vmem:[%s9 + $0x11c] sm:$0xf]
      %v9558 = vld [vmem:[%s9 + $0x120] sm:$0xf]
      %v9559 = vld [vmem:[%s9 + $0x124] sm:$0xf]
      %v9560 = vld [vmem:[%s9 + $0x128] sm:$0xf]
      %v9561 = vld [vmem:[%s9 + $0x12c] sm:$0xf]
      %v9562 = vld [vmem:[%s9 + $0x130] sm:$0xf]
      %v9563 = vld [vmem:[%s9 + $0x134] sm:$0xf]
      %v9564 = vld [vmem:[%s9 + $0x138] sm:$0xf]
      %v9565 = vld [vmem:[%s9 + $0x13c] sm:$0xf]
      %v9566 = vld [vmem:[%s9 + $0x140] sm:$0xf]
      %v9567 = vld [vmem:[%s9 + $0x144] sm:$0xf]
      %v9568 = vld [vmem:[%s9 + $0x148] sm:$0xf]
      %v9569 = vld [vmem:[%s9 + $0x14c] sm:$0xf]
      %v9570 = vld [vmem:[%s9 + $0x150] sm:$0xf]
      %v9571 = vld [vmem:[%s9 + $0x154] sm:$0xf]
      %v9572 = vld [vmem:[%s9 + $0x158] sm:$0xf]
      %v9573 = vld [vmem:[%s9 + $0x15c] sm:$0xf]
      %v9574 = vld [vmem:[%s9 + $0x160] sm:$0xf]
      %v9575 = vld [vmem:[%s9 + $0x164] sm:$0xf]
      %v9576 = vld [vmem:[%s9 + $0x168] sm:$0xf]
      %v9577 = vld [vmem:[%s9 + $0x16c] sm:$0xf]
      %v9578 = vld [vmem:[%s9 + $0x170] sm:$0xf]
      %v9579 = vld [vmem:[%s9 + $0x174] sm:$0xf]
      %v9580 = vld [vmem:[%s9 + $0x178] sm:$0xf]
      %v9581 = vld [vmem:[%s9 + $0x17c] sm:$0xf]
      %v9582 = vld [vmem:[%s9 + $0x180] sm:$0xf]
      %v9583 = vld [vmem:[%s9 + $0x184] sm:$0xf]
      %v9584 = vld [vmem:[%s9 + $0x188] sm:$0xf]
      %v9585 = vld [vmem:[%s9 + $0x18c] sm:$0xf]
      %v9586 = vld [vmem:[%s9 + $0x190] sm:$0xf]
      %v9587 = vld [vmem:[%s9 + $0x194] sm:$0xf]
      %v9588 = vld [vmem:[%s9 + $0x198] sm:$0xf]
      %v9589 = vld [vmem:[%s9 + $0x19c] sm:$0xf]
      %v9590 = vld [vmem:[%s9 + $0x1a0] sm:$0xf]
      %v9591 = vld [vmem:[%s9 + $0x1a4] sm:$0xf]
      %v9592 = vld [vmem:[%s9 + $0x1a8] sm:$0xf]
      %v9593 = vld [vmem:[%s9 + $0x1ac] sm:$0xf]
      %v9594 = vld [vmem:[%s9 + $0x1b0] sm:$0xf]
      %v9595 = vld [vmem:[%s9 + $0x1b4] sm:$0xf]
      %v9596 = vld [vmem:[%s9 + $0x1b8] sm:$0xf]
      %v9597 = vld [vmem:[%s9 + $0x1bc] sm:$0xf]
      %v9598 = vld [vmem:[%s9 + $0x1c0] sm:$0xf]
      %v9599 = vld [vmem:[%s9 + $0x1c4] sm:$0xf]
      %v9600 = vld [vmem:[%s9 + $0x1c8] sm:$0xf]
      %v9601 = vld [vmem:[%s9 + $0x1cc] sm:$0xf]
      %v9602 = vld [vmem:[%s9 + $0x1d0] sm:$0xf]
      %v9603 = vld [vmem:[%s9 + $0x1d4] sm:$0xf]
      %v9604 = vld [vmem:[%s9 + $0x1d8] sm:$0xf]
      %v9605 = vld [vmem:[%s9 + $0x1dc] sm:$0xf]
      %v9606 = vld [vmem:[%s9 + $0x1e0] sm:$0xf]
      %v9607 = vld [vmem:[%s9 + $0x1e4] sm:$0xf]
      %v9608 = vld [vmem:[%s9 + $0x1e8] sm:$0xf]
      %v9609 = vld [vmem:[%s9 + $0x1ec] sm:$0xf]
      %v9610 = vld [vmem:[%s9 + $0x1f0] sm:$0xf]
      %v9611 = vld [vmem:[%s9 + $0x1f4] sm:$0xf]
      %v9612 = vld [vmem:[%s9 + $0x1f8] sm:$0xf]
      %v9613 = vld [vmem:[%s9 + $0x1fc] sm:$0xf]
      %v9614 = vld [vmem:[%s10] sm:$0x1]
      %v9743 = vunpack.c.l.b16 %v9486
      %v9744 = vunpack.c.l.b16 %v9487
      %v9745 = vunpack.c.l.b16 %v9488
      %v9746 = vunpack.c.l.b16 %v9489
      %v9747 = vunpack.c.l.b16 %v9490
      %v9748 = vunpack.c.l.b16 %v9491
      %v9749 = vunpack.c.l.b16 %v9492
      %v9750 = vunpack.c.l.b16 %v9493
      %v9751 = vunpack.c.l.b16 %v9494
      %v9752 = vunpack.c.l.b16 %v9495
      %v9753 = vunpack.c.l.b16 %v9496
      %v9754 = vunpack.c.l.b16 %v9497
      %v9755 = vunpack.c.l.b16 %v9498
      %v9756 = vunpack.c.l.b16 %v9499
      %v9757 = vunpack.c.l.b16 %v9500
      %v9758 = vunpack.c.l.b16 %v9501
      %v9759 = vunpack.c.l.b16 %v9502
      %v9760 = vunpack.c.l.b16 %v9503
      %v9761 = vunpack.c.l.b16 %v9504
      %v9762 = vunpack.c.l.b16 %v9505
      %v9763 = vunpack.c.l.b16 %v9506
      %v9764 = vunpack.c.l.b16 %v9507
      %v9765 = vunpack.c.l.b16 %v9508
      %v9766 = vunpack.c.l.b16 %v9509
      %v9767 = vunpack.c.l.b16 %v9510
      %v9768 = vunpack.c.l.b16 %v9511
      %v9769 = vunpack.c.l.b16 %v9512
      %v9770 = vunpack.c.l.b16 %v9513
      %v9771 = vunpack.c.l.b16 %v9514
      %v9772 = vunpack.c.l.b16 %v9515
      %v9773 = vunpack.c.l.b16 %v9516
      %v9774 = vunpack.c.l.b16 %v9517
      %v9775 = vunpack.c.l.b16 %v9518
      %v9776 = vunpack.c.l.b16 %v9519
      %v9777 = vunpack.c.l.b16 %v9520
      %v9778 = vunpack.c.l.b16 %v9521
      %v9779 = vunpack.c.l.b16 %v9522
      %v9780 = vunpack.c.l.b16 %v9523
      %v9781 = vunpack.c.l.b16 %v9524
      %v9782 = vunpack.c.l.b16 %v9525
      %v9783 = vunpack.c.l.b16 %v9526
      %v9784 = vunpack.c.l.b16 %v9527
      %v9785 = vunpack.c.l.b16 %v9528
      %v9786 = vunpack.c.l.b16 %v9529
      %v9787 = vunpack.c.l.b16 %v9530
      %v9788 = vunpack.c.l.b16 %v9531
      %v9789 = vunpack.c.l.b16 %v9532
      %v9790 = vunpack.c.l.b16 %v9533
      %v9791 = vunpack.c.l.b16 %v9534
      %v9792 = vunpack.c.l.b16 %v9535
      %v9793 = vunpack.c.l.b16 %v9536
      %v9794 = vunpack.c.l.b16 %v9537
      %v9795 = vunpack.c.l.b16 %v9538
      %v9796 = vunpack.c.l.b16 %v9539
      %v9797 = vunpack.c.l.b16 %v9540
      %v9798 = vunpack.c.l.b16 %v9541
      %v9799 = vunpack.c.l.b16 %v9542
      %v9800 = vunpack.c.l.b16 %v9543
      %v9801 = vunpack.c.l.b16 %v9544
      %v9802 = vunpack.c.l.b16 %v9545
      %v9803 = vunpack.c.l.b16 %v9546
      %v9804 = vunpack.c.l.b16 %v9547
      %v9805 = vunpack.c.l.b16 %v9548
      %v9806 = vunpack.c.l.b16 %v9549
      %v9807 = vunpack.c.l.b16 %v9550
      %v9808 = vunpack.c.l.b16 %v9551
      %v9809 = vunpack.c.l.b16 %v9552
      %v9810 = vunpack.c.l.b16 %v9553
      %v9811 = vunpack.c.l.b16 %v9554
      %v9812 = vunpack.c.l.b16 %v9555
      %v9813 = vunpack.c.l.b16 %v9556
      %v9814 = vunpack.c.l.b16 %v9557
      %v9815 = vunpack.c.l.b16 %v9558
      %v9816 = vunpack.c.l.b16 %v9559
      %v9817 = vunpack.c.l.b16 %v9560
      %v9818 = vunpack.c.l.b16 %v9561
      %v9819 = vunpack.c.l.b16 %v9562
      %v9820 = vunpack.c.l.b16 %v9563
      %v9821 = vunpack.c.l.b16 %v9564
      %v9822 = vunpack.c.l.b16 %v9565
      %v9823 = vunpack.c.l.b16 %v9566
      %v9824 = vunpack.c.l.b16 %v9567
      %v9825 = vunpack.c.l.b16 %v9568
      %v9826 = vunpack.c.l.b16 %v9569
      %v9827 = vunpack.c.l.b16 %v9570
      %v9828 = vunpack.c.l.b16 %v9571
      %v9829 = vunpack.c.l.b16 %v9572
      %v9830 = vunpack.c.l.b16 %v9573
      %v9831 = vunpack.c.l.b16 %v9574
      %v9832 = vunpack.c.l.b16 %v9575
      %v9833 = vunpack.c.l.b16 %v9576
      %v9834 = vunpack.c.l.b16 %v9577
      %v9835 = vunpack.c.l.b16 %v9578
      %v9836 = vunpack.c.l.b16 %v9579
      %v9837 = vunpack.c.l.b16 %v9580
      %v9838 = vunpack.c.l.b16 %v9581
      %v9839 = vunpack.c.l.b16 %v9582
      %v9840 = vunpack.c.l.b16 %v9583
      %v9841 = vunpack.c.l.b16 %v9584
      %v9842 = vunpack.c.l.b16 %v9585
      %v9843 = vunpack.c.l.b16 %v9586
      %v9844 = vunpack.c.l.b16 %v9587
      %v9845 = vunpack.c.l.b16 %v9588
      %v9846 = vunpack.c.l.b16 %v9589
      %v9847 = vunpack.c.l.b16 %v9590
      %v9848 = vunpack.c.l.b16 %v9591
      %v9849 = vunpack.c.l.b16 %v9592
      %v9850 = vunpack.c.l.b16 %v9593
      %v9851 = vunpack.c.l.b16 %v9594
      %v9852 = vunpack.c.l.b16 %v9595
      %v9853 = vunpack.c.l.b16 %v9596
      %v9854 = vunpack.c.l.b16 %v9597
      %v9855 = vunpack.c.l.b16 %v9598
      %v9856 = vunpack.c.l.b16 %v9599
      %v9857 = vunpack.c.l.b16 %v9600
      %v9858 = vunpack.c.l.b16 %v9601
      %v9859 = vunpack.c.l.b16 %v9602
      %v9860 = vunpack.c.l.b16 %v9603
      %v9861 = vunpack.c.l.b16 %v9604
      %v9862 = vunpack.c.l.b16 %v9605
      %v9863 = vunpack.c.l.b16 %v9606
      %v9864 = vunpack.c.l.b16 %v9607
      %v9865 = vunpack.c.l.b16 %v9608
      %v9866 = vunpack.c.l.b16 %v9609
      %v9867 = vunpack.c.l.b16 %v9610
      %v9868 = vunpack.c.l.b16 %v9611
      %v9869 = vunpack.c.l.b16 %v9612
      %v9870 = vunpack.c.l.b16 %v9613
      %v9871 = vpack.c.b16 %v9744, %v9743
      %v9872 = vpack.c.b16 %v9746, %v9745
      %v9873 = vpack.c.b16 %v9748, %v9747
      %v9874 = vpack.c.b16 %v9750, %v9749
      %v9875 = vpack.c.b16 %v9752, %v9751
      %v9876 = vpack.c.b16 %v9754, %v9753
      %v9877 = vpack.c.b16 %v9756, %v9755
      %v9878 = vpack.c.b16 %v9758, %v9757
      %v9879 = vpack.c.b16 %v9760, %v9759
      %v9880 = vpack.c.b16 %v9762, %v9761
      %v9881 = vpack.c.b16 %v9764, %v9763
      %v9882 = vpack.c.b16 %v9766, %v9765
      %v9883 = vpack.c.b16 %v9768, %v9767
      %v9884 = vpack.c.b16 %v9770, %v9769
      %v9885 = vpack.c.b16 %v9772, %v9771
      %v9886 = vpack.c.b16 %v9774, %v9773
      %v9887 = vpack.c.b16 %v9776, %v9775
      %v9888 = vpack.c.b16 %v9778, %v9777
      %v9889 = vpack.c.b16 %v9780, %v9779
      %v9890 = vpack.c.b16 %v9782, %v9781
      %v9891 = vpack.c.b16 %v9784, %v9783
      %v9892 = vpack.c.b16 %v9786, %v9785
      %v9893 = vpack.c.b16 %v9788, %v9787
      %v9894 = vpack.c.b16 %v9790, %v9789
      %v9895 = vpack.c.b16 %v9792, %v9791
      %v9896 = vpack.c.b16 %v9794, %v9793
      %v9897 = vpack.c.b16 %v9796, %v9795
      %v9898 = vpack.c.b16 %v9798, %v9797
      %v9899 = vpack.c.b16 %v9800, %v9799
      %v9900 = vpack.c.b16 %v9802, %v9801
      %v9901 = vpack.c.b16 %v9804, %v9803
      %v9902 = vpack.c.b16 %v9806, %v9805
      %v9903 = vpack.c.b16 %v9808, %v9807
      %v9904 = vpack.c.b16 %v9810, %v9809
      %v9905 = vpack.c.b16 %v9812, %v9811
      %v9906 = vpack.c.b16 %v9814, %v9813
      %v9907 = vpack.c.b16 %v9816, %v9815
      %v9908 = vpack.c.b16 %v9818, %v9817
      %v9909 = vpack.c.b16 %v9820, %v9819
      %v9910 = vpack.c.b16 %v9822, %v9821
      %v9911 = vpack.c.b16 %v9824, %v9823
      %v9912 = vpack.c.b16 %v9826, %v9825
      %v9913 = vpack.c.b16 %v9828, %v9827
      %v9914 = vpack.c.b16 %v9830, %v9829
      %v9915 = vpack.c.b16 %v9832, %v9831
      %v9916 = vpack.c.b16 %v9834, %v9833
      %v9917 = vpack.c.b16 %v9836, %v9835
      %v9918 = vpack.c.b16 %v9838, %v9837
      %v9919 = vpack.c.b16 %v9840, %v9839
      %v9920 = vpack.c.b16 %v9842, %v9841
      %v9921 = vpack.c.b16 %v9844, %v9843
      %v9922 = vpack.c.b16 %v9846, %v9845
      %v9923 = vpack.c.b16 %v9848, %v9847
      %v9924 = vpack.c.b16 %v9850, %v9849
      %v9925 = vpack.c.b16 %v9852, %v9851
      %v9926 = vpack.c.b16 %v9854, %v9853
      %v9927 = vpack.c.b16 %v9856, %v9855
      %v9928 = vpack.c.b16 %v9858, %v9857
      %v9929 = vpack.c.b16 %v9860, %v9859
      %v9930 = vpack.c.b16 %v9862, %v9861
      %v9931 = vpack.c.b16 %v9864, %v9863
      %v9932 = vpack.c.b16 %v9866, %v9865
      %v9933 = vpack.c.b16 %v9868, %v9867
      %v9934 = vpack.c.b16 %v9870, %v9869
      %9999 = vmatprep.subr.bf16.mxu0 0
      %10000 = vmatpush1.bf16.msra.mxu0 %v9878
      %10001 = vmatprep.subr.bf16.mxu0 0
      %10002 = vmatpush1.bf16.msra.mxu0 %v9877
      %10003 = vmatprep.subr.bf16.mxu0 0
      %10004 = vmatpush1.bf16.msra.mxu0 %v9876
      %10005 = vmatprep.subr.bf16.mxu0 0
      %10006 = vmatpush1.bf16.msra.mxu0 %v9875
      %10007 = vmatprep.subr.bf16.mxu0 0
      %10008 = vmatpush1.bf16.msra.mxu0 %v9874
      %10009 = vmatprep.subr.bf16.mxu0 0
      %10010 = vmatpush1.bf16.msra.mxu0 %v9873
      %10011 = vmatprep.subr.bf16.mxu0 0
      %10012 = vmatpush1.bf16.msra.mxu0 %v9872
      %10013 = vmatprep.subr.bf16.mxu0 0
      %10014 = vmatpush1.bf16.msra.mxu0 %v9871
      %10015 = vmatprep.subr.bf16.mxu0 0
      %10016 = vmatpush2.bf16.msra.mxu0 %v9886
      %10017 = vmatprep.subr.bf16.mxu0 0
      %10018 = vmatpush2.bf16.msra.mxu0 %v9885
      %10019 = vmatprep.subr.bf16.mxu0 0
      %10020 = vmatpush2.bf16.msra.mxu0 %v9884
      %10021 = vmatprep.subr.bf16.mxu0 0
      %10022 = vmatpush2.bf16.msra.mxu0 %v9883
      %10023 = vmatprep.subr.bf16.mxu0 0
      %10024 = vmatpush2.bf16.msra.mxu0 %v9882
      %10025 = vmatprep.subr.bf16.mxu0 0
      %10026 = vmatpush2.bf16.msra.mxu0 %v9881
      %10027 = vmatprep.subr.bf16.mxu0 0
      %10028 = vmatpush2.bf16.msra.mxu0 %v9880
      %10029 = vmatprep.subr.bf16.mxu0 0
      %10030 = vmatpush2.bf16.msra.mxu0 %v9879
      %10031 = vmatprep.mubr.bf16.mxu0 %v9479
      %10032 = vmatmul.mubr.bf16.gmra.mxu0 %v9478
      %v10033 = vpop.f32.mrf.mxu0
      %v10034 = vadd.f32 %v9614, %v10033
      %v10035 = vpop.f32.mrf.mxu0
      %v10036 = vpop.f32.mrf.mxu0
      %v10037 = vpop.f32.mrf.mxu0
      %10038 = vdwg.mxu0
      %10039 = vmatprep.subr.bf16.mxu0 0
      %10040 = vmatpush1.bf16.msra.mxu0 %v9894
      %10041 = vmatprep.subr.bf16.mxu0 0
      %10042 = vmatpush1.bf16.msra.mxu0 %v9893
      %10043 = vmatprep.subr.bf16.mxu0 0
      %10044 = vmatpush1.bf16.msra.mxu0 %v9892
      %10045 = vmatprep.subr.bf16.mxu0 0
      %10046 = vmatpush1.bf16.msra.mxu0 %v9891
      %10047 = vmatprep.subr.bf16.mxu0 0
      %10048 = vmatpush1.bf16.msra.mxu0 %v9890
      %10049 = vmatprep.subr.bf16.mxu0 0
      %10050 = vmatpush1.bf16.msra.mxu0 %v9889
      %10051 = vmatprep.subr.bf16.mxu0 0
      %10052 = vmatpush1.bf16.msra.mxu0 %v9888
      %10053 = vmatprep.subr.bf16.mxu0 0
      %10054 = vmatpush1.bf16.msra.mxu0 %v9887
      %10055 = vmatprep.subr.bf16.mxu0 0
      %10056 = vmatpush2.bf16.msra.mxu0 %v9902
      %10057 = vmatprep.subr.bf16.mxu0 0
      %10058 = vmatpush2.bf16.msra.mxu0 %v9901
      %10059 = vmatprep.subr.bf16.mxu0 0
      %10060 = vmatpush2.bf16.msra.mxu0 %v9900
      %10061 = vmatprep.subr.bf16.mxu0 0
      %10062 = vmatpush2.bf16.msra.mxu0 %v9899
      %10063 = vmatprep.subr.bf16.mxu0 0
      %10064 = vmatpush2.bf16.msra.mxu0 %v9898
      %10065 = vmatprep.subr.bf16.mxu0 0
      %10066 = vmatpush2.bf16.msra.mxu0 %v9897
      %10067 = vmatprep.subr.bf16.mxu0 0
      %10068 = vmatpush2.bf16.msra.mxu0 %v9896
      %10069 = vmatprep.subr.bf16.mxu0 0
      %10070 = vmatpush2.bf16.msra.mxu0 %v9895
      %10071 = vmatprep.mubr.bf16.mxu0 %v9481
      %10072 = vmatmul.mubr.bf16.gmra.mxu0 %v9480
      %v10073 = vpop.f32.mrf.mxu0
      %v10074 = vadd.f32 %v10034, %v10073
      %v10075 = vpop.f32.mrf.mxu0
      %v10076 = vpop.f32.mrf.mxu0
      %v10077 = vpop.f32.mrf.mxu0
      %10078 = vdwg.mxu0
      %10079 = vmatprep.subr.bf16.mxu0 0
      %10080 = vmatpush1.bf16.msra.mxu0 %v9910
      %10081 = vmatprep.subr.bf16.mxu0 0
      %10082 = vmatpush1.bf16.msra.mxu0 %v9909
      %10083 = vmatprep.subr.bf16.mxu0 0
      %10084 = vmatpush1.bf16.msra.mxu0 %v9908
      %10085 = vmatprep.subr.bf16.mxu0 0
      %10086 = vmatpush1.bf16.msra.mxu0 %v9907
      %10087 = vmatprep.subr.bf16.mxu0 0
      %10088 = vmatpush1.bf16.msra.mxu0 %v9906
      %10089 = vmatprep.subr.bf16.mxu0 0
      %10090 = vmatpush1.bf16.msra.mxu0 %v9905
      %10091 = vmatprep.subr.bf16.mxu0 0
      %10092 = vmatpush1.bf16.msra.mxu0 %v9904
      %10093 = vmatprep.subr.bf16.mxu0 0
      %10094 = vmatpush1.bf16.msra.mxu0 %v9903
      %10095 = vmatprep.subr.bf16.mxu0 0
      %10096 = vmatpush2.bf16.msra.mxu0 %v9918
      %10097 = vmatprep.subr.bf16.mxu0 0
      %10098 = vmatpush2.bf16.msra.mxu0 %v9917
      %10099 = vmatprep.subr.bf16.mxu0 0
      %10100 = vmatpush2.bf16.msra.mxu0 %v9916
      %10101 = vmatprep.subr.bf16.mxu0 0
      %10102 = vmatpush2.bf16.msra.mxu0 %v9915
      %10103 = vmatprep.subr.bf16.mxu0 0
      %10104 = vmatpush2.bf16.msra.mxu0 %v9914
      %10105 = vmatprep.subr.bf16.mxu0 0
      %10106 = vmatpush2.bf16.msra.mxu0 %v9913
      %10107 = vmatprep.subr.bf16.mxu0 0
      %10108 = vmatpush2.bf16.msra.mxu0 %v9912
      %10109 = vmatprep.subr.bf16.mxu0 0
      %10110 = vmatpush2.bf16.msra.mxu0 %v9911
      %10111 = vmatprep.mubr.bf16.mxu0 %v9483
      %10112 = vmatmul.mubr.bf16.gmra.mxu0 %v9482
      %v10113 = vpop.f32.mrf.mxu0
      %v10114 = vadd.f32 %v10074, %v10113
      %v10115 = vpop.f32.mrf.mxu0
      %v10116 = vpop.f32.mrf.mxu0
      %v10117 = vpop.f32.mrf.mxu0
      %10118 = vdwg.mxu0
      %10119 = vmatprep.subr.bf16.mxu0 0
      %10120 = vmatpush1.bf16.msra.mxu0 %v9926
      %10121 = vmatprep.subr.bf16.mxu0 0
      %10122 = vmatpush1.bf16.msra.mxu0 %v9925
      %10123 = vmatprep.subr.bf16.mxu0 0
      %10124 = vmatpush1.bf16.msra.mxu0 %v9924
      %10125 = vmatprep.subr.bf16.mxu0 0
      %10126 = vmatpush1.bf16.msra.mxu0 %v9923
      %10127 = vmatprep.subr.bf16.mxu0 0
      %10128 = vmatpush1.bf16.msra.mxu0 %v9922
      %10129 = vmatprep.subr.bf16.mxu0 0
      %10130 = vmatpush1.bf16.msra.mxu0 %v9921
      %10131 = vmatprep.subr.bf16.mxu0 0
      %10132 = vmatpush1.bf16.msra.mxu0 %v9920
      %10133 = vmatprep.subr.bf16.mxu0 0
      %10134 = vmatpush1.bf16.msra.mxu0 %v9919
      %10135 = vmatprep.subr.bf16.mxu0 0
      %10136 = vmatpush2.bf16.msra.mxu0 %v9934
      %10137 = vmatprep.subr.bf16.mxu0 0
      %10138 = vmatpush2.bf16.msra.mxu0 %v9933
      %10139 = vmatprep.subr.bf16.mxu0 0
      %10140 = vmatpush2.bf16.msra.mxu0 %v9932
      %10141 = vmatprep.subr.bf16.mxu0 0
      %10142 = vmatpush2.bf16.msra.mxu0 %v9931
      %10143 = vmatprep.subr.bf16.mxu0 0
      %10144 = vmatpush2.bf16.msra.mxu0 %v9930
      %10145 = vmatprep.subr.bf16.mxu0 0
      %10146 = vmatpush2.bf16.msra.mxu0 %v9929
      %10147 = vmatprep.subr.bf16.mxu0 0
      %10148 = vmatpush2.bf16.msra.mxu0 %v9928
      %10149 = vmatprep.subr.bf16.mxu0 0
      %10150 = vmatpush2.bf16.msra.mxu0 %v9927
      %10151 = vmatprep.mubr.bf16.mxu0 %v9485
      %10152 = vmatmul.mubr.bf16.gmra.mxu0 %v9484
      %v10153 = vpop.f32.mrf.mxu0
      %v10154 = vadd.f32 %v10114, %v10153
      %v10155 = vpop.f32.mrf.mxu0
      %v10156 = vpop.f32.mrf.mxu0
      %v10157 = vpop.f32.mrf.mxu0
      %10158 = vdwg.mxu0
      %v10159 = vmax.f32 %v10154, 0.0
      %v10160 = vpack.c.bf16 %v10159, %v10159
      %v10161 = vld [vmem:[%s11] sm:$0xf]
      %v10162 = vld [vmem:[%s11 + $0x4] sm:$0xf]
      %v10163 = vld [vmem:[%s11 + $0x8] sm:$0xf]
      %v10164 = vld [vmem:[%s11 + $0xc] sm:$0xf]
      %v10165 = vld [vmem:[%s11 + $0x10] sm:$0xf]
      %v10166 = vld [vmem:[%s11 + $0x14] sm:$0xf]
      %v10167 = vld [vmem:[%s11 + $0x18] sm:$0xf]
      %v10168 = vld [vmem:[%s11 + $0x1c] sm:$0xf]
      %v10169 = vld [vmem:[%s11 + $0x20] sm:$0xf]
      %v10170 = vld [vmem:[%s11 + $0x24] sm:$0xf]
      %v10171 = vld [vmem:[%s11 + $0x28] sm:$0xf]
      %v10172 = vld [vmem:[%s11 + $0x2c] sm:$0xf]
      %v10173 = vld [vmem:[%s11 + $0x30] sm:$0xf]
      %v10174 = vld [vmem:[%s11 + $0x34] sm:$0xf]
      %v10175 = vld [vmem:[%s11 + $0x38] sm:$0xf]
      %v10176 = vld [vmem:[%s11 + $0x3c] sm:$0xf]
      %v10177 = vld [vmem:[%s12] sm:$0x1]
      %v10194 = vunpack.c.l.b16 %v10161
      %v10195 = vunpack.c.l.b16 %v10162
      %v10196 = vunpack.c.l.b16 %v10163
      %v10197 = vunpack.c.l.b16 %v10164
      %v10198 = vunpack.c.l.b16 %v10165
      %v10199 = vunpack.c.l.b16 %v10166
      %v10200 = vunpack.c.l.b16 %v10167
      %v10201 = vunpack.c.l.b16 %v10168
      %v10202 = vunpack.c.l.b16 %v10169
      %v10203 = vunpack.c.l.b16 %v10170
      %v10204 = vunpack.c.l.b16 %v10171
      %v10205 = vunpack.c.l.b16 %v10172
      %v10206 = vunpack.c.l.b16 %v10173
      %v10207 = vunpack.c.l.b16 %v10174
      %v10208 = vunpack.c.l.b16 %v10175
      %v10209 = vunpack.c.l.b16 %v10176
      %v10210 = vpack.c.b16 %v10195, %v10194
      %v10211 = vpack.c.b16 %v10197, %v10196
      %v10212 = vpack.c.b16 %v10199, %v10198
      %v10213 = vpack.c.b16 %v10201, %v10200
      %v10214 = vpack.c.b16 %v10203, %v10202
      %v10215 = vpack.c.b16 %v10205, %v10204
      %v10216 = vpack.c.b16 %v10207, %v10206
      %v10217 = vpack.c.b16 %v10209, %v10208
      %10226 = vmatprep.subr.bf16.mxu0 0
      %10227 = vmatpush1.bf16.msra.mxu0 %v10217
      %10228 = vmatprep.subr.bf16.mxu0 0
      %10229 = vmatpush1.bf16.msra.mxu0 %v10216
      %10230 = vmatprep.subr.bf16.mxu0 0
      %10231 = vmatpush1.bf16.msra.mxu0 %v10215
      %10232 = vmatprep.subr.bf16.mxu0 0
      %10233 = vmatpush1.bf16.msra.mxu0 %v10214
      %10234 = vmatprep.subr.bf16.mxu0 0
      %10235 = vmatpush1.bf16.msra.mxu0 %v10213
      %10236 = vmatprep.subr.bf16.mxu0 0
      %10237 = vmatpush1.bf16.msra.mxu0 %v10212
      %10238 = vmatprep.subr.bf16.mxu0 0
      %10239 = vmatpush1.bf16.msra.mxu0 %v10211
      %10240 = vmatprep.subr.bf16.mxu0 0
      %10241 = vmatpush1.bf16.msra.mxu0 %v10210
      %10242 = vmatprep.subr.bf16.mxu0 0
      %10243 = vmatpush2.bf16.msra.mxu0 0
      %10244 = vmatprep.subr.bf16.mxu0 0
      %10245 = vmatpush2.bf16.msra.mxu0 0
      %10246 = vmatprep.subr.bf16.mxu0 0
      %10247 = vmatpush2.bf16.msra.mxu0 0
      %10248 = vmatprep.subr.bf16.mxu0 0
      %10249 = vmatpush2.bf16.msra.mxu0 0
      %10250 = vmatprep.subr.bf16.mxu0 0
      %10251 = vmatpush2.bf16.msra.mxu0 0
      %10252 = vmatprep.subr.bf16.mxu0 0
      %10253 = vmatpush2.bf16.msra.mxu0 0
      %10254 = vmatprep.subr.bf16.mxu0 0
      %10255 = vmatpush2.bf16.msra.mxu0 0
      %10256 = vmatprep.subr.bf16.mxu0 0
      %10257 = vmatpush2.bf16.msra.mxu0 0
      %10258 = vmatprep.mubr.bf16.mxu0 0
      %10259 = vmatmul.mubr.bf16.gmra.mxu0 %v10160
      %v10260 = vpop.f32.mrf.mxu0
      %v10261 = vadd.f32 %v10177, %v10260
      %v10262 = vpop.f32.mrf.mxu0
      %v10263 = vpop.f32.mrf.mxu0
      %v10264 = vpop.f32.mrf.mxu0
      %10265 = vdwg.mxu0
      %v10266 = vlaneseq
      %v10267 = vshrl.u32 %v10266, 7
      %v10268 = vsub.s32 0, %v10267
      %v10269 = vrot.slane %v10261, %v10268
      %10270 = vst [vmem:[%s438] sm:$0xff] %v10269
      %p10271 = scmp.lt.s32.totalorder %s24, 3
      %s10272 = scalar_select %p10271, %s24, 3
      %s10273 = smul.addr %s10272, 8
      %s10274 = scalar_lea.vmem %s13, %s10273
      // Predicated region
      $region73: #{siamese_forward.1} parent=71 // pred_check
        %p10275 = pneg %p320
      $region74: #{siamese_forward.1} parent=71 // pred_check_branch
        %10277 = sbr.rel (%p10275) target = $region76
      $region75: #{siamese_forward.1} parent=71 // pred_region
        _
      $region76: #{siamese_forward.1} parent=71 // pred_fallthru
        _
    $region72: #{siamese_forward.1} parent=5 // pred_fallthru
      _
    %p10278 = scmp.le.s32.totalorder 2, %s19
    // Predicated region
    $region77: #{siamese_forward.1} parent=5 // pred_check
      %p10279 = pneg %p10278
    $region78: #{siamese_forward.1} parent=5 // pred_check_branch
      %10281 = sbr.rel (%p10279) target = $region80
    $region79: #{siamese_forward.1} parent=5 // pred_region
      %s10282 = ssub.s32 %s19, 2
      // Predicated region
      $region81: #{siamese_forward.1} parent=79 // pred_check
        %p10283 = pneg %p326
      $region82: #{siamese_forward.1} parent=79 // pred_check_branch
        %10285 = sbr.rel (%p10283) target = $region84
      $region83: #{siamese_forward.1} parent=79 // pred_region
        %p10286 = scmp.lt.s32.totalorder %s25, 3
        %s10287 = scalar_select %p10286, %s25, 3
        %s10288 = smul.addr %s10287, 8
        %s10289 = scalar_lea.vmem %s13, %s10288
      $region84: #{siamese_forward.1} parent=79 // pred_fallthru
        _
    $region80: #{siamese_forward.1} parent=5 // pred_fallthru
      _
  $region6: #{siamese_forward.1} parent=0 // loop_footer
    %s23 = sadd.s32 1, %s19
  $region7: #{siamese_forward.1} parent=0 // loop_footer_branch
    %18 = sbr.rel target = $region3
  $region8: #{siamese_forward.1} parent=0 // loop_exit
    _

</llo_original>
